<compile_context>
chip_gen: v7x
topology: tpu7x:2x2x1
jax: 0.10.0
libtpu: 0.0.40
codegen_flags: <defaults>
</compile_context>

<pallas_src>
import functools

import jax
import jax.numpy as jnp
from jax.experimental import pallas as pl
from jax.experimental.pallas import tpu as pltpu

# ----------------------------- scaled UNI-ViT config -----------------------------
PATCH = 16
IN_CH = 3
EMBED_DIM = 256          # real UNI: 1024
DEPTH = 4                # real UNI: 24
NUM_HEADS = 2            # real UNI: 16   (head_dim kept at 128 -> lane aligned)
HEAD_DIM = EMBED_DIM // NUM_HEADS
MLP_DIM = 4 * EMBED_DIM
HEAD_HIDDEN = 256        # per-task MLP hidden size (from the module spec)
NT_PAD = 128             # lane-dense padded task axis for the fused head matmul
LN_EPS = 1e-6
LS_INIT = 1e-5           # LayerScale init_values from the module spec
NEG_INF = -1e9

_BLOCK_KEYS = ("ln1_g", "ln1_b", "wqkv", "bqkv", "wproj", "bproj", "ls1",
               "ln2_g", "ln2_b", "wfc1", "bfc1", "wfc2", "bfc2", "ls2")


def _const_spec(shape):
    """Full-array block, identical for every grid step (fetched once, stays resident)."""
    zeros = (0,) * len(shape)
    return pl.BlockSpec(tuple(shape), lambda b, l: zeros)


def _depth_spec(shape):
    """Depth-stacked weight: block (1, *rest), indexed by the depth grid axis."""
    rest = (0,) * (len(shape) - 1)
    return pl.BlockSpec((1,) + tuple(shape[1:]), lambda b, l: (l,) + rest)


def _layernorm(v, g, b):
    mu = jnp.mean(v, axis=-1, keepdims=True)
    c = v - mu
    var = jnp.mean(c * c, axis=-1, keepdims=True)
    return c * jax.lax.rsqrt(var + LN_EPS) * g + b


def _pick_batch_tile(batch, t_pad, rows_target=256):
    """Largest batch tile with bt*t_pad <= rows_target, keeping >=2 parallel grid
    steps (v7x megacore) whenever the batch allows it."""
    limit = max(1, rows_target // t_pad)
    if batch >= 2:
        limit = max(1, min(limit, batch // 2))
    for cand in range(limit, 0, -1):
        if batch % cand == 0:
            return cand
    return 1


# --------------------------------------------------------------------------------
# The single fused kernel: patch-embed (l==0) -> transformer block l ->
# final LN + multitask heads (l==DEPTH-1).  grid = (batch_blocks, DEPTH).
# --------------------------------------------------------------------------------
def _uni_kernel(patches_ref, pw_ref, pb_ref, cls_ref, pos_ref,
                ln1g, ln1b, wqkv, bqkv, wproj, bproj, ls1,
                ln2g, ln2b, wfc1, bfc1, wfc2, bfc2, ls2,
                ng, nb, hw1, hb1, hw2, hb2,
                o_ref, tok_ref, *, num_heads, num_valid):
    l = pl.program_id(1)
    bt, t, p = patches_ref.shape
    d = pw_ref.shape[-1]
    hd = d // num_heads
    m = bt * t                                       # matmul M dimension (rows)

    # ---- depth step 0: fused patch-embed + cls token + pos-embed ----
    @pl.when(l == 0)
    def _embed():
        pe = jnp.dot(patches_ref[...].reshape(m, p), pw_ref[...],
                     preferred_element_type=jnp.float32).reshape(bt, t, d)
        row = jax.lax.broadcasted_iota(jnp.int32, (bt, t, d), 1)
        tok = jnp.where(row == 0, cls_ref[...], pe + pb_ref[...])   # cls vs conv+bias
        tok = jnp.where(row < num_valid, tok + pos_ref[...], 0.0)   # zero pad rows
        tok_ref[...] = tok.reshape(m, d)

    x = tok_ref[...]                                                 # (m, d) f32

    # ---- multi-head self-attention + LayerScale residual ----
    h = _layernorm(x, ln1g[0], ln1b[0])
    qkv = jnp.dot(h.astype(jnp.bfloat16), wqkv[0],
                  preferred_element_type=jnp.float32) + bqkv[0]      # (m, 3d)
    qkv3 = qkv.reshape(bt, t, 3 * d)
    key_idx = jax.lax.broadcasted_iota(jnp.int32, (1, 1, t), 2)
    mask = jnp.where(key_idx < num_valid, 0.0, NEG_INF)              # padded keys
    scale = float(hd) ** -0.5
    wproj_full = wproj[0]                                            # (d, d) bf16
    acc = jnp.zeros((m, d), jnp.float32)
    for i in range(num_heads):                                       # static unroll
        lo = i * hd                                                  # 128-lane aligned
        q = qkv3[:, :, lo:lo + hd].astype(jnp.bfloat16)
        k = qkv3[:, :, d + lo:d + lo + hd].astype(jnp.bfloat16)
        v = qkv3[:, :, 2 * d + lo:2 * d + lo + hd].astype(jnp.bfloat16)
        s = jnp.einsum('bqd,bkd->bqk', q, k,
                       preferred_element_type=jnp.float32) * scale + mask
        s = s - jnp.max(s, axis=-1, keepdims=True)
        ps = jnp.exp(s)
        ps = ps * pl.reciprocal(jnp.sum(ps, axis=-1, keepdims=True), approx=True)
        oh = jnp.einsum('bqk,bkd->bqd', ps.astype(jnp.bfloat16), v,
                        preferred_element_type=jnp.float32)          # (bt, t, hd)
        # fold the per-head concat into the output projection (row-slice of Wproj)
        acc = acc + jnp.dot(oh.reshape(m, hd).astype(jnp.bfloat16),
                            wproj_full[lo:lo + hd, :],
                            preferred_element_type=jnp.float32)
    x = x + ls1[0] * (acc + bproj[0])

    # ---- MLP + LayerScale residual ----
    h2 = _layernorm(x, ln2g[0], ln2b[0])
    f1 = jnp.dot(h2.astype(jnp.bfloat16), wfc1[0],
                 preferred_element_type=jnp.float32) + bfc1[0]
    # TODO(synk): timm/UNI uses exact erf-GELU; tanh-approximate GELU used here.
    f1 = jax.nn.gelu(f1, approximate=True)
    f2 = jnp.dot(f1.astype(jnp.bfloat16), wfc2[0],
                 preferred_element_type=jnp.float32) + bfc2[0]
    x = x + ls2[0] * f2
    tok_ref[...] = x                                                 # stays in VMEM

    # ---- final depth step: final LN + all task heads on the cls rows ----
    @pl.when(l == pl.num_programs(1) - 1)
    def _heads():
        cls_rows = x.reshape(bt, t, d)[:, 0, :]                      # (bt, d)
        feat = _layernorm(cls_rows, ng[...], nb[...])
        hh = jnp.dot(feat.astype(jnp.bfloat16), hw1[...],
                     preferred_element_type=jnp.float32) + hb1[...]  # (bt, nt*256)
        hh = jnp.maximum(hh, 0.0)                                    # ReLU
        out = jnp.dot(hh.astype(jnp.bfloat16), hw2[...],             # block-diag fc2
                      preferred_element_type=jnp.float32) + hb2[...] # (bt, NT_PAD)
        o_ref[...] = out.reshape(bt, 1, NT_PAD)                      # lane-dense store


# --------------------------------------------------------------------------------
# Parameters (synthetic, deterministic) and forward pass
# --------------------------------------------------------------------------------
def init_params(key, num_patches, num_tasks):
    assert num_tasks <= NT_PAD
    D = EMBED_DIM
    P = PATCH * PATCH * IN_CH
    t_pad = ((1 + num_patches + 7) // 8) * 8
    keys = iter(jax.random.split(key, 64))
    nxt = lambda: next(keys)
    wbf = lambda shape, std: (jax.random.normal(nxt(), shape, jnp.float32) * std
                              ).astype(jnp.bfloat16)
    wfp = lambda shape, std: jax.random.normal(nxt(), shape, jnp.float32) * std

    params = {
        # NOTE: real PyTorch conv weights (D, C, kh, kw) must be permuted to
        # (kh, kw, C, D).reshape(P, D) to match this (ph, pw, c)-flattened patch layout.
        "patch_w": wbf((P, D), 0.02),
        "patch_b": jnp.zeros((1, D), jnp.float32),
        "cls": wfp((1, D), 0.02),
        "pos": wfp((t_pad, D), 0.02),
        "norm_g": jnp.ones((1, D), jnp.float32),
        "norm_b": jnp.zeros((1, D), jnp.float32),
        "heads_w1": wbf((D, num_tasks * HEAD_HIDDEN), 0.02),
        "heads_b1": jnp.zeros((1, num_tasks * HEAD_HIDDEN), jnp.float32),
    }
    # per-task (256 -> 1) weights packed into one block-diagonal, lane-padded matrix so
    # the fused head reduces to a single MXU matmul with a lane-dense (bt, 128) store.
    w2 = wfp((num_tasks, HEAD_HIDDEN), 0.02)
    w2_bd = jnp.zeros((num_tasks * HEAD_HIDDEN, NT_PAD), jnp.float32)
    for ti in range(num_tasks):
        w2_bd = w2_bd.at[ti * HEAD_HIDDEN:(ti + 1) * HEAD_HIDDEN, ti].set(w2[ti])
    params["heads_w2"] = w2_bd.astype(jnp.bfloat16)
    params["heads_b2"] = jnp.zeros((1, NT_PAD), jnp.float32)

    # transformer block weights stacked along a leading depth axis
    params["blocks"] = {
        "ln1_g": jnp.ones((DEPTH, 1, D), jnp.float32),
        "ln1_b": jnp.zeros((DEPTH, 1, D), jnp.float32),
        "wqkv": wbf((DEPTH, D, 3 * D), 0.02),
        "bqkv": jnp.zeros((DEPTH, 1, 3 * D), jnp.float32),
        "wproj": wbf((DEPTH, D, D), 0.02),
        "bproj": jnp.zeros((DEPTH, 1, D), jnp.float32),
        "ls1": jnp.full((DEPTH, 1, D), LS_INIT, jnp.float32),
        "ln2_g": jnp.ones((DEPTH, 1, D), jnp.float32),
        "ln2_b": jnp.zeros((DEPTH, 1, D), jnp.float32),
        "wfc1": wbf((DEPTH, D, MLP_DIM), 0.02),
        "bfc1": jnp.zeros((DEPTH, 1, MLP_DIM), jnp.float32),
        "wfc2": wbf((DEPTH, MLP_DIM, D), 0.02),
        "bfc2": jnp.zeros((DEPTH, 1, D), jnp.float32),
        "ls2": jnp.full((DEPTH, 1, D), LS_INIT, jnp.float32),
    }
    return params


def uni_multitask_forward(params, x_nchw, num_tasks):
    B, C, H, W = x_nchw.shape
    gh, gw = H // PATCH, W // PATCH
    n_patches = gh * gw
    t_pad = params["pos"].shape[0]
    num_valid = 1 + n_patches
    D = EMBED_DIM
    P = PATCH * PATCH * C

    # NCHW -> flattened non-overlapping patches (pure data movement, stays in XLA).
    # Row 0 is reserved for the cls token; pad rows to a sublane multiple of 8.
    # Patches cross HBM in bf16 (halves activation DMA bytes).
    x = jnp.transpose(x_nchw, (0, 2, 3, 1)).astype(jnp.float32)          # NHWC
    x = x.reshape(B, gh, PATCH, gw, PATCH, C)
    x = jnp.transpose(x, (0, 1, 3, 2, 4, 5)).reshape(B, n_patches, P)
    patches = jnp.pad(x, ((0, 0), (1, t_pad - 1 - n_patches), (0, 0))
                      ).astype(jnp.bfloat16)

    bt = _pick_batch_tile(B, t_pad)

    const_embed = [params["patch_w"], params["patch_b"], params["cls"], params["pos"]]
    stacked = [params["blocks"][k] for k in _BLOCK_KEYS]
    const_head = [params["norm_g"], params["norm_b"],
                  params["heads_w1"], params["heads_b1"],
                  params["heads_w2"], params["heads_b2"]]

    in_specs = [pl.BlockSpec((bt, t_pad, P), lambda b, l: (b, 0, 0))]    # patches
    in_specs += [_const_spec(a.shape) for a in const_embed]
    in_specs += [_depth_spec(a.shape) for a in stacked]                  # per-layer
    in_specs += [_const_spec(a.shape) for a in const_head]

    logits = pl.pallas_call(
        functools.partial(_uni_kernel, num_heads=NUM_HEADS, num_valid=num_valid),
        out_shape=jax.ShapeDtypeStruct((B, 1, NT_PAD), jnp.float32),
        grid=(B // bt, DEPTH),
        in_specs=in_specs,
        out_specs=pl.BlockSpec((bt, 1, NT_PAD), lambda b, l: (b, 0, 0)),
        scratch_shapes=[pltpu.VMEM((bt * t_pad, D), jnp.float32)],       # resident tokens
        compiler_params=pltpu.CompilerParams(
            dimension_semantics=("parallel", "arbitrary")),
    )(patches, *const_embed, *stacked, *const_head)

    logits = logits[:, 0, :num_tasks]                                    # (B, num_tasks)
    # list of (B, 1) outputs, matching the PyTorch module
    return [logits[:, i:i + 1] for i in range(num_tasks)]


# --------------------------------------------------------------------------------
if __name__ == "__main__":
    NUM_TASKS = 3
    B, IMG = 2, 32
    key = jax.random.PRNGKey(0)
    pkey, xkey = jax.random.split(key)

    n_patches = (IMG // PATCH) ** 2
    params = init_params(pkey, n_patches, NUM_TASKS)
    x = jax.random.normal(xkey, (B, IN_CH, IMG, IMG), jnp.float32)

    fwd = jax.jit(functools.partial(uni_multitask_forward, num_tasks=NUM_TASKS))
    outs = fwd(params, x)
    outs = jax.block_until_ready(outs)

    assert isinstance(outs, list) and len(outs) == NUM_TASKS
    assert all(o.shape == (B, 1) for o in outs)
    assert all(bool(jnp.all(jnp.isfinite(o))) for o in outs)
    print("KERNEL_OK")
</pallas_src>

<mosaic_0001>
module attributes {stable_mosaic.version = 11 : i64} {
  func.func @_uni_kernel(%arg0: i32, %arg1: i32, %arg2: memref<1x8x768xbf16, #tpu.memory_space<vmem>>, %arg3: memref<768x256xbf16, #tpu.memory_space<vmem>>, %arg4: memref<1x256xf32, #tpu.memory_space<vmem>>, %arg5: memref<1x256xf32, #tpu.memory_space<vmem>>, %arg6: memref<8x256xf32, #tpu.memory_space<vmem>>, %arg7: memref<1x1x256xf32, #tpu.memory_space<vmem>>, %arg8: memref<1x1x256xf32, #tpu.memory_space<vmem>>, %arg9: memref<1x256x768xbf16, #tpu.memory_space<vmem>>, %arg10: memref<1x1x768xf32, #tpu.memory_space<vmem>>, %arg11: memref<1x256x256xbf16, #tpu.memory_space<vmem>>, %arg12: memref<1x1x256xf32, #tpu.memory_space<vmem>>, %arg13: memref<1x1x256xf32, #tpu.memory_space<vmem>>, %arg14: memref<1x1x256xf32, #tpu.memory_space<vmem>>, %arg15: memref<1x1x256xf32, #tpu.memory_space<vmem>>, %arg16: memref<1x256x1024xbf16, #tpu.memory_space<vmem>>, %arg17: memref<1x1x1024xf32, #tpu.memory_space<vmem>>, %arg18: memref<1x1024x256xbf16, #tpu.memory_space<vmem>>, %arg19: memref<1x1x256xf32, #tpu.memory_space<vmem>>, %arg20: memref<1x1x256xf32, #tpu.memory_space<vmem>>, %arg21: memref<1x256xf32, #tpu.memory_space<vmem>>, %arg22: memref<1x256xf32, #tpu.memory_space<vmem>>, %arg23: memref<256x768xbf16, #tpu.memory_space<vmem>>, %arg24: memref<1x768xf32, #tpu.memory_space<vmem>>, %arg25: memref<768x128xbf16, #tpu.memory_space<vmem>>, %arg26: memref<1x128xf32, #tpu.memory_space<vmem>>, %arg27: memref<1x1x128xf32, #tpu.memory_space<vmem>>, %arg28: memref<8x256xf32, #tpu.memory_space<vmem>>) attributes {dimension_semantics = [#tpu.dimension_semantics<parallel>, #tpu.dimension_semantics<arbitrary>], iteration_bounds = array<i64: 2, 4>, scalar_prefetch = 0 : i64, scratch_operands = 1 : i64, tpu.core_type = #tpu.core_type<tc>, window_params = [{transform_indices = @transform_0, window_bounds = array<i64: 1, 8, 768>}, {pipeline_mode = #tpu.pipeline_mode<synchronous>, transform_indices = @transform_1, window_bounds = array<i64: 768, 256>}, {pipeline_mode = #tpu.pipeline_mode<synchronous>, transform_indices = @transform_2, window_bounds = array<i64: 1, 256>}, {pipeline_mode = #tpu.pipeline_mode<synchronous>, transform_indices = @transform_3, window_bounds = array<i64: 1, 256>}, {pipeline_mode = #tpu.pipeline_mode<synchronous>, transform_indices = @transform_4, window_bounds = array<i64: 8, 256>}, {transform_indices = @transform_5, window_bounds = array<i64: 1, 1, 256>}, {transform_indices = @transform_6, window_bounds = array<i64: 1, 1, 256>}, {transform_indices = @transform_7, window_bounds = array<i64: 1, 256, 768>}, {transform_indices = @transform_8, window_bounds = array<i64: 1, 1, 768>}, {transform_indices = @transform_9, window_bounds = array<i64: 1, 256, 256>}, {transform_indices = @transform_10, window_bounds = array<i64: 1, 1, 256>}, {transform_indices = @transform_11, window_bounds = array<i64: 1, 1, 256>}, {transform_indices = @transform_12, window_bounds = array<i64: 1, 1, 256>}, {transform_indices = @transform_13, window_bounds = array<i64: 1, 1, 256>}, {transform_indices = @transform_14, window_bounds = array<i64: 1, 256, 1024>}, {transform_indices = @transform_15, window_bounds = array<i64: 1, 1, 1024>}, {transform_indices = @transform_16, window_bounds = array<i64: 1, 1024, 256>}, {transform_indices = @transform_17, window_bounds = array<i64: 1, 1, 256>}, {transform_indices = @transform_18, window_bounds = array<i64: 1, 1, 256>}, {pipeline_mode = #tpu.pipeline_mode<synchronous>, transform_indices = @transform_19, window_bounds = array<i64: 1, 256>}, {pipeline_mode = #tpu.pipeline_mode<synchronous>, transform_indices = @transform_20, window_bounds = array<i64: 1, 256>}, {pipeline_mode = #tpu.pipeline_mode<synchronous>, transform_indices = @transform_21, window_bounds = array<i64: 256, 768>}, {pipeline_mode = #tpu.pipeline_mode<synchronous>, transform_indices = @transform_22, window_bounds = array<i64: 1, 768>}, {pipeline_mode = #tpu.pipeline_mode<synchronous>, transform_indices = @transform_23, window_bounds = array<i64: 768, 128>}, {pipeline_mode = #tpu.pipeline_mode<synchronous>, transform_indices = @transform_24, window_bounds = array<i64: 1, 128>}, {transform_indices = @transform_25, window_bounds = array<i64: 1, 1, 128>}]} {
    %c0_i32 = arith.constant 0 : i32
    %0 = arith.cmpi eq, %arg1, %c0_i32 : i32
    %1 = arith.extui %0 : i1 to i32
    %c0_i32_0 = arith.constant 0 : i32
    %2 = arith.cmpi ne, %1, %c0_i32_0 : i32
    scf.if %2 {
      %c0_78 = arith.constant 0 : index
      %c0_79 = arith.constant 0 : index
      %c0_80 = arith.constant 0 : index
      %173 = vector.load %arg2[%c0_78, %c0_79, %c0_80] : memref<1x8x768xbf16, #tpu.memory_space<vmem>>, vector<1x8x768xbf16>
      %174 = vector.shape_cast %173 : vector<1x8x768xbf16> to vector<8x768xbf16>
      %c0_81 = arith.constant 0 : index
      %c0_82 = arith.constant 0 : index
      %175 = vector.load %arg3[%c0_81, %c0_82] : memref<768x256xbf16, #tpu.memory_space<vmem>>, vector<768x256xbf16>
      %cst_83 = arith.constant dense<0.000000e+00> : vector<8x256xf32>
      %176 = tpu.matmul %174, %175, %cst_83 {dimension_numbers = #tpu.dot_dimension_numbers<[1], [0], [0], [1], [0, 0, 1, 1], [], []>} : vector<8x768xbf16>, vector<768x256xbf16>, vector<8x256xf32> -> vector<8x256xf32>
      %177 = vector.shape_cast %176 : vector<8x256xf32> to vector<1x8x256xf32>
      %178 = tpu.iota {dimensions = array<i32: 1>} : vector<1x8x256xi32>
      %c0_i32_84 = arith.constant 0 : i32
      %179 = vector.broadcast %c0_i32_84 : i32 to vector<1x8x256xi32>
      %180 = arith.cmpi eq, %178, %179 : vector<1x8x256xi32>
      %c0_85 = arith.constant 0 : index
      %c0_86 = arith.constant 0 : index
      %181 = vector.load %arg5[%c0_85, %c0_86] : memref<1x256xf32, #tpu.memory_space<vmem>>, vector<1x256xf32>
      %c0_87 = arith.constant 0 : index
      %c0_88 = arith.constant 0 : index
      %182 = vector.load %arg4[%c0_87, %c0_88] : memref<1x256xf32, #tpu.memory_space<vmem>>, vector<1x256xf32>
      %183 = vector.shape_cast %182 : vector<1x256xf32> to vector<1x1x256xf32>
      %184 = vector.broadcast %183 : vector<1x1x256xf32> to vector<1x8x256xf32>
      %185 = arith.addf %177, %184 : vector<1x8x256xf32>
      %186 = vector.shape_cast %181 : vector<1x256xf32> to vector<1x1x256xf32>
      %187 = vector.broadcast %186 : vector<1x1x256xf32> to vector<1x8x256xf32>
      %188 = arith.select %180, %187, %185 : vector<1x8x256xi1>, vector<1x8x256xf32>
      %c5_i32_89 = arith.constant 5 : i32
      %189 = vector.broadcast %c5_i32_89 : i32 to vector<1x8x256xi32>
      %190 = arith.cmpi slt, %178, %189 : vector<1x8x256xi32>
      %c0_90 = arith.constant 0 : index
      %c0_91 = arith.constant 0 : index
      %191 = vector.load %arg6[%c0_90, %c0_91] : memref<8x256xf32, #tpu.memory_space<vmem>>, vector<8x256xf32>
      %192 = vector.shape_cast %191 : vector<8x256xf32> to vector<1x8x256xf32>
      %193 = arith.addf %188, %192 : vector<1x8x256xf32>
      %cst_92 = arith.constant 0.000000e+00 : f32
      %194 = vector.broadcast %cst_92 : f32 to vector<1x8x256xf32>
      %195 = arith.select %190, %193, %194 : vector<1x8x256xi1>, vector<1x8x256xf32>
      %196 = vector.shape_cast %195 : vector<1x8x256xf32> to vector<8x256xf32>
      %c0_93 = arith.constant 0 : index
      %c0_94 = arith.constant 0 : index
      %197 = vector.load %arg28[%c0_93, %c0_94] : memref<8x256xf32, #tpu.memory_space<vmem>>, vector<8x256xf32>
      tpu.vector_store %arg28[%c0_93, %c0_94], %196 {strides = array<i32>} : memref<8x256xf32, #tpu.memory_space<vmem>>, vector<8x256xf32>,
    } else {
    }
    %c0 = arith.constant 0 : index
    %c0_1 = arith.constant 0 : index
    %3 = vector.load %arg28[%c0, %c0_1] : memref<8x256xf32, #tpu.memory_space<vmem>>, vector<8x256xf32>
    %c0_2 = arith.constant 0 : index
    %c0_3 = arith.constant 0 : index
    %c0_4 = arith.constant 0 : index
    %4 = vector.load %arg7[%c0_2, %c0_3, %c0_4] : memref<1x1x256xf32, #tpu.memory_space<vmem>>, vector<1x1x256xf32>
    %5 = vector.shape_cast %4 : vector<1x1x256xf32> to vector<1x256xf32>
    %c0_5 = arith.constant 0 : index
    %c0_6 = arith.constant 0 : index
    %c0_7 = arith.constant 0 : index
    %6 = vector.load %arg8[%c0_5, %c0_6, %c0_7] : memref<1x1x256xf32, #tpu.memory_space<vmem>>, vector<1x1x256xf32>
    %7 = vector.shape_cast %6 : vector<1x1x256xf32> to vector<1x256xf32>
    %cst = arith.constant dense<0.000000e+00> : vector<8xf32>
    %8 = vector.multi_reduction <add>, %3, %cst [1] : vector<8x256xf32> to vector<8xf32>
    %9 = vector.shape_cast %8 : vector<8xf32> to vector<8x1xf32>
    %cst_8 = arith.constant 2.560000e+02 : f32
    %10 = vector.broadcast %cst_8 : f32 to vector<8x1xf32>
    %11 = arith.divf %9, %10 : vector<8x1xf32>
    %12 = vector.broadcast %11 : vector<8x1xf32> to vector<8x256xf32>
    %13 = arith.subf %3, %12 : vector<8x256xf32>
    %14 = arith.mulf %13, %13 : vector<8x256xf32>
    %cst_9 = arith.constant dense<0.000000e+00> : vector<8xf32>
    %15 = vector.multi_reduction <add>, %14, %cst_9 [1] : vector<8x256xf32> to vector<8xf32>
    %16 = vector.shape_cast %15 : vector<8xf32> to vector<8x1xf32>
    %cst_10 = arith.constant 2.560000e+02 : f32
    %17 = vector.broadcast %cst_10 : f32 to vector<8x1xf32>
    %18 = arith.divf %16, %17 : vector<8x1xf32>
    %cst_11 = arith.constant 9.99999997E-7 : f32
    %19 = vector.broadcast %cst_11 : f32 to vector<8x1xf32>
    %20 = arith.addf %18, %19 : vector<8x1xf32>
    %21 = math.rsqrt %20 : vector<8x1xf32>
    %22 = vector.broadcast %21 : vector<8x1xf32> to vector<8x256xf32>
    %23 = arith.mulf %13, %22 : vector<8x256xf32>
    %24 = vector.broadcast %5 : vector<1x256xf32> to vector<8x256xf32>
    %25 = arith.mulf %23, %24 : vector<8x256xf32>
    %26 = vector.broadcast %7 : vector<1x256xf32> to vector<8x256xf32>
    %27 = arith.addf %25, %26 : vector<8x256xf32>
    %28 = arith.truncf %27 : vector<8x256xf32> to vector<8x256xbf16>
    %c0_12 = arith.constant 0 : index
    %c0_13 = arith.constant 0 : index
    %c0_14 = arith.constant 0 : index
    %29 = vector.load %arg9[%c0_12, %c0_13, %c0_14] : memref<1x256x768xbf16, #tpu.memory_space<vmem>>, vector<1x256x768xbf16>
    %30 = vector.shape_cast %29 : vector<1x256x768xbf16> to vector<256x768xbf16>
    %cst_15 = arith.constant dense<0.000000e+00> : vector<8x768xf32>
    %31 = tpu.matmul %28, %30, %cst_15 {dimension_numbers = #tpu.dot_dimension_numbers<[1], [0], [0], [1], [0, 0, 1, 1], [], []>} : vector<8x256xbf16>, vector<256x768xbf16>, vector<8x768xf32> -> vector<8x768xf32>
    %c0_16 = arith.constant 0 : index
    %c0_17 = arith.constant 0 : index
    %c0_18 = arith.constant 0 : index
    %32 = vector.load %arg10[%c0_16, %c0_17, %c0_18] : memref<1x1x768xf32, #tpu.memory_space<vmem>>, vector<1x1x768xf32>
    %33 = vector.shape_cast %32 : vector<1x1x768xf32> to vector<1x768xf32>
    %34 = vector.broadcast %33 : vector<1x768xf32> to vector<8x768xf32>
    %35 = arith.addf %31, %34 : vector<8x768xf32>
    %36 = vector.shape_cast %35 : vector<8x768xf32> to vector<1x8x768xf32>
    %37 = tpu.iota {dimensions = array<i32: 2>} : vector<1x1x8xi32>
    %c5_i32 = arith.constant 5 : i32
    %38 = vector.broadcast %c5_i32 : i32 to vector<1x1x8xi32>
    %39 = arith.cmpi slt, %37, %38 : vector<1x1x8xi32>
    %cst_19 = arith.constant 0.000000e+00 : f32
    %cst_20 = arith.constant -1.000000e+09 : f32
    %40 = vector.broadcast %cst_19 : f32 to vector<1x1x8xf32>
    %41 = vector.broadcast %cst_20 : f32 to vector<1x1x8xf32>
    %42 = arith.select %39, %40, %41 : vector<1x1x8xi1>, vector<1x1x8xf32>
    %c0_21 = arith.constant 0 : index
    %c0_22 = arith.constant 0 : index
    %c0_23 = arith.constant 0 : index
    %43 = vector.load %arg11[%c0_21, %c0_22, %c0_23] : memref<1x256x256xbf16, #tpu.memory_space<vmem>>, vector<1x256x256xbf16>
    %44 = vector.shape_cast %43 : vector<1x256x256xbf16> to vector<256x256xbf16>
    %cst_24 = arith.constant 0.000000e+00 : f32
    %45 = vector.broadcast %cst_24 : f32 to vector<8x256xf32>
    %46 = vector.extract_strided_slice %36 {offsets = [0, 0, 0], sizes = [1, 8, 128], strides = [1, 1, 1]} : vector<1x8x768xf32> to vector<1x8x128xf32>
    %47 = arith.truncf %46 : vector<1x8x128xf32> to vector<1x8x128xbf16>
    %48 = vector.extract_strided_slice %36 {offsets = [0, 0, 256], sizes = [1, 8, 128], strides = [1, 1, 1]} : vector<1x8x768xf32> to vector<1x8x128xf32>
    %49 = arith.truncf %48 : vector<1x8x128xf32> to vector<1x8x128xbf16>
    %50 = vector.extract_strided_slice %36 {offsets = [0, 0, 512], sizes = [1, 8, 128], strides = [1, 1, 1]} : vector<1x8x768xf32> to vector<1x8x128xf32>
    %51 = arith.truncf %50 : vector<1x8x128xf32> to vector<1x8x128xbf16>
    "tpu.trace_start"() <{level = 10 : i32, message = "bqd,bkd->bqk"}> : () -> ()
    %cst_25 = arith.constant dense<0.000000e+00> : vector<1x8x8xf32>
    %52 = tpu.matmul %47, %49, %cst_25 {dimension_numbers = #tpu.dot_dimension_numbers<[2], [2], [1], [1], [0, 0, 0, 1, 1, 1], [0], [0]>} : vector<1x8x128xbf16>, vector<1x8x128xbf16>, vector<1x8x8xf32> -> vector<1x8x8xf32>
    "tpu.trace_stop"() : () -> ()
    %cst_26 = arith.constant 0.0883883461 : f32
    %53 = vector.broadcast %cst_26 : f32 to vector<1x8x8xf32>
    %54 = arith.mulf %52, %53 : vector<1x8x8xf32>
    %55 = vector.broadcast %42 : vector<1x1x8xf32> to vector<1x8x8xf32>
    %56 = arith.addf %54, %55 : vector<1x8x8xf32>
    %cst_27 = arith.constant dense<0xFF800000> : vector<1x8xf32>
    %57 = vector.multi_reduction <maximumf>, %56, %cst_27 [2] : vector<1x8x8xf32> to vector<1x8xf32>
    %58 = vector.shape_cast %57 : vector<1x8xf32> to vector<1x8x1xf32>
    %59 = vector.broadcast %58 : vector<1x8x1xf32> to vector<1x8x8xf32>
    %60 = arith.subf %56, %59 : vector<1x8x8xf32>
    %61 = math.exp %60 : vector<1x8x8xf32>
    %cst_28 = arith.constant dense<0.000000e+00> : vector<1x8xf32>
    %62 = vector.multi_reduction <add>, %61, %cst_28 [2] : vector<1x8x8xf32> to vector<1x8xf32>
    %63 = vector.shape_cast %62 : vector<1x8xf32> to vector<1x8x1xf32>
    %64 = tpu.reciprocal %63 {approx = true} : vector<1x8x1xf32> -> vector<1x8x1xf32>
    %65 = vector.broadcast %64 : vector<1x8x1xf32> to vector<1x8x8xf32>
    %66 = arith.mulf %61, %65 : vector<1x8x8xf32>
    %67 = arith.truncf %66 : vector<1x8x8xf32> to vector<1x8x8xbf16>
    "tpu.trace_start"() <{level = 10 : i32, message = "bqk,bkd->bqd"}> : () -> ()
    %cst_29 = arith.constant dense<0.000000e+00> : vector<1x8x128xf32>
    %68 = tpu.matmul %67, %51, %cst_29 {dimension_numbers = #tpu.dot_dimension_numbers<[2], [1], [1], [2], [0, 0, 0, 1, 1, 2], [0], [0]>} : vector<1x8x8xbf16>, vector<1x8x128xbf16>, vector<1x8x128xf32> -> vector<1x8x128xf32>
    "tpu.trace_stop"() : () -> ()
    %69 = vector.shape_cast %68 : vector<1x8x128xf32> to vector<8x128xf32>
    %70 = arith.truncf %69 : vector<8x128xf32> to vector<8x128xbf16>
    %71 = vector.extract_strided_slice %44 {offsets = [0, 0], sizes = [128, 256], strides = [1, 1]} : vector<256x256xbf16> to vector<128x256xbf16>
    %cst_30 = arith.constant dense<0.000000e+00> : vector<8x256xf32>
    %72 = tpu.matmul %70, %71, %cst_30 {dimension_numbers = #tpu.dot_dimension_numbers<[1], [0], [0], [1], [0, 0, 1, 1], [], []>} : vector<8x128xbf16>, vector<128x256xbf16>, vector<8x256xf32> -> vector<8x256xf32>
    %73 = arith.addf %45, %72 : vector<8x256xf32>
    %74 = vector.extract_strided_slice %36 {offsets = [0, 0, 128], sizes = [1, 8, 128], strides = [1, 1, 1]} : vector<1x8x768xf32> to vector<1x8x128xf32>
    %75 = arith.truncf %74 : vector<1x8x128xf32> to vector<1x8x128xbf16>
    %76 = vector.extract_strided_slice %36 {offsets = [0, 0, 384], sizes = [1, 8, 128], strides = [1, 1, 1]} : vector<1x8x768xf32> to vector<1x8x128xf32>
    %77 = arith.truncf %76 : vector<1x8x128xf32> to vector<1x8x128xbf16>
    %78 = vector.extract_strided_slice %36 {offsets = [0, 0, 640], sizes = [1, 8, 128], strides = [1, 1, 1]} : vector<1x8x768xf32> to vector<1x8x128xf32>
    %79 = arith.truncf %78 : vector<1x8x128xf32> to vector<1x8x128xbf16>
    "tpu.trace_start"() <{level = 10 : i32, message = "bqd,bkd->bqk"}> : () -> ()
    %cst_31 = arith.constant dense<0.000000e+00> : vector<1x8x8xf32>
    %80 = tpu.matmul %75, %77, %cst_31 {dimension_numbers = #tpu.dot_dimension_numbers<[2], [2], [1], [1], [0, 0, 0, 1, 1, 1], [0], [0]>} : vector<1x8x128xbf16>, vector<1x8x128xbf16>, vector<1x8x8xf32> -> vector<1x8x8xf32>
    "tpu.trace_stop"() : () -> ()
    %cst_32 = arith.constant 0.0883883461 : f32
    %81 = vector.broadcast %cst_32 : f32 to vector<1x8x8xf32>
    %82 = arith.mulf %80, %81 : vector<1x8x8xf32>
    %83 = vector.broadcast %42 : vector<1x1x8xf32> to vector<1x8x8xf32>
    %84 = arith.addf %82, %83 : vector<1x8x8xf32>
    %cst_33 = arith.constant dense<0xFF800000> : vector<1x8xf32>
    %85 = vector.multi_reduction <maximumf>, %84, %cst_33 [2] : vector<1x8x8xf32> to vector<1x8xf32>
    %86 = vector.shape_cast %85 : vector<1x8xf32> to vector<1x8x1xf32>
    %87 = vector.broadcast %86 : vector<1x8x1xf32> to vector<1x8x8xf32>
    %88 = arith.subf %84, %87 : vector<1x8x8xf32>
    %89 = math.exp %88 : vector<1x8x8xf32>
    %cst_34 = arith.constant dense<0.000000e+00> : vector<1x8xf32>
    %90 = vector.multi_reduction <add>, %89, %cst_34 [2] : vector<1x8x8xf32> to vector<1x8xf32>
    %91 = vector.shape_cast %90 : vector<1x8xf32> to vector<1x8x1xf32>
    %92 = tpu.reciprocal %91 {approx = true} : vector<1x8x1xf32> -> vector<1x8x1xf32>
    %93 = vector.broadcast %92 : vector<1x8x1xf32> to vector<1x8x8xf32>
    %94 = arith.mulf %89, %93 : vector<1x8x8xf32>
    %95 = arith.truncf %94 : vector<1x8x8xf32> to vector<1x8x8xbf16>
    "tpu.trace_start"() <{level = 10 : i32, message = "bqk,bkd->bqd"}> : () -> ()
    %cst_35 = arith.constant dense<0.000000e+00> : vector<1x8x128xf32>
    %96 = tpu.matmul %95, %79, %cst_35 {dimension_numbers = #tpu.dot_dimension_numbers<[2], [1], [1], [2], [0, 0, 0, 1, 1, 2], [0], [0]>} : vector<1x8x8xbf16>, vector<1x8x128xbf16>, vector<1x8x128xf32> -> vector<1x8x128xf32>
    "tpu.trace_stop"() : () -> ()
    %97 = vector.shape_cast %96 : vector<1x8x128xf32> to vector<8x128xf32>
    %98 = arith.truncf %97 : vector<8x128xf32> to vector<8x128xbf16>
    %99 = vector.extract_strided_slice %44 {offsets = [128, 0], sizes = [128, 256], strides = [1, 1]} : vector<256x256xbf16> to vector<128x256xbf16>
    %cst_36 = arith.constant dense<0.000000e+00> : vector<8x256xf32>
    %100 = tpu.matmul %98, %99, %cst_36 {dimension_numbers = #tpu.dot_dimension_numbers<[1], [0], [0], [1], [0, 0, 1, 1], [], []>} : vector<8x128xbf16>, vector<128x256xbf16>, vector<8x256xf32> -> vector<8x256xf32>
    %101 = arith.addf %73, %100 : vector<8x256xf32>
    %c0_37 = arith.constant 0 : index
    %c0_38 = arith.constant 0 : index
    %c0_39 = arith.constant 0 : index
    %102 = vector.load %arg13[%c0_37, %c0_38, %c0_39] : memref<1x1x256xf32, #tpu.memory_space<vmem>>, vector<1x1x256xf32>
    %103 = vector.shape_cast %102 : vector<1x1x256xf32> to vector<1x256xf32>
    %c0_40 = arith.constant 0 : index
    %c0_41 = arith.constant 0 : index
    %c0_42 = arith.constant 0 : index
    %104 = vector.load %arg12[%c0_40, %c0_41, %c0_42] : memref<1x1x256xf32, #tpu.memory_space<vmem>>, vector<1x1x256xf32>
    %105 = vector.shape_cast %104 : vector<1x1x256xf32> to vector<1x256xf32>
    %106 = vector.broadcast %105 : vector<1x256xf32> to vector<8x256xf32>
    %107 = arith.addf %101, %106 : vector<8x256xf32>
    %108 = vector.broadcast %103 : vector<1x256xf32> to vector<8x256xf32>
    %109 = arith.mulf %108, %107 : vector<8x256xf32>
    %110 = arith.addf %3, %109 : vector<8x256xf32>
    %c0_43 = arith.constant 0 : index
    %c0_44 = arith.constant 0 : index
    %c0_45 = arith.constant 0 : index
    %111 = vector.load %arg14[%c0_43, %c0_44, %c0_45] : memref<1x1x256xf32, #tpu.memory_space<vmem>>, vector<1x1x256xf32>
    %112 = vector.shape_cast %111 : vector<1x1x256xf32> to vector<1x256xf32>
    %c0_46 = arith.constant 0 : index
    %c0_47 = arith.constant 0 : index
    %c0_48 = arith.constant 0 : index
    %113 = vector.load %arg15[%c0_46, %c0_47, %c0_48] : memref<1x1x256xf32, #tpu.memory_space<vmem>>, vector<1x1x256xf32>
    %114 = vector.shape_cast %113 : vector<1x1x256xf32> to vector<1x256xf32>
    %cst_49 = arith.constant dense<0.000000e+00> : vector<8xf32>
    %115 = vector.multi_reduction <add>, %110, %cst_49 [1] : vector<8x256xf32> to vector<8xf32>
    %116 = vector.shape_cast %115 : vector<8xf32> to vector<8x1xf32>
    %cst_50 = arith.constant 2.560000e+02 : f32
    %117 = vector.broadcast %cst_50 : f32 to vector<8x1xf32>
    %118 = arith.divf %116, %117 : vector<8x1xf32>
    %119 = vector.broadcast %118 : vector<8x1xf32> to vector<8x256xf32>
    %120 = arith.subf %110, %119 : vector<8x256xf32>
    %121 = arith.mulf %120, %120 : vector<8x256xf32>
    %cst_51 = arith.constant dense<0.000000e+00> : vector<8xf32>
    %122 = vector.multi_reduction <add>, %121, %cst_51 [1] : vector<8x256xf32> to vector<8xf32>
    %123 = vector.shape_cast %122 : vector<8xf32> to vector<8x1xf32>
    %cst_52 = arith.constant 2.560000e+02 : f32
    %124 = vector.broadcast %cst_52 : f32 to vector<8x1xf32>
    %125 = arith.divf %123, %124 : vector<8x1xf32>
    %cst_53 = arith.constant 9.99999997E-7 : f32
    %126 = vector.broadcast %cst_53 : f32 to vector<8x1xf32>
    %127 = arith.addf %125, %126 : vector<8x1xf32>
    %128 = math.rsqrt %127 : vector<8x1xf32>
    %129 = vector.broadcast %128 : vector<8x1xf32> to vector<8x256xf32>
    %130 = arith.mulf %120, %129 : vector<8x256xf32>
    %131 = vector.broadcast %112 : vector<1x256xf32> to vector<8x256xf32>
    %132 = arith.mulf %130, %131 : vector<8x256xf32>
    %133 = vector.broadcast %114 : vector<1x256xf32> to vector<8x256xf32>
    %134 = arith.addf %132, %133 : vector<8x256xf32>
    %135 = arith.truncf %134 : vector<8x256xf32> to vector<8x256xbf16>
    %c0_54 = arith.constant 0 : index
    %c0_55 = arith.constant 0 : index
    %c0_56 = arith.constant 0 : index
    %136 = vector.load %arg16[%c0_54, %c0_55, %c0_56] : memref<1x256x1024xbf16, #tpu.memory_space<vmem>>, vector<1x256x1024xbf16>
    %137 = vector.shape_cast %136 : vector<1x256x1024xbf16> to vector<256x1024xbf16>
    %cst_57 = arith.constant dense<0.000000e+00> : vector<8x1024xf32>
    %138 = tpu.matmul %135, %137, %cst_57 {dimension_numbers = #tpu.dot_dimension_numbers<[1], [0], [0], [1], [0, 0, 1, 1], [], []>} : vector<8x256xbf16>, vector<256x1024xbf16>, vector<8x1024xf32> -> vector<8x1024xf32>
    %c0_58 = arith.constant 0 : index
    %c0_59 = arith.constant 0 : index
    %c0_60 = arith.constant 0 : index
    %139 = vector.load %arg17[%c0_58, %c0_59, %c0_60] : memref<1x1x1024xf32, #tpu.memory_space<vmem>>, vector<1x1x1024xf32>
    %140 = vector.shape_cast %139 : vector<1x1x1024xf32> to vector<1x1024xf32>
    %141 = vector.broadcast %140 : vector<1x1024xf32> to vector<8x1024xf32>
    %142 = arith.addf %138, %141 : vector<8x1024xf32>
    %143 = arith.mulf %142, %142 : vector<8x1024xf32>
    %144 = arith.mulf %142, %143 : vector<8x1024xf32>
    %cst_61 = arith.constant 4.471500e-02 : f32
    %145 = vector.broadcast %cst_61 : f32 to vector<8x1024xf32>
    %146 = arith.mulf %145, %144 : vector<8x1024xf32>
    %147 = arith.addf %142, %146 : vector<8x1024xf32>
    %cst_62 = arith.constant 0.797884583 : f32
    %148 = vector.broadcast %cst_62 : f32 to vector<8x1024xf32>
    %149 = arith.mulf %148, %147 : vector<8x1024xf32>
    %150 = math.tanh %149 : vector<8x1024xf32>
    %cst_63 = arith.constant 1.000000e+00 : f32
    %151 = vector.broadcast %cst_63 : f32 to vector<8x1024xf32>
    %152 = arith.addf %151, %150 : vector<8x1024xf32>
    %cst_64 = arith.constant 5.000000e-01 : f32
    %153 = vector.broadcast %cst_64 : f32 to vector<8x1024xf32>
    %154 = arith.mulf %153, %152 : vector<8x1024xf32>
    %155 = arith.mulf %142, %154 : vector<8x1024xf32>
    %156 = arith.truncf %155 : vector<8x1024xf32> to vector<8x1024xbf16>
    %c0_65 = arith.constant 0 : index
    %c0_66 = arith.constant 0 : index
    %c0_67 = arith.constant 0 : index
    %157 = vector.load %arg18[%c0_65, %c0_66, %c0_67] : memref<1x1024x256xbf16, #tpu.memory_space<vmem>>, vector<1x1024x256xbf16>
    %158 = vector.shape_cast %157 : vector<1x1024x256xbf16> to vector<1024x256xbf16>
    %cst_68 = arith.constant dense<0.000000e+00> : vector<8x256xf32>
    %159 = tpu.matmul %156, %158, %cst_68 {dimension_numbers = #tpu.dot_dimension_numbers<[1], [0], [0], [1], [0, 0, 1, 1], [], []>} : vector<8x1024xbf16>, vector<1024x256xbf16>, vector<8x256xf32> -> vector<8x256xf32>
    %c0_69 = arith.constant 0 : index
    %c0_70 = arith.constant 0 : index
    %c0_71 = arith.constant 0 : index
    %160 = vector.load %arg19[%c0_69, %c0_70, %c0_71] : memref<1x1x256xf32, #tpu.memory_space<vmem>>, vector<1x1x256xf32>
    %161 = vector.shape_cast %160 : vector<1x1x256xf32> to vector<1x256xf32>
    %162 = vector.broadcast %161 : vector<1x256xf32> to vector<8x256xf32>
    %163 = arith.addf %159, %162 : vector<8x256xf32>
    %c0_72 = arith.constant 0 : index
    %c0_73 = arith.constant 0 : index
    %c0_74 = arith.constant 0 : index
    %164 = vector.load %arg20[%c0_72, %c0_73, %c0_74] : memref<1x1x256xf32, #tpu.memory_space<vmem>>, vector<1x1x256xf32>
    %165 = vector.shape_cast %164 : vector<1x1x256xf32> to vector<1x256xf32>
    %166 = vector.broadcast %165 : vector<1x256xf32> to vector<8x256xf32>
    %167 = arith.mulf %166, %163 : vector<8x256xf32>
    %168 = arith.addf %110, %167 : vector<8x256xf32>
    %c0_75 = arith.constant 0 : index
    %c0_76 = arith.constant 0 : index
    %169 = vector.load %arg28[%c0_75, %c0_76] : memref<8x256xf32, #tpu.memory_space<vmem>>, vector<8x256xf32>
    tpu.vector_store %arg28[%c0_75, %c0_76], %168 {strides = array<i32>} : memref<8x256xf32, #tpu.memory_space<vmem>>, vector<8x256xf32>,
    %c3_i32 = arith.constant 3 : i32
    %170 = arith.cmpi eq, %arg1, %c3_i32 : i32
    %171 = arith.extui %170 : i1 to i32
    %c0_i32_77 = arith.constant 0 : i32
    %172 = arith.cmpi ne, %171, %c0_i32_77 : i32
    scf.if %172 {
      %173 = vector.shape_cast %168 : vector<8x256xf32> to vector<1x8x256xf32>
      %174 = vector.extract_strided_slice %173 {offsets = [0, 0, 0], sizes = [1, 1, 256], strides = [1, 1, 1]} : vector<1x8x256xf32> to vector<1x1x256xf32>
      %175 = vector.shape_cast %174 : vector<1x1x256xf32> to vector<1x256xf32>
      %c0_78 = arith.constant 0 : index
      %c0_79 = arith.constant 0 : index
      %176 = vector.load %arg21[%c0_78, %c0_79] : memref<1x256xf32, #tpu.memory_space<vmem>>, vector<1x256xf32>
      %c0_80 = arith.constant 0 : index
      %c0_81 = arith.constant 0 : index
      %177 = vector.load %arg22[%c0_80, %c0_81] : memref<1x256xf32, #tpu.memory_space<vmem>>, vector<1x256xf32>
      %cst_82 = arith.constant dense<0.000000e+00> : vector<1xf32>
      %178 = vector.multi_reduction <add>, %175, %cst_82 [1] : vector<1x256xf32> to vector<1xf32>
      %179 = vector.shape_cast %178 : vector<1xf32> to vector<1x1xf32>
      %cst_83 = arith.constant 2.560000e+02 : f32
      %180 = vector.broadcast %cst_83 : f32 to vector<1x1xf32>
      %181 = arith.divf %179, %180 : vector<1x1xf32>
      %182 = vector.broadcast %181 : vector<1x1xf32> to vector<1x256xf32>
      %183 = arith.subf %175, %182 : vector<1x256xf32>
      %184 = arith.mulf %183, %183 : vector<1x256xf32>
      %cst_84 = arith.constant dense<0.000000e+00> : vector<1xf32>
      %185 = vector.multi_reduction <add>, %184, %cst_84 [1] : vector<1x256xf32> to vector<1xf32>
      %186 = vector.shape_cast %185 : vector<1xf32> to vector<1x1xf32>
      %cst_85 = arith.constant 2.560000e+02 : f32
      %187 = vector.broadcast %cst_85 : f32 to vector<1x1xf32>
      %188 = arith.divf %186, %187 : vector<1x1xf32>
      %cst_86 = arith.constant 9.99999997E-7 : f32
      %189 = vector.broadcast %cst_86 : f32 to vector<1x1xf32>
      %190 = arith.addf %188, %189 : vector<1x1xf32>
      %191 = math.rsqrt %190 : vector<1x1xf32>
      %192 = vector.broadcast %191 : vector<1x1xf32> to vector<1x256xf32>
      %193 = arith.mulf %183, %192 : vector<1x256xf32>
      %194 = arith.mulf %193, %176 : vector<1x256xf32>
      %195 = arith.addf %194, %177 : vector<1x256xf32>
      %196 = arith.truncf %195 : vector<1x256xf32> to vector<1x256xbf16>
      %c0_87 = arith.constant 0 : index
      %c0_88 = arith.constant 0 : index
      %197 = vector.load %arg23[%c0_87, %c0_88] : memref<256x768xbf16, #tpu.memory_space<vmem>>, vector<256x768xbf16>
      %cst_89 = arith.constant dense<0.000000e+00> : vector<1x768xf32>
      %198 = tpu.matmul %196, %197, %cst_89 {dimension_numbers = #tpu.dot_dimension_numbers<[1], [0], [0], [1], [0, 0, 1, 1], [], []>} : vector<1x256xbf16>, vector<256x768xbf16>, vector<1x768xf32> -> vector<1x768xf32>
      %c0_90 = arith.constant 0 : index
      %c0_91 = arith.constant 0 : index
      %199 = vector.load %arg24[%c0_90, %c0_91] : memref<1x768xf32, #tpu.memory_space<vmem>>, vector<1x768xf32>
      %200 = arith.addf %198, %199 : vector<1x768xf32>
      %cst_92 = arith.constant 0.000000e+00 : f32
      %201 = vector.broadcast %cst_92 : f32 to vector<1x768xf32>
      %202 = arith.maximumf %200, %201 : vector<1x768xf32>
      %203 = arith.truncf %202 : vector<1x768xf32> to vector<1x768xbf16>
      %c0_93 = arith.constant 0 : index
      %c0_94 = arith.constant 0 : index
      %204 = vector.load %arg25[%c0_93, %c0_94] : memref<768x128xbf16, #tpu.memory_space<vmem>>, vector<768x128xbf16>
      %cst_95 = arith.constant dense<0.000000e+00> : vector<1x128xf32>
      %205 = tpu.matmul %203, %204, %cst_95 {dimension_numbers = #tpu.dot_dimension_numbers<[1], [0], [0], [1], [0, 0, 1, 1], [], []>} : vector<1x768xbf16>, vector<768x128xbf16>, vector<1x128xf32> -> vector<1x128xf32>
      %c0_96 = arith.constant 0 : index
      %c0_97 = arith.constant 0 : index
      %206 = vector.load %arg26[%c0_96, %c0_97] : memref<1x128xf32, #tpu.memory_space<vmem>>, vector<1x128xf32>
      %207 = arith.addf %205, %206 : vector<1x128xf32>
      %208 = vector.shape_cast %207 : vector<1x128xf32> to vector<1x1x128xf32>
      %c0_98 = arith.constant 0 : index
      %c0_99 = arith.constant 0 : index
      %c0_100 = arith.constant 0 : index
      %209 = vector.load %arg27[%c0_98, %c0_99, %c0_100] : memref<1x1x128xf32, #tpu.memory_space<vmem>>, vector<1x1x128xf32>
      tpu.vector_store %arg27[%c0_98, %c0_99, %c0_100], %208 {strides = array<i32>} : memref<1x1x128xf32, #tpu.memory_space<vmem>>, vector<1x1x128xf32>,
    } else {
    }
    return
  }
  func.func @transform_0(%arg0: i32, %arg1: i32) -> (i32, i32, i32) {
    %c0_i32 = arith.constant 0 : i32
    %c0_i32_0 = arith.constant 0 : i32
    %c0_i32_1 = arith.constant 0 : i32
    return %arg0, %c0_i32, %c0_i32_0 : i32, i32, i32
  }
  func.func @transform_1(%arg0: i32, %arg1: i32) -> (i32, i32) {
    %c0_i32 = arith.constant 0 : i32
    %c0_i32_0 = arith.constant 0 : i32
    %c0_i32_1 = arith.constant 0 : i32
    return %c0_i32, %c0_i32_0 : i32, i32
  }
  func.func @transform_2(%arg0: i32, %arg1: i32) -> (i32, i32) {
    %c0_i32 = arith.constant 0 : i32
    %c0_i32_0 = arith.constant 0 : i32
    %c0_i32_1 = arith.constant 0 : i32
    return %c0_i32, %c0_i32_0 : i32, i32
  }
  func.func @transform_3(%arg0: i32, %arg1: i32) -> (i32, i32) {
    %c0_i32 = arith.constant 0 : i32
    %c0_i32_0 = arith.constant 0 : i32
    %c0_i32_1 = arith.constant 0 : i32
    return %c0_i32, %c0_i32_0 : i32, i32
  }
  func.func @transform_4(%arg0: i32, %arg1: i32) -> (i32, i32) {
    %c0_i32 = arith.constant 0 : i32
    %c0_i32_0 = arith.constant 0 : i32
    %c0_i32_1 = arith.constant 0 : i32
    return %c0_i32, %c0_i32_0 : i32, i32
  }
  func.func @transform_5(%arg0: i32, %arg1: i32) -> (i32, i32, i32) {
    %c0_i32 = arith.constant 0 : i32
    %c0_i32_0 = arith.constant 0 : i32
    %c0_i32_1 = arith.constant 0 : i32
    return %arg1, %c0_i32, %c0_i32_0 : i32, i32, i32
  }
  func.func @transform_6(%arg0: i32, %arg1: i32) -> (i32, i32, i32) {
    %c0_i32 = arith.constant 0 : i32
    %c0_i32_0 = arith.constant 0 : i32
    %c0_i32_1 = arith.constant 0 : i32
    return %arg1, %c0_i32, %c0_i32_0 : i32, i32, i32
  }
  func.func @transform_7(%arg0: i32, %arg1: i32) -> (i32, i32, i32) {
    %c0_i32 = arith.constant 0 : i32
    %c0_i32_0 = arith.constant 0 : i32
    %c0_i32_1 = arith.constant 0 : i32
    return %arg1, %c0_i32, %c0_i32_0 : i32, i32, i32
  }
  func.func @transform_8(%arg0: i32, %arg1: i32) -> (i32, i32, i32) {
    %c0_i32 = arith.constant 0 : i32
    %c0_i32_0 = arith.constant 0 : i32
    %c0_i32_1 = arith.constant 0 : i32
    return %arg1, %c0_i32, %c0_i32_0 : i32, i32, i32
  }
  func.func @transform_9(%arg0: i32, %arg1: i32) -> (i32, i32, i32) {
    %c0_i32 = arith.constant 0 : i32
    %c0_i32_0 = arith.constant 0 : i32
    %c0_i32_1 = arith.constant 0 : i32
    return %arg1, %c0_i32, %c0_i32_0 : i32, i32, i32
  }
  func.func @transform_10(%arg0: i32, %arg1: i32) -> (i32, i32, i32) {
    %c0_i32 = arith.constant 0 : i32
    %c0_i32_0 = arith.constant 0 : i32
    %c0_i32_1 = arith.constant 0 : i32
    return %arg1, %c0_i32, %c0_i32_0 : i32, i32, i32
  }
  func.func @transform_11(%arg0: i32, %arg1: i32) -> (i32, i32, i32) {
    %c0_i32 = arith.constant 0 : i32
    %c0_i32_0 = arith.constant 0 : i32
    %c0_i32_1 = arith.constant 0 : i32
    return %arg1, %c0_i32, %c0_i32_0 : i32, i32, i32
  }
  func.func @transform_12(%arg0: i32, %arg1: i32) -> (i32, i32, i32) {
    %c0_i32 = arith.constant 0 : i32
    %c0_i32_0 = arith.constant 0 : i32
    %c0_i32_1 = arith.constant 0 : i32
    return %arg1, %c0_i32, %c0_i32_0 : i32, i32, i32
  }
  func.func @transform_13(%arg0: i32, %arg1: i32) -> (i32, i32, i32) {
    %c0_i32 = arith.constant 0 : i32
    %c0_i32_0 = arith.constant 0 : i32
    %c0_i32_1 = arith.constant 0 : i32
    return %arg1, %c0_i32, %c0_i32_0 : i32, i32, i32
  }
  func.func @transform_14(%arg0: i32, %arg1: i32) -> (i32, i32, i32) {
    %c0_i32 = arith.constant 0 : i32
    %c0_i32_0 = arith.constant 0 : i32
    %c0_i32_1 = arith.constant 0 : i32
    return %arg1, %c0_i32, %c0_i32_0 : i32, i32, i32
  }
  func.func @transform_15(%arg0: i32, %arg1: i32) -> (i32, i32, i32) {
    %c0_i32 = arith.constant 0 : i32
    %c0_i32_0 = arith.constant 0 : i32
    %c0_i32_1 = arith.constant 0 : i32
    return %arg1, %c0_i32, %c0_i32_0 : i32, i32, i32
  }
  func.func @transform_16(%arg0: i32, %arg1: i32) -> (i32, i32, i32) {
    %c0_i32 = arith.constant 0 : i32
    %c0_i32_0 = arith.constant 0 : i32
    %c0_i32_1 = arith.constant 0 : i32
    return %arg1, %c0_i32, %c0_i32_0 : i32, i32, i32
  }
  func.func @transform_17(%arg0: i32, %arg1: i32) -> (i32, i32, i32) {
    %c0_i32 = arith.constant 0 : i32
    %c0_i32_0 = arith.constant 0 : i32
    %c0_i32_1 = arith.constant 0 : i32
    return %arg1, %c0_i32, %c0_i32_0 : i32, i32, i32
  }
  func.func @transform_18(%arg0: i32, %arg1: i32) -> (i32, i32, i32) {
    %c0_i32 = arith.constant 0 : i32
    %c0_i32_0 = arith.constant 0 : i32
    %c0_i32_1 = arith.constant 0 : i32
    return %arg1, %c0_i32, %c0_i32_0 : i32, i32, i32
  }
  func.func @transform_19(%arg0: i32, %arg1: i32) -> (i32, i32) {
    %c0_i32 = arith.constant 0 : i32
    %c0_i32_0 = arith.constant 0 : i32
    %c0_i32_1 = arith.constant 0 : i32
    return %c0_i32, %c0_i32_0 : i32, i32
  }
  func.func @transform_20(%arg0: i32, %arg1: i32) -> (i32, i32) {
    %c0_i32 = arith.constant 0 : i32
    %c0_i32_0 = arith.constant 0 : i32
    %c0_i32_1 = arith.constant 0 : i32
    return %c0_i32, %c0_i32_0 : i32, i32
  }
  func.func @transform_21(%arg0: i32, %arg1: i32) -> (i32, i32) {
    %c0_i32 = arith.constant 0 : i32
    %c0_i32_0 = arith.constant 0 : i32
    %c0_i32_1 = arith.constant 0 : i32
    return %c0_i32, %c0_i32_0 : i32, i32
  }
  func.func @transform_22(%arg0: i32, %arg1: i32) -> (i32, i32) {
    %c0_i32 = arith.constant 0 : i32
    %c0_i32_0 = arith.constant 0 : i32
    %c0_i32_1 = arith.constant 0 : i32
    return %c0_i32, %c0_i32_0 : i32, i32
  }
  func.func @transform_23(%arg0: i32, %arg1: i32) -> (i32, i32) {
    %c0_i32 = arith.constant 0 : i32
    %c0_i32_0 = arith.constant 0 : i32
    %c0_i32_1 = arith.constant 0 : i32
    return %c0_i32, %c0_i32_0 : i32, i32
  }
  func.func @transform_24(%arg0: i32, %arg1: i32) -> (i32, i32) {
    %c0_i32 = arith.constant 0 : i32
    %c0_i32_0 = arith.constant 0 : i32
    %c0_i32_1 = arith.constant 0 : i32
    return %c0_i32, %c0_i32_0 : i32, i32
  }
  func.func @transform_25(%arg0: i32, %arg1: i32) -> (i32, i32, i32) {
    %c0_i32 = arith.constant 0 : i32
    %c0_i32_0 = arith.constant 0 : i32
    %c0_i32_1 = arith.constant 0 : i32
    return %arg0, %c0_i32, %c0_i32_0 : i32, i32, i32
  }
}

</mosaic_0001>

<llo_original>
// kernel: uni_multitask_forward.1
$region0: #{uni_multitask_forward.1}
  #allocation0 [shape = 'u32[]', space=smem, size = 0x4, offset = 0x4, fixed_abs, tag = 'smem constant byte address 0x4 - core index']
  #allocation1 [shape = 'u32[144,128]{1,0:T(1,128)}', space=vmem, size = 0x12000, scoped, tag = 'internal scratch']
  #allocation2 [shape = 'f32[8,256]{1,0:T(8,128)}', space=vmem, size = 0x2000, scoped, tag = 'scratch operand']
  %s0 = inlined_call_operand.vmem [shape: bf16[2,8,768], index: 0, kind: input, shape index: {}]
  %s1 = inlined_call_operand.hbm [shape: bf16[768,256], index: 1, kind: input, shape index: {}]
  %s2 = inlined_call_operand.hbm [shape: f32[1,256], index: 2, kind: input, shape index: {}]
  %s3 = inlined_call_operand.hbm [shape: f32[1,256], index: 3, kind: input, shape index: {}]
  %s4 = inlined_call_operand.hbm [shape: f32[8,256], index: 4, kind: input, shape index: {}]
  %s5 = inlined_call_operand.hbm [shape: f32[4,1,256], index: 5, kind: input, shape index: {}]
  %s6 = inlined_call_operand.hbm [shape: f32[4,1,256], index: 6, kind: input, shape index: {}]
  %s7 = inlined_call_operand.hbm [shape: bf16[4,256,768], index: 7, kind: input, shape index: {}]
  %s8 = inlined_call_operand.hbm [shape: f32[4,1,768], index: 8, kind: input, shape index: {}]
  %s9 = inlined_call_operand.hbm [shape: bf16[4,256,256], index: 9, kind: input, shape index: {}]
  %s10 = inlined_call_operand.hbm [shape: f32[4,1,256], index: 10, kind: input, shape index: {}]
  %s11 = inlined_call_operand.hbm [shape: f32[4,1,256], index: 11, kind: input, shape index: {}]
  %s12 = inlined_call_operand.hbm [shape: f32[4,1,256], index: 12, kind: input, shape index: {}]
  %s13 = inlined_call_operand.hbm [shape: f32[4,1,256], index: 13, kind: input, shape index: {}]
  %s14 = inlined_call_operand.hbm [shape: bf16[4,256,1024], index: 14, kind: input, shape index: {}]
  %s15 = inlined_call_operand.hbm [shape: f32[4,1,1024], index: 15, kind: input, shape index: {}]
  %s16 = inlined_call_operand.hbm [shape: bf16[4,1024,256], index: 16, kind: input, shape index: {}]
  %s17 = inlined_call_operand.hbm [shape: f32[4,1,256], index: 17, kind: input, shape index: {}]
  %s18 = inlined_call_operand.hbm [shape: f32[4,1,256], index: 18, kind: input, shape index: {}]
  %s19 = inlined_call_operand.hbm [shape: f32[1,256], index: 19, kind: input, shape index: {}]
  %s20 = inlined_call_operand.hbm [shape: f32[1,256], index: 20, kind: input, shape index: {}]
  %s21 = inlined_call_operand.hbm [shape: bf16[256,768], index: 21, kind: input, shape index: {}]
  %s22 = inlined_call_operand.hbm [shape: f32[1,768], index: 22, kind: input, shape index: {}]
  %s23 = inlined_call_operand.hbm [shape: bf16[768,128], index: 23, kind: input, shape index: {}]
  %s24 = inlined_call_operand.hbm [shape: f32[1,128], index: 24, kind: input, shape index: {}]
  %s25 = inlined_call_operand.vmem [shape: f32[2,1,128], index: 25, kind: output, shape index: {}]
  %s26 = sld [smem:[#allocation0]]
  $region237: #{uni_multitask_forward.1} parent=0
    _
  %s28 = ssub.s32 1, %s26
  %s29 = scalar_select 0, %s28, %s26
  $region1: #{uni_multitask_forward.1} parent=0
    #allocation3 [shape = 'u8[393216]{0}', space=vmem, size = 0x60000, scoped, tag = 'input window, operand 1, single buffered']
    #allocation4 [shape = 's32[2]{0}', space=sflag, size = 0x8, scoped, tag = 'scoped memory for uni_multitask_forward.1']
    #allocation5 [shape = 'u8[1024]{0}', space=vmem, size = 0x400, scoped, tag = 'input window, operand 2, single buffered']
    #allocation6 [shape = 's32[1]{0}', space=sflag, size = 0x4, scoped, tag = 'scoped memory for uni_multitask_forward.1']
    #allocation7 [shape = 'u8[1024]{0}', space=vmem, size = 0x400, scoped, tag = 'input window, operand 3, single buffered']
    #allocation8 [shape = 'u8[8192]{0}', space=vmem, size = 0x2000, scoped, tag = 'input window, operand 4, single buffered']
    #allocation9 [shape = 's32[1]{0}', space=sflag, size = 0x4, scoped, tag = 'scoped memory for uni_multitask_forward.1']
    #allocation10 [shape = 'u8[2048]{0}', space=vmem, size = 0x800, scoped, tag = 'input window, operand 5']
    #allocation11 [shape = 'u8[2048]{0}', space=vmem, size = 0x800, scoped, tag = 'input window, operand 6']
    #allocation12 [shape = 'u8[786432]{0}', space=vmem, size = 0xc0000, scoped, tag = 'input window, operand 7']
    #allocation13 [shape = 'u8[6144]{0}', space=vmem, size = 0x1800, scoped, tag = 'input window, operand 8']
    #allocation14 [shape = 'u8[262144]{0}', space=vmem, size = 0x40000, scoped, tag = 'input window, operand 9']
    #allocation15 [shape = 'u8[2048]{0}', space=vmem, size = 0x800, scoped, tag = 'input window, operand 10']
    #allocation16 [shape = 'u8[2048]{0}', space=vmem, size = 0x800, scoped, tag = 'input window, operand 11']
    #allocation17 [shape = 'u8[2048]{0}', space=vmem, size = 0x800, scoped, tag = 'input window, operand 12']
    #allocation18 [shape = 'u8[2048]{0}', space=vmem, size = 0x800, scoped, tag = 'input window, operand 13']
    #allocation19 [shape = 'u8[1048576]{0}', space=vmem, size = 0x100000, scoped, tag = 'input window, operand 14']
    #allocation20 [shape = 'u8[8192]{0}', space=vmem, size = 0x2000, scoped, tag = 'input window, operand 15']
    #allocation21 [shape = 'u8[1048576]{0}', space=vmem, size = 0x100000, scoped, tag = 'input window, operand 16']
    #allocation22 [shape = 'u8[2048]{0}', space=vmem, size = 0x800, scoped, tag = 'input window, operand 17']
    #allocation23 [shape = 'u8[2048]{0}', space=vmem, size = 0x800, scoped, tag = 'input window, operand 18']
    #allocation24 [shape = 'u8[1024]{0}', space=vmem, size = 0x400, scoped, tag = 'input window, operand 19, single buffered']
    #allocation25 [shape = 'u8[1024]{0}', space=vmem, size = 0x400, scoped, tag = 'input window, operand 20, single buffered']
    #allocation26 [shape = 'u8[393216]{0}', space=vmem, size = 0x60000, scoped, tag = 'input window, operand 21, single buffered']
    #allocation27 [shape = 's32[1]{0}', space=sflag, size = 0x4, scoped, tag = 'scoped memory for uni_multitask_forward.1']
    #allocation28 [shape = 'u8[3072]{0}', space=vmem, size = 0xc00, scoped, tag = 'input window, operand 22, single buffered']
    #allocation29 [shape = 'u8[196608]{0}', space=vmem, size = 0x30000, scoped, tag = 'input window, operand 23, single buffered']
    #allocation30 [shape = 's32[1]{0}', space=sflag, size = 0x4, scoped, tag = 'scoped memory for uni_multitask_forward.1']
    #allocation31 [shape = 'u8[512]{0}', space=vmem, size = 0x400, scoped, tag = 'input window, operand 24, single buffered']
    %30 = vsyncpa [#allocation4], 0
    %31 = vsyncpa [#allocation6], 0
    %32 = vsyncpa [#allocation9], 0
    %33 = vsyncpa [#allocation27], 0
    %34 = vsyncpa [#allocation30], 0
    loop: start=0, step=1, limit=10
    $region2: #{uni_multitask_forward.1} parent=1 // loop_pre_header
      _
    $region3: #{uni_multitask_forward.1} parent=1 // loop_header
      %s36 = sphi 0, %s40
      %p37 = scmp.ge.s32.totalorder %s36, 10
      %s43 = sphi 0, %s55
      %s44 = sphi 0, %s51
      %s45 = sphi 0, %s43
      %s46 = sphi 0, %s44
      %s47 = sphi 0, %s45
      %s48 = sphi 0, %s46
      %s58 = sphi 0, %s60
      %s61 = sphi 0, %s58
      %s62 = sphi 0, %s61
      %s78 = sphi 0, %s62
      %s82 = sphi 0, %s82
      %s84 = sphi 0, %s82
      %s85 = sphi 0, %s84
      %s99 = sphi 0, %s85
      %s103 = sphi 0, %s103
      %s105 = sphi 0, %s103
      %s106 = sphi 0, %s105
      %s120 = sphi 0, %s106
      %s124 = sphi 0, %s124
      %s126 = sphi 0, %s124
      %s127 = sphi 0, %s126
      %s141 = sphi 0, %s127
      %s145 = sphi 0, %s145
      %s147 = sphi 0, %s145
      %s148 = sphi 0, %s147
      %s162 = sphi 0, %s148
      %s168 = sphi 0, %s170
      %s171 = sphi 0, %s168
      %s172 = sphi 0, %s171
      %s188 = sphi 0, %s172
      %s194 = sphi 0, %s196
      %s197 = sphi 0, %s194
      %s198 = sphi 0, %s197
      %s214 = sphi 0, %s198
      %s220 = sphi 0, %s222
      %s223 = sphi 0, %s220
      %s224 = sphi 0, %s223
      %s240 = sphi 0, %s224
      %s246 = sphi 0, %s248
      %s249 = sphi 0, %s246
      %s250 = sphi 0, %s249
      %s266 = sphi 0, %s250
      %s272 = sphi 0, %s274
      %s275 = sphi 0, %s272
      %s276 = sphi 0, %s275
      %s292 = sphi 0, %s276
      %s298 = sphi 0, %s300
      %s301 = sphi 0, %s298
      %s302 = sphi 0, %s301
      %s318 = sphi 0, %s302
      %s324 = sphi 0, %s326
      %s327 = sphi 0, %s324
      %s328 = sphi 0, %s327
      %s344 = sphi 0, %s328
      %s350 = sphi 0, %s352
      %s353 = sphi 0, %s350
      %s354 = sphi 0, %s353
      %s370 = sphi 0, %s354
      %s376 = sphi 0, %s378
      %s379 = sphi 0, %s376
      %s380 = sphi 0, %s379
      %s396 = sphi 0, %s380
      %s402 = sphi 0, %s404
      %s405 = sphi 0, %s402
      %s406 = sphi 0, %s405
      %s422 = sphi 0, %s406
      %s428 = sphi 0, %s430
      %s431 = sphi 0, %s428
      %s432 = sphi 0, %s431
      %s448 = sphi 0, %s432
      %s454 = sphi 0, %s456
      %s457 = sphi 0, %s454
      %s458 = sphi 0, %s457
      %s474 = sphi 0, %s458
      %s480 = sphi 0, %s482
      %s483 = sphi 0, %s480
      %s484 = sphi 0, %s483
      %s500 = sphi 0, %s484
      %s506 = sphi 0, %s508
      %s509 = sphi 0, %s506
      %s510 = sphi 0, %s509
      %s526 = sphi 0, %s510
      %s530 = sphi 0, %s530
      %s532 = sphi 0, %s530
      %s533 = sphi 0, %s532
      %s547 = sphi 0, %s533
      %s551 = sphi 0, %s551
      %s553 = sphi 0, %s551
      %s554 = sphi 0, %s553
      %s568 = sphi 0, %s554
      %s572 = sphi 0, %s572
      %s574 = sphi 0, %s572
      %s575 = sphi 0, %s574
      %s589 = sphi 0, %s575
      %s593 = sphi 0, %s593
      %s595 = sphi 0, %s593
      %s596 = sphi 0, %s595
      %s610 = sphi 0, %s596
      %s614 = sphi 0, %s614
      %s616 = sphi 0, %s614
      %s617 = sphi 0, %s616
      %s631 = sphi 0, %s617
      %s635 = sphi 0, %s635
      %s637 = sphi 0, %s635
      %s638 = sphi 0, %s637
      %s652 = sphi 0, %s638
      %s658 = sphi 0, %s660
      %s661 = sphi 0, %s658
      %s662 = sphi 0, %s661
      %s678 = sphi 0, %s662
    $region4: #{uni_multitask_forward.1} parent=1 // loop_header_branch
      %39 = sbr.rel (%p37) target = $region8
    $region5: #{uni_multitask_forward.1} parent=1 // loop_body
      %s41 = ssub.s32 %s36, 1
      %s42 = ssub.s32 %s36, 2
      %s49 = sadd.s32 1, %s44
      %p50 = scmp.ge.s32.totalorder %s49, 4
      %s51 = scalar_select %p50, 0, %s49
      %s52 = sadd.s32 1, %s43
      %s53 = scalar_select %p50, %s52, %s43
      %p54 = scmp.ge.s32.totalorder %s53, 2
      %s55 = scalar_select %p54, 0, %s53
      %s56 = ssub.s32 %s43, %s55
      %p57 = scmp.eq.s32.totalorder %s56, 0
      %s59 = sadd.s32 %s58, 1
      %s60 = scalar_select %p57, %s58, %s59
      %p63 = pneg %p57
      %p64 = scmp.eq.s32.totalorder %s36, 7
      %p65 = por %p63, %p64
      %p66 = scmp.ne.s32.totalorder %s58, %s61
      %p67 = scmp.eq.s32.totalorder %s36, 0
      %p68 = por %p66, %p67
      %p69 = scmp.ne.s32.totalorder %s58, %s61
      %p70 = scmp.eq.s32.totalorder %s41, 7
      %p71 = por %p69, %p70
      %p72 = scmp.ne.s32.totalorder %s61, %s62
      %p73 = scmp.eq.s32.totalorder %s41, 0
      %p74 = por %p72, %p73
      %p75 = scmp.ne.s32.totalorder %s61, %s62
      %p76 = scmp.eq.s32.totalorder %s42, 7
      %p77 = por %p75, %p76
      %p79 = scmp.ne.s32.totalorder %s62, %s78
      %p80 = scmp.eq.s32.totalorder %s42, 0
      %p81 = por %p79, %p80
      %s83 = sadd.s32 %s82, 1
      %p86 = scmp.eq.s32.totalorder %s36, 7
      %p87 = scmp.ne.s32.totalorder %s82, %s84
      %p88 = scmp.eq.s32.totalorder %s36, 0
      %p89 = por %p87, %p88
      %p90 = scmp.ne.s32.totalorder %s82, %s84
      %p91 = scmp.eq.s32.totalorder %s41, 7
      %p92 = por %p90, %p91
      %p93 = scmp.ne.s32.totalorder %s84, %s85
      %p94 = scmp.eq.s32.totalorder %s41, 0
      %p95 = por %p93, %p94
      %p96 = scmp.ne.s32.totalorder %s84, %s85
      %p97 = scmp.eq.s32.totalorder %s42, 7
      %p98 = por %p96, %p97
      %p100 = scmp.ne.s32.totalorder %s85, %s99
      %p101 = scmp.eq.s32.totalorder %s42, 0
      %p102 = por %p100, %p101
      %s104 = sadd.s32 %s103, 1
      %p107 = scmp.eq.s32.totalorder %s36, 7
      %p108 = scmp.ne.s32.totalorder %s103, %s105
      %p109 = scmp.eq.s32.totalorder %s36, 0
      %p110 = por %p108, %p109
      %p111 = scmp.ne.s32.totalorder %s103, %s105
      %p112 = scmp.eq.s32.totalorder %s41, 7
      %p113 = por %p111, %p112
      %p114 = scmp.ne.s32.totalorder %s105, %s106
      %p115 = scmp.eq.s32.totalorder %s41, 0
      %p116 = por %p114, %p115
      %p117 = scmp.ne.s32.totalorder %s105, %s106
      %p118 = scmp.eq.s32.totalorder %s42, 7
      %p119 = por %p117, %p118
      %p121 = scmp.ne.s32.totalorder %s106, %s120
      %p122 = scmp.eq.s32.totalorder %s42, 0
      %p123 = por %p121, %p122
      %s125 = sadd.s32 %s124, 1
      %p128 = scmp.eq.s32.totalorder %s36, 7
      %p129 = scmp.ne.s32.totalorder %s124, %s126
      %p130 = scmp.eq.s32.totalorder %s36, 0
      %p131 = por %p129, %p130
      %p132 = scmp.ne.s32.totalorder %s124, %s126
      %p133 = scmp.eq.s32.totalorder %s41, 7
      %p134 = por %p132, %p133
      %p135 = scmp.ne.s32.totalorder %s126, %s127
      %p136 = scmp.eq.s32.totalorder %s41, 0
      %p137 = por %p135, %p136
      %p138 = scmp.ne.s32.totalorder %s126, %s127
      %p139 = scmp.eq.s32.totalorder %s42, 7
      %p140 = por %p138, %p139
      %p142 = scmp.ne.s32.totalorder %s127, %s141
      %p143 = scmp.eq.s32.totalorder %s42, 0
      %p144 = por %p142, %p143
      %s146 = sadd.s32 %s145, 1
      %p149 = scmp.eq.s32.totalorder %s36, 7
      %p150 = scmp.ne.s32.totalorder %s145, %s147
      %p151 = scmp.eq.s32.totalorder %s36, 0
      %p152 = por %p150, %p151
      %p153 = scmp.ne.s32.totalorder %s145, %s147
      %p154 = scmp.eq.s32.totalorder %s41, 7
      %p155 = por %p153, %p154
      %p156 = scmp.ne.s32.totalorder %s147, %s148
      %p157 = scmp.eq.s32.totalorder %s41, 0
      %p158 = por %p156, %p157
      %p159 = scmp.ne.s32.totalorder %s147, %s148
      %p160 = scmp.eq.s32.totalorder %s42, 7
      %p161 = por %p159, %p160
      %p163 = scmp.ne.s32.totalorder %s148, %s162
      %p164 = scmp.eq.s32.totalorder %s42, 0
      %p165 = por %p163, %p164
      %s166 = ssub.s32 %s44, %s51
      %p167 = scmp.eq.s32.totalorder %s166, 0
      %s169 = sadd.s32 %s168, 1
      %s170 = scalar_select %p167, %s168, %s169
      %p173 = pneg %p167
      %p174 = scmp.eq.s32.totalorder %s36, 7
      %p175 = por %p173, %p174
      %p176 = scmp.ne.s32.totalorder %s168, %s171
      %p177 = scmp.eq.s32.totalorder %s36, 0
      %p178 = por %p176, %p177
      %p179 = scmp.ne.s32.totalorder %s168, %s171
      %p180 = scmp.eq.s32.totalorder %s41, 7
      %p181 = por %p179, %p180
      %p182 = scmp.ne.s32.totalorder %s171, %s172
      %p183 = scmp.eq.s32.totalorder %s41, 0
      %p184 = por %p182, %p183
      %p185 = scmp.ne.s32.totalorder %s171, %s172
      %p186 = scmp.eq.s32.totalorder %s42, 7
      %p187 = por %p185, %p186
      %p189 = scmp.ne.s32.totalorder %s172, %s188
      %p190 = scmp.eq.s32.totalorder %s42, 0
      %p191 = por %p189, %p190
      %s192 = ssub.s32 %s44, %s51
      %p193 = scmp.eq.s32.totalorder %s192, 0
      %s195 = sadd.s32 %s194, 1
      %s196 = scalar_select %p193, %s194, %s195
      %p199 = pneg %p193
      %p200 = scmp.eq.s32.totalorder %s36, 7
      %p201 = por %p199, %p200
      %p202 = scmp.ne.s32.totalorder %s194, %s197
      %p203 = scmp.eq.s32.totalorder %s36, 0
      %p204 = por %p202, %p203
      %p205 = scmp.ne.s32.totalorder %s194, %s197
      %p206 = scmp.eq.s32.totalorder %s41, 7
      %p207 = por %p205, %p206
      %p208 = scmp.ne.s32.totalorder %s197, %s198
      %p209 = scmp.eq.s32.totalorder %s41, 0
      %p210 = por %p208, %p209
      %p211 = scmp.ne.s32.totalorder %s197, %s198
      %p212 = scmp.eq.s32.totalorder %s42, 7
      %p213 = por %p211, %p212
      %p215 = scmp.ne.s32.totalorder %s198, %s214
      %p216 = scmp.eq.s32.totalorder %s42, 0
      %p217 = por %p215, %p216
      %s218 = ssub.s32 %s44, %s51
      %p219 = scmp.eq.s32.totalorder %s218, 0
      %s221 = sadd.s32 %s220, 1
      %s222 = scalar_select %p219, %s220, %s221
      %p225 = pneg %p219
      %p226 = scmp.eq.s32.totalorder %s36, 7
      %p227 = por %p225, %p226
      %p228 = scmp.ne.s32.totalorder %s220, %s223
      %p229 = scmp.eq.s32.totalorder %s36, 0
      %p230 = por %p228, %p229
      %p231 = scmp.ne.s32.totalorder %s220, %s223
      %p232 = scmp.eq.s32.totalorder %s41, 7
      %p233 = por %p231, %p232
      %p234 = scmp.ne.s32.totalorder %s223, %s224
      %p235 = scmp.eq.s32.totalorder %s41, 0
      %p236 = por %p234, %p235
      %p237 = scmp.ne.s32.totalorder %s223, %s224
      %p238 = scmp.eq.s32.totalorder %s42, 7
      %p239 = por %p237, %p238
      %p241 = scmp.ne.s32.totalorder %s224, %s240
      %p242 = scmp.eq.s32.totalorder %s42, 0
      %p243 = por %p241, %p242
      %s244 = ssub.s32 %s44, %s51
      %p245 = scmp.eq.s32.totalorder %s244, 0
      %s247 = sadd.s32 %s246, 1
      %s248 = scalar_select %p245, %s246, %s247
      %p251 = pneg %p245
      %p252 = scmp.eq.s32.totalorder %s36, 7
      %p253 = por %p251, %p252
      %p254 = scmp.ne.s32.totalorder %s246, %s249
      %p255 = scmp.eq.s32.totalorder %s36, 0
      %p256 = por %p254, %p255
      %p257 = scmp.ne.s32.totalorder %s246, %s249
      %p258 = scmp.eq.s32.totalorder %s41, 7
      %p259 = por %p257, %p258
      %p260 = scmp.ne.s32.totalorder %s249, %s250
      %p261 = scmp.eq.s32.totalorder %s41, 0
      %p262 = por %p260, %p261
      %p263 = scmp.ne.s32.totalorder %s249, %s250
      %p264 = scmp.eq.s32.totalorder %s42, 7
      %p265 = por %p263, %p264
      %p267 = scmp.ne.s32.totalorder %s250, %s266
      %p268 = scmp.eq.s32.totalorder %s42, 0
      %p269 = por %p267, %p268
      %s270 = ssub.s32 %s44, %s51
      %p271 = scmp.eq.s32.totalorder %s270, 0
      %s273 = sadd.s32 %s272, 1
      %s274 = scalar_select %p271, %s272, %s273
      %p277 = pneg %p271
      %p278 = scmp.eq.s32.totalorder %s36, 7
      %p279 = por %p277, %p278
      %p280 = scmp.ne.s32.totalorder %s272, %s275
      %p281 = scmp.eq.s32.totalorder %s36, 0
      %p282 = por %p280, %p281
      %p283 = scmp.ne.s32.totalorder %s272, %s275
      %p284 = scmp.eq.s32.totalorder %s41, 7
      %p285 = por %p283, %p284
      %p286 = scmp.ne.s32.totalorder %s275, %s276
      %p287 = scmp.eq.s32.totalorder %s41, 0
      %p288 = por %p286, %p287
      %p289 = scmp.ne.s32.totalorder %s275, %s276
      %p290 = scmp.eq.s32.totalorder %s42, 7
      %p291 = por %p289, %p290
      %p293 = scmp.ne.s32.totalorder %s276, %s292
      %p294 = scmp.eq.s32.totalorder %s42, 0
      %p295 = por %p293, %p294
      %s296 = ssub.s32 %s44, %s51
      %p297 = scmp.eq.s32.totalorder %s296, 0
      %s299 = sadd.s32 %s298, 1
      %s300 = scalar_select %p297, %s298, %s299
      %p303 = pneg %p297
      %p304 = scmp.eq.s32.totalorder %s36, 7
      %p305 = por %p303, %p304
      %p306 = scmp.ne.s32.totalorder %s298, %s301
      %p307 = scmp.eq.s32.totalorder %s36, 0
      %p308 = por %p306, %p307
      %p309 = scmp.ne.s32.totalorder %s298, %s301
      %p310 = scmp.eq.s32.totalorder %s41, 7
      %p311 = por %p309, %p310
      %p312 = scmp.ne.s32.totalorder %s301, %s302
      %p313 = scmp.eq.s32.totalorder %s41, 0
      %p314 = por %p312, %p313
      %p315 = scmp.ne.s32.totalorder %s301, %s302
      %p316 = scmp.eq.s32.totalorder %s42, 7
      %p317 = por %p315, %p316
      %p319 = scmp.ne.s32.totalorder %s302, %s318
      %p320 = scmp.eq.s32.totalorder %s42, 0
      %p321 = por %p319, %p320
      %s322 = ssub.s32 %s44, %s51
      %p323 = scmp.eq.s32.totalorder %s322, 0
      %s325 = sadd.s32 %s324, 1
      %s326 = scalar_select %p323, %s324, %s325
      %p329 = pneg %p323
      %p330 = scmp.eq.s32.totalorder %s36, 7
      %p331 = por %p329, %p330
      %p332 = scmp.ne.s32.totalorder %s324, %s327
      %p333 = scmp.eq.s32.totalorder %s36, 0
      %p334 = por %p332, %p333
      %p335 = scmp.ne.s32.totalorder %s324, %s327
      %p336 = scmp.eq.s32.totalorder %s41, 7
      %p337 = por %p335, %p336
      %p338 = scmp.ne.s32.totalorder %s327, %s328
      %p339 = scmp.eq.s32.totalorder %s41, 0
      %p340 = por %p338, %p339
      %p341 = scmp.ne.s32.totalorder %s327, %s328
      %p342 = scmp.eq.s32.totalorder %s42, 7
      %p343 = por %p341, %p342
      %p345 = scmp.ne.s32.totalorder %s328, %s344
      %p346 = scmp.eq.s32.totalorder %s42, 0
      %p347 = por %p345, %p346
      %s348 = ssub.s32 %s44, %s51
      %p349 = scmp.eq.s32.totalorder %s348, 0
      %s351 = sadd.s32 %s350, 1
      %s352 = scalar_select %p349, %s350, %s351
      %p355 = pneg %p349
      %p356 = scmp.eq.s32.totalorder %s36, 7
      %p357 = por %p355, %p356
      %p358 = scmp.ne.s32.totalorder %s350, %s353
      %p359 = scmp.eq.s32.totalorder %s36, 0
      %p360 = por %p358, %p359
      %p361 = scmp.ne.s32.totalorder %s350, %s353
      %p362 = scmp.eq.s32.totalorder %s41, 7
      %p363 = por %p361, %p362
      %p364 = scmp.ne.s32.totalorder %s353, %s354
      %p365 = scmp.eq.s32.totalorder %s41, 0
      %p366 = por %p364, %p365
      %p367 = scmp.ne.s32.totalorder %s353, %s354
      %p368 = scmp.eq.s32.totalorder %s42, 7
      %p369 = por %p367, %p368
      %p371 = scmp.ne.s32.totalorder %s354, %s370
      %p372 = scmp.eq.s32.totalorder %s42, 0
      %p373 = por %p371, %p372
      %s374 = ssub.s32 %s44, %s51
      %p375 = scmp.eq.s32.totalorder %s374, 0
      %s377 = sadd.s32 %s376, 1
      %s378 = scalar_select %p375, %s376, %s377
      %p381 = pneg %p375
      %p382 = scmp.eq.s32.totalorder %s36, 7
      %p383 = por %p381, %p382
      %p384 = scmp.ne.s32.totalorder %s376, %s379
      %p385 = scmp.eq.s32.totalorder %s36, 0
      %p386 = por %p384, %p385
      %p387 = scmp.ne.s32.totalorder %s376, %s379
      %p388 = scmp.eq.s32.totalorder %s41, 7
      %p389 = por %p387, %p388
      %p390 = scmp.ne.s32.totalorder %s379, %s380
      %p391 = scmp.eq.s32.totalorder %s41, 0
      %p392 = por %p390, %p391
      %p393 = scmp.ne.s32.totalorder %s379, %s380
      %p394 = scmp.eq.s32.totalorder %s42, 7
      %p395 = por %p393, %p394
      %p397 = scmp.ne.s32.totalorder %s380, %s396
      %p398 = scmp.eq.s32.totalorder %s42, 0
      %p399 = por %p397, %p398
      %s400 = ssub.s32 %s44, %s51
      %p401 = scmp.eq.s32.totalorder %s400, 0
      %s403 = sadd.s32 %s402, 1
      %s404 = scalar_select %p401, %s402, %s403
      %p407 = pneg %p401
      %p408 = scmp.eq.s32.totalorder %s36, 7
      %p409 = por %p407, %p408
      %p410 = scmp.ne.s32.totalorder %s402, %s405
      %p411 = scmp.eq.s32.totalorder %s36, 0
      %p412 = por %p410, %p411
      %p413 = scmp.ne.s32.totalorder %s402, %s405
      %p414 = scmp.eq.s32.totalorder %s41, 7
      %p415 = por %p413, %p414
      %p416 = scmp.ne.s32.totalorder %s405, %s406
      %p417 = scmp.eq.s32.totalorder %s41, 0
      %p418 = por %p416, %p417
      %p419 = scmp.ne.s32.totalorder %s405, %s406
      %p420 = scmp.eq.s32.totalorder %s42, 7
      %p421 = por %p419, %p420
      %p423 = scmp.ne.s32.totalorder %s406, %s422
      %p424 = scmp.eq.s32.totalorder %s42, 0
      %p425 = por %p423, %p424
      %s426 = ssub.s32 %s44, %s51
      %p427 = scmp.eq.s32.totalorder %s426, 0
      %s429 = sadd.s32 %s428, 1
      %s430 = scalar_select %p427, %s428, %s429
      %p433 = pneg %p427
      %p434 = scmp.eq.s32.totalorder %s36, 7
      %p435 = por %p433, %p434
      %p436 = scmp.ne.s32.totalorder %s428, %s431
      %p437 = scmp.eq.s32.totalorder %s36, 0
      %p438 = por %p436, %p437
      %p439 = scmp.ne.s32.totalorder %s428, %s431
      %p440 = scmp.eq.s32.totalorder %s41, 7
      %p441 = por %p439, %p440
      %p442 = scmp.ne.s32.totalorder %s431, %s432
      %p443 = scmp.eq.s32.totalorder %s41, 0
      %p444 = por %p442, %p443
      %p445 = scmp.ne.s32.totalorder %s431, %s432
      %p446 = scmp.eq.s32.totalorder %s42, 7
      %p447 = por %p445, %p446
      %p449 = scmp.ne.s32.totalorder %s432, %s448
      %p450 = scmp.eq.s32.totalorder %s42, 0
      %p451 = por %p449, %p450
      %s452 = ssub.s32 %s44, %s51
      %p453 = scmp.eq.s32.totalorder %s452, 0
      %s455 = sadd.s32 %s454, 1
      %s456 = scalar_select %p453, %s454, %s455
      %p459 = pneg %p453
      %p460 = scmp.eq.s32.totalorder %s36, 7
      %p461 = por %p459, %p460
      %p462 = scmp.ne.s32.totalorder %s454, %s457
      %p463 = scmp.eq.s32.totalorder %s36, 0
      %p464 = por %p462, %p463
      %p465 = scmp.ne.s32.totalorder %s454, %s457
      %p466 = scmp.eq.s32.totalorder %s41, 7
      %p467 = por %p465, %p466
      %p468 = scmp.ne.s32.totalorder %s457, %s458
      %p469 = scmp.eq.s32.totalorder %s41, 0
      %p470 = por %p468, %p469
      %p471 = scmp.ne.s32.totalorder %s457, %s458
      %p472 = scmp.eq.s32.totalorder %s42, 7
      %p473 = por %p471, %p472
      %p475 = scmp.ne.s32.totalorder %s458, %s474
      %p476 = scmp.eq.s32.totalorder %s42, 0
      %p477 = por %p475, %p476
      %s478 = ssub.s32 %s44, %s51
      %p479 = scmp.eq.s32.totalorder %s478, 0
      %s481 = sadd.s32 %s480, 1
      %s482 = scalar_select %p479, %s480, %s481
      %p485 = pneg %p479
      %p486 = scmp.eq.s32.totalorder %s36, 7
      %p487 = por %p485, %p486
      %p488 = scmp.ne.s32.totalorder %s480, %s483
      %p489 = scmp.eq.s32.totalorder %s36, 0
      %p490 = por %p488, %p489
      %p491 = scmp.ne.s32.totalorder %s480, %s483
      %p492 = scmp.eq.s32.totalorder %s41, 7
      %p493 = por %p491, %p492
      %p494 = scmp.ne.s32.totalorder %s483, %s484
      %p495 = scmp.eq.s32.totalorder %s41, 0
      %p496 = por %p494, %p495
      %p497 = scmp.ne.s32.totalorder %s483, %s484
      %p498 = scmp.eq.s32.totalorder %s42, 7
      %p499 = por %p497, %p498
      %p501 = scmp.ne.s32.totalorder %s484, %s500
      %p502 = scmp.eq.s32.totalorder %s42, 0
      %p503 = por %p501, %p502
      %s504 = ssub.s32 %s44, %s51
      %p505 = scmp.eq.s32.totalorder %s504, 0
      %s507 = sadd.s32 %s506, 1
      %s508 = scalar_select %p505, %s506, %s507
      %p511 = pneg %p505
      %p512 = scmp.eq.s32.totalorder %s36, 7
      %p513 = por %p511, %p512
      %p514 = scmp.ne.s32.totalorder %s506, %s509
      %p515 = scmp.eq.s32.totalorder %s36, 0
      %p516 = por %p514, %p515
      %p517 = scmp.ne.s32.totalorder %s506, %s509
      %p518 = scmp.eq.s32.totalorder %s41, 7
      %p519 = por %p517, %p518
      %p520 = scmp.ne.s32.totalorder %s509, %s510
      %p521 = scmp.eq.s32.totalorder %s41, 0
      %p522 = por %p520, %p521
      %p523 = scmp.ne.s32.totalorder %s509, %s510
      %p524 = scmp.eq.s32.totalorder %s42, 7
      %p525 = por %p523, %p524
      %p527 = scmp.ne.s32.totalorder %s510, %s526
      %p528 = scmp.eq.s32.totalorder %s42, 0
      %p529 = por %p527, %p528
      %s531 = sadd.s32 %s530, 1
      %p534 = scmp.eq.s32.totalorder %s36, 7
      %p535 = scmp.ne.s32.totalorder %s530, %s532
      %p536 = scmp.eq.s32.totalorder %s36, 0
      %p537 = por %p535, %p536
      %p538 = scmp.ne.s32.totalorder %s530, %s532
      %p539 = scmp.eq.s32.totalorder %s41, 7
      %p540 = por %p538, %p539
      %p541 = scmp.ne.s32.totalorder %s532, %s533
      %p542 = scmp.eq.s32.totalorder %s41, 0
      %p543 = por %p541, %p542
      %p544 = scmp.ne.s32.totalorder %s532, %s533
      %p545 = scmp.eq.s32.totalorder %s42, 7
      %p546 = por %p544, %p545
      %p548 = scmp.ne.s32.totalorder %s533, %s547
      %p549 = scmp.eq.s32.totalorder %s42, 0
      %p550 = por %p548, %p549
      %s552 = sadd.s32 %s551, 1
      %p555 = scmp.eq.s32.totalorder %s36, 7
      %p556 = scmp.ne.s32.totalorder %s551, %s553
      %p557 = scmp.eq.s32.totalorder %s36, 0
      %p558 = por %p556, %p557
      %p559 = scmp.ne.s32.totalorder %s551, %s553
      %p560 = scmp.eq.s32.totalorder %s41, 7
      %p561 = por %p559, %p560
      %p562 = scmp.ne.s32.totalorder %s553, %s554
      %p563 = scmp.eq.s32.totalorder %s41, 0
      %p564 = por %p562, %p563
      %p565 = scmp.ne.s32.totalorder %s553, %s554
      %p566 = scmp.eq.s32.totalorder %s42, 7
      %p567 = por %p565, %p566
      %p569 = scmp.ne.s32.totalorder %s554, %s568
      %p570 = scmp.eq.s32.totalorder %s42, 0
      %p571 = por %p569, %p570
      %s573 = sadd.s32 %s572, 1
      %p576 = scmp.eq.s32.totalorder %s36, 7
      %p577 = scmp.ne.s32.totalorder %s572, %s574
      %p578 = scmp.eq.s32.totalorder %s36, 0
      %p579 = por %p577, %p578
      %p580 = scmp.ne.s32.totalorder %s572, %s574
      %p581 = scmp.eq.s32.totalorder %s41, 7
      %p582 = por %p580, %p581
      %p583 = scmp.ne.s32.totalorder %s574, %s575
      %p584 = scmp.eq.s32.totalorder %s41, 0
      %p585 = por %p583, %p584
      %p586 = scmp.ne.s32.totalorder %s574, %s575
      %p587 = scmp.eq.s32.totalorder %s42, 7
      %p588 = por %p586, %p587
      %p590 = scmp.ne.s32.totalorder %s575, %s589
      %p591 = scmp.eq.s32.totalorder %s42, 0
      %p592 = por %p590, %p591
      %s594 = sadd.s32 %s593, 1
      %p597 = scmp.eq.s32.totalorder %s36, 7
      %p598 = scmp.ne.s32.totalorder %s593, %s595
      %p599 = scmp.eq.s32.totalorder %s36, 0
      %p600 = por %p598, %p599
      %p601 = scmp.ne.s32.totalorder %s593, %s595
      %p602 = scmp.eq.s32.totalorder %s41, 7
      %p603 = por %p601, %p602
      %p604 = scmp.ne.s32.totalorder %s595, %s596
      %p605 = scmp.eq.s32.totalorder %s41, 0
      %p606 = por %p604, %p605
      %p607 = scmp.ne.s32.totalorder %s595, %s596
      %p608 = scmp.eq.s32.totalorder %s42, 7
      %p609 = por %p607, %p608
      %p611 = scmp.ne.s32.totalorder %s596, %s610
      %p612 = scmp.eq.s32.totalorder %s42, 0
      %p613 = por %p611, %p612
      %s615 = sadd.s32 %s614, 1
      %p618 = scmp.eq.s32.totalorder %s36, 7
      %p619 = scmp.ne.s32.totalorder %s614, %s616
      %p620 = scmp.eq.s32.totalorder %s36, 0
      %p621 = por %p619, %p620
      %p622 = scmp.ne.s32.totalorder %s614, %s616
      %p623 = scmp.eq.s32.totalorder %s41, 7
      %p624 = por %p622, %p623
      %p625 = scmp.ne.s32.totalorder %s616, %s617
      %p626 = scmp.eq.s32.totalorder %s41, 0
      %p627 = por %p625, %p626
      %p628 = scmp.ne.s32.totalorder %s616, %s617
      %p629 = scmp.eq.s32.totalorder %s42, 7
      %p630 = por %p628, %p629
      %p632 = scmp.ne.s32.totalorder %s617, %s631
      %p633 = scmp.eq.s32.totalorder %s42, 0
      %p634 = por %p632, %p633
      %s636 = sadd.s32 %s635, 1
      %p639 = scmp.eq.s32.totalorder %s36, 7
      %p640 = scmp.ne.s32.totalorder %s635, %s637
      %p641 = scmp.eq.s32.totalorder %s36, 0
      %p642 = por %p640, %p641
      %p643 = scmp.ne.s32.totalorder %s635, %s637
      %p644 = scmp.eq.s32.totalorder %s41, 7
      %p645 = por %p643, %p644
      %p646 = scmp.ne.s32.totalorder %s637, %s638
      %p647 = scmp.eq.s32.totalorder %s41, 0
      %p648 = por %p646, %p647
      %p649 = scmp.ne.s32.totalorder %s637, %s638
      %p650 = scmp.eq.s32.totalorder %s42, 7
      %p651 = por %p649, %p650
      %p653 = scmp.ne.s32.totalorder %s638, %s652
      %p654 = scmp.eq.s32.totalorder %s42, 0
      %p655 = por %p653, %p654
      %s656 = ssub.s32 %s43, %s55
      %p657 = scmp.eq.s32.totalorder %s656, 0
      %s659 = sadd.s32 %s658, 1
      %s660 = scalar_select %p657, %s658, %s659
      %p663 = pneg %p657
      %p664 = scmp.eq.s32.totalorder %s36, 7
      %p665 = por %p663, %p664
      %p666 = scmp.ne.s32.totalorder %s658, %s661
      %p667 = scmp.eq.s32.totalorder %s36, 0
      %p668 = por %p666, %p667
      %p669 = scmp.ne.s32.totalorder %s658, %s661
      %p670 = scmp.eq.s32.totalorder %s41, 7
      %p671 = por %p669, %p670
      %p672 = scmp.ne.s32.totalorder %s661, %s662
      %p673 = scmp.eq.s32.totalorder %s41, 0
      %p674 = por %p672, %p673
      %p675 = scmp.ne.s32.totalorder %s661, %s662
      %p676 = scmp.eq.s32.totalorder %s42, 7
      %p677 = por %p675, %p676
      %p679 = scmp.ne.s32.totalorder %s662, %s678
      %p680 = scmp.eq.s32.totalorder %s42, 0
      %p681 = por %p679, %p680
      %p682 = scmp.le.s32.totalorder 1, %s36
      %p683 = scmp.lt.s32.totalorder %s36, 9
      %p684 = pnand %p682, %p683
      %p685 = pneg %p684
      // Predicated region
      $region9: #{uni_multitask_forward.1} parent=5 // pred_check
        _
      $region10: #{uni_multitask_forward.1} parent=5 // pred_check_branch
        %687 = sbr.rel (%p684) target = $region12
      $region11: #{uni_multitask_forward.1} parent=5 // pred_region
        %s688 = ssub.s32 %s36, 1
        // Predicated region
        $region13: #{uni_multitask_forward.1} parent=11 // pred_check
          %p689 = pneg %p95
        $region14: #{uni_multitask_forward.1} parent=11 // pred_check_branch
          %691 = sbr.rel (%p689) target = $region16
        $region15: #{uni_multitask_forward.1} parent=11 // pred_region
          %s693 = ssub.s32 12288, 12288
          %694 = vsyncadd [#allocation4], %s693
          %s695 = sshll.u32 [#allocation3], 4
          %s696 = int_to_ptr.vmem [resolvable:$true] %s695
          %701 = dma.hbm_to_vmem [thread:$0]  %s1, 12288, %s696, [#allocation4], 128, 128, 8
        $region16: #{uni_multitask_forward.1} parent=11 // pred_fallthru
          _
        // Predicated region
        $region17: #{uni_multitask_forward.1} parent=11 // pred_check
          %p702 = pneg %p116
        $region18: #{uni_multitask_forward.1} parent=11 // pred_check_branch
          %704 = sbr.rel (%p702) target = $region20
        $region19: #{uni_multitask_forward.1} parent=11 // pred_region
          %s706 = ssub.s32 32, 32
          %707 = vsyncadd [#allocation6], %s706
          %s709 = sshll.u32 [#allocation5], 4
          %s710 = int_to_ptr.vmem [resolvable:$true] %s709
          %712 = dma.hbm_to_vmem [thread:$0]  %s2, 32, %s710, [#allocation6]
        $region20: #{uni_multitask_forward.1} parent=11 // pred_fallthru
          _
        // Predicated region
        $region21: #{uni_multitask_forward.1} parent=11 // pred_check
          %p713 = pneg %p137
        $region22: #{uni_multitask_forward.1} parent=11 // pred_check_branch
          %715 = sbr.rel (%p713) target = $region24
        $region23: #{uni_multitask_forward.1} parent=11 // pred_region
          %s717 = ssub.s32 32, 32
          %718 = vsyncadd [#allocation6], %s717
          %s720 = sshll.u32 [#allocation7], 4
          %s721 = int_to_ptr.vmem [resolvable:$true] %s720
          %723 = dma.hbm_to_vmem [thread:$0]  %s3, 32, %s721, [#allocation6]
        $region24: #{uni_multitask_forward.1} parent=11 // pred_fallthru
          _
        // Predicated region
        $region25: #{uni_multitask_forward.1} parent=11 // pred_check
          %p724 = pneg %p158
        $region26: #{uni_multitask_forward.1} parent=11 // pred_check_branch
          %726 = sbr.rel (%p724) target = $region28
        $region27: #{uni_multitask_forward.1} parent=11 // pred_region
          %s728 = ssub.s32 256, 256
          %729 = vsyncadd [#allocation9], %s728
          %s731 = sshll.u32 [#allocation8], 4
          %s732 = int_to_ptr.vmem [resolvable:$true] %s731
          %734 = dma.hbm_to_vmem [thread:$0]  %s4, 256, %s732, [#allocation9]
        $region28: #{uni_multitask_forward.1} parent=11 // pred_fallthru
          _
        // Predicated region
        $region29: #{uni_multitask_forward.1} parent=11 // pred_check
          %p735 = pneg %p543
        $region30: #{uni_multitask_forward.1} parent=11 // pred_check_branch
          %737 = sbr.rel (%p735) target = $region32
        $region31: #{uni_multitask_forward.1} parent=11 // pred_region
          %s739 = ssub.s32 32, 32
          %740 = vsyncadd [#allocation6], %s739
          %s742 = sshll.u32 [#allocation24], 4
          %s743 = int_to_ptr.vmem [resolvable:$true] %s742
          %745 = dma.hbm_to_vmem [thread:$0]  %s19, 32, %s743, [#allocation6]
        $region32: #{uni_multitask_forward.1} parent=11 // pred_fallthru
          _
        // Predicated region
        $region33: #{uni_multitask_forward.1} parent=11 // pred_check
          %p746 = pneg %p564
        $region34: #{uni_multitask_forward.1} parent=11 // pred_check_branch
          %748 = sbr.rel (%p746) target = $region36
        $region35: #{uni_multitask_forward.1} parent=11 // pred_region
          %s750 = ssub.s32 32, 32
          %751 = vsyncadd [#allocation9], %s750
          %s753 = sshll.u32 [#allocation25], 4
          %s754 = int_to_ptr.vmem [resolvable:$true] %s753
          %756 = dma.hbm_to_vmem [thread:$0]  %s20, 32, %s754, [#allocation9]
        $region36: #{uni_multitask_forward.1} parent=11 // pred_fallthru
          _
        // Predicated region
        $region37: #{uni_multitask_forward.1} parent=11 // pred_check
          %p757 = pneg %p585
        $region38: #{uni_multitask_forward.1} parent=11 // pred_check_branch
          %759 = sbr.rel (%p757) target = $region40
        $region39: #{uni_multitask_forward.1} parent=11 // pred_region
          %s761 = ssub.s32 12288, 12288
          %762 = vsyncadd [#allocation27], %s761
          %s763 = sshll.u32 [#allocation26], 4
          %s764 = int_to_ptr.vmem [resolvable:$true] %s763
          %769 = dma.hbm_to_vmem [thread:$0]  %s21, 12288, %s764, [#allocation27], 384, 384, 24
        $region40: #{uni_multitask_forward.1} parent=11 // pred_fallthru
          _
        // Predicated region
        $region41: #{uni_multitask_forward.1} parent=11 // pred_check
          %p770 = pneg %p606
        $region42: #{uni_multitask_forward.1} parent=11 // pred_check_branch
          %772 = sbr.rel (%p770) target = $region44
        $region43: #{uni_multitask_forward.1} parent=11 // pred_region
          %s774 = ssub.s32 96, 96
          %775 = vsyncadd [#allocation27], %s774
          %s777 = sshll.u32 [#allocation28], 4
          %s778 = int_to_ptr.vmem [resolvable:$true] %s777
          %780 = dma.hbm_to_vmem [thread:$0]  %s22, 96, %s778, [#allocation27]
        $region44: #{uni_multitask_forward.1} parent=11 // pred_fallthru
          _
        // Predicated region
        $region45: #{uni_multitask_forward.1} parent=11 // pred_check
          %p781 = pneg %p627
        $region46: #{uni_multitask_forward.1} parent=11 // pred_check_branch
          %783 = sbr.rel (%p781) target = $region48
        $region47: #{uni_multitask_forward.1} parent=11 // pred_region
          %s785 = ssub.s32 6144, 6144
          %786 = vsyncadd [#allocation30], %s785
          %s787 = sshll.u32 [#allocation29], 4
          %s788 = int_to_ptr.vmem [resolvable:$true] %s787
          %793 = dma.hbm_to_vmem [thread:$0]  %s23, 6144, %s788, [#allocation30], 64, 64, 4
        $region48: #{uni_multitask_forward.1} parent=11 // pred_fallthru
          _
        // Predicated region
        $region49: #{uni_multitask_forward.1} parent=11 // pred_check
          %p794 = pneg %p648
        $region50: #{uni_multitask_forward.1} parent=11 // pred_check_branch
          %796 = sbr.rel (%p794) target = $region52
        $region51: #{uni_multitask_forward.1} parent=11 // pred_region
          %s798 = ssub.s32 16, 16
          %799 = vsyncadd [#allocation30], %s798
          %s801 = sshll.u32 [#allocation31], 4
          %s802 = int_to_ptr.vmem [resolvable:$true] %s801
          %804 = dma.hbm_to_vmem [thread:$0]  %s24, 16, %s802, [#allocation30]
        $region52: #{uni_multitask_forward.1} parent=11 // pred_fallthru
          _
      $region12: #{uni_multitask_forward.1} parent=5 // pred_fallthru
        _
      %p805 = scmp.lt.s32.totalorder %s36, 8
      // Predicated region
      $region53: #{uni_multitask_forward.1} parent=5 // pred_check
        %p806 = pneg %p805
      $region54: #{uni_multitask_forward.1} parent=5 // pred_check_branch
        %808 = sbr.rel (%p806) target = $region56
      $region55: #{uni_multitask_forward.1} parent=5 // pred_region
        // Predicated region
        $region57: #{uni_multitask_forward.1} parent=55 // pred_check
          %p809 = pneg %p68
        $region58: #{uni_multitask_forward.1} parent=55 // pred_check_branch
          %811 = sbr.rel (%p809) target = $region60
        $region59: #{uni_multitask_forward.1} parent=55 // pred_region
          %p812 = scmp.lt.s32.totalorder %s43, 1
          %s813 = scalar_select %p812, %s43, 1
          %s814 = smul.addr %s813, 6
          %s815 = smul.addr %s814, 4
          %s816 = scalar_lea.vmem %s0, %s815
        $region60: #{uni_multitask_forward.1} parent=55 // pred_fallthru
          _
        // Predicated region
        $region61: #{uni_multitask_forward.1} parent=55 // pred_check
          %p817 = pneg %p178
        $region62: #{uni_multitask_forward.1} parent=55 // pred_check_branch
          %819 = sbr.rel (%p817) target = $region64
        $region63: #{uni_multitask_forward.1} parent=55 // pred_region
          %s820 = sand.u32 %s36, 1
          %s821 = scalar_lea.sflag [#allocation4], %s820
          %s822 = sand.u32 %s168, 1
          %s823 = smul.addr %s822, 2
          %s824 = scalar_lea.vmem [#allocation10], %s823
          %s826 = ssub.s32 32, 32
          %827 = vsyncadd %s821, %s826
          %s828 = smul.addr %s44, 2
          %s829 = smul.addr %s828, 16
          %s830 = scalar_lea.hbm %s5, %s829
          %s832 = sshll.u32 %s824, 4
          %s833 = int_to_ptr.vmem [resolvable:$true] %s832
          %835 = dma.hbm_to_vmem [thread:$0]  %s830, 32, %s833, %s821
        $region64: #{uni_multitask_forward.1} parent=55 // pred_fallthru
          _
        // Predicated region
        $region65: #{uni_multitask_forward.1} parent=55 // pred_check
          %p836 = pneg %p204
        $region66: #{uni_multitask_forward.1} parent=55 // pred_check_branch
          %838 = sbr.rel (%p836) target = $region68
        $region67: #{uni_multitask_forward.1} parent=55 // pred_region
          %s839 = sand.u32 %s36, 1
          %s840 = scalar_lea.sflag [#allocation4], %s839
          %s841 = sand.u32 %s194, 1
          %s842 = smul.addr %s841, 2
          %s843 = scalar_lea.vmem [#allocation11], %s842
          %s845 = ssub.s32 32, 32
          %846 = vsyncadd %s840, %s845
          %s847 = smul.addr %s44, 2
          %s848 = smul.addr %s847, 16
          %s849 = scalar_lea.hbm %s6, %s848
          %s851 = sshll.u32 %s843, 4
          %s852 = int_to_ptr.vmem [resolvable:$true] %s851
          %854 = dma.hbm_to_vmem [thread:$0]  %s849, 32, %s852, %s840
        $region68: #{uni_multitask_forward.1} parent=55 // pred_fallthru
          _
        // Predicated region
        $region69: #{uni_multitask_forward.1} parent=55 // pred_check
          %p855 = pneg %p230
        $region70: #{uni_multitask_forward.1} parent=55 // pred_check_branch
          %857 = sbr.rel (%p855) target = $region72
        $region71: #{uni_multitask_forward.1} parent=55 // pred_region
          %s858 = sand.u32 %s36, 1
          %s859 = scalar_lea.sflag [#allocation4], %s858
          %s860 = sand.u32 %s220, 1
          %s861 = smul.addr %s860, 768
          %s862 = scalar_lea.vmem [#allocation12], %s861
          %s864 = ssub.s32 12288, 12288
          %865 = vsyncadd %s859, %s864
          %s866 = smul.addr %s44, 192
          %s867 = smul.addr %s866, 64
          %s868 = scalar_lea.hbm %s7, %s867
          %s869 = sshll.u32 %s862, 4
          %s870 = int_to_ptr.vmem [resolvable:$true] %s869
          %875 = dma.hbm_to_vmem [thread:$0]  %s868, 12288, %s870, %s859, 384, 384, 24
        $region72: #{uni_multitask_forward.1} parent=55 // pred_fallthru
          _
        // Predicated region
        $region73: #{uni_multitask_forward.1} parent=55 // pred_check
          %p876 = pneg %p256
        $region74: #{uni_multitask_forward.1} parent=55 // pred_check_branch
          %878 = sbr.rel (%p876) target = $region76
        $region75: #{uni_multitask_forward.1} parent=55 // pred_region
          %s879 = sand.u32 %s36, 1
          %s880 = scalar_lea.sflag [#allocation4], %s879
          %s881 = sand.u32 %s246, 1
          %s882 = smul.addr %s881, 6
          %s883 = scalar_lea.vmem [#allocation13], %s882
          %s885 = ssub.s32 96, 96
          %886 = vsyncadd %s880, %s885
          %s887 = smul.addr %s44, 6
          %s888 = smul.addr %s887, 16
          %s889 = scalar_lea.hbm %s8, %s888
          %s891 = sshll.u32 %s883, 4
          %s892 = int_to_ptr.vmem [resolvable:$true] %s891
          %894 = dma.hbm_to_vmem [thread:$0]  %s889, 96, %s892, %s880
        $region76: #{uni_multitask_forward.1} parent=55 // pred_fallthru
          _
        // Predicated region
        $region77: #{uni_multitask_forward.1} parent=55 // pred_check
          %p895 = pneg %p282
        $region78: #{uni_multitask_forward.1} parent=55 // pred_check_branch
          %897 = sbr.rel (%p895) target = $region80
        $region79: #{uni_multitask_forward.1} parent=55 // pred_region
          %s898 = sand.u32 %s36, 1
          %s899 = scalar_lea.sflag [#allocation4], %s898
          %s900 = sand.u32 %s272, 1
          %s901 = smul.addr %s900, 256
          %s902 = scalar_lea.vmem [#allocation14], %s901
          %s904 = ssub.s32 4096, 4096
          %905 = vsyncadd %s899, %s904
          %s906 = smul.addr %s44, 64
          %s907 = smul.addr %s906, 64
          %s908 = scalar_lea.hbm %s9, %s907
          %s909 = sshll.u32 %s902, 4
          %s910 = int_to_ptr.vmem [resolvable:$true] %s909
          %915 = dma.hbm_to_vmem [thread:$0]  %s908, 4096, %s910, %s899, 128, 128, 8
        $region80: #{uni_multitask_forward.1} parent=55 // pred_fallthru
          _
        // Predicated region
        $region81: #{uni_multitask_forward.1} parent=55 // pred_check
          %p916 = pneg %p308
        $region82: #{uni_multitask_forward.1} parent=55 // pred_check_branch
          %918 = sbr.rel (%p916) target = $region84
        $region83: #{uni_multitask_forward.1} parent=55 // pred_region
          %s919 = sand.u32 %s36, 1
          %s920 = scalar_lea.sflag [#allocation4], %s919
          %s921 = sand.u32 %s298, 1
          %s922 = smul.addr %s921, 2
          %s923 = scalar_lea.vmem [#allocation15], %s922
          %s925 = ssub.s32 32, 32
          %926 = vsyncadd %s920, %s925
          %s927 = smul.addr %s44, 2
          %s928 = smul.addr %s927, 16
          %s929 = scalar_lea.hbm %s10, %s928
          %s931 = sshll.u32 %s923, 4
          %s932 = int_to_ptr.vmem [resolvable:$true] %s931
          %934 = dma.hbm_to_vmem [thread:$0]  %s929, 32, %s932, %s920
        $region84: #{uni_multitask_forward.1} parent=55 // pred_fallthru
          _
        // Predicated region
        $region85: #{uni_multitask_forward.1} parent=55 // pred_check
          %p935 = pneg %p334
        $region86: #{uni_multitask_forward.1} parent=55 // pred_check_branch
          %937 = sbr.rel (%p935) target = $region88
        $region87: #{uni_multitask_forward.1} parent=55 // pred_region
          %s938 = sand.u32 %s36, 1
          %s939 = scalar_lea.sflag [#allocation4], %s938
          %s940 = sand.u32 %s324, 1
          %s941 = smul.addr %s940, 2
          %s942 = scalar_lea.vmem [#allocation16], %s941
          %s944 = ssub.s32 32, 32
          %945 = vsyncadd %s939, %s944
          %s946 = smul.addr %s44, 2
          %s947 = smul.addr %s946, 16
          %s948 = scalar_lea.hbm %s11, %s947
          %s950 = sshll.u32 %s942, 4
          %s951 = int_to_ptr.vmem [resolvable:$true] %s950
          %953 = dma.hbm_to_vmem [thread:$0]  %s948, 32, %s951, %s939
        $region88: #{uni_multitask_forward.1} parent=55 // pred_fallthru
          _
        // Predicated region
        $region89: #{uni_multitask_forward.1} parent=55 // pred_check
          %p954 = pneg %p360
        $region90: #{uni_multitask_forward.1} parent=55 // pred_check_branch
          %956 = sbr.rel (%p954) target = $region92
        $region91: #{uni_multitask_forward.1} parent=55 // pred_region
          %s957 = sand.u32 %s36, 1
          %s958 = scalar_lea.sflag [#allocation4], %s957
          %s959 = sand.u32 %s350, 1
          %s960 = smul.addr %s959, 2
          %s961 = scalar_lea.vmem [#allocation17], %s960
          %s963 = ssub.s32 32, 32
          %964 = vsyncadd %s958, %s963
          %s965 = smul.addr %s44, 2
          %s966 = smul.addr %s965, 16
          %s967 = scalar_lea.hbm %s12, %s966
          %s969 = sshll.u32 %s961, 4
          %s970 = int_to_ptr.vmem [resolvable:$true] %s969
          %972 = dma.hbm_to_vmem [thread:$0]  %s967, 32, %s970, %s958
        $region92: #{uni_multitask_forward.1} parent=55 // pred_fallthru
          _
        // Predicated region
        $region93: #{uni_multitask_forward.1} parent=55 // pred_check
          %p973 = pneg %p386
        $region94: #{uni_multitask_forward.1} parent=55 // pred_check_branch
          %975 = sbr.rel (%p973) target = $region96
        $region95: #{uni_multitask_forward.1} parent=55 // pred_region
          %s976 = sand.u32 %s36, 1
          %s977 = scalar_lea.sflag [#allocation4], %s976
          %s978 = sand.u32 %s376, 1
          %s979 = smul.addr %s978, 2
          %s980 = scalar_lea.vmem [#allocation18], %s979
          %s982 = ssub.s32 32, 32
          %983 = vsyncadd %s977, %s982
          %s984 = smul.addr %s44, 2
          %s985 = smul.addr %s984, 16
          %s986 = scalar_lea.hbm %s13, %s985
          %s988 = sshll.u32 %s980, 4
          %s989 = int_to_ptr.vmem [resolvable:$true] %s988
          %991 = dma.hbm_to_vmem [thread:$0]  %s986, 32, %s989, %s977
        $region96: #{uni_multitask_forward.1} parent=55 // pred_fallthru
          _
        // Predicated region
        $region97: #{uni_multitask_forward.1} parent=55 // pred_check
          %p992 = pneg %p412
        $region98: #{uni_multitask_forward.1} parent=55 // pred_check_branch
          %994 = sbr.rel (%p992) target = $region100
        $region99: #{uni_multitask_forward.1} parent=55 // pred_region
          %s995 = sand.u32 %s36, 1
          %s996 = scalar_lea.sflag [#allocation4], %s995
          %s997 = sand.u32 %s402, 1
          %s998 = smul.addr %s997, 1024
          %s999 = scalar_lea.vmem [#allocation19], %s998
          %s1001 = ssub.s32 16384, 16384
          %1002 = vsyncadd %s996, %s1001
          %s1003 = smul.addr %s44, 256
          %s1004 = smul.addr %s1003, 64
          %s1005 = scalar_lea.hbm %s14, %s1004
          %s1006 = sshll.u32 %s999, 4
          %s1007 = int_to_ptr.vmem [resolvable:$true] %s1006
          %1012 = dma.hbm_to_vmem [thread:$0]  %s1005, 16384, %s1007, %s996, 512, 512, 32
        $region100: #{uni_multitask_forward.1} parent=55 // pred_fallthru
          _
        // Predicated region
        $region101: #{uni_multitask_forward.1} parent=55 // pred_check
          %p1013 = pneg %p438
        $region102: #{uni_multitask_forward.1} parent=55 // pred_check_branch
          %1015 = sbr.rel (%p1013) target = $region104
        $region103: #{uni_multitask_forward.1} parent=55 // pred_region
          %s1016 = sand.u32 %s36, 1
          %s1017 = scalar_lea.sflag [#allocation4], %s1016
          %s1018 = sand.u32 %s428, 1
          %s1019 = smul.addr %s1018, 8
          %s1020 = scalar_lea.vmem [#allocation20], %s1019
          %s1022 = ssub.s32 128, 128
          %1023 = vsyncadd %s1017, %s1022
          %s1024 = smul.addr %s44, 8
          %s1025 = smul.addr %s1024, 16
          %s1026 = scalar_lea.hbm %s15, %s1025
          %s1028 = sshll.u32 %s1020, 4
          %s1029 = int_to_ptr.vmem [resolvable:$true] %s1028
          %1031 = dma.hbm_to_vmem [thread:$0]  %s1026, 128, %s1029, %s1017
        $region104: #{uni_multitask_forward.1} parent=55 // pred_fallthru
          _
        // Predicated region
        $region105: #{uni_multitask_forward.1} parent=55 // pred_check
          %p1032 = pneg %p464
        $region106: #{uni_multitask_forward.1} parent=55 // pred_check_branch
          %1034 = sbr.rel (%p1032) target = $region108
        $region107: #{uni_multitask_forward.1} parent=55 // pred_region
          %s1035 = sand.u32 %s36, 1
          %s1036 = scalar_lea.sflag [#allocation4], %s1035
          %s1037 = sand.u32 %s454, 1
          %s1038 = smul.addr %s1037, 1024
          %s1039 = scalar_lea.vmem [#allocation21], %s1038
          %s1041 = ssub.s32 16384, 16384
          %1042 = vsyncadd %s1036, %s1041
          %s1043 = smul.addr %s44, 256
          %s1044 = smul.addr %s1043, 64
          %s1045 = scalar_lea.hbm %s16, %s1044
          %s1046 = sshll.u32 %s1039, 4
          %s1047 = int_to_ptr.vmem [resolvable:$true] %s1046
          %1052 = dma.hbm_to_vmem [thread:$0]  %s1045, 16384, %s1047, %s1036, 128, 128, 8
        $region108: #{uni_multitask_forward.1} parent=55 // pred_fallthru
          _
        // Predicated region
        $region109: #{uni_multitask_forward.1} parent=55 // pred_check
          %p1053 = pneg %p490
        $region110: #{uni_multitask_forward.1} parent=55 // pred_check_branch
          %1055 = sbr.rel (%p1053) target = $region112
        $region111: #{uni_multitask_forward.1} parent=55 // pred_region
          %s1056 = sand.u32 %s36, 1
          %s1057 = scalar_lea.sflag [#allocation4], %s1056
          %s1058 = sand.u32 %s480, 1
          %s1059 = smul.addr %s1058, 2
          %s1060 = scalar_lea.vmem [#allocation22], %s1059
          %s1062 = ssub.s32 32, 32
          %1063 = vsyncadd %s1057, %s1062
          %s1064 = smul.addr %s44, 2
          %s1065 = smul.addr %s1064, 16
          %s1066 = scalar_lea.hbm %s17, %s1065
          %s1068 = sshll.u32 %s1060, 4
          %s1069 = int_to_ptr.vmem [resolvable:$true] %s1068
          %1071 = dma.hbm_to_vmem [thread:$0]  %s1066, 32, %s1069, %s1057
        $region112: #{uni_multitask_forward.1} parent=55 // pred_fallthru
          _
        // Predicated region
        $region113: #{uni_multitask_forward.1} parent=55 // pred_check
          %p1072 = pneg %p516
        $region114: #{uni_multitask_forward.1} parent=55 // pred_check_branch
          %1074 = sbr.rel (%p1072) target = $region116
        $region115: #{uni_multitask_forward.1} parent=55 // pred_region
          %s1075 = sand.u32 %s36, 1
          %s1076 = scalar_lea.sflag [#allocation4], %s1075
          %s1077 = sand.u32 %s506, 1
          %s1078 = smul.addr %s1077, 2
          %s1079 = scalar_lea.vmem [#allocation23], %s1078
          %s1081 = ssub.s32 32, 32
          %1082 = vsyncadd %s1076, %s1081
          %s1083 = smul.addr %s44, 2
          %s1084 = smul.addr %s1083, 16
          %s1085 = scalar_lea.hbm %s18, %s1084
          %s1087 = sshll.u32 %s1079, 4
          %s1088 = int_to_ptr.vmem [resolvable:$true] %s1087
          %1090 = dma.hbm_to_vmem [thread:$0]  %s1085, 32, %s1088, %s1076
        $region116: #{uni_multitask_forward.1} parent=55 // pred_fallthru
          _
      $region56: #{uni_multitask_forward.1} parent=5 // pred_fallthru
        _
      %p1091 = scmp.le.s32.totalorder 1, %s36
      %p1092 = scmp.lt.s32.totalorder %s36, 9
      %p1093 = pnand %p1091, %p1092
      %p1094 = pneg %p1093
      // Predicated region
      $region117: #{uni_multitask_forward.1} parent=5 // pred_check
        _
      $region118: #{uni_multitask_forward.1} parent=5 // pred_check_branch
        %1096 = sbr.rel (%p1093) target = $region120
      $region119: #{uni_multitask_forward.1} parent=5 // pred_region
        %s1097 = ssub.s32 %s36, 1
        // Predicated region
        $region121: #{uni_multitask_forward.1} parent=119 // pred_check
          %p1098 = pneg %p95
        $region122: #{uni_multitask_forward.1} parent=119 // pred_check_branch
          %1100 = sbr.rel (%p1098) target = $region124
        $region123: #{uni_multitask_forward.1} parent=119 // pred_region
          %1101 = dma.done [#allocation4], 12288
        $region124: #{uni_multitask_forward.1} parent=119 // pred_fallthru
          _
        // Predicated region
        $region125: #{uni_multitask_forward.1} parent=119 // pred_check
          %p1102 = pneg %p116
        $region126: #{uni_multitask_forward.1} parent=119 // pred_check_branch
          %1104 = sbr.rel (%p1102) target = $region128
        $region127: #{uni_multitask_forward.1} parent=119 // pred_region
          %1105 = dma.done [#allocation6], 32
        $region128: #{uni_multitask_forward.1} parent=119 // pred_fallthru
          _
        // Predicated region
        $region129: #{uni_multitask_forward.1} parent=119 // pred_check
          %p1106 = pneg %p137
        $region130: #{uni_multitask_forward.1} parent=119 // pred_check_branch
          %1108 = sbr.rel (%p1106) target = $region132
        $region131: #{uni_multitask_forward.1} parent=119 // pred_region
          %1109 = dma.done [#allocation6], 32
        $region132: #{uni_multitask_forward.1} parent=119 // pred_fallthru
          _
        // Predicated region
        $region133: #{uni_multitask_forward.1} parent=119 // pred_check
          %p1110 = pneg %p158
        $region134: #{uni_multitask_forward.1} parent=119 // pred_check_branch
          %1112 = sbr.rel (%p1110) target = $region136
        $region135: #{uni_multitask_forward.1} parent=119 // pred_region
          %1113 = dma.done [#allocation9], 256
        $region136: #{uni_multitask_forward.1} parent=119 // pred_fallthru
          _
        %s1114 = sand.u32 %s41, 1
        %s1115 = scalar_lea.sflag [#allocation4], %s1114
        %s1116 = sand.u32 %s171, 1
        %s1117 = smul.addr %s1116, 2
        %s1118 = scalar_lea.vmem [#allocation10], %s1117
        // Predicated region
        $region137: #{uni_multitask_forward.1} parent=119 // pred_check
          %p1119 = pneg %p184
        $region138: #{uni_multitask_forward.1} parent=119 // pred_check_branch
          %1121 = sbr.rel (%p1119) target = $region140
        $region139: #{uni_multitask_forward.1} parent=119 // pred_region
          %1122 = dma.done %s1115, 32
        $region140: #{uni_multitask_forward.1} parent=119 // pred_fallthru
          _
        %s1123 = sand.u32 %s41, 1
        %s1124 = scalar_lea.sflag [#allocation4], %s1123
        %s1125 = sand.u32 %s197, 1
        %s1126 = smul.addr %s1125, 2
        %s1127 = scalar_lea.vmem [#allocation11], %s1126
        // Predicated region
        $region141: #{uni_multitask_forward.1} parent=119 // pred_check
          %p1128 = pneg %p210
        $region142: #{uni_multitask_forward.1} parent=119 // pred_check_branch
          %1130 = sbr.rel (%p1128) target = $region144
        $region143: #{uni_multitask_forward.1} parent=119 // pred_region
          %1131 = dma.done %s1124, 32
        $region144: #{uni_multitask_forward.1} parent=119 // pred_fallthru
          _
        %s1132 = sand.u32 %s41, 1
        %s1133 = scalar_lea.sflag [#allocation4], %s1132
        %s1134 = sand.u32 %s223, 1
        %s1135 = smul.addr %s1134, 768
        %s1136 = scalar_lea.vmem [#allocation12], %s1135
        // Predicated region
        $region145: #{uni_multitask_forward.1} parent=119 // pred_check
          %p1137 = pneg %p236
        $region146: #{uni_multitask_forward.1} parent=119 // pred_check_branch
          %1139 = sbr.rel (%p1137) target = $region148
        $region147: #{uni_multitask_forward.1} parent=119 // pred_region
          %1140 = dma.done %s1133, 12288
        $region148: #{uni_multitask_forward.1} parent=119 // pred_fallthru
          _
        %s1141 = sand.u32 %s41, 1
        %s1142 = scalar_lea.sflag [#allocation4], %s1141
        %s1143 = sand.u32 %s249, 1
        %s1144 = smul.addr %s1143, 6
        %s1145 = scalar_lea.vmem [#allocation13], %s1144
        // Predicated region
        $region149: #{uni_multitask_forward.1} parent=119 // pred_check
          %p1146 = pneg %p262
        $region150: #{uni_multitask_forward.1} parent=119 // pred_check_branch
          %1148 = sbr.rel (%p1146) target = $region152
        $region151: #{uni_multitask_forward.1} parent=119 // pred_region
          %1149 = dma.done %s1142, 96
        $region152: #{uni_multitask_forward.1} parent=119 // pred_fallthru
          _
        %s1150 = sand.u32 %s41, 1
        %s1151 = scalar_lea.sflag [#allocation4], %s1150
        %s1152 = sand.u32 %s275, 1
        %s1153 = smul.addr %s1152, 256
        %s1154 = scalar_lea.vmem [#allocation14], %s1153
        // Predicated region
        $region153: #{uni_multitask_forward.1} parent=119 // pred_check
          %p1155 = pneg %p288
        $region154: #{uni_multitask_forward.1} parent=119 // pred_check_branch
          %1157 = sbr.rel (%p1155) target = $region156
        $region155: #{uni_multitask_forward.1} parent=119 // pred_region
          %1158 = dma.done %s1151, 4096
        $region156: #{uni_multitask_forward.1} parent=119 // pred_fallthru
          _
        %s1159 = sand.u32 %s41, 1
        %s1160 = scalar_lea.sflag [#allocation4], %s1159
        %s1161 = sand.u32 %s301, 1
        %s1162 = smul.addr %s1161, 2
        %s1163 = scalar_lea.vmem [#allocation15], %s1162
        // Predicated region
        $region157: #{uni_multitask_forward.1} parent=119 // pred_check
          %p1164 = pneg %p314
        $region158: #{uni_multitask_forward.1} parent=119 // pred_check_branch
          %1166 = sbr.rel (%p1164) target = $region160
        $region159: #{uni_multitask_forward.1} parent=119 // pred_region
          %1167 = dma.done %s1160, 32
        $region160: #{uni_multitask_forward.1} parent=119 // pred_fallthru
          _
        %s1168 = sand.u32 %s41, 1
        %s1169 = scalar_lea.sflag [#allocation4], %s1168
        %s1170 = sand.u32 %s327, 1
        %s1171 = smul.addr %s1170, 2
        %s1172 = scalar_lea.vmem [#allocation16], %s1171
        // Predicated region
        $region161: #{uni_multitask_forward.1} parent=119 // pred_check
          %p1173 = pneg %p340
        $region162: #{uni_multitask_forward.1} parent=119 // pred_check_branch
          %1175 = sbr.rel (%p1173) target = $region164
        $region163: #{uni_multitask_forward.1} parent=119 // pred_region
          %1176 = dma.done %s1169, 32
        $region164: #{uni_multitask_forward.1} parent=119 // pred_fallthru
          _
        %s1177 = sand.u32 %s41, 1
        %s1178 = scalar_lea.sflag [#allocation4], %s1177
        %s1179 = sand.u32 %s353, 1
        %s1180 = smul.addr %s1179, 2
        %s1181 = scalar_lea.vmem [#allocation17], %s1180
        // Predicated region
        $region165: #{uni_multitask_forward.1} parent=119 // pred_check
          %p1182 = pneg %p366
        $region166: #{uni_multitask_forward.1} parent=119 // pred_check_branch
          %1184 = sbr.rel (%p1182) target = $region168
        $region167: #{uni_multitask_forward.1} parent=119 // pred_region
          %1185 = dma.done %s1178, 32
        $region168: #{uni_multitask_forward.1} parent=119 // pred_fallthru
          _
        %s1186 = sand.u32 %s41, 1
        %s1187 = scalar_lea.sflag [#allocation4], %s1186
        %s1188 = sand.u32 %s379, 1
        %s1189 = smul.addr %s1188, 2
        %s1190 = scalar_lea.vmem [#allocation18], %s1189
        // Predicated region
        $region169: #{uni_multitask_forward.1} parent=119 // pred_check
          %p1191 = pneg %p392
        $region170: #{uni_multitask_forward.1} parent=119 // pred_check_branch
          %1193 = sbr.rel (%p1191) target = $region172
        $region171: #{uni_multitask_forward.1} parent=119 // pred_region
          %1194 = dma.done %s1187, 32
        $region172: #{uni_multitask_forward.1} parent=119 // pred_fallthru
          _
        %s1195 = sand.u32 %s41, 1
        %s1196 = scalar_lea.sflag [#allocation4], %s1195
        %s1197 = sand.u32 %s405, 1
        %s1198 = smul.addr %s1197, 1024
        %s1199 = scalar_lea.vmem [#allocation19], %s1198
        // Predicated region
        $region173: #{uni_multitask_forward.1} parent=119 // pred_check
          %p1200 = pneg %p418
        $region174: #{uni_multitask_forward.1} parent=119 // pred_check_branch
          %1202 = sbr.rel (%p1200) target = $region176
        $region175: #{uni_multitask_forward.1} parent=119 // pred_region
          %1203 = dma.done %s1196, 16384
        $region176: #{uni_multitask_forward.1} parent=119 // pred_fallthru
          _
        %s1204 = sand.u32 %s41, 1
        %s1205 = scalar_lea.sflag [#allocation4], %s1204
        %s1206 = sand.u32 %s431, 1
        %s1207 = smul.addr %s1206, 8
        %s1208 = scalar_lea.vmem [#allocation20], %s1207
        // Predicated region
        $region177: #{uni_multitask_forward.1} parent=119 // pred_check
          %p1209 = pneg %p444
        $region178: #{uni_multitask_forward.1} parent=119 // pred_check_branch
          %1211 = sbr.rel (%p1209) target = $region180
        $region179: #{uni_multitask_forward.1} parent=119 // pred_region
          %1212 = dma.done %s1205, 128
        $region180: #{uni_multitask_forward.1} parent=119 // pred_fallthru
          _
        %s1213 = sand.u32 %s41, 1
        %s1214 = scalar_lea.sflag [#allocation4], %s1213
        %s1215 = sand.u32 %s457, 1
        %s1216 = smul.addr %s1215, 1024
        %s1217 = scalar_lea.vmem [#allocation21], %s1216
        // Predicated region
        $region181: #{uni_multitask_forward.1} parent=119 // pred_check
          %p1218 = pneg %p470
        $region182: #{uni_multitask_forward.1} parent=119 // pred_check_branch
          %1220 = sbr.rel (%p1218) target = $region184
        $region183: #{uni_multitask_forward.1} parent=119 // pred_region
          %1221 = dma.done %s1214, 16384
        $region184: #{uni_multitask_forward.1} parent=119 // pred_fallthru
          _
        %s1222 = sand.u32 %s41, 1
        %s1223 = scalar_lea.sflag [#allocation4], %s1222
        %s1224 = sand.u32 %s483, 1
        %s1225 = smul.addr %s1224, 2
        %s1226 = scalar_lea.vmem [#allocation22], %s1225
        // Predicated region
        $region185: #{uni_multitask_forward.1} parent=119 // pred_check
          %p1227 = pneg %p496
        $region186: #{uni_multitask_forward.1} parent=119 // pred_check_branch
          %1229 = sbr.rel (%p1227) target = $region188
        $region187: #{uni_multitask_forward.1} parent=119 // pred_region
          %1230 = dma.done %s1223, 32
        $region188: #{uni_multitask_forward.1} parent=119 // pred_fallthru
          _
        %s1231 = sand.u32 %s41, 1
        %s1232 = scalar_lea.sflag [#allocation4], %s1231
        %s1233 = sand.u32 %s509, 1
        %s1234 = smul.addr %s1233, 2
        %s1235 = scalar_lea.vmem [#allocation23], %s1234
        // Predicated region
        $region189: #{uni_multitask_forward.1} parent=119 // pred_check
          %p1236 = pneg %p522
        $region190: #{uni_multitask_forward.1} parent=119 // pred_check_branch
          %1238 = sbr.rel (%p1236) target = $region192
        $region191: #{uni_multitask_forward.1} parent=119 // pred_region
          %1239 = dma.done %s1232, 32
        $region192: #{uni_multitask_forward.1} parent=119 // pred_fallthru
          _
        // Predicated region
        $region193: #{uni_multitask_forward.1} parent=119 // pred_check
          %p1240 = pneg %p543
        $region194: #{uni_multitask_forward.1} parent=119 // pred_check_branch
          %1242 = sbr.rel (%p1240) target = $region196
        $region195: #{uni_multitask_forward.1} parent=119 // pred_region
          %1243 = dma.done [#allocation6], 32
        $region196: #{uni_multitask_forward.1} parent=119 // pred_fallthru
          _
        // Predicated region
        $region197: #{uni_multitask_forward.1} parent=119 // pred_check
          %p1244 = pneg %p564
        $region198: #{uni_multitask_forward.1} parent=119 // pred_check_branch
          %1246 = sbr.rel (%p1244) target = $region200
        $region199: #{uni_multitask_forward.1} parent=119 // pred_region
          %1247 = dma.done [#allocation9], 32
        $region200: #{uni_multitask_forward.1} parent=119 // pred_fallthru
          _
        // Predicated region
        $region201: #{uni_multitask_forward.1} parent=119 // pred_check
          %p1248 = pneg %p585
        $region202: #{uni_multitask_forward.1} parent=119 // pred_check_branch
          %1250 = sbr.rel (%p1248) target = $region204
        $region203: #{uni_multitask_forward.1} parent=119 // pred_region
          %1251 = dma.done [#allocation27], 12288
        $region204: #{uni_multitask_forward.1} parent=119 // pred_fallthru
          _
        // Predicated region
        $region205: #{uni_multitask_forward.1} parent=119 // pred_check
          %p1252 = pneg %p606
        $region206: #{uni_multitask_forward.1} parent=119 // pred_check_branch
          %1254 = sbr.rel (%p1252) target = $region208
        $region207: #{uni_multitask_forward.1} parent=119 // pred_region
          %1255 = dma.done [#allocation27], 96
        $region208: #{uni_multitask_forward.1} parent=119 // pred_fallthru
          _
        // Predicated region
        $region209: #{uni_multitask_forward.1} parent=119 // pred_check
          %p1256 = pneg %p627
        $region210: #{uni_multitask_forward.1} parent=119 // pred_check_branch
          %1258 = sbr.rel (%p1256) target = $region212
        $region211: #{uni_multitask_forward.1} parent=119 // pred_region
          %1259 = dma.done [#allocation30], 6144
        $region212: #{uni_multitask_forward.1} parent=119 // pred_fallthru
          _
        // Predicated region
        $region213: #{uni_multitask_forward.1} parent=119 // pred_check
          %p1260 = pneg %p648
        $region214: #{uni_multitask_forward.1} parent=119 // pred_check_branch
          %1262 = sbr.rel (%p1260) target = $region216
        $region215: #{uni_multitask_forward.1} parent=119 // pred_region
          %1263 = dma.done [#allocation30], 16
        $region216: #{uni_multitask_forward.1} parent=119 // pred_fallthru
          _
        %p1264 = scmp.lt.s32.totalorder %s45, 1
        %s1265 = scalar_select %p1264, %s45, 1
        %s1266 = smul.addr %s1265, 6
        %s1267 = smul.addr %s1266, 4
        %s1268 = scalar_lea.vmem %s0, %s1267
        %p1269 = pneg %p74
        %p1270 = pneg %p71
        %p1271 = pneg %p95
        %p1272 = pneg %p92
        %p1273 = pneg %p116
        %p1274 = pneg %p113
        %p1275 = pneg %p137
        %p1276 = pneg %p134
        %p1277 = pneg %p158
        %p1278 = pneg %p155
        %s1279 = sand.u32 %s41, 1
        %s1280 = scalar_lea.sflag [#allocation4], %s1279
        %s1281 = sand.u32 %s171, 1
        %s1282 = smul.addr %s1281, 2
        %s1283 = scalar_lea.vmem [#allocation10], %s1282
        %p1284 = pneg %p184
        %p1285 = pneg %p181
        %s1286 = sand.u32 %s41, 1
        %s1287 = scalar_lea.sflag [#allocation4], %s1286
        %s1288 = sand.u32 %s197, 1
        %s1289 = smul.addr %s1288, 2
        %s1290 = scalar_lea.vmem [#allocation11], %s1289
        %p1291 = pneg %p210
        %p1292 = pneg %p207
        %s1293 = sand.u32 %s41, 1
        %s1294 = scalar_lea.sflag [#allocation4], %s1293
        %s1295 = sand.u32 %s223, 1
        %s1296 = smul.addr %s1295, 768
        %s1297 = scalar_lea.vmem [#allocation12], %s1296
        %p1298 = pneg %p236
        %p1299 = pneg %p233
        %s1300 = sand.u32 %s41, 1
        %s1301 = scalar_lea.sflag [#allocation4], %s1300
        %s1302 = sand.u32 %s249, 1
        %s1303 = smul.addr %s1302, 6
        %s1304 = scalar_lea.vmem [#allocation13], %s1303
        %p1305 = pneg %p262
        %p1306 = pneg %p259
        %s1307 = sand.u32 %s41, 1
        %s1308 = scalar_lea.sflag [#allocation4], %s1307
        %s1309 = sand.u32 %s275, 1
        %s1310 = smul.addr %s1309, 256
        %s1311 = scalar_lea.vmem [#allocation14], %s1310
        %p1312 = pneg %p288
        %p1313 = pneg %p285
        %s1314 = sand.u32 %s41, 1
        %s1315 = scalar_lea.sflag [#allocation4], %s1314
        %s1316 = sand.u32 %s301, 1
        %s1317 = smul.addr %s1316, 2
        %s1318 = scalar_lea.vmem [#allocation15], %s1317
        %p1319 = pneg %p314
        %p1320 = pneg %p311
        %s1321 = sand.u32 %s41, 1
        %s1322 = scalar_lea.sflag [#allocation4], %s1321
        %s1323 = sand.u32 %s327, 1
        %s1324 = smul.addr %s1323, 2
        %s1325 = scalar_lea.vmem [#allocation16], %s1324
        %p1326 = pneg %p340
        %p1327 = pneg %p337
        %s1328 = sand.u32 %s41, 1
        %s1329 = scalar_lea.sflag [#allocation4], %s1328
        %s1330 = sand.u32 %s353, 1
        %s1331 = smul.addr %s1330, 2
        %s1332 = scalar_lea.vmem [#allocation17], %s1331
        %p1333 = pneg %p366
        %p1334 = pneg %p363
        %s1335 = sand.u32 %s41, 1
        %s1336 = scalar_lea.sflag [#allocation4], %s1335
        %s1337 = sand.u32 %s379, 1
        %s1338 = smul.addr %s1337, 2
        %s1339 = scalar_lea.vmem [#allocation18], %s1338
        %p1340 = pneg %p392
        %p1341 = pneg %p389
        %s1342 = sand.u32 %s41, 1
        %s1343 = scalar_lea.sflag [#allocation4], %s1342
        %s1344 = sand.u32 %s405, 1
        %s1345 = smul.addr %s1344, 1024
        %s1346 = scalar_lea.vmem [#allocation19], %s1345
        %p1347 = pneg %p418
        %p1348 = pneg %p415
        %s1349 = sand.u32 %s41, 1
        %s1350 = scalar_lea.sflag [#allocation4], %s1349
        %s1351 = sand.u32 %s431, 1
        %s1352 = smul.addr %s1351, 8
        %s1353 = scalar_lea.vmem [#allocation20], %s1352
        %p1354 = pneg %p444
        %p1355 = pneg %p441
        %s1356 = sand.u32 %s41, 1
        %s1357 = scalar_lea.sflag [#allocation4], %s1356
        %s1358 = sand.u32 %s457, 1
        %s1359 = smul.addr %s1358, 1024
        %s1360 = scalar_lea.vmem [#allocation21], %s1359
        %p1361 = pneg %p470
        %p1362 = pneg %p467
        %s1363 = sand.u32 %s41, 1
        %s1364 = scalar_lea.sflag [#allocation4], %s1363
        %s1365 = sand.u32 %s483, 1
        %s1366 = smul.addr %s1365, 2
        %s1367 = scalar_lea.vmem [#allocation22], %s1366
        %p1368 = pneg %p496
        %p1369 = pneg %p493
        %s1370 = sand.u32 %s41, 1
        %s1371 = scalar_lea.sflag [#allocation4], %s1370
        %s1372 = sand.u32 %s509, 1
        %s1373 = smul.addr %s1372, 2
        %s1374 = scalar_lea.vmem [#allocation23], %s1373
        %p1375 = pneg %p522
        %p1376 = pneg %p519
        %p1377 = pneg %p543
        %p1378 = pneg %p540
        %p1379 = pneg %p564
        %p1380 = pneg %p561
        %p1381 = pneg %p585
        %p1382 = pneg %p582
        %p1383 = pneg %p606
        %p1384 = pneg %p603
        %p1385 = pneg %p627
        %p1386 = pneg %p624
        %p1387 = pneg %p648
        %p1388 = pneg %p645
        %p1389 = pneg %p674
        %p1390 = pneg %p671
        %p1391 = scmp.lt.s32.totalorder %s45, 1
        %s1392 = scalar_select %p1391, %s45, 1
        %s1393 = scalar_lea.vmem %s25, %s1392
        %p1394 = scmp.lt.s32.totalorder %s45, 1
        %s1395 = scalar_select %p1394, %s45, 1
        %s1396 = smul.addr %s1395, 6
        %s1397 = smul.addr %s1396, 4
        %s1398 = scalar_lea.vmem %s0, %s1397
        %p1399 = scmp.lt.s32.totalorder %s45, 1
        %s1400 = scalar_select %p1399, %s45, 1
        %s1401 = scalar_lea.vmem %s25, %s1400
        %p1403 = scmp.eq.s32.totalorder %s46, 0
        // Predicated region
        $region217: #{uni_multitask_forward.1} parent=119 // pred_check
          %p1404 = pneg %p1403
        $region218: #{uni_multitask_forward.1} parent=119 // pred_check_branch
          %1406 = sbr.rel (%p1404) target = $region220
        $region219: #{uni_multitask_forward.1} parent=119 // pred_region
          %v1407 = vld [vmem:[%s1398] sm:$0xff]
          %v1408 = vld [vmem:[%s1398 + $0x8] sm:$0xff]
          %v1409 = vld [vmem:[%s1398 + $0x10] sm:$0xff]
          %v1410 = vld [vmem:[#allocation3] sm:$0xff]
          %v1411 = vld [vmem:[#allocation3 + $0x8] sm:$0xff]
          %v1412 = vld [vmem:[#allocation3 + $0x10] sm:$0xff]
          %v1413 = vld [vmem:[#allocation3 + $0x18] sm:$0xff]
          %v1414 = vld [vmem:[#allocation3 + $0x20] sm:$0xff]
          %v1415 = vld [vmem:[#allocation3 + $0x28] sm:$0xff]
          %v1416 = vld [vmem:[#allocation3 + $0x30] sm:$0xff]
          %v1417 = vld [vmem:[#allocation3 + $0x38] sm:$0xff]
          %v1418 = vld [vmem:[#allocation3 + $0x40] sm:$0xff]
          %v1419 = vld [vmem:[#allocation3 + $0x48] sm:$0xff]
          %v1420 = vld [vmem:[#allocation3 + $0x50] sm:$0xff]
          %v1421 = vld [vmem:[#allocation3 + $0x58] sm:$0xff]
          %v1422 = vld [vmem:[#allocation3 + $0x60] sm:$0xff]
          %v1423 = vld [vmem:[#allocation3 + $0x68] sm:$0xff]
          %v1424 = vld [vmem:[#allocation3 + $0x70] sm:$0xff]
          %v1425 = vld [vmem:[#allocation3 + $0x78] sm:$0xff]
          %v1426 = vld [vmem:[#allocation3 + $0x80] sm:$0xff]
          %v1427 = vld [vmem:[#allocation3 + $0x88] sm:$0xff]
          %v1428 = vld [vmem:[#allocation3 + $0x90] sm:$0xff]
          %v1429 = vld [vmem:[#allocation3 + $0x98] sm:$0xff]
          %v1430 = vld [vmem:[#allocation3 + $0xa0] sm:$0xff]
          %v1431 = vld [vmem:[#allocation3 + $0xa8] sm:$0xff]
          %v1432 = vld [vmem:[#allocation3 + $0xb0] sm:$0xff]
          %v1433 = vld [vmem:[#allocation3 + $0xb8] sm:$0xff]
          %v1434 = vld [vmem:[#allocation3 + $0xc0] sm:$0xff]
          %v1435 = vld [vmem:[#allocation3 + $0xc8] sm:$0xff]
          %v1436 = vld [vmem:[#allocation3 + $0xd0] sm:$0xff]
          %v1437 = vld [vmem:[#allocation3 + $0xd8] sm:$0xff]
          %v1438 = vld [vmem:[#allocation3 + $0xe0] sm:$0xff]
          %v1439 = vld [vmem:[#allocation3 + $0xe8] sm:$0xff]
          %v1440 = vld [vmem:[#allocation3 + $0xf0] sm:$0xff]
          %v1441 = vld [vmem:[#allocation3 + $0xf8] sm:$0xff]
          %v1442 = vld [vmem:[#allocation3 + $0x100] sm:$0xff]
          %v1443 = vld [vmem:[#allocation3 + $0x108] sm:$0xff]
          %v1444 = vld [vmem:[#allocation3 + $0x110] sm:$0xff]
          %v1445 = vld [vmem:[#allocation3 + $0x118] sm:$0xff]
          %v1446 = vld [vmem:[#allocation3 + $0x120] sm:$0xff]
          %v1447 = vld [vmem:[#allocation3 + $0x128] sm:$0xff]
          %v1448 = vld [vmem:[#allocation3 + $0x130] sm:$0xff]
          %v1449 = vld [vmem:[#allocation3 + $0x138] sm:$0xff]
          %v1450 = vld [vmem:[#allocation3 + $0x140] sm:$0xff]
          %v1451 = vld [vmem:[#allocation3 + $0x148] sm:$0xff]
          %v1452 = vld [vmem:[#allocation3 + $0x150] sm:$0xff]
          %v1453 = vld [vmem:[#allocation3 + $0x158] sm:$0xff]
          %v1454 = vld [vmem:[#allocation3 + $0x160] sm:$0xff]
          %v1455 = vld [vmem:[#allocation3 + $0x168] sm:$0xff]
          %v1456 = vld [vmem:[#allocation3 + $0x170] sm:$0xff]
          %v1457 = vld [vmem:[#allocation3 + $0x178] sm:$0xff]
          %v1458 = vld [vmem:[#allocation3 + $0x180] sm:$0xff]
          %v1459 = vld [vmem:[#allocation3 + $0x188] sm:$0xff]
          %v1460 = vld [vmem:[#allocation3 + $0x190] sm:$0xff]
          %v1461 = vld [vmem:[#allocation3 + $0x198] sm:$0xff]
          %v1462 = vld [vmem:[#allocation3 + $0x1a0] sm:$0xff]
          %v1463 = vld [vmem:[#allocation3 + $0x1a8] sm:$0xff]
          %v1464 = vld [vmem:[#allocation3 + $0x1b0] sm:$0xff]
          %v1465 = vld [vmem:[#allocation3 + $0x1b8] sm:$0xff]
          %v1466 = vld [vmem:[#allocation3 + $0x1c0] sm:$0xff]
          %v1467 = vld [vmem:[#allocation3 + $0x1c8] sm:$0xff]
          %v1468 = vld [vmem:[#allocation3 + $0x1d0] sm:$0xff]
          %v1469 = vld [vmem:[#allocation3 + $0x1d8] sm:$0xff]
          %v1470 = vld [vmem:[#allocation3 + $0x1e0] sm:$0xff]
          %v1471 = vld [vmem:[#allocation3 + $0x1e8] sm:$0xff]
          %v1472 = vld [vmem:[#allocation3 + $0x1f0] sm:$0xff]
          %v1473 = vld [vmem:[#allocation3 + $0x1f8] sm:$0xff]
          %v1474 = vld [vmem:[#allocation3 + $0x200] sm:$0xff]
          %v1475 = vld [vmem:[#allocation3 + $0x208] sm:$0xff]
          %v1476 = vld [vmem:[#allocation3 + $0x210] sm:$0xff]
          %v1477 = vld [vmem:[#allocation3 + $0x218] sm:$0xff]
          %v1478 = vld [vmem:[#allocation3 + $0x220] sm:$0xff]
          %v1479 = vld [vmem:[#allocation3 + $0x228] sm:$0xff]
          %v1480 = vld [vmem:[#allocation3 + $0x230] sm:$0xff]
          %v1481 = vld [vmem:[#allocation3 + $0x238] sm:$0xff]
          %v1482 = vld [vmem:[#allocation3 + $0x240] sm:$0xff]
          %v1483 = vld [vmem:[#allocation3 + $0x248] sm:$0xff]
          %v1484 = vld [vmem:[#allocation3 + $0x250] sm:$0xff]
          %v1485 = vld [vmem:[#allocation3 + $0x258] sm:$0xff]
          %v1486 = vld [vmem:[#allocation3 + $0x260] sm:$0xff]
          %v1487 = vld [vmem:[#allocation3 + $0x268] sm:$0xff]
          %v1488 = vld [vmem:[#allocation3 + $0x270] sm:$0xff]
          %v1489 = vld [vmem:[#allocation3 + $0x278] sm:$0xff]
          %v1490 = vld [vmem:[#allocation3 + $0x280] sm:$0xff]
          %v1491 = vld [vmem:[#allocation3 + $0x288] sm:$0xff]
          %v1492 = vld [vmem:[#allocation3 + $0x290] sm:$0xff]
          %v1493 = vld [vmem:[#allocation3 + $0x298] sm:$0xff]
          %v1494 = vld [vmem:[#allocation3 + $0x2a0] sm:$0xff]
          %v1495 = vld [vmem:[#allocation3 + $0x2a8] sm:$0xff]
          %v1496 = vld [vmem:[#allocation3 + $0x2b0] sm:$0xff]
          %v1497 = vld [vmem:[#allocation3 + $0x2b8] sm:$0xff]
          %v1498 = vld [vmem:[#allocation3 + $0x2c0] sm:$0xff]
          %v1499 = vld [vmem:[#allocation3 + $0x2c8] sm:$0xff]
          %v1500 = vld [vmem:[#allocation3 + $0x2d0] sm:$0xff]
          %v1501 = vld [vmem:[#allocation3 + $0x2d8] sm:$0xff]
          %v1502 = vld [vmem:[#allocation3 + $0x2e0] sm:$0xff]
          %v1503 = vld [vmem:[#allocation3 + $0x2e8] sm:$0xff]
          %v1504 = vld [vmem:[#allocation3 + $0x2f0] sm:$0xff]
          %v1505 = vld [vmem:[#allocation3 + $0x2f8] sm:$0xff]
          %v1509 = vunpack.c.l.b16 %v1407
          %v1510 = vunpack.c.h.b16 %v1407
          %v1511 = vunpack.c.l.b16 %v1408
          %v1512 = vunpack.c.h.b16 %v1408
          %v1513 = vunpack.c.l.b16 %v1409
          %v1514 = vunpack.c.h.b16 %v1409
          %v1515 = vpack.c.b16 %v1509, %v1509
          %v1516 = vpack.c.b16 %v1510, %v1510
          %v1517 = vpack.c.b16 %v1511, %v1511
          %v1518 = vpack.c.b16 %v1512, %v1512
          %v1519 = vpack.c.b16 %v1513, %v1513
          %v1520 = vpack.c.b16 %v1514, %v1514
          %v1623 = vunpack.c.l.b16 %v1410
          %v1624 = vunpack.c.h.b16 %v1410
          %v1625 = vunpack.c.l.b16 %v1411
          %v1626 = vunpack.c.h.b16 %v1411
          %v1627 = vunpack.c.l.b16 %v1412
          %v1628 = vunpack.c.h.b16 %v1412
          %v1629 = vunpack.c.l.b16 %v1413
          %v1630 = vunpack.c.h.b16 %v1413
          %v1631 = vunpack.c.l.b16 %v1414
          %v1632 = vunpack.c.h.b16 %v1414
          %v1633 = vunpack.c.l.b16 %v1415
          %v1634 = vunpack.c.h.b16 %v1415
          %v1635 = vunpack.c.l.b16 %v1416
          %v1636 = vunpack.c.h.b16 %v1416
          %v1637 = vunpack.c.l.b16 %v1417
          %v1638 = vunpack.c.h.b16 %v1417
          %v1639 = vunpack.c.l.b16 %v1418
          %v1640 = vunpack.c.h.b16 %v1418
          %v1641 = vunpack.c.l.b16 %v1419
          %v1642 = vunpack.c.h.b16 %v1419
          %v1643 = vunpack.c.l.b16 %v1420
          %v1644 = vunpack.c.h.b16 %v1420
          %v1645 = vunpack.c.l.b16 %v1421
          %v1646 = vunpack.c.h.b16 %v1421
          %v1647 = vunpack.c.l.b16 %v1422
          %v1648 = vunpack.c.h.b16 %v1422
          %v1649 = vunpack.c.l.b16 %v1423
          %v1650 = vunpack.c.h.b16 %v1423
          %v1651 = vunpack.c.l.b16 %v1424
          %v1652 = vunpack.c.h.b16 %v1424
          %v1653 = vunpack.c.l.b16 %v1425
          %v1654 = vunpack.c.h.b16 %v1425
          %v1655 = vunpack.c.l.b16 %v1426
          %v1656 = vunpack.c.h.b16 %v1426
          %v1657 = vunpack.c.l.b16 %v1427
          %v1658 = vunpack.c.h.b16 %v1427
          %v1659 = vunpack.c.l.b16 %v1428
          %v1660 = vunpack.c.h.b16 %v1428
          %v1661 = vunpack.c.l.b16 %v1429
          %v1662 = vunpack.c.h.b16 %v1429
          %v1663 = vunpack.c.l.b16 %v1430
          %v1664 = vunpack.c.h.b16 %v1430
          %v1665 = vunpack.c.l.b16 %v1431
          %v1666 = vunpack.c.h.b16 %v1431
          %v1667 = vunpack.c.l.b16 %v1432
          %v1668 = vunpack.c.h.b16 %v1432
          %v1669 = vunpack.c.l.b16 %v1433
          %v1670 = vunpack.c.h.b16 %v1433
          %v1671 = vunpack.c.l.b16 %v1434
          %v1672 = vunpack.c.h.b16 %v1434
          %v1673 = vunpack.c.l.b16 %v1435
          %v1674 = vunpack.c.h.b16 %v1435
          %v1675 = vunpack.c.l.b16 %v1436
          %v1676 = vunpack.c.h.b16 %v1436
          %v1677 = vunpack.c.l.b16 %v1437
          %v1678 = vunpack.c.h.b16 %v1437
          %v1679 = vunpack.c.l.b16 %v1438
          %v1680 = vunpack.c.h.b16 %v1438
          %v1681 = vunpack.c.l.b16 %v1439
          %v1682 = vunpack.c.h.b16 %v1439
          %v1683 = vunpack.c.l.b16 %v1440
          %v1684 = vunpack.c.h.b16 %v1440
          %v1685 = vunpack.c.l.b16 %v1441
          %v1686 = vunpack.c.h.b16 %v1441
          %v1687 = vunpack.c.l.b16 %v1442
          %v1688 = vunpack.c.h.b16 %v1442
          %v1689 = vunpack.c.l.b16 %v1443
          %v1690 = vunpack.c.h.b16 %v1443
          %v1691 = vunpack.c.l.b16 %v1444
          %v1692 = vunpack.c.h.b16 %v1444
          %v1693 = vunpack.c.l.b16 %v1445
          %v1694 = vunpack.c.h.b16 %v1445
          %v1695 = vunpack.c.l.b16 %v1446
          %v1696 = vunpack.c.h.b16 %v1446
          %v1697 = vunpack.c.l.b16 %v1447
          %v1698 = vunpack.c.h.b16 %v1447
          %v1699 = vunpack.c.l.b16 %v1448
          %v1700 = vunpack.c.h.b16 %v1448
          %v1701 = vunpack.c.l.b16 %v1449
          %v1702 = vunpack.c.h.b16 %v1449
          %v1703 = vunpack.c.l.b16 %v1450
          %v1704 = vunpack.c.h.b16 %v1450
          %v1705 = vunpack.c.l.b16 %v1451
          %v1706 = vunpack.c.h.b16 %v1451
          %v1707 = vunpack.c.l.b16 %v1452
          %v1708 = vunpack.c.h.b16 %v1452
          %v1709 = vunpack.c.l.b16 %v1453
          %v1710 = vunpack.c.h.b16 %v1453
          %v1711 = vunpack.c.l.b16 %v1454
          %v1712 = vunpack.c.h.b16 %v1454
          %v1713 = vunpack.c.l.b16 %v1455
          %v1714 = vunpack.c.h.b16 %v1455
          %v1715 = vunpack.c.l.b16 %v1456
          %v1716 = vunpack.c.h.b16 %v1456
          %v1717 = vunpack.c.l.b16 %v1457
          %v1718 = vunpack.c.h.b16 %v1457
          %v1719 = vunpack.c.l.b16 %v1458
          %v1720 = vunpack.c.h.b16 %v1458
          %v1721 = vunpack.c.l.b16 %v1459
          %v1722 = vunpack.c.h.b16 %v1459
          %v1723 = vunpack.c.l.b16 %v1460
          %v1724 = vunpack.c.h.b16 %v1460
          %v1725 = vunpack.c.l.b16 %v1461
          %v1726 = vunpack.c.h.b16 %v1461
          %v1727 = vunpack.c.l.b16 %v1462
          %v1728 = vunpack.c.h.b16 %v1462
          %v1729 = vunpack.c.l.b16 %v1463
          %v1730 = vunpack.c.h.b16 %v1463
          %v1731 = vunpack.c.l.b16 %v1464
          %v1732 = vunpack.c.h.b16 %v1464
          %v1733 = vunpack.c.l.b16 %v1465
          %v1734 = vunpack.c.h.b16 %v1465
          %v1735 = vunpack.c.l.b16 %v1466
          %v1736 = vunpack.c.h.b16 %v1466
          %v1737 = vunpack.c.l.b16 %v1467
          %v1738 = vunpack.c.h.b16 %v1467
          %v1739 = vunpack.c.l.b16 %v1468
          %v1740 = vunpack.c.h.b16 %v1468
          %v1741 = vunpack.c.l.b16 %v1469
          %v1742 = vunpack.c.h.b16 %v1469
          %v1743 = vunpack.c.l.b16 %v1470
          %v1744 = vunpack.c.h.b16 %v1470
          %v1745 = vunpack.c.l.b16 %v1471
          %v1746 = vunpack.c.h.b16 %v1471
          %v1747 = vunpack.c.l.b16 %v1472
          %v1748 = vunpack.c.h.b16 %v1472
          %v1749 = vunpack.c.l.b16 %v1473
          %v1750 = vunpack.c.h.b16 %v1473
          %v1751 = vunpack.c.l.b16 %v1474
          %v1752 = vunpack.c.h.b16 %v1474
          %v1753 = vunpack.c.l.b16 %v1475
          %v1754 = vunpack.c.h.b16 %v1475
          %v1755 = vunpack.c.l.b16 %v1476
          %v1756 = vunpack.c.h.b16 %v1476
          %v1757 = vunpack.c.l.b16 %v1477
          %v1758 = vunpack.c.h.b16 %v1477
          %v1759 = vunpack.c.l.b16 %v1478
          %v1760 = vunpack.c.h.b16 %v1478
          %v1761 = vunpack.c.l.b16 %v1479
          %v1762 = vunpack.c.h.b16 %v1479
          %v1763 = vunpack.c.l.b16 %v1480
          %v1764 = vunpack.c.h.b16 %v1480
          %v1765 = vunpack.c.l.b16 %v1481
          %v1766 = vunpack.c.h.b16 %v1481
          %v1767 = vunpack.c.l.b16 %v1482
          %v1768 = vunpack.c.h.b16 %v1482
          %v1769 = vunpack.c.l.b16 %v1483
          %v1770 = vunpack.c.h.b16 %v1483
          %v1771 = vunpack.c.l.b16 %v1484
          %v1772 = vunpack.c.h.b16 %v1484
          %v1773 = vunpack.c.l.b16 %v1485
          %v1774 = vunpack.c.h.b16 %v1485
          %v1775 = vunpack.c.l.b16 %v1486
          %v1776 = vunpack.c.h.b16 %v1486
          %v1777 = vunpack.c.l.b16 %v1487
          %v1778 = vunpack.c.h.b16 %v1487
          %v1779 = vunpack.c.l.b16 %v1488
          %v1780 = vunpack.c.h.b16 %v1488
          %v1781 = vunpack.c.l.b16 %v1489
          %v1782 = vunpack.c.h.b16 %v1489
          %v1783 = vunpack.c.l.b16 %v1490
          %v1784 = vunpack.c.h.b16 %v1490
          %v1785 = vunpack.c.l.b16 %v1491
          %v1786 = vunpack.c.h.b16 %v1491
          %v1787 = vunpack.c.l.b16 %v1492
          %v1788 = vunpack.c.h.b16 %v1492
          %v1789 = vunpack.c.l.b16 %v1493
          %v1790 = vunpack.c.h.b16 %v1493
          %v1791 = vunpack.c.l.b16 %v1494
          %v1792 = vunpack.c.h.b16 %v1494
          %v1793 = vunpack.c.l.b16 %v1495
          %v1794 = vunpack.c.h.b16 %v1495
          %v1795 = vunpack.c.l.b16 %v1496
          %v1796 = vunpack.c.h.b16 %v1496
          %v1797 = vunpack.c.l.b16 %v1497
          %v1798 = vunpack.c.h.b16 %v1497
          %v1799 = vunpack.c.l.b16 %v1498
          %v1800 = vunpack.c.h.b16 %v1498
          %v1801 = vunpack.c.l.b16 %v1499
          %v1802 = vunpack.c.h.b16 %v1499
          %v1803 = vunpack.c.l.b16 %v1500
          %v1804 = vunpack.c.h.b16 %v1500
          %v1805 = vunpack.c.l.b16 %v1501
          %v1806 = vunpack.c.h.b16 %v1501
          %v1807 = vunpack.c.l.b16 %v1502
          %v1808 = vunpack.c.h.b16 %v1502
          %v1809 = vunpack.c.l.b16 %v1503
          %v1810 = vunpack.c.h.b16 %v1503
          %v1811 = vunpack.c.l.b16 %v1504
          %v1812 = vunpack.c.h.b16 %v1504
          %v1813 = vunpack.c.l.b16 %v1505
          %v1814 = vunpack.c.h.b16 %v1505
          %v1815 = vpack.c.b16 %v1625, %v1623
          %v1816 = vpack.c.b16 %v1626, %v1624
          %v1817 = vpack.c.b16 %v1629, %v1627
          %v1818 = vpack.c.b16 %v1630, %v1628
          %v1819 = vpack.c.b16 %v1633, %v1631
          %v1820 = vpack.c.b16 %v1634, %v1632
          %v1821 = vpack.c.b16 %v1637, %v1635
          %v1822 = vpack.c.b16 %v1638, %v1636
          %v1823 = vpack.c.b16 %v1641, %v1639
          %v1824 = vpack.c.b16 %v1642, %v1640
          %v1825 = vpack.c.b16 %v1645, %v1643
          %v1826 = vpack.c.b16 %v1646, %v1644
          %v1827 = vpack.c.b16 %v1649, %v1647
          %v1828 = vpack.c.b16 %v1650, %v1648
          %v1829 = vpack.c.b16 %v1653, %v1651
          %v1830 = vpack.c.b16 %v1654, %v1652
          %v1831 = vpack.c.b16 %v1657, %v1655
          %v1832 = vpack.c.b16 %v1658, %v1656
          %v1833 = vpack.c.b16 %v1661, %v1659
          %v1834 = vpack.c.b16 %v1662, %v1660
          %v1835 = vpack.c.b16 %v1665, %v1663
          %v1836 = vpack.c.b16 %v1666, %v1664
          %v1837 = vpack.c.b16 %v1669, %v1667
          %v1838 = vpack.c.b16 %v1670, %v1668
          %v1839 = vpack.c.b16 %v1673, %v1671
          %v1840 = vpack.c.b16 %v1674, %v1672
          %v1841 = vpack.c.b16 %v1677, %v1675
          %v1842 = vpack.c.b16 %v1678, %v1676
          %v1843 = vpack.c.b16 %v1681, %v1679
          %v1844 = vpack.c.b16 %v1682, %v1680
          %v1845 = vpack.c.b16 %v1685, %v1683
          %v1846 = vpack.c.b16 %v1686, %v1684
          %v1847 = vpack.c.b16 %v1689, %v1687
          %v1848 = vpack.c.b16 %v1690, %v1688
          %v1849 = vpack.c.b16 %v1693, %v1691
          %v1850 = vpack.c.b16 %v1694, %v1692
          %v1851 = vpack.c.b16 %v1697, %v1695
          %v1852 = vpack.c.b16 %v1698, %v1696
          %v1853 = vpack.c.b16 %v1701, %v1699
          %v1854 = vpack.c.b16 %v1702, %v1700
          %v1855 = vpack.c.b16 %v1705, %v1703
          %v1856 = vpack.c.b16 %v1706, %v1704
          %v1857 = vpack.c.b16 %v1709, %v1707
          %v1858 = vpack.c.b16 %v1710, %v1708
          %v1859 = vpack.c.b16 %v1713, %v1711
          %v1860 = vpack.c.b16 %v1714, %v1712
          %v1861 = vpack.c.b16 %v1717, %v1715
          %v1862 = vpack.c.b16 %v1718, %v1716
          %v1863 = vpack.c.b16 %v1721, %v1719
          %v1864 = vpack.c.b16 %v1722, %v1720
          %v1865 = vpack.c.b16 %v1725, %v1723
          %v1866 = vpack.c.b16 %v1726, %v1724
          %v1867 = vpack.c.b16 %v1729, %v1727
          %v1868 = vpack.c.b16 %v1730, %v1728
          %v1869 = vpack.c.b16 %v1733, %v1731
          %v1870 = vpack.c.b16 %v1734, %v1732
          %v1871 = vpack.c.b16 %v1737, %v1735
          %v1872 = vpack.c.b16 %v1738, %v1736
          %v1873 = vpack.c.b16 %v1741, %v1739
          %v1874 = vpack.c.b16 %v1742, %v1740
          %v1875 = vpack.c.b16 %v1745, %v1743
          %v1876 = vpack.c.b16 %v1746, %v1744
          %v1877 = vpack.c.b16 %v1749, %v1747
          %v1878 = vpack.c.b16 %v1750, %v1748
          %v1879 = vpack.c.b16 %v1753, %v1751
          %v1880 = vpack.c.b16 %v1754, %v1752
          %v1881 = vpack.c.b16 %v1757, %v1755
          %v1882 = vpack.c.b16 %v1758, %v1756
          %v1883 = vpack.c.b16 %v1761, %v1759
          %v1884 = vpack.c.b16 %v1762, %v1760
          %v1885 = vpack.c.b16 %v1765, %v1763
          %v1886 = vpack.c.b16 %v1766, %v1764
          %v1887 = vpack.c.b16 %v1769, %v1767
          %v1888 = vpack.c.b16 %v1770, %v1768
          %v1889 = vpack.c.b16 %v1773, %v1771
          %v1890 = vpack.c.b16 %v1774, %v1772
          %v1891 = vpack.c.b16 %v1777, %v1775
          %v1892 = vpack.c.b16 %v1778, %v1776
          %v1893 = vpack.c.b16 %v1781, %v1779
          %v1894 = vpack.c.b16 %v1782, %v1780
          %v1895 = vpack.c.b16 %v1785, %v1783
          %v1896 = vpack.c.b16 %v1786, %v1784
          %v1897 = vpack.c.b16 %v1789, %v1787
          %v1898 = vpack.c.b16 %v1790, %v1788
          %v1899 = vpack.c.b16 %v1793, %v1791
          %v1900 = vpack.c.b16 %v1794, %v1792
          %v1901 = vpack.c.b16 %v1797, %v1795
          %v1902 = vpack.c.b16 %v1798, %v1796
          %v1903 = vpack.c.b16 %v1801, %v1799
          %v1904 = vpack.c.b16 %v1802, %v1800
          %v1905 = vpack.c.b16 %v1805, %v1803
          %v1906 = vpack.c.b16 %v1806, %v1804
          %v1907 = vpack.c.b16 %v1809, %v1807
          %v1908 = vpack.c.b16 %v1810, %v1808
          %v1909 = vpack.c.b16 %v1813, %v1811
          %v1910 = vpack.c.b16 %v1814, %v1812
          %2007 = vmatprep.subr.bf16.mxu0 %v1816
          %2008 = vmatpush1.bf16.msra.mxu0 %v1815
          %2009 = vmatprep.subr.bf16.mxu0 %v1818
          %2010 = vmatpush1.bf16.msra.mxu0 %v1817
          %2011 = vmatprep.subr.bf16.mxu0 %v1820
          %2012 = vmatpush1.bf16.msra.mxu0 %v1819
          %2013 = vmatprep.subr.bf16.mxu0 %v1822
          %2014 = vmatpush1.bf16.msra.mxu0 %v1821
          %2015 = vmatprep.subr.bf16.mxu0 %v1824
          %2016 = vmatpush1.bf16.msra.mxu0 %v1823
          %2017 = vmatprep.subr.bf16.mxu0 %v1826
          %2018 = vmatpush1.bf16.msra.mxu0 %v1825
          %2019 = vmatprep.subr.bf16.mxu0 %v1828
          %2020 = vmatpush1.bf16.msra.mxu0 %v1827
          %2021 = vmatprep.subr.bf16.mxu0 %v1830
          %2022 = vmatpush1.bf16.msra.mxu0 %v1829
          %2023 = vmatprep.subr.bf16.mxu0 %v1832
          %2024 = vmatpush1.bf16.msra.mxu0 %v1831
          %2025 = vmatprep.subr.bf16.mxu0 %v1834
          %2026 = vmatpush1.bf16.msra.mxu0 %v1833
          %2027 = vmatprep.subr.bf16.mxu0 %v1836
          %2028 = vmatpush1.bf16.msra.mxu0 %v1835
          %2029 = vmatprep.subr.bf16.mxu0 %v1838
          %2030 = vmatpush1.bf16.msra.mxu0 %v1837
          %2031 = vmatprep.subr.bf16.mxu0 %v1840
          %2032 = vmatpush1.bf16.msra.mxu0 %v1839
          %2033 = vmatprep.subr.bf16.mxu0 %v1842
          %2034 = vmatpush1.bf16.msra.mxu0 %v1841
          %2035 = vmatprep.subr.bf16.mxu0 %v1844
          %2036 = vmatpush1.bf16.msra.mxu0 %v1843
          %2037 = vmatprep.subr.bf16.mxu0 %v1846
          %2038 = vmatpush1.bf16.msra.mxu0 %v1845
          %2039 = vmatprep.mubr.bf16.mxu0 %v1516
          %2040 = vmatmul.mubr.bf16.gmra.mrb[0].mxu0 %v1515
          %v2041 = vpop.f32.mrb[0].mxu0
          %v2042 = vadd.f32 0.0, %v2041
          %v2043 = vpop.f32.mrb[0].mxu0
          %v2044 = vadd.f32 0.0, %v2043
          %v2045 = vpop.f32.mrb[0].mxu0
          %v2046 = vpop.f32.mrb[0].mxu0
          %2047 = vdwg.mxu0
          %2048 = vmatprep.subr.bf16.mxu0 %v1848
          %2049 = vmatpush1.bf16.msra.mxu0 %v1847
          %2050 = vmatprep.subr.bf16.mxu0 %v1850
          %2051 = vmatpush1.bf16.msra.mxu0 %v1849
          %2052 = vmatprep.subr.bf16.mxu0 %v1852
          %2053 = vmatpush1.bf16.msra.mxu0 %v1851
          %2054 = vmatprep.subr.bf16.mxu0 %v1854
          %2055 = vmatpush1.bf16.msra.mxu0 %v1853
          %2056 = vmatprep.subr.bf16.mxu0 %v1856
          %2057 = vmatpush1.bf16.msra.mxu0 %v1855
          %2058 = vmatprep.subr.bf16.mxu0 %v1858
          %2059 = vmatpush1.bf16.msra.mxu0 %v1857
          %2060 = vmatprep.subr.bf16.mxu0 %v1860
          %2061 = vmatpush1.bf16.msra.mxu0 %v1859
          %2062 = vmatprep.subr.bf16.mxu0 %v1862
          %2063 = vmatpush1.bf16.msra.mxu0 %v1861
          %2064 = vmatprep.subr.bf16.mxu0 %v1864
          %2065 = vmatpush1.bf16.msra.mxu0 %v1863
          %2066 = vmatprep.subr.bf16.mxu0 %v1866
          %2067 = vmatpush1.bf16.msra.mxu0 %v1865
          %2068 = vmatprep.subr.bf16.mxu0 %v1868
          %2069 = vmatpush1.bf16.msra.mxu0 %v1867
          %2070 = vmatprep.subr.bf16.mxu0 %v1870
          %2071 = vmatpush1.bf16.msra.mxu0 %v1869
          %2072 = vmatprep.subr.bf16.mxu0 %v1872
          %2073 = vmatpush1.bf16.msra.mxu0 %v1871
          %2074 = vmatprep.subr.bf16.mxu0 %v1874
          %2075 = vmatpush1.bf16.msra.mxu0 %v1873
          %2076 = vmatprep.subr.bf16.mxu0 %v1876
          %2077 = vmatpush1.bf16.msra.mxu0 %v1875
          %2078 = vmatprep.subr.bf16.mxu0 %v1878
          %2079 = vmatpush1.bf16.msra.mxu0 %v1877
          %2080 = vmatprep.mubr.bf16.mxu0 %v1518
          %2081 = vmatmul.mubr.bf16.gmra.mrb[0].mxu0 %v1517
          %v2082 = vpop.f32.mrb[0].mxu0
          %v2083 = vadd.f32 %v2042, %v2082
          %v2084 = vpop.f32.mrb[0].mxu0
          %v2085 = vadd.f32 %v2044, %v2084
          %v2086 = vpop.f32.mrb[0].mxu0
          %v2087 = vpop.f32.mrb[0].mxu0
          %2088 = vdwg.mxu0
          %2089 = vmatprep.subr.bf16.mxu0 %v1880
          %2090 = vmatpush1.bf16.msra.mxu0 %v1879
          %2091 = vmatprep.subr.bf16.mxu0 %v1882
          %2092 = vmatpush1.bf16.msra.mxu0 %v1881
          %2093 = vmatprep.subr.bf16.mxu0 %v1884
          %2094 = vmatpush1.bf16.msra.mxu0 %v1883
          %2095 = vmatprep.subr.bf16.mxu0 %v1886
          %2096 = vmatpush1.bf16.msra.mxu0 %v1885
          %2097 = vmatprep.subr.bf16.mxu0 %v1888
          %2098 = vmatpush1.bf16.msra.mxu0 %v1887
          %2099 = vmatprep.subr.bf16.mxu0 %v1890
          %2100 = vmatpush1.bf16.msra.mxu0 %v1889
          %2101 = vmatprep.subr.bf16.mxu0 %v1892
          %2102 = vmatpush1.bf16.msra.mxu0 %v1891
          %2103 = vmatprep.subr.bf16.mxu0 %v1894
          %2104 = vmatpush1.bf16.msra.mxu0 %v1893
          %2105 = vmatprep.subr.bf16.mxu0 %v1896
          %2106 = vmatpush1.bf16.msra.mxu0 %v1895
          %2107 = vmatprep.subr.bf16.mxu0 %v1898
          %2108 = vmatpush1.bf16.msra.mxu0 %v1897
          %2109 = vmatprep.subr.bf16.mxu0 %v1900
          %2110 = vmatpush1.bf16.msra.mxu0 %v1899
          %2111 = vmatprep.subr.bf16.mxu0 %v1902
          %2112 = vmatpush1.bf16.msra.mxu0 %v1901
          %2113 = vmatprep.subr.bf16.mxu0 %v1904
          %2114 = vmatpush1.bf16.msra.mxu0 %v1903
          %2115 = vmatprep.subr.bf16.mxu0 %v1906
          %2116 = vmatpush1.bf16.msra.mxu0 %v1905
          %2117 = vmatprep.subr.bf16.mxu0 %v1908
          %2118 = vmatpush1.bf16.msra.mxu0 %v1907
          %2119 = vmatprep.subr.bf16.mxu0 %v1910
          %2120 = vmatpush1.bf16.msra.mxu0 %v1909
          %2121 = vmatprep.mubr.bf16.mxu0 %v1520
          %2122 = vmatmul.mubr.bf16.gmra.mrb[0].mxu0 %v1519
          %v2123 = vpop.f32.mrb[0].mxu0
          %v2124 = vadd.f32 %v2083, %v2123
          %v2125 = vpop.f32.mrb[0].mxu0
          %v2126 = vadd.f32 %v2085, %v2125
          %v2127 = vpop.f32.mrb[0].mxu0
          %v2128 = vpop.f32.mrb[0].mxu0
          %2129 = vdwg.mxu0
          %v2130 = vlaneseq
          %v2131 = vshrl.u32 %v2130, 7
          %vm2132 = vcmp.eq.s32.totalorder %v2131, 0
          %v2133 = vld [vmem:[#allocation7] sm:$0x3]
          %v2134 = vld [vmem:[#allocation5] sm:$0x3]
          %v2136 = vlaneseq
          %v2137 = vshrl.u32 %v2136, 7
          %v2138 = vsub.s32 0, %v2137
          %v2139 = vrot.slane %v2134, %v2138
          %v2140 = vlaneseq
          %v2141 = vshrl.u32 %v2140, 7
          %v2142 = vsub.s32 1, %v2141
          %v2143 = vrot.slane %v2134, %v2142
          %v2146 = vadd.f32 %v2124, %v2139
          %v2147 = vadd.f32 %v2126, %v2143
          %v2149 = vlaneseq
          %v2150 = vshrl.u32 %v2149, 7
          %v2151 = vsub.s32 0, %v2150
          %v2152 = vrot.slane %v2133, %v2151
          %v2153 = vlaneseq
          %v2154 = vshrl.u32 %v2153, 7
          %v2155 = vsub.s32 1, %v2154
          %v2156 = vrot.slane %v2133, %v2155
          %v2159 = vsel %vm2132, %v2152, %v2146
          %v2160 = vsel %vm2132, %v2156, %v2147
          %vm2161 = vcmp.lt.s32.totalorder %v2131, 5
          %v2162 = vld [vmem:[#allocation8] sm:$0xff]
          %v2163 = vld [vmem:[#allocation8 + $0x8] sm:$0xff]
          %v2164 = vadd.f32 %v2159, %v2162
          %v2165 = vadd.f32 %v2160, %v2163
          %v2166 = vsel %vm2161, %v2164, 0.0
          %v2167 = vsel %vm2161, %v2165, 0.0
          %2168 = vst [vmem:[#allocation2] sm:$0xff] %v2166
          %2169 = vst [vmem:[#allocation2 + $0x8] sm:$0xff] %v2167
        $region220: #{uni_multitask_forward.1} parent=119 // pred_fallthru
          _
        %v2170 = vld [vmem:[#allocation2] sm:$0xff]
        %v2171 = vld [vmem:[#allocation2 + $0x8] sm:$0xff]
        %v2172 = vld [vmem:[%s1118] sm:$0x3]
        %v2173 = vld [vmem:[%s1127] sm:$0x3]
        %v2174 = vadd.f32 %v2170, %v2171
        %2175 = vadd.xlane.f32.xlu0 %v2174
        %v2176 = vpop.xlane.xlu0 %2175
        %v2177 = vrcp.pop 256.0
        %v2178 = vmul.f32 %v2176, %v2177
        %v2179 = vsub.f32 %v2170, %v2178
        %v2180 = vsub.f32 %v2171, %v2178
        %v2181 = vmul.f32 %v2179, %v2179
        %v2182 = vmul.f32 %v2180, %v2180
        %v2183 = vadd.f32 %v2181, %v2182
        %2184 = vadd.xlane.f32.xlu0 %v2183
        %v2185 = vpop.xlane.xlu0 %2184
        %v2186 = vmul.f32 %v2185, %v2177
        %v2187 = vadd.f32 %v2186, 1e-06
        %v2188 = vrsqrt.pop %v2187
        %v2189 = vmul.f32 %v2179, %v2188
        %v2190 = vmul.f32 %v2180, %v2188
        %v2192 = vlaneseq
        %v2193 = vshrl.u32 %v2192, 7
        %v2194 = vsub.s32 0, %v2193
        %v2195 = vrot.slane %v2172, %v2194
        %v2196 = vlaneseq
        %v2197 = vshrl.u32 %v2196, 7
        %v2198 = vsub.s32 1, %v2197
        %v2199 = vrot.slane %v2172, %v2198
        %v2202 = vmul.f32 %v2189, %v2195
        %v2203 = vmul.f32 %v2190, %v2199
        %v2205 = vlaneseq
        %v2206 = vshrl.u32 %v2205, 7
        %v2207 = vsub.s32 0, %v2206
        %v2208 = vrot.slane %v2173, %v2207
        %v2209 = vlaneseq
        %v2210 = vshrl.u32 %v2209, 7
        %v2211 = vsub.s32 1, %v2210
        %v2212 = vrot.slane %v2173, %v2211
        %v2215 = vadd.f32 %v2202, %v2208
        %v2216 = vadd.f32 %v2203, %v2212
        %v2217 = vpack.c.bf16 %v2215, %v2215
        %v2218 = vpack.c.bf16 %v2216, %v2216
        %v2219 = vld [vmem:[%s1136] sm:$0xff]
        %v2220 = vld [vmem:[%s1136 + $0x8] sm:$0xff]
        %v2221 = vld [vmem:[%s1136 + $0x10] sm:$0xff]
        %v2222 = vld [vmem:[%s1136 + $0x18] sm:$0xff]
        %v2223 = vld [vmem:[%s1136 + $0x20] sm:$0xff]
        %v2224 = vld [vmem:[%s1136 + $0x28] sm:$0xff]
        %v2225 = vld [vmem:[%s1136 + $0x30] sm:$0xff]
        %v2226 = vld [vmem:[%s1136 + $0x38] sm:$0xff]
        %v2227 = vld [vmem:[%s1136 + $0x40] sm:$0xff]
        %v2228 = vld [vmem:[%s1136 + $0x48] sm:$0xff]
        %v2229 = vld [vmem:[%s1136 + $0x50] sm:$0xff]
        %v2230 = vld [vmem:[%s1136 + $0x58] sm:$0xff]
        %v2231 = vld [vmem:[%s1136 + $0x60] sm:$0xff]
        %v2232 = vld [vmem:[%s1136 + $0x68] sm:$0xff]
        %v2233 = vld [vmem:[%s1136 + $0x70] sm:$0xff]
        %v2234 = vld [vmem:[%s1136 + $0x78] sm:$0xff]
        %v2235 = vld [vmem:[%s1136 + $0x80] sm:$0xff]
        %v2236 = vld [vmem:[%s1136 + $0x88] sm:$0xff]
        %v2237 = vld [vmem:[%s1136 + $0x90] sm:$0xff]
        %v2238 = vld [vmem:[%s1136 + $0x98] sm:$0xff]
        %v2239 = vld [vmem:[%s1136 + $0xa0] sm:$0xff]
        %v2240 = vld [vmem:[%s1136 + $0xa8] sm:$0xff]
        %v2241 = vld [vmem:[%s1136 + $0xb0] sm:$0xff]
        %v2242 = vld [vmem:[%s1136 + $0xb8] sm:$0xff]
        %v2243 = vld [vmem:[%s1136 + $0xc0] sm:$0xff]
        %v2244 = vld [vmem:[%s1136 + $0xc8] sm:$0xff]
        %v2245 = vld [vmem:[%s1136 + $0xd0] sm:$0xff]
        %v2246 = vld [vmem:[%s1136 + $0xd8] sm:$0xff]
        %v2247 = vld [vmem:[%s1136 + $0xe0] sm:$0xff]
        %v2248 = vld [vmem:[%s1136 + $0xe8] sm:$0xff]
        %v2249 = vld [vmem:[%s1136 + $0xf0] sm:$0xff]
        %v2250 = vld [vmem:[%s1136 + $0xf8] sm:$0xff]
        %v2251 = vld [vmem:[%s1136 + $0x100] sm:$0xff]
        %v2252 = vld [vmem:[%s1136 + $0x108] sm:$0xff]
        %v2253 = vld [vmem:[%s1136 + $0x110] sm:$0xff]
        %v2254 = vld [vmem:[%s1136 + $0x118] sm:$0xff]
        %v2255 = vld [vmem:[%s1136 + $0x120] sm:$0xff]
        %v2256 = vld [vmem:[%s1136 + $0x128] sm:$0xff]
        %v2257 = vld [vmem:[%s1136 + $0x130] sm:$0xff]
        %v2258 = vld [vmem:[%s1136 + $0x138] sm:$0xff]
        %v2259 = vld [vmem:[%s1136 + $0x140] sm:$0xff]
        %v2260 = vld [vmem:[%s1136 + $0x148] sm:$0xff]
        %v2261 = vld [vmem:[%s1136 + $0x150] sm:$0xff]
        %v2262 = vld [vmem:[%s1136 + $0x158] sm:$0xff]
        %v2263 = vld [vmem:[%s1136 + $0x160] sm:$0xff]
        %v2264 = vld [vmem:[%s1136 + $0x168] sm:$0xff]
        %v2265 = vld [vmem:[%s1136 + $0x170] sm:$0xff]
        %v2266 = vld [vmem:[%s1136 + $0x178] sm:$0xff]
        %v2267 = vld [vmem:[%s1136 + $0x180] sm:$0xff]
        %v2268 = vld [vmem:[%s1136 + $0x188] sm:$0xff]
        %v2269 = vld [vmem:[%s1136 + $0x190] sm:$0xff]
        %v2270 = vld [vmem:[%s1136 + $0x198] sm:$0xff]
        %v2271 = vld [vmem:[%s1136 + $0x1a0] sm:$0xff]
        %v2272 = vld [vmem:[%s1136 + $0x1a8] sm:$0xff]
        %v2273 = vld [vmem:[%s1136 + $0x1b0] sm:$0xff]
        %v2274 = vld [vmem:[%s1136 + $0x1b8] sm:$0xff]
        %v2275 = vld [vmem:[%s1136 + $0x1c0] sm:$0xff]
        %v2276 = vld [vmem:[%s1136 + $0x1c8] sm:$0xff]
        %v2277 = vld [vmem:[%s1136 + $0x1d0] sm:$0xff]
        %v2278 = vld [vmem:[%s1136 + $0x1d8] sm:$0xff]
        %v2279 = vld [vmem:[%s1136 + $0x1e0] sm:$0xff]
        %v2280 = vld [vmem:[%s1136 + $0x1e8] sm:$0xff]
        %v2281 = vld [vmem:[%s1136 + $0x1f0] sm:$0xff]
        %v2282 = vld [vmem:[%s1136 + $0x1f8] sm:$0xff]
        %v2283 = vld [vmem:[%s1136 + $0x200] sm:$0xff]
        %v2284 = vld [vmem:[%s1136 + $0x208] sm:$0xff]
        %v2285 = vld [vmem:[%s1136 + $0x210] sm:$0xff]
        %v2286 = vld [vmem:[%s1136 + $0x218] sm:$0xff]
        %v2287 = vld [vmem:[%s1136 + $0x220] sm:$0xff]
        %v2288 = vld [vmem:[%s1136 + $0x228] sm:$0xff]
        %v2289 = vld [vmem:[%s1136 + $0x230] sm:$0xff]
        %v2290 = vld [vmem:[%s1136 + $0x238] sm:$0xff]
        %v2291 = vld [vmem:[%s1136 + $0x240] sm:$0xff]
        %v2292 = vld [vmem:[%s1136 + $0x248] sm:$0xff]
        %v2293 = vld [vmem:[%s1136 + $0x250] sm:$0xff]
        %v2294 = vld [vmem:[%s1136 + $0x258] sm:$0xff]
        %v2295 = vld [vmem:[%s1136 + $0x260] sm:$0xff]
        %v2296 = vld [vmem:[%s1136 + $0x268] sm:$0xff]
        %v2297 = vld [vmem:[%s1136 + $0x270] sm:$0xff]
        %v2298 = vld [vmem:[%s1136 + $0x278] sm:$0xff]
        %v2299 = vld [vmem:[%s1136 + $0x280] sm:$0xff]
        %v2300 = vld [vmem:[%s1136 + $0x288] sm:$0xff]
        %v2301 = vld [vmem:[%s1136 + $0x290] sm:$0xff]
        %v2302 = vld [vmem:[%s1136 + $0x298] sm:$0xff]
        %v2303 = vld [vmem:[%s1136 + $0x2a0] sm:$0xff]
        %v2304 = vld [vmem:[%s1136 + $0x2a8] sm:$0xff]
        %v2305 = vld [vmem:[%s1136 + $0x2b0] sm:$0xff]
        %v2306 = vld [vmem:[%s1136 + $0x2b8] sm:$0xff]
        %v2307 = vld [vmem:[%s1136 + $0x2c0] sm:$0xff]
        %v2308 = vld [vmem:[%s1136 + $0x2c8] sm:$0xff]
        %v2309 = vld [vmem:[%s1136 + $0x2d0] sm:$0xff]
        %v2310 = vld [vmem:[%s1136 + $0x2d8] sm:$0xff]
        %v2311 = vld [vmem:[%s1136 + $0x2e0] sm:$0xff]
        %v2312 = vld [vmem:[%s1136 + $0x2e8] sm:$0xff]
        %v2313 = vld [vmem:[%s1136 + $0x2f0] sm:$0xff]
        %v2314 = vld [vmem:[%s1136 + $0x2f8] sm:$0xff]
        %v2315 = vld [vmem:[%s1145] sm:$0x3f]
        %v2317 = vlaneseq
        %v2318 = vshrl.u32 %v2317, 7
        %v2319 = vsub.s32 0, %v2318
        %v2320 = vrot.slane %v2315, %v2319
        %v2321 = vlaneseq
        %v2322 = vshrl.u32 %v2321, 7
        %v2323 = vsub.s32 1, %v2322
        %v2324 = vrot.slane %v2315, %v2323
        %v2325 = vlaneseq
        %v2326 = vshrl.u32 %v2325, 7
        %v2327 = vsub.s32 2, %v2326
        %v2328 = vrot.slane %v2315, %v2327
        %v2329 = vlaneseq
        %v2330 = vshrl.u32 %v2329, 7
        %v2331 = vsub.s32 3, %v2330
        %v2332 = vrot.slane %v2315, %v2331
        %v2333 = vlaneseq
        %v2334 = vshrl.u32 %v2333, 7
        %v2335 = vsub.s32 4, %v2334
        %v2336 = vrot.slane %v2315, %v2335
        %v2337 = vlaneseq
        %v2338 = vshrl.u32 %v2337, 7
        %v2339 = vsub.s32 5, %v2338
        %v2340 = vrot.slane %v2315, %v2339
        %v2443 = vunpack.c.l.b16 %v2219
        %v2444 = vunpack.c.h.b16 %v2219
        %v2445 = vunpack.c.l.b16 %v2220
        %v2446 = vunpack.c.h.b16 %v2220
        %v2447 = vunpack.c.l.b16 %v2221
        %v2448 = vunpack.c.h.b16 %v2221
        %v2449 = vunpack.c.l.b16 %v2222
        %v2450 = vunpack.c.h.b16 %v2222
        %v2451 = vunpack.c.l.b16 %v2223
        %v2452 = vunpack.c.h.b16 %v2223
        %v2453 = vunpack.c.l.b16 %v2224
        %v2454 = vunpack.c.h.b16 %v2224
        %v2455 = vunpack.c.l.b16 %v2225
        %v2456 = vunpack.c.h.b16 %v2225
        %v2457 = vunpack.c.l.b16 %v2226
        %v2458 = vunpack.c.h.b16 %v2226
        %v2459 = vunpack.c.l.b16 %v2227
        %v2460 = vunpack.c.h.b16 %v2227
        %v2461 = vunpack.c.l.b16 %v2228
        %v2462 = vunpack.c.h.b16 %v2228
        %v2463 = vunpack.c.l.b16 %v2229
        %v2464 = vunpack.c.h.b16 %v2229
        %v2465 = vunpack.c.l.b16 %v2230
        %v2466 = vunpack.c.h.b16 %v2230
        %v2467 = vunpack.c.l.b16 %v2231
        %v2468 = vunpack.c.h.b16 %v2231
        %v2469 = vunpack.c.l.b16 %v2232
        %v2470 = vunpack.c.h.b16 %v2232
        %v2471 = vunpack.c.l.b16 %v2233
        %v2472 = vunpack.c.h.b16 %v2233
        %v2473 = vunpack.c.l.b16 %v2234
        %v2474 = vunpack.c.h.b16 %v2234
        %v2475 = vunpack.c.l.b16 %v2235
        %v2476 = vunpack.c.h.b16 %v2235
        %v2477 = vunpack.c.l.b16 %v2236
        %v2478 = vunpack.c.h.b16 %v2236
        %v2479 = vunpack.c.l.b16 %v2237
        %v2480 = vunpack.c.h.b16 %v2237
        %v2481 = vunpack.c.l.b16 %v2238
        %v2482 = vunpack.c.h.b16 %v2238
        %v2483 = vunpack.c.l.b16 %v2239
        %v2484 = vunpack.c.h.b16 %v2239
        %v2485 = vunpack.c.l.b16 %v2240
        %v2486 = vunpack.c.h.b16 %v2240
        %v2487 = vunpack.c.l.b16 %v2241
        %v2488 = vunpack.c.h.b16 %v2241
        %v2489 = vunpack.c.l.b16 %v2242
        %v2490 = vunpack.c.h.b16 %v2242
        %v2491 = vunpack.c.l.b16 %v2243
        %v2492 = vunpack.c.h.b16 %v2243
        %v2493 = vunpack.c.l.b16 %v2244
        %v2494 = vunpack.c.h.b16 %v2244
        %v2495 = vunpack.c.l.b16 %v2245
        %v2496 = vunpack.c.h.b16 %v2245
        %v2497 = vunpack.c.l.b16 %v2246
        %v2498 = vunpack.c.h.b16 %v2246
        %v2499 = vunpack.c.l.b16 %v2247
        %v2500 = vunpack.c.h.b16 %v2247
        %v2501 = vunpack.c.l.b16 %v2248
        %v2502 = vunpack.c.h.b16 %v2248
        %v2503 = vunpack.c.l.b16 %v2249
        %v2504 = vunpack.c.h.b16 %v2249
        %v2505 = vunpack.c.l.b16 %v2250
        %v2506 = vunpack.c.h.b16 %v2250
        %v2507 = vunpack.c.l.b16 %v2251
        %v2508 = vunpack.c.h.b16 %v2251
        %v2509 = vunpack.c.l.b16 %v2252
        %v2510 = vunpack.c.h.b16 %v2252
        %v2511 = vunpack.c.l.b16 %v2253
        %v2512 = vunpack.c.h.b16 %v2253
        %v2513 = vunpack.c.l.b16 %v2254
        %v2514 = vunpack.c.h.b16 %v2254
        %v2515 = vunpack.c.l.b16 %v2255
        %v2516 = vunpack.c.h.b16 %v2255
        %v2517 = vunpack.c.l.b16 %v2256
        %v2518 = vunpack.c.h.b16 %v2256
        %v2519 = vunpack.c.l.b16 %v2257
        %v2520 = vunpack.c.h.b16 %v2257
        %v2521 = vunpack.c.l.b16 %v2258
        %v2522 = vunpack.c.h.b16 %v2258
        %v2523 = vunpack.c.l.b16 %v2259
        %v2524 = vunpack.c.h.b16 %v2259
        %v2525 = vunpack.c.l.b16 %v2260
        %v2526 = vunpack.c.h.b16 %v2260
        %v2527 = vunpack.c.l.b16 %v2261
        %v2528 = vunpack.c.h.b16 %v2261
        %v2529 = vunpack.c.l.b16 %v2262
        %v2530 = vunpack.c.h.b16 %v2262
        %v2531 = vunpack.c.l.b16 %v2263
        %v2532 = vunpack.c.h.b16 %v2263
        %v2533 = vunpack.c.l.b16 %v2264
        %v2534 = vunpack.c.h.b16 %v2264
        %v2535 = vunpack.c.l.b16 %v2265
        %v2536 = vunpack.c.h.b16 %v2265
        %v2537 = vunpack.c.l.b16 %v2266
        %v2538 = vunpack.c.h.b16 %v2266
        %v2539 = vunpack.c.l.b16 %v2267
        %v2540 = vunpack.c.h.b16 %v2267
        %v2541 = vunpack.c.l.b16 %v2268
        %v2542 = vunpack.c.h.b16 %v2268
        %v2543 = vunpack.c.l.b16 %v2269
        %v2544 = vunpack.c.h.b16 %v2269
        %v2545 = vunpack.c.l.b16 %v2270
        %v2546 = vunpack.c.h.b16 %v2270
        %v2547 = vunpack.c.l.b16 %v2271
        %v2548 = vunpack.c.h.b16 %v2271
        %v2549 = vunpack.c.l.b16 %v2272
        %v2550 = vunpack.c.h.b16 %v2272
        %v2551 = vunpack.c.l.b16 %v2273
        %v2552 = vunpack.c.h.b16 %v2273
        %v2553 = vunpack.c.l.b16 %v2274
        %v2554 = vunpack.c.h.b16 %v2274
        %v2555 = vunpack.c.l.b16 %v2275
        %v2556 = vunpack.c.h.b16 %v2275
        %v2557 = vunpack.c.l.b16 %v2276
        %v2558 = vunpack.c.h.b16 %v2276
        %v2559 = vunpack.c.l.b16 %v2277
        %v2560 = vunpack.c.h.b16 %v2277
        %v2561 = vunpack.c.l.b16 %v2278
        %v2562 = vunpack.c.h.b16 %v2278
        %v2563 = vunpack.c.l.b16 %v2279
        %v2564 = vunpack.c.h.b16 %v2279
        %v2565 = vunpack.c.l.b16 %v2280
        %v2566 = vunpack.c.h.b16 %v2280
        %v2567 = vunpack.c.l.b16 %v2281
        %v2568 = vunpack.c.h.b16 %v2281
        %v2569 = vunpack.c.l.b16 %v2282
        %v2570 = vunpack.c.h.b16 %v2282
        %v2571 = vunpack.c.l.b16 %v2283
        %v2572 = vunpack.c.h.b16 %v2283
        %v2573 = vunpack.c.l.b16 %v2284
        %v2574 = vunpack.c.h.b16 %v2284
        %v2575 = vunpack.c.l.b16 %v2285
        %v2576 = vunpack.c.h.b16 %v2285
        %v2577 = vunpack.c.l.b16 %v2286
        %v2578 = vunpack.c.h.b16 %v2286
        %v2579 = vunpack.c.l.b16 %v2287
        %v2580 = vunpack.c.h.b16 %v2287
        %v2581 = vunpack.c.l.b16 %v2288
        %v2582 = vunpack.c.h.b16 %v2288
        %v2583 = vunpack.c.l.b16 %v2289
        %v2584 = vunpack.c.h.b16 %v2289
        %v2585 = vunpack.c.l.b16 %v2290
        %v2586 = vunpack.c.h.b16 %v2290
        %v2587 = vunpack.c.l.b16 %v2291
        %v2588 = vunpack.c.h.b16 %v2291
        %v2589 = vunpack.c.l.b16 %v2292
        %v2590 = vunpack.c.h.b16 %v2292
        %v2591 = vunpack.c.l.b16 %v2293
        %v2592 = vunpack.c.h.b16 %v2293
        %v2593 = vunpack.c.l.b16 %v2294
        %v2594 = vunpack.c.h.b16 %v2294
        %v2595 = vunpack.c.l.b16 %v2295
        %v2596 = vunpack.c.h.b16 %v2295
        %v2597 = vunpack.c.l.b16 %v2296
        %v2598 = vunpack.c.h.b16 %v2296
        %v2599 = vunpack.c.l.b16 %v2297
        %v2600 = vunpack.c.h.b16 %v2297
        %v2601 = vunpack.c.l.b16 %v2298
        %v2602 = vunpack.c.h.b16 %v2298
        %v2603 = vunpack.c.l.b16 %v2299
        %v2604 = vunpack.c.h.b16 %v2299
        %v2605 = vunpack.c.l.b16 %v2300
        %v2606 = vunpack.c.h.b16 %v2300
        %v2607 = vunpack.c.l.b16 %v2301
        %v2608 = vunpack.c.h.b16 %v2301
        %v2609 = vunpack.c.l.b16 %v2302
        %v2610 = vunpack.c.h.b16 %v2302
        %v2611 = vunpack.c.l.b16 %v2303
        %v2612 = vunpack.c.h.b16 %v2303
        %v2613 = vunpack.c.l.b16 %v2304
        %v2614 = vunpack.c.h.b16 %v2304
        %v2615 = vunpack.c.l.b16 %v2305
        %v2616 = vunpack.c.h.b16 %v2305
        %v2617 = vunpack.c.l.b16 %v2306
        %v2618 = vunpack.c.h.b16 %v2306
        %v2619 = vunpack.c.l.b16 %v2307
        %v2620 = vunpack.c.h.b16 %v2307
        %v2621 = vunpack.c.l.b16 %v2308
        %v2622 = vunpack.c.h.b16 %v2308
        %v2623 = vunpack.c.l.b16 %v2309
        %v2624 = vunpack.c.h.b16 %v2309
        %v2625 = vunpack.c.l.b16 %v2310
        %v2626 = vunpack.c.h.b16 %v2310
        %v2627 = vunpack.c.l.b16 %v2311
        %v2628 = vunpack.c.h.b16 %v2311
        %v2629 = vunpack.c.l.b16 %v2312
        %v2630 = vunpack.c.h.b16 %v2312
        %v2631 = vunpack.c.l.b16 %v2313
        %v2632 = vunpack.c.h.b16 %v2313
        %v2633 = vunpack.c.l.b16 %v2314
        %v2634 = vunpack.c.h.b16 %v2314
        %v2635 = vpack.c.b16 %v2449, %v2443
        %v2636 = vpack.c.b16 %v2450, %v2444
        %v2637 = vpack.c.b16 %v2451, %v2445
        %v2638 = vpack.c.b16 %v2452, %v2446
        %v2639 = vpack.c.b16 %v2453, %v2447
        %v2640 = vpack.c.b16 %v2454, %v2448
        %v2641 = vpack.c.b16 %v2461, %v2455
        %v2642 = vpack.c.b16 %v2462, %v2456
        %v2643 = vpack.c.b16 %v2463, %v2457
        %v2644 = vpack.c.b16 %v2464, %v2458
        %v2645 = vpack.c.b16 %v2465, %v2459
        %v2646 = vpack.c.b16 %v2466, %v2460
        %v2647 = vpack.c.b16 %v2473, %v2467
        %v2648 = vpack.c.b16 %v2474, %v2468
        %v2649 = vpack.c.b16 %v2475, %v2469
        %v2650 = vpack.c.b16 %v2476, %v2470
        %v2651 = vpack.c.b16 %v2477, %v2471
        %v2652 = vpack.c.b16 %v2478, %v2472
        %v2653 = vpack.c.b16 %v2485, %v2479
        %v2654 = vpack.c.b16 %v2486, %v2480
        %v2655 = vpack.c.b16 %v2487, %v2481
        %v2656 = vpack.c.b16 %v2488, %v2482
        %v2657 = vpack.c.b16 %v2489, %v2483
        %v2658 = vpack.c.b16 %v2490, %v2484
        %v2659 = vpack.c.b16 %v2497, %v2491
        %v2660 = vpack.c.b16 %v2498, %v2492
        %v2661 = vpack.c.b16 %v2499, %v2493
        %v2662 = vpack.c.b16 %v2500, %v2494
        %v2663 = vpack.c.b16 %v2501, %v2495
        %v2664 = vpack.c.b16 %v2502, %v2496
        %v2665 = vpack.c.b16 %v2509, %v2503
        %v2666 = vpack.c.b16 %v2510, %v2504
        %v2667 = vpack.c.b16 %v2511, %v2505
        %v2668 = vpack.c.b16 %v2512, %v2506
        %v2669 = vpack.c.b16 %v2513, %v2507
        %v2670 = vpack.c.b16 %v2514, %v2508
        %v2671 = vpack.c.b16 %v2521, %v2515
        %v2672 = vpack.c.b16 %v2522, %v2516
        %v2673 = vpack.c.b16 %v2523, %v2517
        %v2674 = vpack.c.b16 %v2524, %v2518
        %v2675 = vpack.c.b16 %v2525, %v2519
        %v2676 = vpack.c.b16 %v2526, %v2520
        %v2677 = vpack.c.b16 %v2533, %v2527
        %v2678 = vpack.c.b16 %v2534, %v2528
        %v2679 = vpack.c.b16 %v2535, %v2529
        %v2680 = vpack.c.b16 %v2536, %v2530
        %v2681 = vpack.c.b16 %v2537, %v2531
        %v2682 = vpack.c.b16 %v2538, %v2532
        %v2683 = vpack.c.b16 %v2545, %v2539
        %v2684 = vpack.c.b16 %v2546, %v2540
        %v2685 = vpack.c.b16 %v2547, %v2541
        %v2686 = vpack.c.b16 %v2548, %v2542
        %v2687 = vpack.c.b16 %v2549, %v2543
        %v2688 = vpack.c.b16 %v2550, %v2544
        %v2689 = vpack.c.b16 %v2557, %v2551
        %v2690 = vpack.c.b16 %v2558, %v2552
        %v2691 = vpack.c.b16 %v2559, %v2553
        %v2692 = vpack.c.b16 %v2560, %v2554
        %v2693 = vpack.c.b16 %v2561, %v2555
        %v2694 = vpack.c.b16 %v2562, %v2556
        %v2695 = vpack.c.b16 %v2569, %v2563
        %v2696 = vpack.c.b16 %v2570, %v2564
        %v2697 = vpack.c.b16 %v2571, %v2565
        %v2698 = vpack.c.b16 %v2572, %v2566
        %v2699 = vpack.c.b16 %v2573, %v2567
        %v2700 = vpack.c.b16 %v2574, %v2568
        %v2701 = vpack.c.b16 %v2581, %v2575
        %v2702 = vpack.c.b16 %v2582, %v2576
        %v2703 = vpack.c.b16 %v2583, %v2577
        %v2704 = vpack.c.b16 %v2584, %v2578
        %v2705 = vpack.c.b16 %v2585, %v2579
        %v2706 = vpack.c.b16 %v2586, %v2580
        %v2707 = vpack.c.b16 %v2593, %v2587
        %v2708 = vpack.c.b16 %v2594, %v2588
        %v2709 = vpack.c.b16 %v2595, %v2589
        %v2710 = vpack.c.b16 %v2596, %v2590
        %v2711 = vpack.c.b16 %v2597, %v2591
        %v2712 = vpack.c.b16 %v2598, %v2592
        %v2713 = vpack.c.b16 %v2605, %v2599
        %v2714 = vpack.c.b16 %v2606, %v2600
        %v2715 = vpack.c.b16 %v2607, %v2601
        %v2716 = vpack.c.b16 %v2608, %v2602
        %v2717 = vpack.c.b16 %v2609, %v2603
        %v2718 = vpack.c.b16 %v2610, %v2604
        %v2719 = vpack.c.b16 %v2617, %v2611
        %v2720 = vpack.c.b16 %v2618, %v2612
        %v2721 = vpack.c.b16 %v2619, %v2613
        %v2722 = vpack.c.b16 %v2620, %v2614
        %v2723 = vpack.c.b16 %v2621, %v2615
        %v2724 = vpack.c.b16 %v2622, %v2616
        %v2725 = vpack.c.b16 %v2629, %v2623
        %v2726 = vpack.c.b16 %v2630, %v2624
        %v2727 = vpack.c.b16 %v2631, %v2625
        %v2728 = vpack.c.b16 %v2632, %v2626
        %v2729 = vpack.c.b16 %v2633, %v2627
        %v2730 = vpack.c.b16 %v2634, %v2628
        %2827 = vmatprep.subr.bf16.mxu0 %v2636
        %2828 = vmatpush1.bf16.msra.mxu0 %v2635
        %2829 = vmatprep.subr.bf16.mxu0 %v2642
        %2830 = vmatpush1.bf16.msra.mxu0 %v2641
        %2831 = vmatprep.subr.bf16.mxu0 %v2648
        %2832 = vmatpush1.bf16.msra.mxu0 %v2647
        %2833 = vmatprep.subr.bf16.mxu0 %v2654
        %2834 = vmatpush1.bf16.msra.mxu0 %v2653
        %2835 = vmatprep.subr.bf16.mxu0 %v2660
        %2836 = vmatpush1.bf16.msra.mxu0 %v2659
        %2837 = vmatprep.subr.bf16.mxu0 %v2666
        %2838 = vmatpush1.bf16.msra.mxu0 %v2665
        %2839 = vmatprep.subr.bf16.mxu0 %v2672
        %2840 = vmatpush1.bf16.msra.mxu0 %v2671
        %2841 = vmatprep.subr.bf16.mxu0 %v2678
        %2842 = vmatpush1.bf16.msra.mxu0 %v2677
        %2843 = vmatprep.subr.bf16.mxu0 %v2684
        %2844 = vmatpush1.bf16.msra.mxu0 %v2683
        %2845 = vmatprep.subr.bf16.mxu0 %v2690
        %2846 = vmatpush1.bf16.msra.mxu0 %v2689
        %2847 = vmatprep.subr.bf16.mxu0 %v2696
        %2848 = vmatpush1.bf16.msra.mxu0 %v2695
        %2849 = vmatprep.subr.bf16.mxu0 %v2702
        %2850 = vmatpush1.bf16.msra.mxu0 %v2701
        %2851 = vmatprep.subr.bf16.mxu0 %v2708
        %2852 = vmatpush1.bf16.msra.mxu0 %v2707
        %2853 = vmatprep.subr.bf16.mxu0 %v2714
        %2854 = vmatpush1.bf16.msra.mxu0 %v2713
        %2855 = vmatprep.subr.bf16.mxu0 %v2720
        %2856 = vmatpush1.bf16.msra.mxu0 %v2719
        %2857 = vmatprep.subr.bf16.mxu0 %v2726
        %2858 = vmatpush1.bf16.msra.mxu0 %v2725
        %2859 = vmatprep.mubr.bf16.mxu0 %v2218
        %2860 = vmatmul.mubr.bf16.gmra.mrb[0].mxu0 %v2217
        %v2861 = vpop.f32.mrb[0].mxu0
        %v2862 = vadd.f32 %v2320, %v2861
        %v2863 = vpop.f32.mrb[0].mxu0
        %v2864 = vadd.f32 %v2324, %v2863
        %v2865 = vpop.f32.mrb[0].mxu0
        %v2866 = vpop.f32.mrb[0].mxu0
        %2867 = vdwg.mxu0
        %2868 = vmatprep.subr.bf16.mxu0 %v2638
        %2869 = vmatpush1.bf16.msra.mxu0 %v2637
        %2870 = vmatprep.subr.bf16.mxu0 %v2644
        %2871 = vmatpush1.bf16.msra.mxu0 %v2643
        %2872 = vmatprep.subr.bf16.mxu0 %v2650
        %2873 = vmatpush1.bf16.msra.mxu0 %v2649
        %2874 = vmatprep.subr.bf16.mxu0 %v2656
        %2875 = vmatpush1.bf16.msra.mxu0 %v2655
        %2876 = vmatprep.subr.bf16.mxu0 %v2662
        %2877 = vmatpush1.bf16.msra.mxu0 %v2661
        %2878 = vmatprep.subr.bf16.mxu0 %v2668
        %2879 = vmatpush1.bf16.msra.mxu0 %v2667
        %2880 = vmatprep.subr.bf16.mxu0 %v2674
        %2881 = vmatpush1.bf16.msra.mxu0 %v2673
        %2882 = vmatprep.subr.bf16.mxu0 %v2680
        %2883 = vmatpush1.bf16.msra.mxu0 %v2679
        %2884 = vmatprep.subr.bf16.mxu0 %v2686
        %2885 = vmatpush1.bf16.msra.mxu0 %v2685
        %2886 = vmatprep.subr.bf16.mxu0 %v2692
        %2887 = vmatpush1.bf16.msra.mxu0 %v2691
        %2888 = vmatprep.subr.bf16.mxu0 %v2698
        %2889 = vmatpush1.bf16.msra.mxu0 %v2697
        %2890 = vmatprep.subr.bf16.mxu0 %v2704
        %2891 = vmatpush1.bf16.msra.mxu0 %v2703
        %2892 = vmatprep.subr.bf16.mxu0 %v2710
        %2893 = vmatpush1.bf16.msra.mxu0 %v2709
        %2894 = vmatprep.subr.bf16.mxu0 %v2716
        %2895 = vmatpush1.bf16.msra.mxu0 %v2715
        %2896 = vmatprep.subr.bf16.mxu0 %v2722
        %2897 = vmatpush1.bf16.msra.mxu0 %v2721
        %2898 = vmatprep.subr.bf16.mxu0 %v2728
        %2899 = vmatpush1.bf16.msra.mxu0 %v2727
        %2900 = vmatprep.mubr.bf16.mxu0 %v2218
        %2901 = vmatmul.mubr.bf16.gmra.mrb[0].mxu0 %v2217
        %v2902 = vpop.f32.mrb[0].mxu0
        %v2903 = vadd.f32 %v2328, %v2902
        %v2904 = vpop.f32.mrb[0].mxu0
        %v2905 = vadd.f32 %v2332, %v2904
        %v2906 = vpop.f32.mrb[0].mxu0
        %v2907 = vpop.f32.mrb[0].mxu0
        %2908 = vdwg.mxu0
        %2909 = vmatprep.subr.bf16.mxu0 %v2640
        %2910 = vmatpush1.bf16.msra.mxu0 %v2639
        %2911 = vmatprep.subr.bf16.mxu0 %v2646
        %2912 = vmatpush1.bf16.msra.mxu0 %v2645
        %2913 = vmatprep.subr.bf16.mxu0 %v2652
        %2914 = vmatpush1.bf16.msra.mxu0 %v2651
        %2915 = vmatprep.subr.bf16.mxu0 %v2658
        %2916 = vmatpush1.bf16.msra.mxu0 %v2657
        %2917 = vmatprep.subr.bf16.mxu0 %v2664
        %2918 = vmatpush1.bf16.msra.mxu0 %v2663
        %2919 = vmatprep.subr.bf16.mxu0 %v2670
        %2920 = vmatpush1.bf16.msra.mxu0 %v2669
        %2921 = vmatprep.subr.bf16.mxu0 %v2676
        %2922 = vmatpush1.bf16.msra.mxu0 %v2675
        %2923 = vmatprep.subr.bf16.mxu0 %v2682
        %2924 = vmatpush1.bf16.msra.mxu0 %v2681
        %2925 = vmatprep.subr.bf16.mxu0 %v2688
        %2926 = vmatpush1.bf16.msra.mxu0 %v2687
        %2927 = vmatprep.subr.bf16.mxu0 %v2694
        %2928 = vmatpush1.bf16.msra.mxu0 %v2693
        %2929 = vmatprep.subr.bf16.mxu0 %v2700
        %2930 = vmatpush1.bf16.msra.mxu0 %v2699
        %2931 = vmatprep.subr.bf16.mxu0 %v2706
        %2932 = vmatpush1.bf16.msra.mxu0 %v2705
        %2933 = vmatprep.subr.bf16.mxu0 %v2712
        %2934 = vmatpush1.bf16.msra.mxu0 %v2711
        %2935 = vmatprep.subr.bf16.mxu0 %v2718
        %2936 = vmatpush1.bf16.msra.mxu0 %v2717
        %2937 = vmatprep.subr.bf16.mxu0 %v2724
        %2938 = vmatpush1.bf16.msra.mxu0 %v2723
        %2939 = vmatprep.subr.bf16.mxu0 %v2730
        %2940 = vmatpush1.bf16.msra.mxu0 %v2729
        %2941 = vmatprep.mubr.bf16.mxu0 %v2218
        %2942 = vmatmul.mubr.bf16.gmra.mrb[0].mxu0 %v2217
        %v2943 = vpop.f32.mrb[0].mxu0
        %v2944 = vadd.f32 %v2336, %v2943
        %v2945 = vpop.f32.mrb[0].mxu0
        %v2946 = vadd.f32 %v2340, %v2945
        %v2947 = vpop.f32.mrb[0].mxu0
        %v2948 = vpop.f32.mrb[0].mxu0
        %2949 = vdwg.mxu0
        %v2950 = vlaneseq
        %v2951 = vand.u32 %v2950, 127
        %vm2952 = vcmp.lt.s32.totalorder %v2951, 5
        %v2953 = vsel %vm2952, 0.0, -1e+09
        %v2954 = vld [vmem:[%s1154] sm:$0xff]
        %v2955 = vld [vmem:[%s1154 + $0x8] sm:$0xff]
        %v2956 = vld [vmem:[%s1154 + $0x10] sm:$0xff]
        %v2957 = vld [vmem:[%s1154 + $0x18] sm:$0xff]
        %v2958 = vld [vmem:[%s1154 + $0x20] sm:$0xff]
        %v2959 = vld [vmem:[%s1154 + $0x28] sm:$0xff]
        %v2960 = vld [vmem:[%s1154 + $0x30] sm:$0xff]
        %v2961 = vld [vmem:[%s1154 + $0x38] sm:$0xff]
        %v2962 = vld [vmem:[%s1154 + $0x40] sm:$0xff]
        %v2963 = vld [vmem:[%s1154 + $0x48] sm:$0xff]
        %v2964 = vld [vmem:[%s1154 + $0x50] sm:$0xff]
        %v2965 = vld [vmem:[%s1154 + $0x58] sm:$0xff]
        %v2966 = vld [vmem:[%s1154 + $0x60] sm:$0xff]
        %v2967 = vld [vmem:[%s1154 + $0x68] sm:$0xff]
        %v2968 = vld [vmem:[%s1154 + $0x70] sm:$0xff]
        %v2969 = vld [vmem:[%s1154 + $0x78] sm:$0xff]
        %v2970 = vld [vmem:[%s1154 + $0x80] sm:$0xff]
        %v2971 = vld [vmem:[%s1154 + $0x88] sm:$0xff]
        %v2972 = vld [vmem:[%s1154 + $0x90] sm:$0xff]
        %v2973 = vld [vmem:[%s1154 + $0x98] sm:$0xff]
        %v2974 = vld [vmem:[%s1154 + $0xa0] sm:$0xff]
        %v2975 = vld [vmem:[%s1154 + $0xa8] sm:$0xff]
        %v2976 = vld [vmem:[%s1154 + $0xb0] sm:$0xff]
        %v2977 = vld [vmem:[%s1154 + $0xb8] sm:$0xff]
        %v2978 = vld [vmem:[%s1154 + $0xc0] sm:$0xff]
        %v2979 = vld [vmem:[%s1154 + $0xc8] sm:$0xff]
        %v2980 = vld [vmem:[%s1154 + $0xd0] sm:$0xff]
        %v2981 = vld [vmem:[%s1154 + $0xd8] sm:$0xff]
        %v2982 = vld [vmem:[%s1154 + $0xe0] sm:$0xff]
        %v2983 = vld [vmem:[%s1154 + $0xe8] sm:$0xff]
        %v2984 = vld [vmem:[%s1154 + $0xf0] sm:$0xff]
        %v2985 = vld [vmem:[%s1154 + $0xf8] sm:$0xff]
        %v2986 = vpack.c.bf16 %v2862, %v2862
        %v2987 = vpack.c.bf16 %v2903, %v2903
        %v2988 = vpack.c.bf16 %v2944, %v2944
        %2989 = vmatprep.subr.bf16.mxu0 0
        %2990 = vmatpush1.bf16.xpose.msra.mxu0 %v2987
        %2991 = vmatprep.subr.bf16.mxu0 0
        %2992 = vmatpush1.bf16.xpose.msra.mxu0 0
        %2993 = vmatprep.subr.bf16.mxu0 0
        %2994 = vmatpush1.bf16.xpose.msra.mxu0 0
        %2995 = vmatprep.subr.bf16.mxu0 0
        %2996 = vmatpush1.bf16.xpose.msra.mxu0 0
        %2997 = vmatprep.subr.bf16.mxu0 0
        %2998 = vmatpush1.bf16.xpose.msra.mxu0 0
        %2999 = vmatprep.subr.bf16.mxu0 0
        %3000 = vmatpush1.bf16.xpose.msra.mxu0 0
        %3001 = vmatprep.subr.bf16.mxu0 0
        %3002 = vmatpush1.bf16.xpose.msra.mxu0 0
        %3003 = vmatprep.subr.bf16.mxu0 0
        %3004 = vmatpush1.bf16.xpose.msra.mxu0 0
        %3005 = vmatprep.subr.bf16.mxu0 0
        %3006 = vmatpush1.bf16.xpose.msra.mxu0 0
        %3007 = vmatprep.subr.bf16.mxu0 0
        %3008 = vmatpush1.bf16.xpose.msra.mxu0 0
        %3009 = vmatprep.subr.bf16.mxu0 0
        %3010 = vmatpush1.bf16.xpose.msra.mxu0 0
        %3011 = vmatprep.subr.bf16.mxu0 0
        %3012 = vmatpush1.bf16.xpose.msra.mxu0 0
        %3013 = vmatprep.subr.bf16.mxu0 0
        %3014 = vmatpush1.bf16.xpose.msra.mxu0 0
        %3015 = vmatprep.subr.bf16.mxu0 0
        %3016 = vmatpush1.bf16.xpose.msra.mxu0 0
        %3017 = vmatprep.subr.bf16.mxu0 0
        %3018 = vmatpush1.bf16.xpose.msra.mxu0 0
        %3019 = vmatprep.subr.bf16.mxu0 0
        %3020 = vmatpush1.bf16.xpose.msra.mxu0 0
        %3021 = vmatprep.mubr.bf16.mxu0 0
        %3022 = vmatmul.mubr.bf16.gmra.mrb[0].mxu0 %v2986
        %v3023 = vpop.f32.mrb[0].mxu0
        %v3024 = vadd.f32 0.0, %v3023
        %v3025 = vpop.f32.mrb[0].mxu0
        %v3026 = vpop.f32.mrb[0].mxu0
        %v3027 = vpop.f32.mrb[0].mxu0
        %3028 = vdwg.mxu0
        %v3029 = vmul.f32 %v3024, 0.088388346
        %v3030 = vadd.f32 %v3029, %v2953
        %vm3031 = vcmask 64512
        %v3032 = vsel %vm3031, %v3030, -inf
        %3033 = vmax.xlane.f32.xlu0 %v3032
        %v3034 = vpop.xlane.xlu0 %3033
        %v3035 = vsub.f32 %v3030, %v3034
        %v3036 = vmul.f32 %v3035, 1.442695
        %v3037 = vpow.pop %v3036
        %v3038 = vsel %vm3031, %v3037, 0.0
        %3039 = vadd.xlane.f32.xlu0 %v3038
        %v3040 = vpop.xlane.xlu0 %3039
        %v3041 = vrcp.pop %v3040
        %v3042 = vmul.f32 %v3037, %v3041
        %v3043 = vpack.c.bf16 %v3042, %v3042
        %v3045 = vsel %vm3031, %v3043, 0
        %vm3047 = vcmask 1043456
        %v3049 = vsel %vm3047, %v2988, 0
        %3051 = vmatprep.subr.bf16.mxu0 0
        %3052 = vmatpush1.bf16.msra.mxu0 %v3049
        %3053 = vmatprep.subr.bf16.mxu0 0
        %3054 = vmatpush1.bf16.msra.mxu0 0
        %3055 = vmatprep.subr.bf16.mxu0 0
        %3056 = vmatpush1.bf16.msra.mxu0 0
        %3057 = vmatprep.subr.bf16.mxu0 0
        %3058 = vmatpush1.bf16.msra.mxu0 0
        %3059 = vmatprep.subr.bf16.mxu0 0
        %3060 = vmatpush1.bf16.msra.mxu0 0
        %3061 = vmatprep.subr.bf16.mxu0 0
        %3062 = vmatpush1.bf16.msra.mxu0 0
        %3063 = vmatprep.subr.bf16.mxu0 0
        %3064 = vmatpush1.bf16.msra.mxu0 0
        %3065 = vmatprep.subr.bf16.mxu0 0
        %3066 = vmatpush1.bf16.msra.mxu0 0
        %3067 = vmatprep.subr.bf16.mxu0 0
        %3068 = vmatpush1.bf16.msra.mxu0 0
        %3069 = vmatprep.subr.bf16.mxu0 0
        %3070 = vmatpush1.bf16.msra.mxu0 0
        %3071 = vmatprep.subr.bf16.mxu0 0
        %3072 = vmatpush1.bf16.msra.mxu0 0
        %3073 = vmatprep.subr.bf16.mxu0 0
        %3074 = vmatpush1.bf16.msra.mxu0 0
        %3075 = vmatprep.subr.bf16.mxu0 0
        %3076 = vmatpush1.bf16.msra.mxu0 0
        %3077 = vmatprep.subr.bf16.mxu0 0
        %3078 = vmatpush1.bf16.msra.mxu0 0
        %3079 = vmatprep.subr.bf16.mxu0 0
        %3080 = vmatpush1.bf16.msra.mxu0 0
        %3081 = vmatprep.subr.bf16.mxu0 0
        %3082 = vmatpush1.bf16.msra.mxu0 0
        %3083 = vmatprep.mubr.bf16.mxu0 0
        %3084 = vmatmul.mubr.bf16.gmra.mrb[0].mxu0 %v3045
        %v3085 = vpop.f32.mrb[0].mxu0
        %v3086 = vadd.f32 0.0, %v3085
        %v3087 = vpop.f32.mrb[0].mxu0
        %v3088 = vpop.f32.mrb[0].mxu0
        %v3089 = vpop.f32.mrb[0].mxu0
        %3090 = vdwg.mxu0
        %v3091 = vpack.c.bf16 %v3086, %v3086
        %v3092 = vpack.c.bf16 %v2864, %v2864
        %v3093 = vpack.c.bf16 %v2905, %v2905
        %v3094 = vpack.c.bf16 %v2946, %v2946
        %3095 = vmatprep.subr.bf16.mxu0 0
        %3096 = vmatpush1.bf16.xpose.msra.mxu0 %v3093
        %3097 = vmatprep.subr.bf16.mxu0 0
        %3098 = vmatpush1.bf16.xpose.msra.mxu0 0
        %3099 = vmatprep.subr.bf16.mxu0 0
        %3100 = vmatpush1.bf16.xpose.msra.mxu0 0
        %3101 = vmatprep.subr.bf16.mxu0 0
        %3102 = vmatpush1.bf16.xpose.msra.mxu0 0
        %3103 = vmatprep.subr.bf16.mxu0 0
        %3104 = vmatpush1.bf16.xpose.msra.mxu0 0
        %3105 = vmatprep.subr.bf16.mxu0 0
        %3106 = vmatpush1.bf16.xpose.msra.mxu0 0
        %3107 = vmatprep.subr.bf16.mxu0 0
        %3108 = vmatpush1.bf16.xpose.msra.mxu0 0
        %3109 = vmatprep.subr.bf16.mxu0 0
        %3110 = vmatpush1.bf16.xpose.msra.mxu0 0
        %3111 = vmatprep.subr.bf16.mxu0 0
        %3112 = vmatpush1.bf16.xpose.msra.mxu0 0
        %3113 = vmatprep.subr.bf16.mxu0 0
        %3114 = vmatpush1.bf16.xpose.msra.mxu0 0
        %3115 = vmatprep.subr.bf16.mxu0 0
        %3116 = vmatpush1.bf16.xpose.msra.mxu0 0
        %3117 = vmatprep.subr.bf16.mxu0 0
        %3118 = vmatpush1.bf16.xpose.msra.mxu0 0
        %3119 = vmatprep.subr.bf16.mxu0 0
        %3120 = vmatpush1.bf16.xpose.msra.mxu0 0
        %3121 = vmatprep.subr.bf16.mxu0 0
        %3122 = vmatpush1.bf16.xpose.msra.mxu0 0
        %3123 = vmatprep.subr.bf16.mxu0 0
        %3124 = vmatpush1.bf16.xpose.msra.mxu0 0
        %3125 = vmatprep.subr.bf16.mxu0 0
        %3126 = vmatpush1.bf16.xpose.msra.mxu0 0
        %3127 = vmatprep.mubr.bf16.mxu0 0
        %3128 = vmatmul.mubr.bf16.gmra.mrb[0].mxu0 %v3092
        %v3129 = vpop.f32.mrb[0].mxu0
        %v3130 = vadd.f32 0.0, %v3129
        %v3131 = vpop.f32.mrb[0].mxu0
        %v3132 = vpop.f32.mrb[0].mxu0
        %v3133 = vpop.f32.mrb[0].mxu0
        %3134 = vdwg.mxu0
        %v3135 = vmul.f32 %v3130, 0.088388346
        %v3136 = vadd.f32 %v3135, %v2953
        %v3137 = vsel %vm3031, %v3136, -inf
        %3138 = vmax.xlane.f32.xlu0 %v3137
        %v3139 = vpop.xlane.xlu0 %3138
        %v3140 = vsub.f32 %v3136, %v3139
        %v3141 = vmul.f32 %v3140, 1.442695
        %v3142 = vpow.pop %v3141
        %v3143 = vsel %vm3031, %v3142, 0.0
        %3144 = vadd.xlane.f32.xlu0 %v3143
        %v3145 = vpop.xlane.xlu0 %3144
        %v3146 = vrcp.pop %v3145
        %v3147 = vmul.f32 %v3142, %v3146
        %v3148 = vpack.c.bf16 %v3147, %v3147
        %v3150 = vsel %vm3031, %v3148, 0
        %v3153 = vsel %vm3047, %v3094, 0
        %3155 = vmatprep.subr.bf16.mxu0 0
        %3156 = vmatpush1.bf16.msra.mxu0 %v3153
        %3157 = vmatprep.subr.bf16.mxu0 0
        %3158 = vmatpush1.bf16.msra.mxu0 0
        %3159 = vmatprep.subr.bf16.mxu0 0
        %3160 = vmatpush1.bf16.msra.mxu0 0
        %3161 = vmatprep.subr.bf16.mxu0 0
        %3162 = vmatpush1.bf16.msra.mxu0 0
        %3163 = vmatprep.subr.bf16.mxu0 0
        %3164 = vmatpush1.bf16.msra.mxu0 0
        %3165 = vmatprep.subr.bf16.mxu0 0
        %3166 = vmatpush1.bf16.msra.mxu0 0
        %3167 = vmatprep.subr.bf16.mxu0 0
        %3168 = vmatpush1.bf16.msra.mxu0 0
        %3169 = vmatprep.subr.bf16.mxu0 0
        %3170 = vmatpush1.bf16.msra.mxu0 0
        %3171 = vmatprep.subr.bf16.mxu0 0
        %3172 = vmatpush1.bf16.msra.mxu0 0
        %3173 = vmatprep.subr.bf16.mxu0 0
        %3174 = vmatpush1.bf16.msra.mxu0 0
        %3175 = vmatprep.subr.bf16.mxu0 0
        %3176 = vmatpush1.bf16.msra.mxu0 0
        %3177 = vmatprep.subr.bf16.mxu0 0
        %3178 = vmatpush1.bf16.msra.mxu0 0
        %3179 = vmatprep.subr.bf16.mxu0 0
        %3180 = vmatpush1.bf16.msra.mxu0 0
        %3181 = vmatprep.subr.bf16.mxu0 0
        %3182 = vmatpush1.bf16.msra.mxu0 0
        %3183 = vmatprep.subr.bf16.mxu0 0
        %3184 = vmatpush1.bf16.msra.mxu0 0
        %3185 = vmatprep.subr.bf16.mxu0 0
        %3186 = vmatpush1.bf16.msra.mxu0 0
        %3187 = vmatprep.mubr.bf16.mxu0 0
        %3188 = vmatmul.mubr.bf16.gmra.mrb[0].mxu0 %v3150
        %v3189 = vpop.f32.mrb[0].mxu0
        %v3190 = vadd.f32 0.0, %v3189
        %v3191 = vpop.f32.mrb[0].mxu0
        %v3192 = vpop.f32.mrb[0].mxu0
        %v3193 = vpop.f32.mrb[0].mxu0
        %3194 = vdwg.mxu0
        %v3195 = vpack.c.bf16 %v3190, %v3190
        %v3212 = vunpack.c.l.b16 %v2970
        %v3213 = vunpack.c.h.b16 %v2970
        %v3214 = vunpack.c.l.b16 %v2971
        %v3215 = vunpack.c.h.b16 %v2971
        %v3216 = vunpack.c.l.b16 %v2972
        %v3217 = vunpack.c.h.b16 %v2972
        %v3218 = vunpack.c.l.b16 %v2973
        %v3219 = vunpack.c.h.b16 %v2973
        %v3220 = vunpack.c.l.b16 %v2974
        %v3221 = vunpack.c.h.b16 %v2974
        %v3222 = vunpack.c.l.b16 %v2975
        %v3223 = vunpack.c.h.b16 %v2975
        %v3224 = vunpack.c.l.b16 %v2976
        %v3225 = vunpack.c.h.b16 %v2976
        %v3226 = vunpack.c.l.b16 %v2977
        %v3227 = vunpack.c.h.b16 %v2977
        %v3228 = vunpack.c.l.b16 %v2978
        %v3229 = vunpack.c.h.b16 %v2978
        %v3230 = vunpack.c.l.b16 %v2979
        %v3231 = vunpack.c.h.b16 %v2979
        %v3232 = vunpack.c.l.b16 %v2980
        %v3233 = vunpack.c.h.b16 %v2980
        %v3234 = vunpack.c.l.b16 %v2981
        %v3235 = vunpack.c.h.b16 %v2981
        %v3236 = vunpack.c.l.b16 %v2982
        %v3237 = vunpack.c.h.b16 %v2982
        %v3238 = vunpack.c.l.b16 %v2983
        %v3239 = vunpack.c.h.b16 %v2983
        %v3240 = vunpack.c.l.b16 %v2984
        %v3241 = vunpack.c.h.b16 %v2984
        %v3242 = vunpack.c.l.b16 %v2985
        %v3243 = vunpack.c.h.b16 %v2985
        %v3244 = vpack.c.b16 %v3214, %v3212
        %v3245 = vpack.c.b16 %v3215, %v3213
        %v3246 = vpack.c.b16 %v3218, %v3216
        %v3247 = vpack.c.b16 %v3219, %v3217
        %v3248 = vpack.c.b16 %v3222, %v3220
        %v3249 = vpack.c.b16 %v3223, %v3221
        %v3250 = vpack.c.b16 %v3226, %v3224
        %v3251 = vpack.c.b16 %v3227, %v3225
        %v3252 = vpack.c.b16 %v3230, %v3228
        %v3253 = vpack.c.b16 %v3231, %v3229
        %v3254 = vpack.c.b16 %v3234, %v3232
        %v3255 = vpack.c.b16 %v3235, %v3233
        %v3256 = vpack.c.b16 %v3238, %v3236
        %v3257 = vpack.c.b16 %v3239, %v3237
        %v3258 = vpack.c.b16 %v3242, %v3240
        %v3259 = vpack.c.b16 %v3243, %v3241
        %3276 = vmatprep.subr.bf16.mxu0 %v3245
        %3277 = vmatpush1.bf16.msra.mxu0 %v3244
        %3278 = vmatprep.subr.bf16.mxu0 %v3247
        %3279 = vmatpush1.bf16.msra.mxu0 %v3246
        %3280 = vmatprep.subr.bf16.mxu0 %v3249
        %3281 = vmatpush1.bf16.msra.mxu0 %v3248
        %3282 = vmatprep.subr.bf16.mxu0 %v3251
        %3283 = vmatpush1.bf16.msra.mxu0 %v3250
        %3284 = vmatprep.subr.bf16.mxu0 %v3253
        %3285 = vmatpush1.bf16.msra.mxu0 %v3252
        %3286 = vmatprep.subr.bf16.mxu0 %v3255
        %3287 = vmatpush1.bf16.msra.mxu0 %v3254
        %3288 = vmatprep.subr.bf16.mxu0 %v3257
        %3289 = vmatpush1.bf16.msra.mxu0 %v3256
        %3290 = vmatprep.subr.bf16.mxu0 %v3259
        %3291 = vmatpush1.bf16.msra.mxu0 %v3258
        %3292 = vmatprep.subr.bf16.mxu0 0
        %3293 = vmatpush1.bf16.msra.mxu0 0
        %3294 = vmatprep.subr.bf16.mxu0 0
        %3295 = vmatpush1.bf16.msra.mxu0 0
        %3296 = vmatprep.subr.bf16.mxu0 0
        %3297 = vmatpush1.bf16.msra.mxu0 0
        %3298 = vmatprep.subr.bf16.mxu0 0
        %3299 = vmatpush1.bf16.msra.mxu0 0
        %3300 = vmatprep.subr.bf16.mxu0 0
        %3301 = vmatpush1.bf16.msra.mxu0 0
        %3302 = vmatprep.subr.bf16.mxu0 0
        %3303 = vmatpush1.bf16.msra.mxu0 0
        %3304 = vmatprep.subr.bf16.mxu0 0
        %3305 = vmatpush1.bf16.msra.mxu0 0
        %3306 = vmatprep.subr.bf16.mxu0 0
        %3307 = vmatpush1.bf16.msra.mxu0 0
        %3308 = vmatprep.mubr.bf16.mxu0 0
        %3309 = vmatmul.mubr.bf16.gmra.mrb[0].mxu0 %v3195
        %v3310 = vpop.f32.mrb[0].mxu0
        %v3311 = vadd.f32 0.0, %v3310
        %v3312 = vpop.f32.mrb[0].mxu0
        %v3313 = vadd.f32 0.0, %v3312
        %v3314 = vpop.f32.mrb[0].mxu0
        %v3315 = vpop.f32.mrb[0].mxu0
        %3316 = vdwg.mxu0
        %v3333 = vunpack.c.l.b16 %v2954
        %v3334 = vunpack.c.h.b16 %v2954
        %v3335 = vunpack.c.l.b16 %v2955
        %v3336 = vunpack.c.h.b16 %v2955
        %v3337 = vunpack.c.l.b16 %v2956
        %v3338 = vunpack.c.h.b16 %v2956
        %v3339 = vunpack.c.l.b16 %v2957
        %v3340 = vunpack.c.h.b16 %v2957
        %v3341 = vunpack.c.l.b16 %v2958
        %v3342 = vunpack.c.h.b16 %v2958
        %v3343 = vunpack.c.l.b16 %v2959
        %v3344 = vunpack.c.h.b16 %v2959
        %v3345 = vunpack.c.l.b16 %v2960
        %v3346 = vunpack.c.h.b16 %v2960
        %v3347 = vunpack.c.l.b16 %v2961
        %v3348 = vunpack.c.h.b16 %v2961
        %v3349 = vunpack.c.l.b16 %v2962
        %v3350 = vunpack.c.h.b16 %v2962
        %v3351 = vunpack.c.l.b16 %v2963
        %v3352 = vunpack.c.h.b16 %v2963
        %v3353 = vunpack.c.l.b16 %v2964
        %v3354 = vunpack.c.h.b16 %v2964
        %v3355 = vunpack.c.l.b16 %v2965
        %v3356 = vunpack.c.h.b16 %v2965
        %v3357 = vunpack.c.l.b16 %v2966
        %v3358 = vunpack.c.h.b16 %v2966
        %v3359 = vunpack.c.l.b16 %v2967
        %v3360 = vunpack.c.h.b16 %v2967
        %v3361 = vunpack.c.l.b16 %v2968
        %v3362 = vunpack.c.h.b16 %v2968
        %v3363 = vunpack.c.l.b16 %v2969
        %v3364 = vunpack.c.h.b16 %v2969
        %v3365 = vpack.c.b16 %v3335, %v3333
        %v3366 = vpack.c.b16 %v3336, %v3334
        %v3367 = vpack.c.b16 %v3339, %v3337
        %v3368 = vpack.c.b16 %v3340, %v3338
        %v3369 = vpack.c.b16 %v3343, %v3341
        %v3370 = vpack.c.b16 %v3344, %v3342
        %v3371 = vpack.c.b16 %v3347, %v3345
        %v3372 = vpack.c.b16 %v3348, %v3346
        %v3373 = vpack.c.b16 %v3351, %v3349
        %v3374 = vpack.c.b16 %v3352, %v3350
        %v3375 = vpack.c.b16 %v3355, %v3353
        %v3376 = vpack.c.b16 %v3356, %v3354
        %v3377 = vpack.c.b16 %v3359, %v3357
        %v3378 = vpack.c.b16 %v3360, %v3358
        %v3379 = vpack.c.b16 %v3363, %v3361
        %v3380 = vpack.c.b16 %v3364, %v3362
        %3397 = vmatprep.subr.bf16.mxu0 %v3366
        %3398 = vmatpush1.bf16.msra.mxu0 %v3365
        %3399 = vmatprep.subr.bf16.mxu0 %v3368
        %3400 = vmatpush1.bf16.msra.mxu0 %v3367
        %3401 = vmatprep.subr.bf16.mxu0 %v3370
        %3402 = vmatpush1.bf16.msra.mxu0 %v3369
        %3403 = vmatprep.subr.bf16.mxu0 %v3372
        %3404 = vmatpush1.bf16.msra.mxu0 %v3371
        %3405 = vmatprep.subr.bf16.mxu0 %v3374
        %3406 = vmatpush1.bf16.msra.mxu0 %v3373
        %3407 = vmatprep.subr.bf16.mxu0 %v3376
        %3408 = vmatpush1.bf16.msra.mxu0 %v3375
        %3409 = vmatprep.subr.bf16.mxu0 %v3378
        %3410 = vmatpush1.bf16.msra.mxu0 %v3377
        %3411 = vmatprep.subr.bf16.mxu0 %v3380
        %3412 = vmatpush1.bf16.msra.mxu0 %v3379
        %3413 = vmatprep.subr.bf16.mxu0 0
        %3414 = vmatpush1.bf16.msra.mxu0 0
        %3415 = vmatprep.subr.bf16.mxu0 0
        %3416 = vmatpush1.bf16.msra.mxu0 0
        %3417 = vmatprep.subr.bf16.mxu0 0
        %3418 = vmatpush1.bf16.msra.mxu0 0
        %3419 = vmatprep.subr.bf16.mxu0 0
        %3420 = vmatpush1.bf16.msra.mxu0 0
        %3421 = vmatprep.subr.bf16.mxu0 0
        %3422 = vmatpush1.bf16.msra.mxu0 0
        %3423 = vmatprep.subr.bf16.mxu0 0
        %3424 = vmatpush1.bf16.msra.mxu0 0
        %3425 = vmatprep.subr.bf16.mxu0 0
        %3426 = vmatpush1.bf16.msra.mxu0 0
        %3427 = vmatprep.subr.bf16.mxu0 0
        %3428 = vmatpush1.bf16.msra.mxu0 0
        %3429 = vmatprep.mubr.bf16.mxu0 0
        %3430 = vmatmul.mubr.bf16.gmra.mrb[0].mxu0 %v3091
        %v3431 = vpop.f32.mrb[0].mxu0
        %v3432 = vadd.f32 %v3311, %v3431
        %v3433 = vpop.f32.mrb[0].mxu0
        %v3434 = vadd.f32 %v3313, %v3433
        %v3435 = vpop.f32.mrb[0].mxu0
        %v3436 = vpop.f32.mrb[0].mxu0
        %3437 = vdwg.mxu0
        %v3438 = vld [vmem:[%s1172] sm:$0x3]
        %v3439 = vld [vmem:[%s1163] sm:$0x3]
        %v3441 = vlaneseq
        %v3442 = vshrl.u32 %v3441, 7
        %v3443 = vsub.s32 0, %v3442
        %v3444 = vrot.slane %v3439, %v3443
        %v3445 = vlaneseq
        %v3446 = vshrl.u32 %v3445, 7
        %v3447 = vsub.s32 1, %v3446
        %v3448 = vrot.slane %v3439, %v3447
        %v3451 = vadd.f32 %v3432, %v3444
        %v3452 = vadd.f32 %v3434, %v3448
        %v3454 = vlaneseq
        %v3455 = vshrl.u32 %v3454, 7
        %v3456 = vsub.s32 0, %v3455
        %v3457 = vrot.slane %v3438, %v3456
        %v3458 = vlaneseq
        %v3459 = vshrl.u32 %v3458, 7
        %v3460 = vsub.s32 1, %v3459
        %v3461 = vrot.slane %v3438, %v3460
        %v3464 = vmul.f32 %v3457, %v3451
        %v3465 = vmul.f32 %v3461, %v3452
        %v3466 = vadd.f32 %v2170, %v3464
        %v3467 = vadd.f32 %v2171, %v3465
        %v3468 = vld [vmem:[%s1181] sm:$0x3]
        %v3469 = vld [vmem:[%s1190] sm:$0x3]
        %v3470 = vadd.f32 %v3466, %v3467
        %3471 = vadd.xlane.f32.xlu0 %v3470
        %v3472 = vpop.xlane.xlu0 %3471
        %v3473 = vmul.f32 %v3472, %v2177
        %v3474 = vsub.f32 %v3466, %v3473
        %v3475 = vsub.f32 %v3467, %v3473
        %v3476 = vmul.f32 %v3474, %v3474
        %v3477 = vmul.f32 %v3475, %v3475
        %v3478 = vadd.f32 %v3476, %v3477
        %3479 = vadd.xlane.f32.xlu0 %v3478
        %v3480 = vpop.xlane.xlu0 %3479
        %v3481 = vmul.f32 %v3480, %v2177
        %v3482 = vadd.f32 %v3481, 1e-06
        %v3483 = vrsqrt.pop %v3482
        %v3484 = vmul.f32 %v3474, %v3483
        %v3485 = vmul.f32 %v3475, %v3483
        %v3487 = vlaneseq
        %v3488 = vshrl.u32 %v3487, 7
        %v3489 = vsub.s32 0, %v3488
        %v3490 = vrot.slane %v3468, %v3489
        %v3491 = vlaneseq
        %v3492 = vshrl.u32 %v3491, 7
        %v3493 = vsub.s32 1, %v3492
        %v3494 = vrot.slane %v3468, %v3493
        %v3497 = vmul.f32 %v3484, %v3490
        %v3498 = vmul.f32 %v3485, %v3494
        %v3500 = vlaneseq
        %v3501 = vshrl.u32 %v3500, 7
        %v3502 = vsub.s32 0, %v3501
        %v3503 = vrot.slane %v3469, %v3502
        %v3504 = vlaneseq
        %v3505 = vshrl.u32 %v3504, 7
        %v3506 = vsub.s32 1, %v3505
        %v3507 = vrot.slane %v3469, %v3506
        %v3510 = vadd.f32 %v3497, %v3503
        %v3511 = vadd.f32 %v3498, %v3507
        %v3512 = vpack.c.bf16 %v3510, %v3510
        %v3513 = vpack.c.bf16 %v3511, %v3511
        %v3514 = vld [vmem:[%s1199] sm:$0xff]
        %v3515 = vld [vmem:[%s1199 + $0x8] sm:$0xff]
        %v3516 = vld [vmem:[%s1199 + $0x10] sm:$0xff]
        %v3517 = vld [vmem:[%s1199 + $0x18] sm:$0xff]
        %v3518 = vld [vmem:[%s1199 + $0x20] sm:$0xff]
        %v3519 = vld [vmem:[%s1199 + $0x28] sm:$0xff]
        %v3520 = vld [vmem:[%s1199 + $0x30] sm:$0xff]
        %v3521 = vld [vmem:[%s1199 + $0x38] sm:$0xff]
        %v3522 = vld [vmem:[%s1199 + $0x40] sm:$0xff]
        %v3523 = vld [vmem:[%s1199 + $0x48] sm:$0xff]
        %v3524 = vld [vmem:[%s1199 + $0x50] sm:$0xff]
        %v3525 = vld [vmem:[%s1199 + $0x58] sm:$0xff]
        %v3526 = vld [vmem:[%s1199 + $0x60] sm:$0xff]
        %v3527 = vld [vmem:[%s1199 + $0x68] sm:$0xff]
        %v3528 = vld [vmem:[%s1199 + $0x70] sm:$0xff]
        %v3529 = vld [vmem:[%s1199 + $0x78] sm:$0xff]
        %v3530 = vld [vmem:[%s1199 + $0x80] sm:$0xff]
        %v3531 = vld [vmem:[%s1199 + $0x88] sm:$0xff]
        %v3532 = vld [vmem:[%s1199 + $0x90] sm:$0xff]
        %v3533 = vld [vmem:[%s1199 + $0x98] sm:$0xff]
        %v3534 = vld [vmem:[%s1199 + $0xa0] sm:$0xff]
        %v3535 = vld [vmem:[%s1199 + $0xa8] sm:$0xff]
        %v3536 = vld [vmem:[%s1199 + $0xb0] sm:$0xff]
        %v3537 = vld [vmem:[%s1199 + $0xb8] sm:$0xff]
        %v3538 = vld [vmem:[%s1199 + $0xc0] sm:$0xff]
        %v3539 = vld [vmem:[%s1199 + $0xc8] sm:$0xff]
        %v3540 = vld [vmem:[%s1199 + $0xd0] sm:$0xff]
        %v3541 = vld [vmem:[%s1199 + $0xd8] sm:$0xff]
        %v3542 = vld [vmem:[%s1199 + $0xe0] sm:$0xff]
        %v3543 = vld [vmem:[%s1199 + $0xe8] sm:$0xff]
        %v3544 = vld [vmem:[%s1199 + $0xf0] sm:$0xff]
        %v3545 = vld [vmem:[%s1199 + $0xf8] sm:$0xff]
        %v3546 = vld [vmem:[%s1199 + $0x100] sm:$0xff]
        %v3547 = vld [vmem:[%s1199 + $0x108] sm:$0xff]
        %v3548 = vld [vmem:[%s1199 + $0x110] sm:$0xff]
        %v3549 = vld [vmem:[%s1199 + $0x118] sm:$0xff]
        %v3550 = vld [vmem:[%s1199 + $0x120] sm:$0xff]
        %v3551 = vld [vmem:[%s1199 + $0x128] sm:$0xff]
        %v3552 = vld [vmem:[%s1199 + $0x130] sm:$0xff]
        %v3553 = vld [vmem:[%s1199 + $0x138] sm:$0xff]
        %v3554 = vld [vmem:[%s1199 + $0x140] sm:$0xff]
        %v3555 = vld [vmem:[%s1199 + $0x148] sm:$0xff]
        %v3556 = vld [vmem:[%s1199 + $0x150] sm:$0xff]
        %v3557 = vld [vmem:[%s1199 + $0x158] sm:$0xff]
        %v3558 = vld [vmem:[%s1199 + $0x160] sm:$0xff]
        %v3559 = vld [vmem:[%s1199 + $0x168] sm:$0xff]
        %v3560 = vld [vmem:[%s1199 + $0x170] sm:$0xff]
        %v3561 = vld [vmem:[%s1199 + $0x178] sm:$0xff]
        %v3562 = vld [vmem:[%s1199 + $0x180] sm:$0xff]
        %v3563 = vld [vmem:[%s1199 + $0x188] sm:$0xff]
        %v3564 = vld [vmem:[%s1199 + $0x190] sm:$0xff]
        %v3565 = vld [vmem:[%s1199 + $0x198] sm:$0xff]
        %v3566 = vld [vmem:[%s1199 + $0x1a0] sm:$0xff]
        %v3567 = vld [vmem:[%s1199 + $0x1a8] sm:$0xff]
        %v3568 = vld [vmem:[%s1199 + $0x1b0] sm:$0xff]
        %v3569 = vld [vmem:[%s1199 + $0x1b8] sm:$0xff]
        %v3570 = vld [vmem:[%s1199 + $0x1c0] sm:$0xff]
        %v3571 = vld [vmem:[%s1199 + $0x1c8] sm:$0xff]
        %v3572 = vld [vmem:[%s1199 + $0x1d0] sm:$0xff]
        %v3573 = vld [vmem:[%s1199 + $0x1d8] sm:$0xff]
        %v3574 = vld [vmem:[%s1199 + $0x1e0] sm:$0xff]
        %v3575 = vld [vmem:[%s1199 + $0x1e8] sm:$0xff]
        %v3576 = vld [vmem:[%s1199 + $0x1f0] sm:$0xff]
        %v3577 = vld [vmem:[%s1199 + $0x1f8] sm:$0xff]
        %v3578 = vld [vmem:[%s1199 + $0x200] sm:$0xff]
        %v3579 = vld [vmem:[%s1199 + $0x208] sm:$0xff]
        %v3580 = vld [vmem:[%s1199 + $0x210] sm:$0xff]
        %v3581 = vld [vmem:[%s1199 + $0x218] sm:$0xff]
        %v3582 = vld [vmem:[%s1199 + $0x220] sm:$0xff]
        %v3583 = vld [vmem:[%s1199 + $0x228] sm:$0xff]
        %v3584 = vld [vmem:[%s1199 + $0x230] sm:$0xff]
        %v3585 = vld [vmem:[%s1199 + $0x238] sm:$0xff]
        %v3586 = vld [vmem:[%s1199 + $0x240] sm:$0xff]
        %v3587 = vld [vmem:[%s1199 + $0x248] sm:$0xff]
        %v3588 = vld [vmem:[%s1199 + $0x250] sm:$0xff]
        %v3589 = vld [vmem:[%s1199 + $0x258] sm:$0xff]
        %v3590 = vld [vmem:[%s1199 + $0x260] sm:$0xff]
        %v3591 = vld [vmem:[%s1199 + $0x268] sm:$0xff]
        %v3592 = vld [vmem:[%s1199 + $0x270] sm:$0xff]
        %v3593 = vld [vmem:[%s1199 + $0x278] sm:$0xff]
        %v3594 = vld [vmem:[%s1199 + $0x280] sm:$0xff]
        %v3595 = vld [vmem:[%s1199 + $0x288] sm:$0xff]
        %v3596 = vld [vmem:[%s1199 + $0x290] sm:$0xff]
        %v3597 = vld [vmem:[%s1199 + $0x298] sm:$0xff]
        %v3598 = vld [vmem:[%s1199 + $0x2a0] sm:$0xff]
        %v3599 = vld [vmem:[%s1199 + $0x2a8] sm:$0xff]
        %v3600 = vld [vmem:[%s1199 + $0x2b0] sm:$0xff]
        %v3601 = vld [vmem:[%s1199 + $0x2b8] sm:$0xff]
        %v3602 = vld [vmem:[%s1199 + $0x2c0] sm:$0xff]
        %v3603 = vld [vmem:[%s1199 + $0x2c8] sm:$0xff]
        %v3604 = vld [vmem:[%s1199 + $0x2d0] sm:$0xff]
        %v3605 = vld [vmem:[%s1199 + $0x2d8] sm:$0xff]
        %v3606 = vld [vmem:[%s1199 + $0x2e0] sm:$0xff]
        %v3607 = vld [vmem:[%s1199 + $0x2e8] sm:$0xff]
        %v3608 = vld [vmem:[%s1199 + $0x2f0] sm:$0xff]
        %v3609 = vld [vmem:[%s1199 + $0x2f8] sm:$0xff]
        %v3610 = vld [vmem:[%s1199 + $0x300] sm:$0xff]
        %v3611 = vld [vmem:[%s1199 + $0x308] sm:$0xff]
        %v3612 = vld [vmem:[%s1199 + $0x310] sm:$0xff]
        %v3613 = vld [vmem:[%s1199 + $0x318] sm:$0xff]
        %v3614 = vld [vmem:[%s1199 + $0x320] sm:$0xff]
        %v3615 = vld [vmem:[%s1199 + $0x328] sm:$0xff]
        %v3616 = vld [vmem:[%s1199 + $0x330] sm:$0xff]
        %v3617 = vld [vmem:[%s1199 + $0x338] sm:$0xff]
        %v3618 = vld [vmem:[%s1199 + $0x340] sm:$0xff]
        %v3619 = vld [vmem:[%s1199 + $0x348] sm:$0xff]
        %v3620 = vld [vmem:[%s1199 + $0x350] sm:$0xff]
        %v3621 = vld [vmem:[%s1199 + $0x358] sm:$0xff]
        %v3622 = vld [vmem:[%s1199 + $0x360] sm:$0xff]
        %v3623 = vld [vmem:[%s1199 + $0x368] sm:$0xff]
        %v3624 = vld [vmem:[%s1199 + $0x370] sm:$0xff]
        %v3625 = vld [vmem:[%s1199 + $0x378] sm:$0xff]
        %v3626 = vld [vmem:[%s1199 + $0x380] sm:$0xff]
        %v3627 = vld [vmem:[%s1199 + $0x388] sm:$0xff]
        %v3628 = vld [vmem:[%s1199 + $0x390] sm:$0xff]
        %v3629 = vld [vmem:[%s1199 + $0x398] sm:$0xff]
        %v3630 = vld [vmem:[%s1199 + $0x3a0] sm:$0xff]
        %v3631 = vld [vmem:[%s1199 + $0x3a8] sm:$0xff]
        %v3632 = vld [vmem:[%s1199 + $0x3b0] sm:$0xff]
        %v3633 = vld [vmem:[%s1199 + $0x3b8] sm:$0xff]
        %v3634 = vld [vmem:[%s1199 + $0x3c0] sm:$0xff]
        %v3635 = vld [vmem:[%s1199 + $0x3c8] sm:$0xff]
        %v3636 = vld [vmem:[%s1199 + $0x3d0] sm:$0xff]
        %v3637 = vld [vmem:[%s1199 + $0x3d8] sm:$0xff]
        %v3638 = vld [vmem:[%s1199 + $0x3e0] sm:$0xff]
        %v3639 = vld [vmem:[%s1199 + $0x3e8] sm:$0xff]
        %v3640 = vld [vmem:[%s1199 + $0x3f0] sm:$0xff]
        %v3641 = vld [vmem:[%s1199 + $0x3f8] sm:$0xff]
        %v3642 = vld [vmem:[%s1208] sm:$0xff]
        %v3644 = vlaneseq
        %v3645 = vshrl.u32 %v3644, 7
        %v3646 = vsub.s32 0, %v3645
        %v3647 = vrot.slane %v3642, %v3646
        %v3648 = vlaneseq
        %v3649 = vshrl.u32 %v3648, 7
        %v3650 = vsub.s32 1, %v3649
        %v3651 = vrot.slane %v3642, %v3650
        %v3652 = vlaneseq
        %v3653 = vshrl.u32 %v3652, 7
        %v3654 = vsub.s32 2, %v3653
        %v3655 = vrot.slane %v3642, %v3654
        %v3656 = vlaneseq
        %v3657 = vshrl.u32 %v3656, 7
        %v3658 = vsub.s32 3, %v3657
        %v3659 = vrot.slane %v3642, %v3658
        %v3660 = vlaneseq
        %v3661 = vshrl.u32 %v3660, 7
        %v3662 = vsub.s32 4, %v3661
        %v3663 = vrot.slane %v3642, %v3662
        %v3664 = vlaneseq
        %v3665 = vshrl.u32 %v3664, 7
        %v3666 = vsub.s32 5, %v3665
        %v3667 = vrot.slane %v3642, %v3666
        %v3668 = vlaneseq
        %v3669 = vshrl.u32 %v3668, 7
        %v3670 = vsub.s32 6, %v3669
        %v3671 = vrot.slane %v3642, %v3670
        %v3672 = vlaneseq
        %v3673 = vshrl.u32 %v3672, 7
        %v3674 = vsub.s32 7, %v3673
        %v3675 = vrot.slane %v3642, %v3674
        %v3812 = vunpack.c.l.b16 %v3514
        %v3813 = vunpack.c.h.b16 %v3514
        %v3814 = vunpack.c.l.b16 %v3515
        %v3815 = vunpack.c.h.b16 %v3515
        %v3816 = vunpack.c.l.b16 %v3516
        %v3817 = vunpack.c.h.b16 %v3516
        %v3818 = vunpack.c.l.b16 %v3517
        %v3819 = vunpack.c.h.b16 %v3517
        %v3820 = vunpack.c.l.b16 %v3518
        %v3821 = vunpack.c.h.b16 %v3518
        %v3822 = vunpack.c.l.b16 %v3519
        %v3823 = vunpack.c.h.b16 %v3519
        %v3824 = vunpack.c.l.b16 %v3520
        %v3825 = vunpack.c.h.b16 %v3520
        %v3826 = vunpack.c.l.b16 %v3521
        %v3827 = vunpack.c.h.b16 %v3521
        %v3828 = vunpack.c.l.b16 %v3522
        %v3829 = vunpack.c.h.b16 %v3522
        %v3830 = vunpack.c.l.b16 %v3523
        %v3831 = vunpack.c.h.b16 %v3523
        %v3832 = vunpack.c.l.b16 %v3524
        %v3833 = vunpack.c.h.b16 %v3524
        %v3834 = vunpack.c.l.b16 %v3525
        %v3835 = vunpack.c.h.b16 %v3525
        %v3836 = vunpack.c.l.b16 %v3526
        %v3837 = vunpack.c.h.b16 %v3526
        %v3838 = vunpack.c.l.b16 %v3527
        %v3839 = vunpack.c.h.b16 %v3527
        %v3840 = vunpack.c.l.b16 %v3528
        %v3841 = vunpack.c.h.b16 %v3528
        %v3842 = vunpack.c.l.b16 %v3529
        %v3843 = vunpack.c.h.b16 %v3529
        %v3844 = vunpack.c.l.b16 %v3530
        %v3845 = vunpack.c.h.b16 %v3530
        %v3846 = vunpack.c.l.b16 %v3531
        %v3847 = vunpack.c.h.b16 %v3531
        %v3848 = vunpack.c.l.b16 %v3532
        %v3849 = vunpack.c.h.b16 %v3532
        %v3850 = vunpack.c.l.b16 %v3533
        %v3851 = vunpack.c.h.b16 %v3533
        %v3852 = vunpack.c.l.b16 %v3534
        %v3853 = vunpack.c.h.b16 %v3534
        %v3854 = vunpack.c.l.b16 %v3535
        %v3855 = vunpack.c.h.b16 %v3535
        %v3856 = vunpack.c.l.b16 %v3536
        %v3857 = vunpack.c.h.b16 %v3536
        %v3858 = vunpack.c.l.b16 %v3537
        %v3859 = vunpack.c.h.b16 %v3537
        %v3860 = vunpack.c.l.b16 %v3538
        %v3861 = vunpack.c.h.b16 %v3538
        %v3862 = vunpack.c.l.b16 %v3539
        %v3863 = vunpack.c.h.b16 %v3539
        %v3864 = vunpack.c.l.b16 %v3540
        %v3865 = vunpack.c.h.b16 %v3540
        %v3866 = vunpack.c.l.b16 %v3541
        %v3867 = vunpack.c.h.b16 %v3541
        %v3868 = vunpack.c.l.b16 %v3542
        %v3869 = vunpack.c.h.b16 %v3542
        %v3870 = vunpack.c.l.b16 %v3543
        %v3871 = vunpack.c.h.b16 %v3543
        %v3872 = vunpack.c.l.b16 %v3544
        %v3873 = vunpack.c.h.b16 %v3544
        %v3874 = vunpack.c.l.b16 %v3545
        %v3875 = vunpack.c.h.b16 %v3545
        %v3876 = vunpack.c.l.b16 %v3546
        %v3877 = vunpack.c.h.b16 %v3546
        %v3878 = vunpack.c.l.b16 %v3547
        %v3879 = vunpack.c.h.b16 %v3547
        %v3880 = vunpack.c.l.b16 %v3548
        %v3881 = vunpack.c.h.b16 %v3548
        %v3882 = vunpack.c.l.b16 %v3549
        %v3883 = vunpack.c.h.b16 %v3549
        %v3884 = vunpack.c.l.b16 %v3550
        %v3885 = vunpack.c.h.b16 %v3550
        %v3886 = vunpack.c.l.b16 %v3551
        %v3887 = vunpack.c.h.b16 %v3551
        %v3888 = vunpack.c.l.b16 %v3552
        %v3889 = vunpack.c.h.b16 %v3552
        %v3890 = vunpack.c.l.b16 %v3553
        %v3891 = vunpack.c.h.b16 %v3553
        %v3892 = vunpack.c.l.b16 %v3554
        %v3893 = vunpack.c.h.b16 %v3554
        %v3894 = vunpack.c.l.b16 %v3555
        %v3895 = vunpack.c.h.b16 %v3555
        %v3896 = vunpack.c.l.b16 %v3556
        %v3897 = vunpack.c.h.b16 %v3556
        %v3898 = vunpack.c.l.b16 %v3557
        %v3899 = vunpack.c.h.b16 %v3557
        %v3900 = vunpack.c.l.b16 %v3558
        %v3901 = vunpack.c.h.b16 %v3558
        %v3902 = vunpack.c.l.b16 %v3559
        %v3903 = vunpack.c.h.b16 %v3559
        %v3904 = vunpack.c.l.b16 %v3560
        %v3905 = vunpack.c.h.b16 %v3560
        %v3906 = vunpack.c.l.b16 %v3561
        %v3907 = vunpack.c.h.b16 %v3561
        %v3908 = vunpack.c.l.b16 %v3562
        %v3909 = vunpack.c.h.b16 %v3562
        %v3910 = vunpack.c.l.b16 %v3563
        %v3911 = vunpack.c.h.b16 %v3563
        %v3912 = vunpack.c.l.b16 %v3564
        %v3913 = vunpack.c.h.b16 %v3564
        %v3914 = vunpack.c.l.b16 %v3565
        %v3915 = vunpack.c.h.b16 %v3565
        %v3916 = vunpack.c.l.b16 %v3566
        %v3917 = vunpack.c.h.b16 %v3566
        %v3918 = vunpack.c.l.b16 %v3567
        %v3919 = vunpack.c.h.b16 %v3567
        %v3920 = vunpack.c.l.b16 %v3568
        %v3921 = vunpack.c.h.b16 %v3568
        %v3922 = vunpack.c.l.b16 %v3569
        %v3923 = vunpack.c.h.b16 %v3569
        %v3924 = vunpack.c.l.b16 %v3570
        %v3925 = vunpack.c.h.b16 %v3570
        %v3926 = vunpack.c.l.b16 %v3571
        %v3927 = vunpack.c.h.b16 %v3571
        %v3928 = vunpack.c.l.b16 %v3572
        %v3929 = vunpack.c.h.b16 %v3572
        %v3930 = vunpack.c.l.b16 %v3573
        %v3931 = vunpack.c.h.b16 %v3573
        %v3932 = vunpack.c.l.b16 %v3574
        %v3933 = vunpack.c.h.b16 %v3574
        %v3934 = vunpack.c.l.b16 %v3575
        %v3935 = vunpack.c.h.b16 %v3575
        %v3936 = vunpack.c.l.b16 %v3576
        %v3937 = vunpack.c.h.b16 %v3576
        %v3938 = vunpack.c.l.b16 %v3577
        %v3939 = vunpack.c.h.b16 %v3577
        %v3940 = vunpack.c.l.b16 %v3578
        %v3941 = vunpack.c.h.b16 %v3578
        %v3942 = vunpack.c.l.b16 %v3579
        %v3943 = vunpack.c.h.b16 %v3579
        %v3944 = vunpack.c.l.b16 %v3580
        %v3945 = vunpack.c.h.b16 %v3580
        %v3946 = vunpack.c.l.b16 %v3581
        %v3947 = vunpack.c.h.b16 %v3581
        %v3948 = vunpack.c.l.b16 %v3582
        %v3949 = vunpack.c.h.b16 %v3582
        %v3950 = vunpack.c.l.b16 %v3583
        %v3951 = vunpack.c.h.b16 %v3583
        %v3952 = vunpack.c.l.b16 %v3584
        %v3953 = vunpack.c.h.b16 %v3584
        %v3954 = vunpack.c.l.b16 %v3585
        %v3955 = vunpack.c.h.b16 %v3585
        %v3956 = vunpack.c.l.b16 %v3586
        %v3957 = vunpack.c.h.b16 %v3586
        %v3958 = vunpack.c.l.b16 %v3587
        %v3959 = vunpack.c.h.b16 %v3587
        %v3960 = vunpack.c.l.b16 %v3588
        %v3961 = vunpack.c.h.b16 %v3588
        %v3962 = vunpack.c.l.b16 %v3589
        %v3963 = vunpack.c.h.b16 %v3589
        %v3964 = vunpack.c.l.b16 %v3590
        %v3965 = vunpack.c.h.b16 %v3590
        %v3966 = vunpack.c.l.b16 %v3591
        %v3967 = vunpack.c.h.b16 %v3591
        %v3968 = vunpack.c.l.b16 %v3592
        %v3969 = vunpack.c.h.b16 %v3592
        %v3970 = vunpack.c.l.b16 %v3593
        %v3971 = vunpack.c.h.b16 %v3593
        %v3972 = vunpack.c.l.b16 %v3594
        %v3973 = vunpack.c.h.b16 %v3594
        %v3974 = vunpack.c.l.b16 %v3595
        %v3975 = vunpack.c.h.b16 %v3595
        %v3976 = vunpack.c.l.b16 %v3596
        %v3977 = vunpack.c.h.b16 %v3596
        %v3978 = vunpack.c.l.b16 %v3597
        %v3979 = vunpack.c.h.b16 %v3597
        %v3980 = vunpack.c.l.b16 %v3598
        %v3981 = vunpack.c.h.b16 %v3598
        %v3982 = vunpack.c.l.b16 %v3599
        %v3983 = vunpack.c.h.b16 %v3599
        %v3984 = vunpack.c.l.b16 %v3600
        %v3985 = vunpack.c.h.b16 %v3600
        %v3986 = vunpack.c.l.b16 %v3601
        %v3987 = vunpack.c.h.b16 %v3601
        %v3988 = vunpack.c.l.b16 %v3602
        %v3989 = vunpack.c.h.b16 %v3602
        %v3990 = vunpack.c.l.b16 %v3603
        %v3991 = vunpack.c.h.b16 %v3603
        %v3992 = vunpack.c.l.b16 %v3604
        %v3993 = vunpack.c.h.b16 %v3604
        %v3994 = vunpack.c.l.b16 %v3605
        %v3995 = vunpack.c.h.b16 %v3605
        %v3996 = vunpack.c.l.b16 %v3606
        %v3997 = vunpack.c.h.b16 %v3606
        %v3998 = vunpack.c.l.b16 %v3607
        %v3999 = vunpack.c.h.b16 %v3607
        %v4000 = vunpack.c.l.b16 %v3608
        %v4001 = vunpack.c.h.b16 %v3608
        %v4002 = vunpack.c.l.b16 %v3609
        %v4003 = vunpack.c.h.b16 %v3609
        %v4004 = vunpack.c.l.b16 %v3610
        %v4005 = vunpack.c.h.b16 %v3610
        %v4006 = vunpack.c.l.b16 %v3611
        %v4007 = vunpack.c.h.b16 %v3611
        %v4008 = vunpack.c.l.b16 %v3612
        %v4009 = vunpack.c.h.b16 %v3612
        %v4010 = vunpack.c.l.b16 %v3613
        %v4011 = vunpack.c.h.b16 %v3613
        %v4012 = vunpack.c.l.b16 %v3614
        %v4013 = vunpack.c.h.b16 %v3614
        %v4014 = vunpack.c.l.b16 %v3615
        %v4015 = vunpack.c.h.b16 %v3615
        %v4016 = vunpack.c.l.b16 %v3616
        %v4017 = vunpack.c.h.b16 %v3616
        %v4018 = vunpack.c.l.b16 %v3617
        %v4019 = vunpack.c.h.b16 %v3617
        %v4020 = vunpack.c.l.b16 %v3618
        %v4021 = vunpack.c.h.b16 %v3618
        %v4022 = vunpack.c.l.b16 %v3619
        %v4023 = vunpack.c.h.b16 %v3619
        %v4024 = vunpack.c.l.b16 %v3620
        %v4025 = vunpack.c.h.b16 %v3620
        %v4026 = vunpack.c.l.b16 %v3621
        %v4027 = vunpack.c.h.b16 %v3621
        %v4028 = vunpack.c.l.b16 %v3622
        %v4029 = vunpack.c.h.b16 %v3622
        %v4030 = vunpack.c.l.b16 %v3623
        %v4031 = vunpack.c.h.b16 %v3623
        %v4032 = vunpack.c.l.b16 %v3624
        %v4033 = vunpack.c.h.b16 %v3624
        %v4034 = vunpack.c.l.b16 %v3625
        %v4035 = vunpack.c.h.b16 %v3625
        %v4036 = vunpack.c.l.b16 %v3626
        %v4037 = vunpack.c.h.b16 %v3626
        %v4038 = vunpack.c.l.b16 %v3627
        %v4039 = vunpack.c.h.b16 %v3627
        %v4040 = vunpack.c.l.b16 %v3628
        %v4041 = vunpack.c.h.b16 %v3628
        %v4042 = vunpack.c.l.b16 %v3629
        %v4043 = vunpack.c.h.b16 %v3629
        %v4044 = vunpack.c.l.b16 %v3630
        %v4045 = vunpack.c.h.b16 %v3630
        %v4046 = vunpack.c.l.b16 %v3631
        %v4047 = vunpack.c.h.b16 %v3631
        %v4048 = vunpack.c.l.b16 %v3632
        %v4049 = vunpack.c.h.b16 %v3632
        %v4050 = vunpack.c.l.b16 %v3633
        %v4051 = vunpack.c.h.b16 %v3633
        %v4052 = vunpack.c.l.b16 %v3634
        %v4053 = vunpack.c.h.b16 %v3634
        %v4054 = vunpack.c.l.b16 %v3635
        %v4055 = vunpack.c.h.b16 %v3635
        %v4056 = vunpack.c.l.b16 %v3636
        %v4057 = vunpack.c.h.b16 %v3636
        %v4058 = vunpack.c.l.b16 %v3637
        %v4059 = vunpack.c.h.b16 %v3637
        %v4060 = vunpack.c.l.b16 %v3638
        %v4061 = vunpack.c.h.b16 %v3638
        %v4062 = vunpack.c.l.b16 %v3639
        %v4063 = vunpack.c.h.b16 %v3639
        %v4064 = vunpack.c.l.b16 %v3640
        %v4065 = vunpack.c.h.b16 %v3640
        %v4066 = vunpack.c.l.b16 %v3641
        %v4067 = vunpack.c.h.b16 %v3641
        %v4068 = vpack.c.b16 %v3820, %v3812
        %v4069 = vpack.c.b16 %v3821, %v3813
        %v4070 = vpack.c.b16 %v3822, %v3814
        %v4071 = vpack.c.b16 %v3823, %v3815
        %v4072 = vpack.c.b16 %v3824, %v3816
        %v4073 = vpack.c.b16 %v3825, %v3817
        %v4074 = vpack.c.b16 %v3826, %v3818
        %v4075 = vpack.c.b16 %v3827, %v3819
        %v4076 = vpack.c.b16 %v3836, %v3828
        %v4077 = vpack.c.b16 %v3837, %v3829
        %v4078 = vpack.c.b16 %v3838, %v3830
        %v4079 = vpack.c.b16 %v3839, %v3831
        %v4080 = vpack.c.b16 %v3840, %v3832
        %v4081 = vpack.c.b16 %v3841, %v3833
        %v4082 = vpack.c.b16 %v3842, %v3834
        %v4083 = vpack.c.b16 %v3843, %v3835
        %v4084 = vpack.c.b16 %v3852, %v3844
        %v4085 = vpack.c.b16 %v3853, %v3845
        %v4086 = vpack.c.b16 %v3854, %v3846
        %v4087 = vpack.c.b16 %v3855, %v3847
        %v4088 = vpack.c.b16 %v3856, %v3848
        %v4089 = vpack.c.b16 %v3857, %v3849
        %v4090 = vpack.c.b16 %v3858, %v3850
        %v4091 = vpack.c.b16 %v3859, %v3851
        %v4092 = vpack.c.b16 %v3868, %v3860
        %v4093 = vpack.c.b16 %v3869, %v3861
        %v4094 = vpack.c.b16 %v3870, %v3862
        %v4095 = vpack.c.b16 %v3871, %v3863
        %v4096 = vpack.c.b16 %v3872, %v3864
        %v4097 = vpack.c.b16 %v3873, %v3865
        %v4098 = vpack.c.b16 %v3874, %v3866
        %v4099 = vpack.c.b16 %v3875, %v3867
        %v4100 = vpack.c.b16 %v3884, %v3876
        %v4101 = vpack.c.b16 %v3885, %v3877
        %v4102 = vpack.c.b16 %v3886, %v3878
        %v4103 = vpack.c.b16 %v3887, %v3879
        %v4104 = vpack.c.b16 %v3888, %v3880
        %v4105 = vpack.c.b16 %v3889, %v3881
        %v4106 = vpack.c.b16 %v3890, %v3882
        %v4107 = vpack.c.b16 %v3891, %v3883
        %v4108 = vpack.c.b16 %v3900, %v3892
        %v4109 = vpack.c.b16 %v3901, %v3893
        %v4110 = vpack.c.b16 %v3902, %v3894
        %v4111 = vpack.c.b16 %v3903, %v3895
        %v4112 = vpack.c.b16 %v3904, %v3896
        %v4113 = vpack.c.b16 %v3905, %v3897
        %v4114 = vpack.c.b16 %v3906, %v3898
        %v4115 = vpack.c.b16 %v3907, %v3899
        %v4116 = vpack.c.b16 %v3916, %v3908
        %v4117 = vpack.c.b16 %v3917, %v3909
        %v4118 = vpack.c.b16 %v3918, %v3910
        %v4119 = vpack.c.b16 %v3919, %v3911
        %v4120 = vpack.c.b16 %v3920, %v3912
        %v4121 = vpack.c.b16 %v3921, %v3913
        %v4122 = vpack.c.b16 %v3922, %v3914
        %v4123 = vpack.c.b16 %v3923, %v3915
        %v4124 = vpack.c.b16 %v3932, %v3924
        %v4125 = vpack.c.b16 %v3933, %v3925
        %v4126 = vpack.c.b16 %v3934, %v3926
        %v4127 = vpack.c.b16 %v3935, %v3927
        %v4128 = vpack.c.b16 %v3936, %v3928
        %v4129 = vpack.c.b16 %v3937, %v3929
        %v4130 = vpack.c.b16 %v3938, %v3930
        %v4131 = vpack.c.b16 %v3939, %v3931
        %v4132 = vpack.c.b16 %v3948, %v3940
        %v4133 = vpack.c.b16 %v3949, %v3941
        %v4134 = vpack.c.b16 %v3950, %v3942
        %v4135 = vpack.c.b16 %v3951, %v3943
        %v4136 = vpack.c.b16 %v3952, %v3944
        %v4137 = vpack.c.b16 %v3953, %v3945
        %v4138 = vpack.c.b16 %v3954, %v3946
        %v4139 = vpack.c.b16 %v3955, %v3947
        %v4140 = vpack.c.b16 %v3964, %v3956
        %v4141 = vpack.c.b16 %v3965, %v3957
        %v4142 = vpack.c.b16 %v3966, %v3958
        %v4143 = vpack.c.b16 %v3967, %v3959
        %v4144 = vpack.c.b16 %v3968, %v3960
        %v4145 = vpack.c.b16 %v3969, %v3961
        %v4146 = vpack.c.b16 %v3970, %v3962
        %v4147 = vpack.c.b16 %v3971, %v3963
        %v4148 = vpack.c.b16 %v3980, %v3972
        %v4149 = vpack.c.b16 %v3981, %v3973
        %v4150 = vpack.c.b16 %v3982, %v3974
        %v4151 = vpack.c.b16 %v3983, %v3975
        %v4152 = vpack.c.b16 %v3984, %v3976
        %v4153 = vpack.c.b16 %v3985, %v3977
        %v4154 = vpack.c.b16 %v3986, %v3978
        %v4155 = vpack.c.b16 %v3987, %v3979
        %v4156 = vpack.c.b16 %v3996, %v3988
        %v4157 = vpack.c.b16 %v3997, %v3989
        %v4158 = vpack.c.b16 %v3998, %v3990
        %v4159 = vpack.c.b16 %v3999, %v3991
        %v4160 = vpack.c.b16 %v4000, %v3992
        %v4161 = vpack.c.b16 %v4001, %v3993
        %v4162 = vpack.c.b16 %v4002, %v3994
        %v4163 = vpack.c.b16 %v4003, %v3995
        %v4164 = vpack.c.b16 %v4012, %v4004
        %v4165 = vpack.c.b16 %v4013, %v4005
        %v4166 = vpack.c.b16 %v4014, %v4006
        %v4167 = vpack.c.b16 %v4015, %v4007
        %v4168 = vpack.c.b16 %v4016, %v4008
        %v4169 = vpack.c.b16 %v4017, %v4009
        %v4170 = vpack.c.b16 %v4018, %v4010
        %v4171 = vpack.c.b16 %v4019, %v4011
        %v4172 = vpack.c.b16 %v4028, %v4020
        %v4173 = vpack.c.b16 %v4029, %v4021
        %v4174 = vpack.c.b16 %v4030, %v4022
        %v4175 = vpack.c.b16 %v4031, %v4023
        %v4176 = vpack.c.b16 %v4032, %v4024
        %v4177 = vpack.c.b16 %v4033, %v4025
        %v4178 = vpack.c.b16 %v4034, %v4026
        %v4179 = vpack.c.b16 %v4035, %v4027
        %v4180 = vpack.c.b16 %v4044, %v4036
        %v4181 = vpack.c.b16 %v4045, %v4037
        %v4182 = vpack.c.b16 %v4046, %v4038
        %v4183 = vpack.c.b16 %v4047, %v4039
        %v4184 = vpack.c.b16 %v4048, %v4040
        %v4185 = vpack.c.b16 %v4049, %v4041
        %v4186 = vpack.c.b16 %v4050, %v4042
        %v4187 = vpack.c.b16 %v4051, %v4043
        %v4188 = vpack.c.b16 %v4060, %v4052
        %v4189 = vpack.c.b16 %v4061, %v4053
        %v4190 = vpack.c.b16 %v4062, %v4054
        %v4191 = vpack.c.b16 %v4063, %v4055
        %v4192 = vpack.c.b16 %v4064, %v4056
        %v4193 = vpack.c.b16 %v4065, %v4057
        %v4194 = vpack.c.b16 %v4066, %v4058
        %v4195 = vpack.c.b16 %v4067, %v4059
        %4324 = vmatprep.subr.bf16.mxu0 %v4069
        %4325 = vmatpush1.bf16.msra.mxu0 %v4068
        %4326 = vmatprep.subr.bf16.mxu0 %v4077
        %4327 = vmatpush1.bf16.msra.mxu0 %v4076
        %4328 = vmatprep.subr.bf16.mxu0 %v4085
        %4329 = vmatpush1.bf16.msra.mxu0 %v4084
        %4330 = vmatprep.subr.bf16.mxu0 %v4093
        %4331 = vmatpush1.bf16.msra.mxu0 %v4092
        %4332 = vmatprep.subr.bf16.mxu0 %v4101
        %4333 = vmatpush1.bf16.msra.mxu0 %v4100
        %4334 = vmatprep.subr.bf16.mxu0 %v4109
        %4335 = vmatpush1.bf16.msra.mxu0 %v4108
        %4336 = vmatprep.subr.bf16.mxu0 %v4117
        %4337 = vmatpush1.bf16.msra.mxu0 %v4116
        %4338 = vmatprep.subr.bf16.mxu0 %v4125
        %4339 = vmatpush1.bf16.msra.mxu0 %v4124
        %4340 = vmatprep.subr.bf16.mxu0 %v4133
        %4341 = vmatpush1.bf16.msra.mxu0 %v4132
        %4342 = vmatprep.subr.bf16.mxu0 %v4141
        %4343 = vmatpush1.bf16.msra.mxu0 %v4140
        %4344 = vmatprep.subr.bf16.mxu0 %v4149
        %4345 = vmatpush1.bf16.msra.mxu0 %v4148
        %4346 = vmatprep.subr.bf16.mxu0 %v4157
        %4347 = vmatpush1.bf16.msra.mxu0 %v4156
        %4348 = vmatprep.subr.bf16.mxu0 %v4165
        %4349 = vmatpush1.bf16.msra.mxu0 %v4164
        %4350 = vmatprep.subr.bf16.mxu0 %v4173
        %4351 = vmatpush1.bf16.msra.mxu0 %v4172
        %4352 = vmatprep.subr.bf16.mxu0 %v4181
        %4353 = vmatpush1.bf16.msra.mxu0 %v4180
        %4354 = vmatprep.subr.bf16.mxu0 %v4189
        %4355 = vmatpush1.bf16.msra.mxu0 %v4188
        %4356 = vmatprep.mubr.bf16.mxu0 %v3513
        %4357 = vmatmul.mubr.bf16.gmra.mrb[0].mxu0 %v3512
        %v4358 = vpop.f32.mrb[0].mxu0
        %v4359 = vadd.f32 %v3647, %v4358
        %v4360 = vpop.f32.mrb[0].mxu0
        %v4361 = vadd.f32 %v3651, %v4360
        %v4362 = vpop.f32.mrb[0].mxu0
        %v4363 = vpop.f32.mrb[0].mxu0
        %4364 = vdwg.mxu0
        %4365 = vmatprep.subr.bf16.mxu0 %v4071
        %4366 = vmatpush1.bf16.msra.mxu0 %v4070
        %4367 = vmatprep.subr.bf16.mxu0 %v4079
        %4368 = vmatpush1.bf16.msra.mxu0 %v4078
        %4369 = vmatprep.subr.bf16.mxu0 %v4087
        %4370 = vmatpush1.bf16.msra.mxu0 %v4086
        %4371 = vmatprep.subr.bf16.mxu0 %v4095
        %4372 = vmatpush1.bf16.msra.mxu0 %v4094
        %4373 = vmatprep.subr.bf16.mxu0 %v4103
        %4374 = vmatpush1.bf16.msra.mxu0 %v4102
        %4375 = vmatprep.subr.bf16.mxu0 %v4111
        %4376 = vmatpush1.bf16.msra.mxu0 %v4110
        %4377 = vmatprep.subr.bf16.mxu0 %v4119
        %4378 = vmatpush1.bf16.msra.mxu0 %v4118
        %4379 = vmatprep.subr.bf16.mxu0 %v4127
        %4380 = vmatpush1.bf16.msra.mxu0 %v4126
        %4381 = vmatprep.subr.bf16.mxu0 %v4135
        %4382 = vmatpush1.bf16.msra.mxu0 %v4134
        %4383 = vmatprep.subr.bf16.mxu0 %v4143
        %4384 = vmatpush1.bf16.msra.mxu0 %v4142
        %4385 = vmatprep.subr.bf16.mxu0 %v4151
        %4386 = vmatpush1.bf16.msra.mxu0 %v4150
        %4387 = vmatprep.subr.bf16.mxu0 %v4159
        %4388 = vmatpush1.bf16.msra.mxu0 %v4158
        %4389 = vmatprep.subr.bf16.mxu0 %v4167
        %4390 = vmatpush1.bf16.msra.mxu0 %v4166
        %4391 = vmatprep.subr.bf16.mxu0 %v4175
        %4392 = vmatpush1.bf16.msra.mxu0 %v4174
        %4393 = vmatprep.subr.bf16.mxu0 %v4183
        %4394 = vmatpush1.bf16.msra.mxu0 %v4182
        %4395 = vmatprep.subr.bf16.mxu0 %v4191
        %4396 = vmatpush1.bf16.msra.mxu0 %v4190
        %4397 = vmatprep.mubr.bf16.mxu0 %v3513
        %4398 = vmatmul.mubr.bf16.gmra.mrb[0].mxu0 %v3512
        %v4399 = vpop.f32.mrb[0].mxu0
        %v4400 = vadd.f32 %v3655, %v4399
        %v4401 = vpop.f32.mrb[0].mxu0
        %v4402 = vadd.f32 %v3659, %v4401
        %v4403 = vpop.f32.mrb[0].mxu0
        %v4404 = vpop.f32.mrb[0].mxu0
        %4405 = vdwg.mxu0
        %4406 = vmatprep.subr.bf16.mxu0 %v4073
        %4407 = vmatpush1.bf16.msra.mxu0 %v4072
        %4408 = vmatprep.subr.bf16.mxu0 %v4081
        %4409 = vmatpush1.bf16.msra.mxu0 %v4080
        %4410 = vmatprep.subr.bf16.mxu0 %v4089
        %4411 = vmatpush1.bf16.msra.mxu0 %v4088
        %4412 = vmatprep.subr.bf16.mxu0 %v4097
        %4413 = vmatpush1.bf16.msra.mxu0 %v4096
        %4414 = vmatprep.subr.bf16.mxu0 %v4105
        %4415 = vmatpush1.bf16.msra.mxu0 %v4104
        %4416 = vmatprep.subr.bf16.mxu0 %v4113
        %4417 = vmatpush1.bf16.msra.mxu0 %v4112
        %4418 = vmatprep.subr.bf16.mxu0 %v4121
        %4419 = vmatpush1.bf16.msra.mxu0 %v4120
        %4420 = vmatprep.subr.bf16.mxu0 %v4129
        %4421 = vmatpush1.bf16.msra.mxu0 %v4128
        %4422 = vmatprep.subr.bf16.mxu0 %v4137
        %4423 = vmatpush1.bf16.msra.mxu0 %v4136
        %4424 = vmatprep.subr.bf16.mxu0 %v4145
        %4425 = vmatpush1.bf16.msra.mxu0 %v4144
        %4426 = vmatprep.subr.bf16.mxu0 %v4153
        %4427 = vmatpush1.bf16.msra.mxu0 %v4152
        %4428 = vmatprep.subr.bf16.mxu0 %v4161
        %4429 = vmatpush1.bf16.msra.mxu0 %v4160
        %4430 = vmatprep.subr.bf16.mxu0 %v4169
        %4431 = vmatpush1.bf16.msra.mxu0 %v4168
        %4432 = vmatprep.subr.bf16.mxu0 %v4177
        %4433 = vmatpush1.bf16.msra.mxu0 %v4176
        %4434 = vmatprep.subr.bf16.mxu0 %v4185
        %4435 = vmatpush1.bf16.msra.mxu0 %v4184
        %4436 = vmatprep.subr.bf16.mxu0 %v4193
        %4437 = vmatpush1.bf16.msra.mxu0 %v4192
        %4438 = vmatprep.mubr.bf16.mxu0 %v3513
        %4439 = vmatmul.mubr.bf16.gmra.mrb[0].mxu0 %v3512
        %v4440 = vpop.f32.mrb[0].mxu0
        %v4441 = vadd.f32 %v3663, %v4440
        %v4442 = vpop.f32.mrb[0].mxu0
        %v4443 = vadd.f32 %v3667, %v4442
        %v4444 = vpop.f32.mrb[0].mxu0
        %v4445 = vpop.f32.mrb[0].mxu0
        %4446 = vdwg.mxu0
        %4447 = vmatprep.subr.bf16.mxu0 %v4075
        %4448 = vmatpush1.bf16.msra.mxu0 %v4074
        %4449 = vmatprep.subr.bf16.mxu0 %v4083
        %4450 = vmatpush1.bf16.msra.mxu0 %v4082
        %4451 = vmatprep.subr.bf16.mxu0 %v4091
        %4452 = vmatpush1.bf16.msra.mxu0 %v4090
        %4453 = vmatprep.subr.bf16.mxu0 %v4099
        %4454 = vmatpush1.bf16.msra.mxu0 %v4098
        %4455 = vmatprep.subr.bf16.mxu0 %v4107
        %4456 = vmatpush1.bf16.msra.mxu0 %v4106
        %4457 = vmatprep.subr.bf16.mxu0 %v4115
        %4458 = vmatpush1.bf16.msra.mxu0 %v4114
        %4459 = vmatprep.subr.bf16.mxu0 %v4123
        %4460 = vmatpush1.bf16.msra.mxu0 %v4122
        %4461 = vmatprep.subr.bf16.mxu0 %v4131
        %4462 = vmatpush1.bf16.msra.mxu0 %v4130
        %4463 = vmatprep.subr.bf16.mxu0 %v4139
        %4464 = vmatpush1.bf16.msra.mxu0 %v4138
        %4465 = vmatprep.subr.bf16.mxu0 %v4147
        %4466 = vmatpush1.bf16.msra.mxu0 %v4146
        %4467 = vmatprep.subr.bf16.mxu0 %v4155
        %4468 = vmatpush1.bf16.msra.mxu0 %v4154
        %4469 = vmatprep.subr.bf16.mxu0 %v4163
        %4470 = vmatpush1.bf16.msra.mxu0 %v4162
        %4471 = vmatprep.subr.bf16.mxu0 %v4171
        %4472 = vmatpush1.bf16.msra.mxu0 %v4170
        %4473 = vmatprep.subr.bf16.mxu0 %v4179
        %4474 = vmatpush1.bf16.msra.mxu0 %v4178
        %4475 = vmatprep.subr.bf16.mxu0 %v4187
        %4476 = vmatpush1.bf16.msra.mxu0 %v4186
        %4477 = vmatprep.subr.bf16.mxu0 %v4195
        %4478 = vmatpush1.bf16.msra.mxu0 %v4194
        %4479 = vmatprep.mubr.bf16.mxu0 %v3513
        %4480 = vmatmul.mubr.bf16.gmra.mrb[0].mxu0 %v3512
        %v4481 = vpop.f32.mrb[0].mxu0
        %v4482 = vadd.f32 %v3671, %v4481
        %v4483 = vpop.f32.mrb[0].mxu0
        %v4484 = vadd.f32 %v3675, %v4483
        %v4485 = vpop.f32.mrb[0].mxu0
        %v4486 = vpop.f32.mrb[0].mxu0
        %4487 = vdwg.mxu0
        %v4488 = vmul.f32 %v4359, %v4359
        %v4489 = vmul.f32 %v4361, %v4361
        %v4490 = vmul.f32 %v4400, %v4400
        %v4491 = vmul.f32 %v4402, %v4402
        %v4492 = vmul.f32 %v4441, %v4441
        %v4493 = vmul.f32 %v4443, %v4443
        %v4494 = vmul.f32 %v4482, %v4482
        %v4495 = vmul.f32 %v4484, %v4484
        %v4496 = vmul.f32 %v4359, %v4488
        %v4497 = vmul.f32 %v4361, %v4489
        %v4498 = vmul.f32 %v4400, %v4490
        %v4499 = vmul.f32 %v4402, %v4491
        %v4500 = vmul.f32 %v4441, %v4492
        %v4501 = vmul.f32 %v4443, %v4493
        %v4502 = vmul.f32 %v4482, %v4494
        %v4503 = vmul.f32 %v4484, %v4495
        %v4504 = vmul.f32 %v4496, 0.044715
        %v4505 = vmul.f32 %v4497, 0.044715
        %v4506 = vmul.f32 %v4498, 0.044715
        %v4507 = vmul.f32 %v4499, 0.044715
        %v4508 = vmul.f32 %v4500, 0.044715
        %v4509 = vmul.f32 %v4501, 0.044715
        %v4510 = vmul.f32 %v4502, 0.044715
        %v4511 = vmul.f32 %v4503, 0.044715
        %v4512 = vadd.f32 %v4359, %v4504
        %v4513 = vadd.f32 %v4361, %v4505
        %v4514 = vadd.f32 %v4400, %v4506
        %v4515 = vadd.f32 %v4402, %v4507
        %v4516 = vadd.f32 %v4441, %v4508
        %v4517 = vadd.f32 %v4443, %v4509
        %v4518 = vadd.f32 %v4482, %v4510
        %v4519 = vadd.f32 %v4484, %v4511
        %v4520 = vmul.f32 %v4512, 0.7978846
        %v4521 = vmul.f32 %v4513, 0.7978846
        %v4522 = vmul.f32 %v4514, 0.7978846
        %v4523 = vmul.f32 %v4515, 0.7978846
        %v4524 = vmul.f32 %v4516, 0.7978846
        %v4525 = vmul.f32 %v4517, 0.7978846
        %v4526 = vmul.f32 %v4518, 0.7978846
        %v4527 = vmul.f32 %v4519, 0.7978846
        %v4528 = vtanh.pop %v4520
        %v4529 = vtanh.pop %v4521
        %v4530 = vtanh.pop %v4522
        %v4531 = vtanh.pop %v4523
        %v4532 = vtanh.pop %v4524
        %v4533 = vtanh.pop %v4525
        %v4534 = vtanh.pop %v4526
        %v4535 = vtanh.pop %v4527
        %v4536 = vadd.f32 %v4528, 1.0
        %v4537 = vadd.f32 %v4529, 1.0
        %v4538 = vadd.f32 %v4530, 1.0
        %v4539 = vadd.f32 %v4531, 1.0
        %v4540 = vadd.f32 %v4532, 1.0
        %v4541 = vadd.f32 %v4533, 1.0
        %v4542 = vadd.f32 %v4534, 1.0
        %v4543 = vadd.f32 %v4535, 1.0
        %v4544 = vmul.f32 %v4536, 0.5
        %v4545 = vmul.f32 %v4537, 0.5
        %v4546 = vmul.f32 %v4538, 0.5
        %v4547 = vmul.f32 %v4539, 0.5
        %v4548 = vmul.f32 %v4540, 0.5
        %v4549 = vmul.f32 %v4541, 0.5
        %v4550 = vmul.f32 %v4542, 0.5
        %v4551 = vmul.f32 %v4543, 0.5
        %v4552 = vmul.f32 %v4359, %v4544
        %v4553 = vmul.f32 %v4361, %v4545
        %v4554 = vmul.f32 %v4400, %v4546
        %v4555 = vmul.f32 %v4402, %v4547
        %v4556 = vmul.f32 %v4441, %v4548
        %v4557 = vmul.f32 %v4443, %v4549
        %v4558 = vmul.f32 %v4482, %v4550
        %v4559 = vmul.f32 %v4484, %v4551
        %v4560 = vpack.c.bf16 %v4552, %v4552
        %v4561 = vpack.c.bf16 %v4553, %v4553
        %v4562 = vpack.c.bf16 %v4554, %v4554
        %v4563 = vpack.c.bf16 %v4555, %v4555
        %v4564 = vpack.c.bf16 %v4556, %v4556
        %v4565 = vpack.c.bf16 %v4557, %v4557
        %v4566 = vpack.c.bf16 %v4558, %v4558
        %v4567 = vpack.c.bf16 %v4559, %v4559
        %v4568 = vld [vmem:[%s1217] sm:$0xff]
        %v4569 = vld [vmem:[%s1217 + $0x8] sm:$0xff]
        %v4570 = vld [vmem:[%s1217 + $0x10] sm:$0xff]
        %v4571 = vld [vmem:[%s1217 + $0x18] sm:$0xff]
        %v4572 = vld [vmem:[%s1217 + $0x20] sm:$0xff]
        %v4573 = vld [vmem:[%s1217 + $0x28] sm:$0xff]
        %v4574 = vld [vmem:[%s1217 + $0x30] sm:$0xff]
        %v4575 = vld [vmem:[%s1217 + $0x38] sm:$0xff]
        %v4576 = vld [vmem:[%s1217 + $0x40] sm:$0xff]
        %v4577 = vld [vmem:[%s1217 + $0x48] sm:$0xff]
        %v4578 = vld [vmem:[%s1217 + $0x50] sm:$0xff]
        %v4579 = vld [vmem:[%s1217 + $0x58] sm:$0xff]
        %v4580 = vld [vmem:[%s1217 + $0x60] sm:$0xff]
        %v4581 = vld [vmem:[%s1217 + $0x68] sm:$0xff]
        %v4582 = vld [vmem:[%s1217 + $0x70] sm:$0xff]
        %v4583 = vld [vmem:[%s1217 + $0x78] sm:$0xff]
        %v4584 = vld [vmem:[%s1217 + $0x80] sm:$0xff]
        %v4585 = vld [vmem:[%s1217 + $0x88] sm:$0xff]
        %v4586 = vld [vmem:[%s1217 + $0x90] sm:$0xff]
        %v4587 = vld [vmem:[%s1217 + $0x98] sm:$0xff]
        %v4588 = vld [vmem:[%s1217 + $0xa0] sm:$0xff]
        %v4589 = vld [vmem:[%s1217 + $0xa8] sm:$0xff]
        %v4590 = vld [vmem:[%s1217 + $0xb0] sm:$0xff]
        %v4591 = vld [vmem:[%s1217 + $0xb8] sm:$0xff]
        %v4592 = vld [vmem:[%s1217 + $0xc0] sm:$0xff]
        %v4593 = vld [vmem:[%s1217 + $0xc8] sm:$0xff]
        %v4594 = vld [vmem:[%s1217 + $0xd0] sm:$0xff]
        %v4595 = vld [vmem:[%s1217 + $0xd8] sm:$0xff]
        %v4596 = vld [vmem:[%s1217 + $0xe0] sm:$0xff]
        %v4597 = vld [vmem:[%s1217 + $0xe8] sm:$0xff]
        %v4598 = vld [vmem:[%s1217 + $0xf0] sm:$0xff]
        %v4599 = vld [vmem:[%s1217 + $0xf8] sm:$0xff]
        %v4600 = vld [vmem:[%s1217 + $0x100] sm:$0xff]
        %v4601 = vld [vmem:[%s1217 + $0x108] sm:$0xff]
        %v4602 = vld [vmem:[%s1217 + $0x110] sm:$0xff]
        %v4603 = vld [vmem:[%s1217 + $0x118] sm:$0xff]
        %v4604 = vld [vmem:[%s1217 + $0x120] sm:$0xff]
        %v4605 = vld [vmem:[%s1217 + $0x128] sm:$0xff]
        %v4606 = vld [vmem:[%s1217 + $0x130] sm:$0xff]
        %v4607 = vld [vmem:[%s1217 + $0x138] sm:$0xff]
        %v4608 = vld [vmem:[%s1217 + $0x140] sm:$0xff]
        %v4609 = vld [vmem:[%s1217 + $0x148] sm:$0xff]
        %v4610 = vld [vmem:[%s1217 + $0x150] sm:$0xff]
        %v4611 = vld [vmem:[%s1217 + $0x158] sm:$0xff]
        %v4612 = vld [vmem:[%s1217 + $0x160] sm:$0xff]
        %v4613 = vld [vmem:[%s1217 + $0x168] sm:$0xff]
        %v4614 = vld [vmem:[%s1217 + $0x170] sm:$0xff]
        %v4615 = vld [vmem:[%s1217 + $0x178] sm:$0xff]
        %v4616 = vld [vmem:[%s1217 + $0x180] sm:$0xff]
        %v4617 = vld [vmem:[%s1217 + $0x188] sm:$0xff]
        %v4618 = vld [vmem:[%s1217 + $0x190] sm:$0xff]
        %v4619 = vld [vmem:[%s1217 + $0x198] sm:$0xff]
        %v4620 = vld [vmem:[%s1217 + $0x1a0] sm:$0xff]
        %v4621 = vld [vmem:[%s1217 + $0x1a8] sm:$0xff]
        %v4622 = vld [vmem:[%s1217 + $0x1b0] sm:$0xff]
        %v4623 = vld [vmem:[%s1217 + $0x1b8] sm:$0xff]
        %v4624 = vld [vmem:[%s1217 + $0x1c0] sm:$0xff]
        %v4625 = vld [vmem:[%s1217 + $0x1c8] sm:$0xff]
        %v4626 = vld [vmem:[%s1217 + $0x1d0] sm:$0xff]
        %v4627 = vld [vmem:[%s1217 + $0x1d8] sm:$0xff]
        %v4628 = vld [vmem:[%s1217 + $0x1e0] sm:$0xff]
        %v4629 = vld [vmem:[%s1217 + $0x1e8] sm:$0xff]
        %v4630 = vld [vmem:[%s1217 + $0x1f0] sm:$0xff]
        %v4631 = vld [vmem:[%s1217 + $0x1f8] sm:$0xff]
        %v4632 = vld [vmem:[%s1217 + $0x200] sm:$0xff]
        %v4633 = vld [vmem:[%s1217 + $0x208] sm:$0xff]
        %v4634 = vld [vmem:[%s1217 + $0x210] sm:$0xff]
        %v4635 = vld [vmem:[%s1217 + $0x218] sm:$0xff]
        %v4636 = vld [vmem:[%s1217 + $0x220] sm:$0xff]
        %v4637 = vld [vmem:[%s1217 + $0x228] sm:$0xff]
        %v4638 = vld [vmem:[%s1217 + $0x230] sm:$0xff]
        %v4639 = vld [vmem:[%s1217 + $0x238] sm:$0xff]
        %v4640 = vld [vmem:[%s1217 + $0x240] sm:$0xff]
        %v4641 = vld [vmem:[%s1217 + $0x248] sm:$0xff]
        %v4642 = vld [vmem:[%s1217 + $0x250] sm:$0xff]
        %v4643 = vld [vmem:[%s1217 + $0x258] sm:$0xff]
        %v4644 = vld [vmem:[%s1217 + $0x260] sm:$0xff]
        %v4645 = vld [vmem:[%s1217 + $0x268] sm:$0xff]
        %v4646 = vld [vmem:[%s1217 + $0x270] sm:$0xff]
        %v4647 = vld [vmem:[%s1217 + $0x278] sm:$0xff]
        %v4648 = vld [vmem:[%s1217 + $0x280] sm:$0xff]
        %v4649 = vld [vmem:[%s1217 + $0x288] sm:$0xff]
        %v4650 = vld [vmem:[%s1217 + $0x290] sm:$0xff]
        %v4651 = vld [vmem:[%s1217 + $0x298] sm:$0xff]
        %v4652 = vld [vmem:[%s1217 + $0x2a0] sm:$0xff]
        %v4653 = vld [vmem:[%s1217 + $0x2a8] sm:$0xff]
        %v4654 = vld [vmem:[%s1217 + $0x2b0] sm:$0xff]
        %v4655 = vld [vmem:[%s1217 + $0x2b8] sm:$0xff]
        %v4656 = vld [vmem:[%s1217 + $0x2c0] sm:$0xff]
        %v4657 = vld [vmem:[%s1217 + $0x2c8] sm:$0xff]
        %v4658 = vld [vmem:[%s1217 + $0x2d0] sm:$0xff]
        %v4659 = vld [vmem:[%s1217 + $0x2d8] sm:$0xff]
        %v4660 = vld [vmem:[%s1217 + $0x2e0] sm:$0xff]
        %v4661 = vld [vmem:[%s1217 + $0x2e8] sm:$0xff]
        %v4662 = vld [vmem:[%s1217 + $0x2f0] sm:$0xff]
        %v4663 = vld [vmem:[%s1217 + $0x2f8] sm:$0xff]
        %v4664 = vld [vmem:[%s1217 + $0x300] sm:$0xff]
        %v4665 = vld [vmem:[%s1217 + $0x308] sm:$0xff]
        %v4666 = vld [vmem:[%s1217 + $0x310] sm:$0xff]
        %v4667 = vld [vmem:[%s1217 + $0x318] sm:$0xff]
        %v4668 = vld [vmem:[%s1217 + $0x320] sm:$0xff]
        %v4669 = vld [vmem:[%s1217 + $0x328] sm:$0xff]
        %v4670 = vld [vmem:[%s1217 + $0x330] sm:$0xff]
        %v4671 = vld [vmem:[%s1217 + $0x338] sm:$0xff]
        %v4672 = vld [vmem:[%s1217 + $0x340] sm:$0xff]
        %v4673 = vld [vmem:[%s1217 + $0x348] sm:$0xff]
        %v4674 = vld [vmem:[%s1217 + $0x350] sm:$0xff]
        %v4675 = vld [vmem:[%s1217 + $0x358] sm:$0xff]
        %v4676 = vld [vmem:[%s1217 + $0x360] sm:$0xff]
        %v4677 = vld [vmem:[%s1217 + $0x368] sm:$0xff]
        %v4678 = vld [vmem:[%s1217 + $0x370] sm:$0xff]
        %v4679 = vld [vmem:[%s1217 + $0x378] sm:$0xff]
        %v4680 = vld [vmem:[%s1217 + $0x380] sm:$0xff]
        %v4681 = vld [vmem:[%s1217 + $0x388] sm:$0xff]
        %v4682 = vld [vmem:[%s1217 + $0x390] sm:$0xff]
        %v4683 = vld [vmem:[%s1217 + $0x398] sm:$0xff]
        %v4684 = vld [vmem:[%s1217 + $0x3a0] sm:$0xff]
        %v4685 = vld [vmem:[%s1217 + $0x3a8] sm:$0xff]
        %v4686 = vld [vmem:[%s1217 + $0x3b0] sm:$0xff]
        %v4687 = vld [vmem:[%s1217 + $0x3b8] sm:$0xff]
        %v4688 = vld [vmem:[%s1217 + $0x3c0] sm:$0xff]
        %v4689 = vld [vmem:[%s1217 + $0x3c8] sm:$0xff]
        %v4690 = vld [vmem:[%s1217 + $0x3d0] sm:$0xff]
        %v4691 = vld [vmem:[%s1217 + $0x3d8] sm:$0xff]
        %v4692 = vld [vmem:[%s1217 + $0x3e0] sm:$0xff]
        %v4693 = vld [vmem:[%s1217 + $0x3e8] sm:$0xff]
        %v4694 = vld [vmem:[%s1217 + $0x3f0] sm:$0xff]
        %v4695 = vld [vmem:[%s1217 + $0x3f8] sm:$0xff]
        %v4696 = vld [vmem:[%s1226] sm:$0x3]
        %v4698 = vlaneseq
        %v4699 = vshrl.u32 %v4698, 7
        %v4700 = vsub.s32 0, %v4699
        %v4701 = vrot.slane %v4696, %v4700
        %v4702 = vlaneseq
        %v4703 = vshrl.u32 %v4702, 7
        %v4704 = vsub.s32 1, %v4703
        %v4705 = vrot.slane %v4696, %v4704
        %v4836 = vunpack.c.l.b16 %v4568
        %v4837 = vunpack.c.h.b16 %v4568
        %v4838 = vunpack.c.l.b16 %v4569
        %v4839 = vunpack.c.h.b16 %v4569
        %v4840 = vunpack.c.l.b16 %v4570
        %v4841 = vunpack.c.h.b16 %v4570
        %v4842 = vunpack.c.l.b16 %v4571
        %v4843 = vunpack.c.h.b16 %v4571
        %v4844 = vunpack.c.l.b16 %v4572
        %v4845 = vunpack.c.h.b16 %v4572
        %v4846 = vunpack.c.l.b16 %v4573
        %v4847 = vunpack.c.h.b16 %v4573
        %v4848 = vunpack.c.l.b16 %v4574
        %v4849 = vunpack.c.h.b16 %v4574
        %v4850 = vunpack.c.l.b16 %v4575
        %v4851 = vunpack.c.h.b16 %v4575
        %v4852 = vunpack.c.l.b16 %v4576
        %v4853 = vunpack.c.h.b16 %v4576
        %v4854 = vunpack.c.l.b16 %v4577
        %v4855 = vunpack.c.h.b16 %v4577
        %v4856 = vunpack.c.l.b16 %v4578
        %v4857 = vunpack.c.h.b16 %v4578
        %v4858 = vunpack.c.l.b16 %v4579
        %v4859 = vunpack.c.h.b16 %v4579
        %v4860 = vunpack.c.l.b16 %v4580
        %v4861 = vunpack.c.h.b16 %v4580
        %v4862 = vunpack.c.l.b16 %v4581
        %v4863 = vunpack.c.h.b16 %v4581
        %v4864 = vunpack.c.l.b16 %v4582
        %v4865 = vunpack.c.h.b16 %v4582
        %v4866 = vunpack.c.l.b16 %v4583
        %v4867 = vunpack.c.h.b16 %v4583
        %v4868 = vunpack.c.l.b16 %v4584
        %v4869 = vunpack.c.h.b16 %v4584
        %v4870 = vunpack.c.l.b16 %v4585
        %v4871 = vunpack.c.h.b16 %v4585
        %v4872 = vunpack.c.l.b16 %v4586
        %v4873 = vunpack.c.h.b16 %v4586
        %v4874 = vunpack.c.l.b16 %v4587
        %v4875 = vunpack.c.h.b16 %v4587
        %v4876 = vunpack.c.l.b16 %v4588
        %v4877 = vunpack.c.h.b16 %v4588
        %v4878 = vunpack.c.l.b16 %v4589
        %v4879 = vunpack.c.h.b16 %v4589
        %v4880 = vunpack.c.l.b16 %v4590
        %v4881 = vunpack.c.h.b16 %v4590
        %v4882 = vunpack.c.l.b16 %v4591
        %v4883 = vunpack.c.h.b16 %v4591
        %v4884 = vunpack.c.l.b16 %v4592
        %v4885 = vunpack.c.h.b16 %v4592
        %v4886 = vunpack.c.l.b16 %v4593
        %v4887 = vunpack.c.h.b16 %v4593
        %v4888 = vunpack.c.l.b16 %v4594
        %v4889 = vunpack.c.h.b16 %v4594
        %v4890 = vunpack.c.l.b16 %v4595
        %v4891 = vunpack.c.h.b16 %v4595
        %v4892 = vunpack.c.l.b16 %v4596
        %v4893 = vunpack.c.h.b16 %v4596
        %v4894 = vunpack.c.l.b16 %v4597
        %v4895 = vunpack.c.h.b16 %v4597
        %v4896 = vunpack.c.l.b16 %v4598
        %v4897 = vunpack.c.h.b16 %v4598
        %v4898 = vunpack.c.l.b16 %v4599
        %v4899 = vunpack.c.h.b16 %v4599
        %v4900 = vunpack.c.l.b16 %v4600
        %v4901 = vunpack.c.h.b16 %v4600
        %v4902 = vunpack.c.l.b16 %v4601
        %v4903 = vunpack.c.h.b16 %v4601
        %v4904 = vunpack.c.l.b16 %v4602
        %v4905 = vunpack.c.h.b16 %v4602
        %v4906 = vunpack.c.l.b16 %v4603
        %v4907 = vunpack.c.h.b16 %v4603
        %v4908 = vunpack.c.l.b16 %v4604
        %v4909 = vunpack.c.h.b16 %v4604
        %v4910 = vunpack.c.l.b16 %v4605
        %v4911 = vunpack.c.h.b16 %v4605
        %v4912 = vunpack.c.l.b16 %v4606
        %v4913 = vunpack.c.h.b16 %v4606
        %v4914 = vunpack.c.l.b16 %v4607
        %v4915 = vunpack.c.h.b16 %v4607
        %v4916 = vunpack.c.l.b16 %v4608
        %v4917 = vunpack.c.h.b16 %v4608
        %v4918 = vunpack.c.l.b16 %v4609
        %v4919 = vunpack.c.h.b16 %v4609
        %v4920 = vunpack.c.l.b16 %v4610
        %v4921 = vunpack.c.h.b16 %v4610
        %v4922 = vunpack.c.l.b16 %v4611
        %v4923 = vunpack.c.h.b16 %v4611
        %v4924 = vunpack.c.l.b16 %v4612
        %v4925 = vunpack.c.h.b16 %v4612
        %v4926 = vunpack.c.l.b16 %v4613
        %v4927 = vunpack.c.h.b16 %v4613
        %v4928 = vunpack.c.l.b16 %v4614
        %v4929 = vunpack.c.h.b16 %v4614
        %v4930 = vunpack.c.l.b16 %v4615
        %v4931 = vunpack.c.h.b16 %v4615
        %v4932 = vunpack.c.l.b16 %v4616
        %v4933 = vunpack.c.h.b16 %v4616
        %v4934 = vunpack.c.l.b16 %v4617
        %v4935 = vunpack.c.h.b16 %v4617
        %v4936 = vunpack.c.l.b16 %v4618
        %v4937 = vunpack.c.h.b16 %v4618
        %v4938 = vunpack.c.l.b16 %v4619
        %v4939 = vunpack.c.h.b16 %v4619
        %v4940 = vunpack.c.l.b16 %v4620
        %v4941 = vunpack.c.h.b16 %v4620
        %v4942 = vunpack.c.l.b16 %v4621
        %v4943 = vunpack.c.h.b16 %v4621
        %v4944 = vunpack.c.l.b16 %v4622
        %v4945 = vunpack.c.h.b16 %v4622
        %v4946 = vunpack.c.l.b16 %v4623
        %v4947 = vunpack.c.h.b16 %v4623
        %v4948 = vunpack.c.l.b16 %v4624
        %v4949 = vunpack.c.h.b16 %v4624
        %v4950 = vunpack.c.l.b16 %v4625
        %v4951 = vunpack.c.h.b16 %v4625
        %v4952 = vunpack.c.l.b16 %v4626
        %v4953 = vunpack.c.h.b16 %v4626
        %v4954 = vunpack.c.l.b16 %v4627
        %v4955 = vunpack.c.h.b16 %v4627
        %v4956 = vunpack.c.l.b16 %v4628
        %v4957 = vunpack.c.h.b16 %v4628
        %v4958 = vunpack.c.l.b16 %v4629
        %v4959 = vunpack.c.h.b16 %v4629
        %v4960 = vunpack.c.l.b16 %v4630
        %v4961 = vunpack.c.h.b16 %v4630
        %v4962 = vunpack.c.l.b16 %v4631
        %v4963 = vunpack.c.h.b16 %v4631
        %v4964 = vunpack.c.l.b16 %v4632
        %v4965 = vunpack.c.h.b16 %v4632
        %v4966 = vunpack.c.l.b16 %v4633
        %v4967 = vunpack.c.h.b16 %v4633
        %v4968 = vunpack.c.l.b16 %v4634
        %v4969 = vunpack.c.h.b16 %v4634
        %v4970 = vunpack.c.l.b16 %v4635
        %v4971 = vunpack.c.h.b16 %v4635
        %v4972 = vunpack.c.l.b16 %v4636
        %v4973 = vunpack.c.h.b16 %v4636
        %v4974 = vunpack.c.l.b16 %v4637
        %v4975 = vunpack.c.h.b16 %v4637
        %v4976 = vunpack.c.l.b16 %v4638
        %v4977 = vunpack.c.h.b16 %v4638
        %v4978 = vunpack.c.l.b16 %v4639
        %v4979 = vunpack.c.h.b16 %v4639
        %v4980 = vunpack.c.l.b16 %v4640
        %v4981 = vunpack.c.h.b16 %v4640
        %v4982 = vunpack.c.l.b16 %v4641
        %v4983 = vunpack.c.h.b16 %v4641
        %v4984 = vunpack.c.l.b16 %v4642
        %v4985 = vunpack.c.h.b16 %v4642
        %v4986 = vunpack.c.l.b16 %v4643
        %v4987 = vunpack.c.h.b16 %v4643
        %v4988 = vunpack.c.l.b16 %v4644
        %v4989 = vunpack.c.h.b16 %v4644
        %v4990 = vunpack.c.l.b16 %v4645
        %v4991 = vunpack.c.h.b16 %v4645
        %v4992 = vunpack.c.l.b16 %v4646
        %v4993 = vunpack.c.h.b16 %v4646
        %v4994 = vunpack.c.l.b16 %v4647
        %v4995 = vunpack.c.h.b16 %v4647
        %v4996 = vunpack.c.l.b16 %v4648
        %v4997 = vunpack.c.h.b16 %v4648
        %v4998 = vunpack.c.l.b16 %v4649
        %v4999 = vunpack.c.h.b16 %v4649
        %v5000 = vunpack.c.l.b16 %v4650
        %v5001 = vunpack.c.h.b16 %v4650
        %v5002 = vunpack.c.l.b16 %v4651
        %v5003 = vunpack.c.h.b16 %v4651
        %v5004 = vunpack.c.l.b16 %v4652
        %v5005 = vunpack.c.h.b16 %v4652
        %v5006 = vunpack.c.l.b16 %v4653
        %v5007 = vunpack.c.h.b16 %v4653
        %v5008 = vunpack.c.l.b16 %v4654
        %v5009 = vunpack.c.h.b16 %v4654
        %v5010 = vunpack.c.l.b16 %v4655
        %v5011 = vunpack.c.h.b16 %v4655
        %v5012 = vunpack.c.l.b16 %v4656
        %v5013 = vunpack.c.h.b16 %v4656
        %v5014 = vunpack.c.l.b16 %v4657
        %v5015 = vunpack.c.h.b16 %v4657
        %v5016 = vunpack.c.l.b16 %v4658
        %v5017 = vunpack.c.h.b16 %v4658
        %v5018 = vunpack.c.l.b16 %v4659
        %v5019 = vunpack.c.h.b16 %v4659
        %v5020 = vunpack.c.l.b16 %v4660
        %v5021 = vunpack.c.h.b16 %v4660
        %v5022 = vunpack.c.l.b16 %v4661
        %v5023 = vunpack.c.h.b16 %v4661
        %v5024 = vunpack.c.l.b16 %v4662
        %v5025 = vunpack.c.h.b16 %v4662
        %v5026 = vunpack.c.l.b16 %v4663
        %v5027 = vunpack.c.h.b16 %v4663
        %v5028 = vunpack.c.l.b16 %v4664
        %v5029 = vunpack.c.h.b16 %v4664
        %v5030 = vunpack.c.l.b16 %v4665
        %v5031 = vunpack.c.h.b16 %v4665
        %v5032 = vunpack.c.l.b16 %v4666
        %v5033 = vunpack.c.h.b16 %v4666
        %v5034 = vunpack.c.l.b16 %v4667
        %v5035 = vunpack.c.h.b16 %v4667
        %v5036 = vunpack.c.l.b16 %v4668
        %v5037 = vunpack.c.h.b16 %v4668
        %v5038 = vunpack.c.l.b16 %v4669
        %v5039 = vunpack.c.h.b16 %v4669
        %v5040 = vunpack.c.l.b16 %v4670
        %v5041 = vunpack.c.h.b16 %v4670
        %v5042 = vunpack.c.l.b16 %v4671
        %v5043 = vunpack.c.h.b16 %v4671
        %v5044 = vunpack.c.l.b16 %v4672
        %v5045 = vunpack.c.h.b16 %v4672
        %v5046 = vunpack.c.l.b16 %v4673
        %v5047 = vunpack.c.h.b16 %v4673
        %v5048 = vunpack.c.l.b16 %v4674
        %v5049 = vunpack.c.h.b16 %v4674
        %v5050 = vunpack.c.l.b16 %v4675
        %v5051 = vunpack.c.h.b16 %v4675
        %v5052 = vunpack.c.l.b16 %v4676
        %v5053 = vunpack.c.h.b16 %v4676
        %v5054 = vunpack.c.l.b16 %v4677
        %v5055 = vunpack.c.h.b16 %v4677
        %v5056 = vunpack.c.l.b16 %v4678
        %v5057 = vunpack.c.h.b16 %v4678
        %v5058 = vunpack.c.l.b16 %v4679
        %v5059 = vunpack.c.h.b16 %v4679
        %v5060 = vunpack.c.l.b16 %v4680
        %v5061 = vunpack.c.h.b16 %v4680
        %v5062 = vunpack.c.l.b16 %v4681
        %v5063 = vunpack.c.h.b16 %v4681
        %v5064 = vunpack.c.l.b16 %v4682
        %v5065 = vunpack.c.h.b16 %v4682
        %v5066 = vunpack.c.l.b16 %v4683
        %v5067 = vunpack.c.h.b16 %v4683
        %v5068 = vunpack.c.l.b16 %v4684
        %v5069 = vunpack.c.h.b16 %v4684
        %v5070 = vunpack.c.l.b16 %v4685
        %v5071 = vunpack.c.h.b16 %v4685
        %v5072 = vunpack.c.l.b16 %v4686
        %v5073 = vunpack.c.h.b16 %v4686
        %v5074 = vunpack.c.l.b16 %v4687
        %v5075 = vunpack.c.h.b16 %v4687
        %v5076 = vunpack.c.l.b16 %v4688
        %v5077 = vunpack.c.h.b16 %v4688
        %v5078 = vunpack.c.l.b16 %v4689
        %v5079 = vunpack.c.h.b16 %v4689
        %v5080 = vunpack.c.l.b16 %v4690
        %v5081 = vunpack.c.h.b16 %v4690
        %v5082 = vunpack.c.l.b16 %v4691
        %v5083 = vunpack.c.h.b16 %v4691
        %v5084 = vunpack.c.l.b16 %v4692
        %v5085 = vunpack.c.h.b16 %v4692
        %v5086 = vunpack.c.l.b16 %v4693
        %v5087 = vunpack.c.h.b16 %v4693
        %v5088 = vunpack.c.l.b16 %v4694
        %v5089 = vunpack.c.h.b16 %v4694
        %v5090 = vunpack.c.l.b16 %v4695
        %v5091 = vunpack.c.h.b16 %v4695
        %v5092 = vpack.c.b16 %v4838, %v4836
        %v5093 = vpack.c.b16 %v4839, %v4837
        %v5094 = vpack.c.b16 %v4842, %v4840
        %v5095 = vpack.c.b16 %v4843, %v4841
        %v5096 = vpack.c.b16 %v4846, %v4844
        %v5097 = vpack.c.b16 %v4847, %v4845
        %v5098 = vpack.c.b16 %v4850, %v4848
        %v5099 = vpack.c.b16 %v4851, %v4849
        %v5100 = vpack.c.b16 %v4854, %v4852
        %v5101 = vpack.c.b16 %v4855, %v4853
        %v5102 = vpack.c.b16 %v4858, %v4856
        %v5103 = vpack.c.b16 %v4859, %v4857
        %v5104 = vpack.c.b16 %v4862, %v4860
        %v5105 = vpack.c.b16 %v4863, %v4861
        %v5106 = vpack.c.b16 %v4866, %v4864
        %v5107 = vpack.c.b16 %v4867, %v4865
        %v5108 = vpack.c.b16 %v4870, %v4868
        %v5109 = vpack.c.b16 %v4871, %v4869
        %v5110 = vpack.c.b16 %v4874, %v4872
        %v5111 = vpack.c.b16 %v4875, %v4873
        %v5112 = vpack.c.b16 %v4878, %v4876
        %v5113 = vpack.c.b16 %v4879, %v4877
        %v5114 = vpack.c.b16 %v4882, %v4880
        %v5115 = vpack.c.b16 %v4883, %v4881
        %v5116 = vpack.c.b16 %v4886, %v4884
        %v5117 = vpack.c.b16 %v4887, %v4885
        %v5118 = vpack.c.b16 %v4890, %v4888
        %v5119 = vpack.c.b16 %v4891, %v4889
        %v5120 = vpack.c.b16 %v4894, %v4892
        %v5121 = vpack.c.b16 %v4895, %v4893
        %v5122 = vpack.c.b16 %v4898, %v4896
        %v5123 = vpack.c.b16 %v4899, %v4897
        %v5124 = vpack.c.b16 %v4902, %v4900
        %v5125 = vpack.c.b16 %v4903, %v4901
        %v5126 = vpack.c.b16 %v4906, %v4904
        %v5127 = vpack.c.b16 %v4907, %v4905
        %v5128 = vpack.c.b16 %v4910, %v4908
        %v5129 = vpack.c.b16 %v4911, %v4909
        %v5130 = vpack.c.b16 %v4914, %v4912
        %v5131 = vpack.c.b16 %v4915, %v4913
        %v5132 = vpack.c.b16 %v4918, %v4916
        %v5133 = vpack.c.b16 %v4919, %v4917
        %v5134 = vpack.c.b16 %v4922, %v4920
        %v5135 = vpack.c.b16 %v4923, %v4921
        %v5136 = vpack.c.b16 %v4926, %v4924
        %v5137 = vpack.c.b16 %v4927, %v4925
        %v5138 = vpack.c.b16 %v4930, %v4928
        %v5139 = vpack.c.b16 %v4931, %v4929
        %v5140 = vpack.c.b16 %v4934, %v4932
        %v5141 = vpack.c.b16 %v4935, %v4933
        %v5142 = vpack.c.b16 %v4938, %v4936
        %v5143 = vpack.c.b16 %v4939, %v4937
        %v5144 = vpack.c.b16 %v4942, %v4940
        %v5145 = vpack.c.b16 %v4943, %v4941
        %v5146 = vpack.c.b16 %v4946, %v4944
        %v5147 = vpack.c.b16 %v4947, %v4945
        %v5148 = vpack.c.b16 %v4950, %v4948
        %v5149 = vpack.c.b16 %v4951, %v4949
        %v5150 = vpack.c.b16 %v4954, %v4952
        %v5151 = vpack.c.b16 %v4955, %v4953
        %v5152 = vpack.c.b16 %v4958, %v4956
        %v5153 = vpack.c.b16 %v4959, %v4957
        %v5154 = vpack.c.b16 %v4962, %v4960
        %v5155 = vpack.c.b16 %v4963, %v4961
        %v5156 = vpack.c.b16 %v4966, %v4964
        %v5157 = vpack.c.b16 %v4967, %v4965
        %v5158 = vpack.c.b16 %v4970, %v4968
        %v5159 = vpack.c.b16 %v4971, %v4969
        %v5160 = vpack.c.b16 %v4974, %v4972
        %v5161 = vpack.c.b16 %v4975, %v4973
        %v5162 = vpack.c.b16 %v4978, %v4976
        %v5163 = vpack.c.b16 %v4979, %v4977
        %v5164 = vpack.c.b16 %v4982, %v4980
        %v5165 = vpack.c.b16 %v4983, %v4981
        %v5166 = vpack.c.b16 %v4986, %v4984
        %v5167 = vpack.c.b16 %v4987, %v4985
        %v5168 = vpack.c.b16 %v4990, %v4988
        %v5169 = vpack.c.b16 %v4991, %v4989
        %v5170 = vpack.c.b16 %v4994, %v4992
        %v5171 = vpack.c.b16 %v4995, %v4993
        %v5172 = vpack.c.b16 %v4998, %v4996
        %v5173 = vpack.c.b16 %v4999, %v4997
        %v5174 = vpack.c.b16 %v5002, %v5000
        %v5175 = vpack.c.b16 %v5003, %v5001
        %v5176 = vpack.c.b16 %v5006, %v5004
        %v5177 = vpack.c.b16 %v5007, %v5005
        %v5178 = vpack.c.b16 %v5010, %v5008
        %v5179 = vpack.c.b16 %v5011, %v5009
        %v5180 = vpack.c.b16 %v5014, %v5012
        %v5181 = vpack.c.b16 %v5015, %v5013
        %v5182 = vpack.c.b16 %v5018, %v5016
        %v5183 = vpack.c.b16 %v5019, %v5017
        %v5184 = vpack.c.b16 %v5022, %v5020
        %v5185 = vpack.c.b16 %v5023, %v5021
        %v5186 = vpack.c.b16 %v5026, %v5024
        %v5187 = vpack.c.b16 %v5027, %v5025
        %v5188 = vpack.c.b16 %v5030, %v5028
        %v5189 = vpack.c.b16 %v5031, %v5029
        %v5190 = vpack.c.b16 %v5034, %v5032
        %v5191 = vpack.c.b16 %v5035, %v5033
        %v5192 = vpack.c.b16 %v5038, %v5036
        %v5193 = vpack.c.b16 %v5039, %v5037
        %v5194 = vpack.c.b16 %v5042, %v5040
        %v5195 = vpack.c.b16 %v5043, %v5041
        %v5196 = vpack.c.b16 %v5046, %v5044
        %v5197 = vpack.c.b16 %v5047, %v5045
        %v5198 = vpack.c.b16 %v5050, %v5048
        %v5199 = vpack.c.b16 %v5051, %v5049
        %v5200 = vpack.c.b16 %v5054, %v5052
        %v5201 = vpack.c.b16 %v5055, %v5053
        %v5202 = vpack.c.b16 %v5058, %v5056
        %v5203 = vpack.c.b16 %v5059, %v5057
        %v5204 = vpack.c.b16 %v5062, %v5060
        %v5205 = vpack.c.b16 %v5063, %v5061
        %v5206 = vpack.c.b16 %v5066, %v5064
        %v5207 = vpack.c.b16 %v5067, %v5065
        %v5208 = vpack.c.b16 %v5070, %v5068
        %v5209 = vpack.c.b16 %v5071, %v5069
        %v5210 = vpack.c.b16 %v5074, %v5072
        %v5211 = vpack.c.b16 %v5075, %v5073
        %v5212 = vpack.c.b16 %v5078, %v5076
        %v5213 = vpack.c.b16 %v5079, %v5077
        %v5214 = vpack.c.b16 %v5082, %v5080
        %v5215 = vpack.c.b16 %v5083, %v5081
        %v5216 = vpack.c.b16 %v5086, %v5084
        %v5217 = vpack.c.b16 %v5087, %v5085
        %v5218 = vpack.c.b16 %v5090, %v5088
        %v5219 = vpack.c.b16 %v5091, %v5089
        %5348 = vmatprep.subr.bf16.mxu0 %v5093
        %5349 = vmatpush1.bf16.msra.mxu0 %v5092
        %5350 = vmatprep.subr.bf16.mxu0 %v5095
        %5351 = vmatpush1.bf16.msra.mxu0 %v5094
        %5352 = vmatprep.subr.bf16.mxu0 %v5097
        %5353 = vmatpush1.bf16.msra.mxu0 %v5096
        %5354 = vmatprep.subr.bf16.mxu0 %v5099
        %5355 = vmatpush1.bf16.msra.mxu0 %v5098
        %5356 = vmatprep.subr.bf16.mxu0 %v5101
        %5357 = vmatpush1.bf16.msra.mxu0 %v5100
        %5358 = vmatprep.subr.bf16.mxu0 %v5103
        %5359 = vmatpush1.bf16.msra.mxu0 %v5102
        %5360 = vmatprep.subr.bf16.mxu0 %v5105
        %5361 = vmatpush1.bf16.msra.mxu0 %v5104
        %5362 = vmatprep.subr.bf16.mxu0 %v5107
        %5363 = vmatpush1.bf16.msra.mxu0 %v5106
        %5364 = vmatprep.subr.bf16.mxu0 %v5109
        %5365 = vmatpush1.bf16.msra.mxu0 %v5108
        %5366 = vmatprep.subr.bf16.mxu0 %v5111
        %5367 = vmatpush1.bf16.msra.mxu0 %v5110
        %5368 = vmatprep.subr.bf16.mxu0 %v5113
        %5369 = vmatpush1.bf16.msra.mxu0 %v5112
        %5370 = vmatprep.subr.bf16.mxu0 %v5115
        %5371 = vmatpush1.bf16.msra.mxu0 %v5114
        %5372 = vmatprep.subr.bf16.mxu0 %v5117
        %5373 = vmatpush1.bf16.msra.mxu0 %v5116
        %5374 = vmatprep.subr.bf16.mxu0 %v5119
        %5375 = vmatpush1.bf16.msra.mxu0 %v5118
        %5376 = vmatprep.subr.bf16.mxu0 %v5121
        %5377 = vmatpush1.bf16.msra.mxu0 %v5120
        %5378 = vmatprep.subr.bf16.mxu0 %v5123
        %5379 = vmatpush1.bf16.msra.mxu0 %v5122
        %5380 = vmatprep.mubr.bf16.mxu0 %v4561
        %5381 = vmatmul.mubr.bf16.gmra.mrb[0].mxu0 %v4560
        %v5382 = vpop.f32.mrb[0].mxu0
        %v5383 = vadd.f32 %v4701, %v5382
        %v5384 = vpop.f32.mrb[0].mxu0
        %v5385 = vadd.f32 %v4705, %v5384
        %v5386 = vpop.f32.mrb[0].mxu0
        %v5387 = vpop.f32.mrb[0].mxu0
        %5388 = vdwg.mxu0
        %5389 = vmatprep.subr.bf16.mxu0 %v5125
        %5390 = vmatpush1.bf16.msra.mxu0 %v5124
        %5391 = vmatprep.subr.bf16.mxu0 %v5127
        %5392 = vmatpush1.bf16.msra.mxu0 %v5126
        %5393 = vmatprep.subr.bf16.mxu0 %v5129
        %5394 = vmatpush1.bf16.msra.mxu0 %v5128
        %5395 = vmatprep.subr.bf16.mxu0 %v5131
        %5396 = vmatpush1.bf16.msra.mxu0 %v5130
        %5397 = vmatprep.subr.bf16.mxu0 %v5133
        %5398 = vmatpush1.bf16.msra.mxu0 %v5132
        %5399 = vmatprep.subr.bf16.mxu0 %v5135
        %5400 = vmatpush1.bf16.msra.mxu0 %v5134
        %5401 = vmatprep.subr.bf16.mxu0 %v5137
        %5402 = vmatpush1.bf16.msra.mxu0 %v5136
        %5403 = vmatprep.subr.bf16.mxu0 %v5139
        %5404 = vmatpush1.bf16.msra.mxu0 %v5138
        %5405 = vmatprep.subr.bf16.mxu0 %v5141
        %5406 = vmatpush1.bf16.msra.mxu0 %v5140
        %5407 = vmatprep.subr.bf16.mxu0 %v5143
        %5408 = vmatpush1.bf16.msra.mxu0 %v5142
        %5409 = vmatprep.subr.bf16.mxu0 %v5145
        %5410 = vmatpush1.bf16.msra.mxu0 %v5144
        %5411 = vmatprep.subr.bf16.mxu0 %v5147
        %5412 = vmatpush1.bf16.msra.mxu0 %v5146
        %5413 = vmatprep.subr.bf16.mxu0 %v5149
        %5414 = vmatpush1.bf16.msra.mxu0 %v5148
        %5415 = vmatprep.subr.bf16.mxu0 %v5151
        %5416 = vmatpush1.bf16.msra.mxu0 %v5150
        %5417 = vmatprep.subr.bf16.mxu0 %v5153
        %5418 = vmatpush1.bf16.msra.mxu0 %v5152
        %5419 = vmatprep.subr.bf16.mxu0 %v5155
        %5420 = vmatpush1.bf16.msra.mxu0 %v5154
        %5421 = vmatprep.mubr.bf16.mxu0 %v4563
        %5422 = vmatmul.mubr.bf16.gmra.mrb[0].mxu0 %v4562
        %v5423 = vpop.f32.mrb[0].mxu0
        %v5424 = vadd.f32 %v5383, %v5423
        %v5425 = vpop.f32.mrb[0].mxu0
        %v5426 = vadd.f32 %v5385, %v5425
        %v5427 = vpop.f32.mrb[0].mxu0
        %v5428 = vpop.f32.mrb[0].mxu0
        %5429 = vdwg.mxu0
        %5430 = vmatprep.subr.bf16.mxu0 %v5157
        %5431 = vmatpush1.bf16.msra.mxu0 %v5156
        %5432 = vmatprep.subr.bf16.mxu0 %v5159
        %5433 = vmatpush1.bf16.msra.mxu0 %v5158
        %5434 = vmatprep.subr.bf16.mxu0 %v5161
        %5435 = vmatpush1.bf16.msra.mxu0 %v5160
        %5436 = vmatprep.subr.bf16.mxu0 %v5163
        %5437 = vmatpush1.bf16.msra.mxu0 %v5162
        %5438 = vmatprep.subr.bf16.mxu0 %v5165
        %5439 = vmatpush1.bf16.msra.mxu0 %v5164
        %5440 = vmatprep.subr.bf16.mxu0 %v5167
        %5441 = vmatpush1.bf16.msra.mxu0 %v5166
        %5442 = vmatprep.subr.bf16.mxu0 %v5169
        %5443 = vmatpush1.bf16.msra.mxu0 %v5168
        %5444 = vmatprep.subr.bf16.mxu0 %v5171
        %5445 = vmatpush1.bf16.msra.mxu0 %v5170
        %5446 = vmatprep.subr.bf16.mxu0 %v5173
        %5447 = vmatpush1.bf16.msra.mxu0 %v5172
        %5448 = vmatprep.subr.bf16.mxu0 %v5175
        %5449 = vmatpush1.bf16.msra.mxu0 %v5174
        %5450 = vmatprep.subr.bf16.mxu0 %v5177
        %5451 = vmatpush1.bf16.msra.mxu0 %v5176
        %5452 = vmatprep.subr.bf16.mxu0 %v5179
        %5453 = vmatpush1.bf16.msra.mxu0 %v5178
        %5454 = vmatprep.subr.bf16.mxu0 %v5181
        %5455 = vmatpush1.bf16.msra.mxu0 %v5180
        %5456 = vmatprep.subr.bf16.mxu0 %v5183
        %5457 = vmatpush1.bf16.msra.mxu0 %v5182
        %5458 = vmatprep.subr.bf16.mxu0 %v5185
        %5459 = vmatpush1.bf16.msra.mxu0 %v5184
        %5460 = vmatprep.subr.bf16.mxu0 %v5187
        %5461 = vmatpush1.bf16.msra.mxu0 %v5186
        %5462 = vmatprep.mubr.bf16.mxu0 %v4565
        %5463 = vmatmul.mubr.bf16.gmra.mrb[0].mxu0 %v4564
        %v5464 = vpop.f32.mrb[0].mxu0
        %v5465 = vadd.f32 %v5424, %v5464
        %v5466 = vpop.f32.mrb[0].mxu0
        %v5467 = vadd.f32 %v5426, %v5466
        %v5468 = vpop.f32.mrb[0].mxu0
        %v5469 = vpop.f32.mrb[0].mxu0
        %5470 = vdwg.mxu0
        %5471 = vmatprep.subr.bf16.mxu0 %v5189
        %5472 = vmatpush1.bf16.msra.mxu0 %v5188
        %5473 = vmatprep.subr.bf16.mxu0 %v5191
        %5474 = vmatpush1.bf16.msra.mxu0 %v5190
        %5475 = vmatprep.subr.bf16.mxu0 %v5193
        %5476 = vmatpush1.bf16.msra.mxu0 %v5192
        %5477 = vmatprep.subr.bf16.mxu0 %v5195
        %5478 = vmatpush1.bf16.msra.mxu0 %v5194
        %5479 = vmatprep.subr.bf16.mxu0 %v5197
        %5480 = vmatpush1.bf16.msra.mxu0 %v5196
        %5481 = vmatprep.subr.bf16.mxu0 %v5199
        %5482 = vmatpush1.bf16.msra.mxu0 %v5198
        %5483 = vmatprep.subr.bf16.mxu0 %v5201
        %5484 = vmatpush1.bf16.msra.mxu0 %v5200
        %5485 = vmatprep.subr.bf16.mxu0 %v5203
        %5486 = vmatpush1.bf16.msra.mxu0 %v5202
        %5487 = vmatprep.subr.bf16.mxu0 %v5205
        %5488 = vmatpush1.bf16.msra.mxu0 %v5204
        %5489 = vmatprep.subr.bf16.mxu0 %v5207
        %5490 = vmatpush1.bf16.msra.mxu0 %v5206
        %5491 = vmatprep.subr.bf16.mxu0 %v5209
        %5492 = vmatpush1.bf16.msra.mxu0 %v5208
        %5493 = vmatprep.subr.bf16.mxu0 %v5211
        %5494 = vmatpush1.bf16.msra.mxu0 %v5210
        %5495 = vmatprep.subr.bf16.mxu0 %v5213
        %5496 = vmatpush1.bf16.msra.mxu0 %v5212
        %5497 = vmatprep.subr.bf16.mxu0 %v5215
        %5498 = vmatpush1.bf16.msra.mxu0 %v5214
        %5499 = vmatprep.subr.bf16.mxu0 %v5217
        %5500 = vmatpush1.bf16.msra.mxu0 %v5216
        %5501 = vmatprep.subr.bf16.mxu0 %v5219
        %5502 = vmatpush1.bf16.msra.mxu0 %v5218
        %5503 = vmatprep.mubr.bf16.mxu0 %v4567
        %5504 = vmatmul.mubr.bf16.gmra.mrb[0].mxu0 %v4566
        %v5505 = vpop.f32.mrb[0].mxu0
        %v5506 = vadd.f32 %v5465, %v5505
        %v5507 = vpop.f32.mrb[0].mxu0
        %v5508 = vadd.f32 %v5467, %v5507
        %v5509 = vpop.f32.mrb[0].mxu0
        %v5510 = vpop.f32.mrb[0].mxu0
        %5511 = vdwg.mxu0
        %v5512 = vld [vmem:[%s1235] sm:$0x3]
        %v5514 = vlaneseq
        %v5515 = vshrl.u32 %v5514, 7
        %v5516 = vsub.s32 0, %v5515
        %v5517 = vrot.slane %v5512, %v5516
        %v5518 = vlaneseq
        %v5519 = vshrl.u32 %v5518, 7
        %v5520 = vsub.s32 1, %v5519
        %v5521 = vrot.slane %v5512, %v5520
        %v5524 = vmul.f32 %v5517, %v5506
        %v5525 = vmul.f32 %v5521, %v5508
        %v5526 = vadd.f32 %v3466, %v5524
        %v5527 = vadd.f32 %v3467, %v5525
        %5528 = vst [vmem:[#allocation2] sm:$0xff] %v5526
        %5529 = vst [vmem:[#allocation2 + $0x8] sm:$0xff] %v5527
        %p5530 = scmp.eq.s32.totalorder %s46, 3
        // Predicated region
        $region221: #{uni_multitask_forward.1} parent=119 // pred_check
          %p5531 = pneg %p5530
        $region222: #{uni_multitask_forward.1} parent=119 // pred_check_branch
          %5533 = sbr.rel (%p5531) target = $region224
        $region223: #{uni_multitask_forward.1} parent=119 // pred_region
          %v5534 = vld [vmem:[#allocation24] sm:$0x3]
          %v5535 = vld [vmem:[#allocation25] sm:$0x3]
          %vm5536 = vcmask 1040384
          %v5537 = vsel %vm5536, %v5526, 0.0
          %v5538 = vsel %vm5536, %v5527, 0.0
          %v5539 = vadd.f32 %v5537, %v5538
          %5540 = vadd.xlane.f32.xlu0 %v5539
          %v5541 = vpop.xlane.xlu0 %5540
          %v5542 = vmul.f32 %v5541, %v2177
          %v5543 = vsub.f32 %v5526, %v5542
          %v5544 = vsub.f32 %v5527, %v5542
          %v5545 = vmul.f32 %v5543, %v5543
          %v5546 = vmul.f32 %v5544, %v5544
          %v5547 = vsel %vm5536, %v5545, 0.0
          %v5548 = vsel %vm5536, %v5546, 0.0
          %v5549 = vadd.f32 %v5547, %v5548
          %5550 = vadd.xlane.f32.xlu0 %v5549
          %v5551 = vpop.xlane.xlu0 %5550
          %v5552 = vmul.f32 %v5551, %v2177
          %v5553 = vadd.f32 %v5552, 1e-06
          %v5554 = vrsqrt.pop %v5553
          %v5555 = vmul.f32 %v5543, %v5554
          %v5556 = vmul.f32 %v5544, %v5554
          %v5558 = vlaneseq
          %v5559 = vshrl.u32 %v5558, 7
          %v5560 = vsub.s32 0, %v5559
          %v5561 = vrot.slane %v5534, %v5560
          %v5562 = vlaneseq
          %v5563 = vshrl.u32 %v5562, 7
          %v5564 = vsub.s32 1, %v5563
          %v5565 = vrot.slane %v5534, %v5564
          %v5568 = vmul.f32 %v5555, %v5561
          %v5569 = vmul.f32 %v5556, %v5565
          %v5571 = vlaneseq
          %v5572 = vshrl.u32 %v5571, 7
          %v5573 = vsub.s32 0, %v5572
          %v5574 = vrot.slane %v5535, %v5573
          %v5575 = vlaneseq
          %v5576 = vshrl.u32 %v5575, 7
          %v5577 = vsub.s32 1, %v5576
          %v5578 = vrot.slane %v5535, %v5577
          %v5581 = vadd.f32 %v5568, %v5574
          %v5582 = vadd.f32 %v5569, %v5578
          %v5583 = vpack.c.bf16 %v5581, %v5581
          %v5584 = vpack.c.bf16 %v5582, %v5582
          %v5585 = vld [vmem:[#allocation26] sm:$0xff]
          %v5586 = vld [vmem:[#allocation26 + $0x8] sm:$0xff]
          %v5587 = vld [vmem:[#allocation26 + $0x10] sm:$0xff]
          %v5588 = vld [vmem:[#allocation26 + $0x18] sm:$0xff]
          %v5589 = vld [vmem:[#allocation26 + $0x20] sm:$0xff]
          %v5590 = vld [vmem:[#allocation26 + $0x28] sm:$0xff]
          %v5591 = vld [vmem:[#allocation26 + $0x30] sm:$0xff]
          %v5592 = vld [vmem:[#allocation26 + $0x38] sm:$0xff]
          %v5593 = vld [vmem:[#allocation26 + $0x40] sm:$0xff]
          %v5594 = vld [vmem:[#allocation26 + $0x48] sm:$0xff]
          %v5595 = vld [vmem:[#allocation26 + $0x50] sm:$0xff]
          %v5596 = vld [vmem:[#allocation26 + $0x58] sm:$0xff]
          %v5597 = vld [vmem:[#allocation26 + $0x60] sm:$0xff]
          %v5598 = vld [vmem:[#allocation26 + $0x68] sm:$0xff]
          %v5599 = vld [vmem:[#allocation26 + $0x70] sm:$0xff]
          %v5600 = vld [vmem:[#allocation26 + $0x78] sm:$0xff]
          %v5601 = vld [vmem:[#allocation26 + $0x80] sm:$0xff]
          %v5602 = vld [vmem:[#allocation26 + $0x88] sm:$0xff]
          %v5603 = vld [vmem:[#allocation26 + $0x90] sm:$0xff]
          %v5604 = vld [vmem:[#allocation26 + $0x98] sm:$0xff]
          %v5605 = vld [vmem:[#allocation26 + $0xa0] sm:$0xff]
          %v5606 = vld [vmem:[#allocation26 + $0xa8] sm:$0xff]
          %v5607 = vld [vmem:[#allocation26 + $0xb0] sm:$0xff]
          %v5608 = vld [vmem:[#allocation26 + $0xb8] sm:$0xff]
          %v5609 = vld [vmem:[#allocation26 + $0xc0] sm:$0xff]
          %v5610 = vld [vmem:[#allocation26 + $0xc8] sm:$0xff]
          %v5611 = vld [vmem:[#allocation26 + $0xd0] sm:$0xff]
          %v5612 = vld [vmem:[#allocation26 + $0xd8] sm:$0xff]
          %v5613 = vld [vmem:[#allocation26 + $0xe0] sm:$0xff]
          %v5614 = vld [vmem:[#allocation26 + $0xe8] sm:$0xff]
          %v5615 = vld [vmem:[#allocation26 + $0xf0] sm:$0xff]
          %v5616 = vld [vmem:[#allocation26 + $0xf8] sm:$0xff]
          %v5617 = vld [vmem:[#allocation26 + $0x100] sm:$0xff]
          %v5618 = vld [vmem:[#allocation26 + $0x108] sm:$0xff]
          %v5619 = vld [vmem:[#allocation26 + $0x110] sm:$0xff]
          %v5620 = vld [vmem:[#allocation26 + $0x118] sm:$0xff]
          %v5621 = vld [vmem:[#allocation26 + $0x120] sm:$0xff]
          %v5622 = vld [vmem:[#allocation26 + $0x128] sm:$0xff]
          %v5623 = vld [vmem:[#allocation26 + $0x130] sm:$0xff]
          %v5624 = vld [vmem:[#allocation26 + $0x138] sm:$0xff]
          %v5625 = vld [vmem:[#allocation26 + $0x140] sm:$0xff]
          %v5626 = vld [vmem:[#allocation26 + $0x148] sm:$0xff]
          %v5627 = vld [vmem:[#allocation26 + $0x150] sm:$0xff]
          %v5628 = vld [vmem:[#allocation26 + $0x158] sm:$0xff]
          %v5629 = vld [vmem:[#allocation26 + $0x160] sm:$0xff]
          %v5630 = vld [vmem:[#allocation26 + $0x168] sm:$0xff]
          %v5631 = vld [vmem:[#allocation26 + $0x170] sm:$0xff]
          %v5632 = vld [vmem:[#allocation26 + $0x178] sm:$0xff]
          %v5633 = vld [vmem:[#allocation26 + $0x180] sm:$0xff]
          %v5634 = vld [vmem:[#allocation26 + $0x188] sm:$0xff]
          %v5635 = vld [vmem:[#allocation26 + $0x190] sm:$0xff]
          %v5636 = vld [vmem:[#allocation26 + $0x198] sm:$0xff]
          %v5637 = vld [vmem:[#allocation26 + $0x1a0] sm:$0xff]
          %v5638 = vld [vmem:[#allocation26 + $0x1a8] sm:$0xff]
          %v5639 = vld [vmem:[#allocation26 + $0x1b0] sm:$0xff]
          %v5640 = vld [vmem:[#allocation26 + $0x1b8] sm:$0xff]
          %v5641 = vld [vmem:[#allocation26 + $0x1c0] sm:$0xff]
          %v5642 = vld [vmem:[#allocation26 + $0x1c8] sm:$0xff]
          %v5643 = vld [vmem:[#allocation26 + $0x1d0] sm:$0xff]
          %v5644 = vld [vmem:[#allocation26 + $0x1d8] sm:$0xff]
          %v5645 = vld [vmem:[#allocation26 + $0x1e0] sm:$0xff]
          %v5646 = vld [vmem:[#allocation26 + $0x1e8] sm:$0xff]
          %v5647 = vld [vmem:[#allocation26 + $0x1f0] sm:$0xff]
          %v5648 = vld [vmem:[#allocation26 + $0x1f8] sm:$0xff]
          %v5649 = vld [vmem:[#allocation26 + $0x200] sm:$0xff]
          %v5650 = vld [vmem:[#allocation26 + $0x208] sm:$0xff]
          %v5651 = vld [vmem:[#allocation26 + $0x210] sm:$0xff]
          %v5652 = vld [vmem:[#allocation26 + $0x218] sm:$0xff]
          %v5653 = vld [vmem:[#allocation26 + $0x220] sm:$0xff]
          %v5654 = vld [vmem:[#allocation26 + $0x228] sm:$0xff]
          %v5655 = vld [vmem:[#allocation26 + $0x230] sm:$0xff]
          %v5656 = vld [vmem:[#allocation26 + $0x238] sm:$0xff]
          %v5657 = vld [vmem:[#allocation26 + $0x240] sm:$0xff]
          %v5658 = vld [vmem:[#allocation26 + $0x248] sm:$0xff]
          %v5659 = vld [vmem:[#allocation26 + $0x250] sm:$0xff]
          %v5660 = vld [vmem:[#allocation26 + $0x258] sm:$0xff]
          %v5661 = vld [vmem:[#allocation26 + $0x260] sm:$0xff]
          %v5662 = vld [vmem:[#allocation26 + $0x268] sm:$0xff]
          %v5663 = vld [vmem:[#allocation26 + $0x270] sm:$0xff]
          %v5664 = vld [vmem:[#allocation26 + $0x278] sm:$0xff]
          %v5665 = vld [vmem:[#allocation26 + $0x280] sm:$0xff]
          %v5666 = vld [vmem:[#allocation26 + $0x288] sm:$0xff]
          %v5667 = vld [vmem:[#allocation26 + $0x290] sm:$0xff]
          %v5668 = vld [vmem:[#allocation26 + $0x298] sm:$0xff]
          %v5669 = vld [vmem:[#allocation26 + $0x2a0] sm:$0xff]
          %v5670 = vld [vmem:[#allocation26 + $0x2a8] sm:$0xff]
          %v5671 = vld [vmem:[#allocation26 + $0x2b0] sm:$0xff]
          %v5672 = vld [vmem:[#allocation26 + $0x2b8] sm:$0xff]
          %v5673 = vld [vmem:[#allocation26 + $0x2c0] sm:$0xff]
          %v5674 = vld [vmem:[#allocation26 + $0x2c8] sm:$0xff]
          %v5675 = vld [vmem:[#allocation26 + $0x2d0] sm:$0xff]
          %v5676 = vld [vmem:[#allocation26 + $0x2d8] sm:$0xff]
          %v5677 = vld [vmem:[#allocation26 + $0x2e0] sm:$0xff]
          %v5678 = vld [vmem:[#allocation26 + $0x2e8] sm:$0xff]
          %v5679 = vld [vmem:[#allocation26 + $0x2f0] sm:$0xff]
          %v5680 = vld [vmem:[#allocation26 + $0x2f8] sm:$0xff]
          %v5681 = vld [vmem:[#allocation28] sm:$0x3f]
          %v5778 = vunpack.c.l.b16 %v5585
          %v5779 = vunpack.c.h.b16 %v5585
          %v5780 = vunpack.c.l.b16 %v5586
          %v5781 = vunpack.c.h.b16 %v5586
          %v5782 = vunpack.c.l.b16 %v5587
          %v5783 = vunpack.c.h.b16 %v5587
          %v5784 = vunpack.c.l.b16 %v5588
          %v5785 = vunpack.c.h.b16 %v5588
          %v5786 = vunpack.c.l.b16 %v5589
          %v5787 = vunpack.c.h.b16 %v5589
          %v5788 = vunpack.c.l.b16 %v5590
          %v5789 = vunpack.c.h.b16 %v5590
          %v5790 = vunpack.c.l.b16 %v5591
          %v5791 = vunpack.c.h.b16 %v5591
          %v5792 = vunpack.c.l.b16 %v5592
          %v5793 = vunpack.c.h.b16 %v5592
          %v5794 = vunpack.c.l.b16 %v5593
          %v5795 = vunpack.c.h.b16 %v5593
          %v5796 = vunpack.c.l.b16 %v5594
          %v5797 = vunpack.c.h.b16 %v5594
          %v5798 = vunpack.c.l.b16 %v5595
          %v5799 = vunpack.c.h.b16 %v5595
          %v5800 = vunpack.c.l.b16 %v5596
          %v5801 = vunpack.c.h.b16 %v5596
          %v5802 = vunpack.c.l.b16 %v5597
          %v5803 = vunpack.c.h.b16 %v5597
          %v5804 = vunpack.c.l.b16 %v5598
          %v5805 = vunpack.c.h.b16 %v5598
          %v5806 = vunpack.c.l.b16 %v5599
          %v5807 = vunpack.c.h.b16 %v5599
          %v5808 = vunpack.c.l.b16 %v5600
          %v5809 = vunpack.c.h.b16 %v5600
          %v5810 = vunpack.c.l.b16 %v5601
          %v5811 = vunpack.c.h.b16 %v5601
          %v5812 = vunpack.c.l.b16 %v5602
          %v5813 = vunpack.c.h.b16 %v5602
          %v5814 = vunpack.c.l.b16 %v5603
          %v5815 = vunpack.c.h.b16 %v5603
          %v5816 = vunpack.c.l.b16 %v5604
          %v5817 = vunpack.c.h.b16 %v5604
          %v5818 = vunpack.c.l.b16 %v5605
          %v5819 = vunpack.c.h.b16 %v5605
          %v5820 = vunpack.c.l.b16 %v5606
          %v5821 = vunpack.c.h.b16 %v5606
          %v5822 = vunpack.c.l.b16 %v5607
          %v5823 = vunpack.c.h.b16 %v5607
          %v5824 = vunpack.c.l.b16 %v5608
          %v5825 = vunpack.c.h.b16 %v5608
          %v5826 = vunpack.c.l.b16 %v5609
          %v5827 = vunpack.c.h.b16 %v5609
          %v5828 = vunpack.c.l.b16 %v5610
          %v5829 = vunpack.c.h.b16 %v5610
          %v5830 = vunpack.c.l.b16 %v5611
          %v5831 = vunpack.c.h.b16 %v5611
          %v5832 = vunpack.c.l.b16 %v5612
          %v5833 = vunpack.c.h.b16 %v5612
          %v5834 = vunpack.c.l.b16 %v5613
          %v5835 = vunpack.c.h.b16 %v5613
          %v5836 = vunpack.c.l.b16 %v5614
          %v5837 = vunpack.c.h.b16 %v5614
          %v5838 = vunpack.c.l.b16 %v5615
          %v5839 = vunpack.c.h.b16 %v5615
          %v5840 = vunpack.c.l.b16 %v5616
          %v5841 = vunpack.c.h.b16 %v5616
          %v5842 = vunpack.c.l.b16 %v5617
          %v5843 = vunpack.c.h.b16 %v5617
          %v5844 = vunpack.c.l.b16 %v5618
          %v5845 = vunpack.c.h.b16 %v5618
          %v5846 = vunpack.c.l.b16 %v5619
          %v5847 = vunpack.c.h.b16 %v5619
          %v5848 = vunpack.c.l.b16 %v5620
          %v5849 = vunpack.c.h.b16 %v5620
          %v5850 = vunpack.c.l.b16 %v5621
          %v5851 = vunpack.c.h.b16 %v5621
          %v5852 = vunpack.c.l.b16 %v5622
          %v5853 = vunpack.c.h.b16 %v5622
          %v5854 = vunpack.c.l.b16 %v5623
          %v5855 = vunpack.c.h.b16 %v5623
          %v5856 = vunpack.c.l.b16 %v5624
          %v5857 = vunpack.c.h.b16 %v5624
          %v5858 = vunpack.c.l.b16 %v5625
          %v5859 = vunpack.c.h.b16 %v5625
          %v5860 = vunpack.c.l.b16 %v5626
          %v5861 = vunpack.c.h.b16 %v5626
          %v5862 = vunpack.c.l.b16 %v5627
          %v5863 = vunpack.c.h.b16 %v5627
          %v5864 = vunpack.c.l.b16 %v5628
          %v5865 = vunpack.c.h.b16 %v5628
          %v5866 = vunpack.c.l.b16 %v5629
          %v5867 = vunpack.c.h.b16 %v5629
          %v5868 = vunpack.c.l.b16 %v5630
          %v5869 = vunpack.c.h.b16 %v5630
          %v5870 = vunpack.c.l.b16 %v5631
          %v5871 = vunpack.c.h.b16 %v5631
          %v5872 = vunpack.c.l.b16 %v5632
          %v5873 = vunpack.c.h.b16 %v5632
          %v5874 = vunpack.c.l.b16 %v5633
          %v5875 = vunpack.c.h.b16 %v5633
          %v5876 = vunpack.c.l.b16 %v5634
          %v5877 = vunpack.c.h.b16 %v5634
          %v5878 = vunpack.c.l.b16 %v5635
          %v5879 = vunpack.c.h.b16 %v5635
          %v5880 = vunpack.c.l.b16 %v5636
          %v5881 = vunpack.c.h.b16 %v5636
          %v5882 = vunpack.c.l.b16 %v5637
          %v5883 = vunpack.c.h.b16 %v5637
          %v5884 = vunpack.c.l.b16 %v5638
          %v5885 = vunpack.c.h.b16 %v5638
          %v5886 = vunpack.c.l.b16 %v5639
          %v5887 = vunpack.c.h.b16 %v5639
          %v5888 = vunpack.c.l.b16 %v5640
          %v5889 = vunpack.c.h.b16 %v5640
          %v5890 = vunpack.c.l.b16 %v5641
          %v5891 = vunpack.c.h.b16 %v5641
          %v5892 = vunpack.c.l.b16 %v5642
          %v5893 = vunpack.c.h.b16 %v5642
          %v5894 = vunpack.c.l.b16 %v5643
          %v5895 = vunpack.c.h.b16 %v5643
          %v5896 = vunpack.c.l.b16 %v5644
          %v5897 = vunpack.c.h.b16 %v5644
          %v5898 = vunpack.c.l.b16 %v5645
          %v5899 = vunpack.c.h.b16 %v5645
          %v5900 = vunpack.c.l.b16 %v5646
          %v5901 = vunpack.c.h.b16 %v5646
          %v5902 = vunpack.c.l.b16 %v5647
          %v5903 = vunpack.c.h.b16 %v5647
          %v5904 = vunpack.c.l.b16 %v5648
          %v5905 = vunpack.c.h.b16 %v5648
          %v5906 = vunpack.c.l.b16 %v5649
          %v5907 = vunpack.c.h.b16 %v5649
          %v5908 = vunpack.c.l.b16 %v5650
          %v5909 = vunpack.c.h.b16 %v5650
          %v5910 = vunpack.c.l.b16 %v5651
          %v5911 = vunpack.c.h.b16 %v5651
          %v5912 = vunpack.c.l.b16 %v5652
          %v5913 = vunpack.c.h.b16 %v5652
          %v5914 = vunpack.c.l.b16 %v5653
          %v5915 = vunpack.c.h.b16 %v5653
          %v5916 = vunpack.c.l.b16 %v5654
          %v5917 = vunpack.c.h.b16 %v5654
          %v5918 = vunpack.c.l.b16 %v5655
          %v5919 = vunpack.c.h.b16 %v5655
          %v5920 = vunpack.c.l.b16 %v5656
          %v5921 = vunpack.c.h.b16 %v5656
          %v5922 = vunpack.c.l.b16 %v5657
          %v5923 = vunpack.c.h.b16 %v5657
          %v5924 = vunpack.c.l.b16 %v5658
          %v5925 = vunpack.c.h.b16 %v5658
          %v5926 = vunpack.c.l.b16 %v5659
          %v5927 = vunpack.c.h.b16 %v5659
          %v5928 = vunpack.c.l.b16 %v5660
          %v5929 = vunpack.c.h.b16 %v5660
          %v5930 = vunpack.c.l.b16 %v5661
          %v5931 = vunpack.c.h.b16 %v5661
          %v5932 = vunpack.c.l.b16 %v5662
          %v5933 = vunpack.c.h.b16 %v5662
          %v5934 = vunpack.c.l.b16 %v5663
          %v5935 = vunpack.c.h.b16 %v5663
          %v5936 = vunpack.c.l.b16 %v5664
          %v5937 = vunpack.c.h.b16 %v5664
          %v5938 = vunpack.c.l.b16 %v5665
          %v5939 = vunpack.c.h.b16 %v5665
          %v5940 = vunpack.c.l.b16 %v5666
          %v5941 = vunpack.c.h.b16 %v5666
          %v5942 = vunpack.c.l.b16 %v5667
          %v5943 = vunpack.c.h.b16 %v5667
          %v5944 = vunpack.c.l.b16 %v5668
          %v5945 = vunpack.c.h.b16 %v5668
          %v5946 = vunpack.c.l.b16 %v5669
          %v5947 = vunpack.c.h.b16 %v5669
          %v5948 = vunpack.c.l.b16 %v5670
          %v5949 = vunpack.c.h.b16 %v5670
          %v5950 = vunpack.c.l.b16 %v5671
          %v5951 = vunpack.c.h.b16 %v5671
          %v5952 = vunpack.c.l.b16 %v5672
          %v5953 = vunpack.c.h.b16 %v5672
          %v5954 = vunpack.c.l.b16 %v5673
          %v5955 = vunpack.c.h.b16 %v5673
          %v5956 = vunpack.c.l.b16 %v5674
          %v5957 = vunpack.c.h.b16 %v5674
          %v5958 = vunpack.c.l.b16 %v5675
          %v5959 = vunpack.c.h.b16 %v5675
          %v5960 = vunpack.c.l.b16 %v5676
          %v5961 = vunpack.c.h.b16 %v5676
          %v5962 = vunpack.c.l.b16 %v5677
          %v5963 = vunpack.c.h.b16 %v5677
          %v5964 = vunpack.c.l.b16 %v5678
          %v5965 = vunpack.c.h.b16 %v5678
          %v5966 = vunpack.c.l.b16 %v5679
          %v5967 = vunpack.c.h.b16 %v5679
          %v5968 = vunpack.c.l.b16 %v5680
          %v5969 = vunpack.c.h.b16 %v5680
          %v5970 = vpack.c.b16 %v5784, %v5778
          %v5971 = vpack.c.b16 %v5785, %v5779
          %v5972 = vpack.c.b16 %v5786, %v5780
          %v5973 = vpack.c.b16 %v5787, %v5781
          %v5974 = vpack.c.b16 %v5788, %v5782
          %v5975 = vpack.c.b16 %v5789, %v5783
          %v5976 = vpack.c.b16 %v5796, %v5790
          %v5977 = vpack.c.b16 %v5797, %v5791
          %v5978 = vpack.c.b16 %v5798, %v5792
          %v5979 = vpack.c.b16 %v5799, %v5793
          %v5980 = vpack.c.b16 %v5800, %v5794
          %v5981 = vpack.c.b16 %v5801, %v5795
          %v5982 = vpack.c.b16 %v5808, %v5802
          %v5983 = vpack.c.b16 %v5809, %v5803
          %v5984 = vpack.c.b16 %v5810, %v5804
          %v5985 = vpack.c.b16 %v5811, %v5805
          %v5986 = vpack.c.b16 %v5812, %v5806
          %v5987 = vpack.c.b16 %v5813, %v5807
          %v5988 = vpack.c.b16 %v5820, %v5814
          %v5989 = vpack.c.b16 %v5821, %v5815
          %v5990 = vpack.c.b16 %v5822, %v5816
          %v5991 = vpack.c.b16 %v5823, %v5817
          %v5992 = vpack.c.b16 %v5824, %v5818
          %v5993 = vpack.c.b16 %v5825, %v5819
          %v5994 = vpack.c.b16 %v5832, %v5826
          %v5995 = vpack.c.b16 %v5833, %v5827
          %v5996 = vpack.c.b16 %v5834, %v5828
          %v5997 = vpack.c.b16 %v5835, %v5829
          %v5998 = vpack.c.b16 %v5836, %v5830
          %v5999 = vpack.c.b16 %v5837, %v5831
          %v6000 = vpack.c.b16 %v5844, %v5838
          %v6001 = vpack.c.b16 %v5845, %v5839
          %v6002 = vpack.c.b16 %v5846, %v5840
          %v6003 = vpack.c.b16 %v5847, %v5841
          %v6004 = vpack.c.b16 %v5848, %v5842
          %v6005 = vpack.c.b16 %v5849, %v5843
          %v6006 = vpack.c.b16 %v5856, %v5850
          %v6007 = vpack.c.b16 %v5857, %v5851
          %v6008 = vpack.c.b16 %v5858, %v5852
          %v6009 = vpack.c.b16 %v5859, %v5853
          %v6010 = vpack.c.b16 %v5860, %v5854
          %v6011 = vpack.c.b16 %v5861, %v5855
          %v6012 = vpack.c.b16 %v5868, %v5862
          %v6013 = vpack.c.b16 %v5869, %v5863
          %v6014 = vpack.c.b16 %v5870, %v5864
          %v6015 = vpack.c.b16 %v5871, %v5865
          %v6016 = vpack.c.b16 %v5872, %v5866
          %v6017 = vpack.c.b16 %v5873, %v5867
          %v6018 = vpack.c.b16 %v5880, %v5874
          %v6019 = vpack.c.b16 %v5881, %v5875
          %v6020 = vpack.c.b16 %v5882, %v5876
          %v6021 = vpack.c.b16 %v5883, %v5877
          %v6022 = vpack.c.b16 %v5884, %v5878
          %v6023 = vpack.c.b16 %v5885, %v5879
          %v6024 = vpack.c.b16 %v5892, %v5886
          %v6025 = vpack.c.b16 %v5893, %v5887
          %v6026 = vpack.c.b16 %v5894, %v5888
          %v6027 = vpack.c.b16 %v5895, %v5889
          %v6028 = vpack.c.b16 %v5896, %v5890
          %v6029 = vpack.c.b16 %v5897, %v5891
          %v6030 = vpack.c.b16 %v5904, %v5898
          %v6031 = vpack.c.b16 %v5905, %v5899
          %v6032 = vpack.c.b16 %v5906, %v5900
          %v6033 = vpack.c.b16 %v5907, %v5901
          %v6034 = vpack.c.b16 %v5908, %v5902
          %v6035 = vpack.c.b16 %v5909, %v5903
          %v6036 = vpack.c.b16 %v5916, %v5910
          %v6037 = vpack.c.b16 %v5917, %v5911
          %v6038 = vpack.c.b16 %v5918, %v5912
          %v6039 = vpack.c.b16 %v5919, %v5913
          %v6040 = vpack.c.b16 %v5920, %v5914
          %v6041 = vpack.c.b16 %v5921, %v5915
          %v6042 = vpack.c.b16 %v5928, %v5922
          %v6043 = vpack.c.b16 %v5929, %v5923
          %v6044 = vpack.c.b16 %v5930, %v5924
          %v6045 = vpack.c.b16 %v5931, %v5925
          %v6046 = vpack.c.b16 %v5932, %v5926
          %v6047 = vpack.c.b16 %v5933, %v5927
          %v6048 = vpack.c.b16 %v5940, %v5934
          %v6049 = vpack.c.b16 %v5941, %v5935
          %v6050 = vpack.c.b16 %v5942, %v5936
          %v6051 = vpack.c.b16 %v5943, %v5937
          %v6052 = vpack.c.b16 %v5944, %v5938
          %v6053 = vpack.c.b16 %v5945, %v5939
          %v6054 = vpack.c.b16 %v5952, %v5946
          %v6055 = vpack.c.b16 %v5953, %v5947
          %v6056 = vpack.c.b16 %v5954, %v5948
          %v6057 = vpack.c.b16 %v5955, %v5949
          %v6058 = vpack.c.b16 %v5956, %v5950
          %v6059 = vpack.c.b16 %v5957, %v5951
          %v6060 = vpack.c.b16 %v5964, %v5958
          %v6061 = vpack.c.b16 %v5965, %v5959
          %v6062 = vpack.c.b16 %v5966, %v5960
          %v6063 = vpack.c.b16 %v5967, %v5961
          %v6064 = vpack.c.b16 %v5968, %v5962
          %v6065 = vpack.c.b16 %v5969, %v5963
          %v6163 = vlaneseq
          %v6164 = vshrl.u32 %v6163, 7
          %v6165 = vsub.s32 0, %v6164
          %v6166 = vrot.slane %v5681, %v6165
          %v6167 = vlaneseq
          %v6168 = vshrl.u32 %v6167, 7
          %v6169 = vsub.s32 1, %v6168
          %v6170 = vrot.slane %v5681, %v6169
          %v6171 = vlaneseq
          %v6172 = vshrl.u32 %v6171, 7
          %v6173 = vsub.s32 2, %v6172
          %v6174 = vrot.slane %v5681, %v6173
          %v6175 = vlaneseq
          %v6176 = vshrl.u32 %v6175, 7
          %v6177 = vsub.s32 3, %v6176
          %v6178 = vrot.slane %v5681, %v6177
          %v6179 = vlaneseq
          %v6180 = vshrl.u32 %v6179, 7
          %v6181 = vsub.s32 4, %v6180
          %v6182 = vrot.slane %v5681, %v6181
          %v6183 = vlaneseq
          %v6184 = vshrl.u32 %v6183, 7
          %v6185 = vsub.s32 5, %v6184
          %v6186 = vrot.slane %v5681, %v6185
          %6193 = vmatprep.subr.bf16.mxu0 %v5971
          %6194 = vmatpush1.bf16.msra.mxu0 %v5970
          %6195 = vmatprep.subr.bf16.mxu0 %v5977
          %6196 = vmatpush1.bf16.msra.mxu0 %v5976
          %6197 = vmatprep.subr.bf16.mxu0 %v5983
          %6198 = vmatpush1.bf16.msra.mxu0 %v5982
          %6199 = vmatprep.subr.bf16.mxu0 %v5989
          %6200 = vmatpush1.bf16.msra.mxu0 %v5988
          %6201 = vmatprep.subr.bf16.mxu0 %v5995
          %6202 = vmatpush1.bf16.msra.mxu0 %v5994
          %6203 = vmatprep.subr.bf16.mxu0 %v6001
          %6204 = vmatpush1.bf16.msra.mxu0 %v6000
          %6205 = vmatprep.subr.bf16.mxu0 %v6007
          %6206 = vmatpush1.bf16.msra.mxu0 %v6006
          %6207 = vmatprep.subr.bf16.mxu0 %v6013
          %6208 = vmatpush1.bf16.msra.mxu0 %v6012
          %6209 = vmatprep.subr.bf16.mxu0 %v6019
          %6210 = vmatpush1.bf16.msra.mxu0 %v6018
          %6211 = vmatprep.subr.bf16.mxu0 %v6025
          %6212 = vmatpush1.bf16.msra.mxu0 %v6024
          %6213 = vmatprep.subr.bf16.mxu0 %v6031
          %6214 = vmatpush1.bf16.msra.mxu0 %v6030
          %6215 = vmatprep.subr.bf16.mxu0 %v6037
          %6216 = vmatpush1.bf16.msra.mxu0 %v6036
          %6217 = vmatprep.subr.bf16.mxu0 %v6043
          %6218 = vmatpush1.bf16.msra.mxu0 %v6042
          %6219 = vmatprep.subr.bf16.mxu0 %v6049
          %6220 = vmatpush1.bf16.msra.mxu0 %v6048
          %6221 = vmatprep.subr.bf16.mxu0 %v6055
          %6222 = vmatpush1.bf16.msra.mxu0 %v6054
          %6223 = vmatprep.subr.bf16.mxu0 %v6061
          %6224 = vmatpush1.bf16.msra.mxu0 %v6060
          %6225 = vmatprep.mubr.bf16.mxu0 %v5584
          %6226 = vmatmul.mubr.bf16.gmra.mrb[0].mxu0 %v5583
          %v6227 = vpop.f32.mrb[0].mxu0
          %v6228 = vadd.f32 %v6166, %v6227
          %v6229 = vpop.f32.mrb[0].mxu0
          %v6230 = vadd.f32 %v6170, %v6229
          %v6231 = vpop.f32.mrb[0].mxu0
          %v6232 = vpop.f32.mrb[0].mxu0
          %6233 = vdwg.mxu0
          %6234 = vmatprep.subr.bf16.mxu0 %v5973
          %6235 = vmatpush1.bf16.msra.mxu0 %v5972
          %6236 = vmatprep.subr.bf16.mxu0 %v5979
          %6237 = vmatpush1.bf16.msra.mxu0 %v5978
          %6238 = vmatprep.subr.bf16.mxu0 %v5985
          %6239 = vmatpush1.bf16.msra.mxu0 %v5984
          %6240 = vmatprep.subr.bf16.mxu0 %v5991
          %6241 = vmatpush1.bf16.msra.mxu0 %v5990
          %6242 = vmatprep.subr.bf16.mxu0 %v5997
          %6243 = vmatpush1.bf16.msra.mxu0 %v5996
          %6244 = vmatprep.subr.bf16.mxu0 %v6003
          %6245 = vmatpush1.bf16.msra.mxu0 %v6002
          %6246 = vmatprep.subr.bf16.mxu0 %v6009
          %6247 = vmatpush1.bf16.msra.mxu0 %v6008
          %6248 = vmatprep.subr.bf16.mxu0 %v6015
          %6249 = vmatpush1.bf16.msra.mxu0 %v6014
          %6250 = vmatprep.subr.bf16.mxu0 %v6021
          %6251 = vmatpush1.bf16.msra.mxu0 %v6020
          %6252 = vmatprep.subr.bf16.mxu0 %v6027
          %6253 = vmatpush1.bf16.msra.mxu0 %v6026
          %6254 = vmatprep.subr.bf16.mxu0 %v6033
          %6255 = vmatpush1.bf16.msra.mxu0 %v6032
          %6256 = vmatprep.subr.bf16.mxu0 %v6039
          %6257 = vmatpush1.bf16.msra.mxu0 %v6038
          %6258 = vmatprep.subr.bf16.mxu0 %v6045
          %6259 = vmatpush1.bf16.msra.mxu0 %v6044
          %6260 = vmatprep.subr.bf16.mxu0 %v6051
          %6261 = vmatpush1.bf16.msra.mxu0 %v6050
          %6262 = vmatprep.subr.bf16.mxu0 %v6057
          %6263 = vmatpush1.bf16.msra.mxu0 %v6056
          %6264 = vmatprep.subr.bf16.mxu0 %v6063
          %6265 = vmatpush1.bf16.msra.mxu0 %v6062
          %6266 = vmatprep.mubr.bf16.mxu0 %v5584
          %6267 = vmatmul.mubr.bf16.gmra.mrb[0].mxu0 %v5583
          %v6268 = vpop.f32.mrb[0].mxu0
          %v6269 = vadd.f32 %v6174, %v6268
          %v6270 = vpop.f32.mrb[0].mxu0
          %v6271 = vadd.f32 %v6178, %v6270
          %v6272 = vpop.f32.mrb[0].mxu0
          %v6273 = vpop.f32.mrb[0].mxu0
          %6274 = vdwg.mxu0
          %6275 = vmatprep.subr.bf16.mxu0 %v5975
          %6276 = vmatpush1.bf16.msra.mxu0 %v5974
          %6277 = vmatprep.subr.bf16.mxu0 %v5981
          %6278 = vmatpush1.bf16.msra.mxu0 %v5980
          %6279 = vmatprep.subr.bf16.mxu0 %v5987
          %6280 = vmatpush1.bf16.msra.mxu0 %v5986
          %6281 = vmatprep.subr.bf16.mxu0 %v5993
          %6282 = vmatpush1.bf16.msra.mxu0 %v5992
          %6283 = vmatprep.subr.bf16.mxu0 %v5999
          %6284 = vmatpush1.bf16.msra.mxu0 %v5998
          %6285 = vmatprep.subr.bf16.mxu0 %v6005
          %6286 = vmatpush1.bf16.msra.mxu0 %v6004
          %6287 = vmatprep.subr.bf16.mxu0 %v6011
          %6288 = vmatpush1.bf16.msra.mxu0 %v6010
          %6289 = vmatprep.subr.bf16.mxu0 %v6017
          %6290 = vmatpush1.bf16.msra.mxu0 %v6016
          %6291 = vmatprep.subr.bf16.mxu0 %v6023
          %6292 = vmatpush1.bf16.msra.mxu0 %v6022
          %6293 = vmatprep.subr.bf16.mxu0 %v6029
          %6294 = vmatpush1.bf16.msra.mxu0 %v6028
          %6295 = vmatprep.subr.bf16.mxu0 %v6035
          %6296 = vmatpush1.bf16.msra.mxu0 %v6034
          %6297 = vmatprep.subr.bf16.mxu0 %v6041
          %6298 = vmatpush1.bf16.msra.mxu0 %v6040
          %6299 = vmatprep.subr.bf16.mxu0 %v6047
          %6300 = vmatpush1.bf16.msra.mxu0 %v6046
          %6301 = vmatprep.subr.bf16.mxu0 %v6053
          %6302 = vmatpush1.bf16.msra.mxu0 %v6052
          %6303 = vmatprep.subr.bf16.mxu0 %v6059
          %6304 = vmatpush1.bf16.msra.mxu0 %v6058
          %6305 = vmatprep.subr.bf16.mxu0 %v6065
          %6306 = vmatpush1.bf16.msra.mxu0 %v6064
          %6307 = vmatprep.mubr.bf16.mxu0 %v5584
          %6308 = vmatmul.mubr.bf16.gmra.mrb[0].mxu0 %v5583
          %v6309 = vpop.f32.mrb[0].mxu0
          %v6310 = vadd.f32 %v6182, %v6309
          %v6311 = vpop.f32.mrb[0].mxu0
          %v6312 = vadd.f32 %v6186, %v6311
          %v6313 = vpop.f32.mrb[0].mxu0
          %v6314 = vpop.f32.mrb[0].mxu0
          %6315 = vdwg.mxu0
          %v6316 = vmax.f32 %v6228, 0.0
          %v6317 = vmax.f32 %v6230, 0.0
          %v6318 = vmax.f32 %v6269, 0.0
          %v6319 = vmax.f32 %v6271, 0.0
          %v6320 = vmax.f32 %v6310, 0.0
          %v6321 = vmax.f32 %v6312, 0.0
          %v6322 = vpack.c.bf16 %v6316, %v6316
          %v6323 = vpack.c.bf16 %v6317, %v6317
          %v6324 = vpack.c.bf16 %v6318, %v6318
          %v6325 = vpack.c.bf16 %v6319, %v6319
          %v6326 = vpack.c.bf16 %v6320, %v6320
          %v6327 = vpack.c.bf16 %v6321, %v6321
          %v6328 = vld [vmem:[#allocation29] sm:$0xf]
          %v6329 = vld [vmem:[#allocation29 + $0x4] sm:$0xf]
          %v6330 = vld [vmem:[#allocation29 + $0x8] sm:$0xf]
          %v6331 = vld [vmem:[#allocation29 + $0xc] sm:$0xf]
          %v6332 = vld [vmem:[#allocation29 + $0x10] sm:$0xf]
          %v6333 = vld [vmem:[#allocation29 + $0x14] sm:$0xf]
          %v6334 = vld [vmem:[#allocation29 + $0x18] sm:$0xf]
          %v6335 = vld [vmem:[#allocation29 + $0x1c] sm:$0xf]
          %v6336 = vld [vmem:[#allocation29 + $0x20] sm:$0xf]
          %v6337 = vld [vmem:[#allocation29 + $0x24] sm:$0xf]
          %v6338 = vld [vmem:[#allocation29 + $0x28] sm:$0xf]
          %v6339 = vld [vmem:[#allocation29 + $0x2c] sm:$0xf]
          %v6340 = vld [vmem:[#allocation29 + $0x30] sm:$0xf]
          %v6341 = vld [vmem:[#allocation29 + $0x34] sm:$0xf]
          %v6342 = vld [vmem:[#allocation29 + $0x38] sm:$0xf]
          %v6343 = vld [vmem:[#allocation29 + $0x3c] sm:$0xf]
          %v6344 = vld [vmem:[#allocation29 + $0x40] sm:$0xf]
          %v6345 = vld [vmem:[#allocation29 + $0x44] sm:$0xf]
          %v6346 = vld [vmem:[#allocation29 + $0x48] sm:$0xf]
          %v6347 = vld [vmem:[#allocation29 + $0x4c] sm:$0xf]
          %v6348 = vld [vmem:[#allocation29 + $0x50] sm:$0xf]
          %v6349 = vld [vmem:[#allocation29 + $0x54] sm:$0xf]
          %v6350 = vld [vmem:[#allocation29 + $0x58] sm:$0xf]
          %v6351 = vld [vmem:[#allocation29 + $0x5c] sm:$0xf]
          %v6352 = vld [vmem:[#allocation29 + $0x60] sm:$0xf]
          %v6353 = vld [vmem:[#allocation29 + $0x64] sm:$0xf]
          %v6354 = vld [vmem:[#allocation29 + $0x68] sm:$0xf]
          %v6355 = vld [vmem:[#allocation29 + $0x6c] sm:$0xf]
          %v6356 = vld [vmem:[#allocation29 + $0x70] sm:$0xf]
          %v6357 = vld [vmem:[#allocation29 + $0x74] sm:$0xf]
          %v6358 = vld [vmem:[#allocation29 + $0x78] sm:$0xf]
          %v6359 = vld [vmem:[#allocation29 + $0x7c] sm:$0xf]
          %v6360 = vld [vmem:[#allocation29 + $0x80] sm:$0xf]
          %v6361 = vld [vmem:[#allocation29 + $0x84] sm:$0xf]
          %v6362 = vld [vmem:[#allocation29 + $0x88] sm:$0xf]
          %v6363 = vld [vmem:[#allocation29 + $0x8c] sm:$0xf]
          %v6364 = vld [vmem:[#allocation29 + $0x90] sm:$0xf]
          %v6365 = vld [vmem:[#allocation29 + $0x94] sm:$0xf]
          %v6366 = vld [vmem:[#allocation29 + $0x98] sm:$0xf]
          %v6367 = vld [vmem:[#allocation29 + $0x9c] sm:$0xf]
          %v6368 = vld [vmem:[#allocation29 + $0xa0] sm:$0xf]
          %v6369 = vld [vmem:[#allocation29 + $0xa4] sm:$0xf]
          %v6370 = vld [vmem:[#allocation29 + $0xa8] sm:$0xf]
          %v6371 = vld [vmem:[#allocation29 + $0xac] sm:$0xf]
          %v6372 = vld [vmem:[#allocation29 + $0xb0] sm:$0xf]
          %v6373 = vld [vmem:[#allocation29 + $0xb4] sm:$0xf]
          %v6374 = vld [vmem:[#allocation29 + $0xb8] sm:$0xf]
          %v6375 = vld [vmem:[#allocation29 + $0xbc] sm:$0xf]
          %v6376 = vld [vmem:[#allocation29 + $0xc0] sm:$0xf]
          %v6377 = vld [vmem:[#allocation29 + $0xc4] sm:$0xf]
          %v6378 = vld [vmem:[#allocation29 + $0xc8] sm:$0xf]
          %v6379 = vld [vmem:[#allocation29 + $0xcc] sm:$0xf]
          %v6380 = vld [vmem:[#allocation29 + $0xd0] sm:$0xf]
          %v6381 = vld [vmem:[#allocation29 + $0xd4] sm:$0xf]
          %v6382 = vld [vmem:[#allocation29 + $0xd8] sm:$0xf]
          %v6383 = vld [vmem:[#allocation29 + $0xdc] sm:$0xf]
          %v6384 = vld [vmem:[#allocation29 + $0xe0] sm:$0xf]
          %v6385 = vld [vmem:[#allocation29 + $0xe4] sm:$0xf]
          %v6386 = vld [vmem:[#allocation29 + $0xe8] sm:$0xf]
          %v6387 = vld [vmem:[#allocation29 + $0xec] sm:$0xf]
          %v6388 = vld [vmem:[#allocation29 + $0xf0] sm:$0xf]
          %v6389 = vld [vmem:[#allocation29 + $0xf4] sm:$0xf]
          %v6390 = vld [vmem:[#allocation29 + $0xf8] sm:$0xf]
          %v6391 = vld [vmem:[#allocation29 + $0xfc] sm:$0xf]
          %v6392 = vld [vmem:[#allocation29 + $0x100] sm:$0xf]
          %v6393 = vld [vmem:[#allocation29 + $0x104] sm:$0xf]
          %v6394 = vld [vmem:[#allocation29 + $0x108] sm:$0xf]
          %v6395 = vld [vmem:[#allocation29 + $0x10c] sm:$0xf]
          %v6396 = vld [vmem:[#allocation29 + $0x110] sm:$0xf]
          %v6397 = vld [vmem:[#allocation29 + $0x114] sm:$0xf]
          %v6398 = vld [vmem:[#allocation29 + $0x118] sm:$0xf]
          %v6399 = vld [vmem:[#allocation29 + $0x11c] sm:$0xf]
          %v6400 = vld [vmem:[#allocation29 + $0x120] sm:$0xf]
          %v6401 = vld [vmem:[#allocation29 + $0x124] sm:$0xf]
          %v6402 = vld [vmem:[#allocation29 + $0x128] sm:$0xf]
          %v6403 = vld [vmem:[#allocation29 + $0x12c] sm:$0xf]
          %v6404 = vld [vmem:[#allocation29 + $0x130] sm:$0xf]
          %v6405 = vld [vmem:[#allocation29 + $0x134] sm:$0xf]
          %v6406 = vld [vmem:[#allocation29 + $0x138] sm:$0xf]
          %v6407 = vld [vmem:[#allocation29 + $0x13c] sm:$0xf]
          %v6408 = vld [vmem:[#allocation29 + $0x140] sm:$0xf]
          %v6409 = vld [vmem:[#allocation29 + $0x144] sm:$0xf]
          %v6410 = vld [vmem:[#allocation29 + $0x148] sm:$0xf]
          %v6411 = vld [vmem:[#allocation29 + $0x14c] sm:$0xf]
          %v6412 = vld [vmem:[#allocation29 + $0x150] sm:$0xf]
          %v6413 = vld [vmem:[#allocation29 + $0x154] sm:$0xf]
          %v6414 = vld [vmem:[#allocation29 + $0x158] sm:$0xf]
          %v6415 = vld [vmem:[#allocation29 + $0x15c] sm:$0xf]
          %v6416 = vld [vmem:[#allocation29 + $0x160] sm:$0xf]
          %v6417 = vld [vmem:[#allocation29 + $0x164] sm:$0xf]
          %v6418 = vld [vmem:[#allocation29 + $0x168] sm:$0xf]
          %v6419 = vld [vmem:[#allocation29 + $0x16c] sm:$0xf]
          %v6420 = vld [vmem:[#allocation29 + $0x170] sm:$0xf]
          %v6421 = vld [vmem:[#allocation29 + $0x174] sm:$0xf]
          %v6422 = vld [vmem:[#allocation29 + $0x178] sm:$0xf]
          %v6423 = vld [vmem:[#allocation29 + $0x17c] sm:$0xf]
          %v6424 = vld [vmem:[#allocation31] sm:$0x1]
          %v6521 = vunpack.c.l.b16 %v6328
          %v6522 = vunpack.c.l.b16 %v6329
          %v6523 = vunpack.c.l.b16 %v6330
          %v6524 = vunpack.c.l.b16 %v6331
          %v6525 = vunpack.c.l.b16 %v6332
          %v6526 = vunpack.c.l.b16 %v6333
          %v6527 = vunpack.c.l.b16 %v6334
          %v6528 = vunpack.c.l.b16 %v6335
          %v6529 = vunpack.c.l.b16 %v6336
          %v6530 = vunpack.c.l.b16 %v6337
          %v6531 = vunpack.c.l.b16 %v6338
          %v6532 = vunpack.c.l.b16 %v6339
          %v6533 = vunpack.c.l.b16 %v6340
          %v6534 = vunpack.c.l.b16 %v6341
          %v6535 = vunpack.c.l.b16 %v6342
          %v6536 = vunpack.c.l.b16 %v6343
          %v6537 = vunpack.c.l.b16 %v6344
          %v6538 = vunpack.c.l.b16 %v6345
          %v6539 = vunpack.c.l.b16 %v6346
          %v6540 = vunpack.c.l.b16 %v6347
          %v6541 = vunpack.c.l.b16 %v6348
          %v6542 = vunpack.c.l.b16 %v6349
          %v6543 = vunpack.c.l.b16 %v6350
          %v6544 = vunpack.c.l.b16 %v6351
          %v6545 = vunpack.c.l.b16 %v6352
          %v6546 = vunpack.c.l.b16 %v6353
          %v6547 = vunpack.c.l.b16 %v6354
          %v6548 = vunpack.c.l.b16 %v6355
          %v6549 = vunpack.c.l.b16 %v6356
          %v6550 = vunpack.c.l.b16 %v6357
          %v6551 = vunpack.c.l.b16 %v6358
          %v6552 = vunpack.c.l.b16 %v6359
          %v6553 = vunpack.c.l.b16 %v6360
          %v6554 = vunpack.c.l.b16 %v6361
          %v6555 = vunpack.c.l.b16 %v6362
          %v6556 = vunpack.c.l.b16 %v6363
          %v6557 = vunpack.c.l.b16 %v6364
          %v6558 = vunpack.c.l.b16 %v6365
          %v6559 = vunpack.c.l.b16 %v6366
          %v6560 = vunpack.c.l.b16 %v6367
          %v6561 = vunpack.c.l.b16 %v6368
          %v6562 = vunpack.c.l.b16 %v6369
          %v6563 = vunpack.c.l.b16 %v6370
          %v6564 = vunpack.c.l.b16 %v6371
          %v6565 = vunpack.c.l.b16 %v6372
          %v6566 = vunpack.c.l.b16 %v6373
          %v6567 = vunpack.c.l.b16 %v6374
          %v6568 = vunpack.c.l.b16 %v6375
          %v6569 = vunpack.c.l.b16 %v6376
          %v6570 = vunpack.c.l.b16 %v6377
          %v6571 = vunpack.c.l.b16 %v6378
          %v6572 = vunpack.c.l.b16 %v6379
          %v6573 = vunpack.c.l.b16 %v6380
          %v6574 = vunpack.c.l.b16 %v6381
          %v6575 = vunpack.c.l.b16 %v6382
          %v6576 = vunpack.c.l.b16 %v6383
          %v6577 = vunpack.c.l.b16 %v6384
          %v6578 = vunpack.c.l.b16 %v6385
          %v6579 = vunpack.c.l.b16 %v6386
          %v6580 = vunpack.c.l.b16 %v6387
          %v6581 = vunpack.c.l.b16 %v6388
          %v6582 = vunpack.c.l.b16 %v6389
          %v6583 = vunpack.c.l.b16 %v6390
          %v6584 = vunpack.c.l.b16 %v6391
          %v6585 = vunpack.c.l.b16 %v6392
          %v6586 = vunpack.c.l.b16 %v6393
          %v6587 = vunpack.c.l.b16 %v6394
          %v6588 = vunpack.c.l.b16 %v6395
          %v6589 = vunpack.c.l.b16 %v6396
          %v6590 = vunpack.c.l.b16 %v6397
          %v6591 = vunpack.c.l.b16 %v6398
          %v6592 = vunpack.c.l.b16 %v6399
          %v6593 = vunpack.c.l.b16 %v6400
          %v6594 = vunpack.c.l.b16 %v6401
          %v6595 = vunpack.c.l.b16 %v6402
          %v6596 = vunpack.c.l.b16 %v6403
          %v6597 = vunpack.c.l.b16 %v6404
          %v6598 = vunpack.c.l.b16 %v6405
          %v6599 = vunpack.c.l.b16 %v6406
          %v6600 = vunpack.c.l.b16 %v6407
          %v6601 = vunpack.c.l.b16 %v6408
          %v6602 = vunpack.c.l.b16 %v6409
          %v6603 = vunpack.c.l.b16 %v6410
          %v6604 = vunpack.c.l.b16 %v6411
          %v6605 = vunpack.c.l.b16 %v6412
          %v6606 = vunpack.c.l.b16 %v6413
          %v6607 = vunpack.c.l.b16 %v6414
          %v6608 = vunpack.c.l.b16 %v6415
          %v6609 = vunpack.c.l.b16 %v6416
          %v6610 = vunpack.c.l.b16 %v6417
          %v6611 = vunpack.c.l.b16 %v6418
          %v6612 = vunpack.c.l.b16 %v6419
          %v6613 = vunpack.c.l.b16 %v6420
          %v6614 = vunpack.c.l.b16 %v6421
          %v6615 = vunpack.c.l.b16 %v6422
          %v6616 = vunpack.c.l.b16 %v6423
          %v6617 = vpack.c.b16 %v6522, %v6521
          %v6618 = vpack.c.b16 %v6524, %v6523
          %v6619 = vpack.c.b16 %v6526, %v6525
          %v6620 = vpack.c.b16 %v6528, %v6527
          %v6621 = vpack.c.b16 %v6530, %v6529
          %v6622 = vpack.c.b16 %v6532, %v6531
          %v6623 = vpack.c.b16 %v6534, %v6533
          %v6624 = vpack.c.b16 %v6536, %v6535
          %v6625 = vpack.c.b16 %v6538, %v6537
          %v6626 = vpack.c.b16 %v6540, %v6539
          %v6627 = vpack.c.b16 %v6542, %v6541
          %v6628 = vpack.c.b16 %v6544, %v6543
          %v6629 = vpack.c.b16 %v6546, %v6545
          %v6630 = vpack.c.b16 %v6548, %v6547
          %v6631 = vpack.c.b16 %v6550, %v6549
          %v6632 = vpack.c.b16 %v6552, %v6551
          %v6633 = vpack.c.b16 %v6554, %v6553
          %v6634 = vpack.c.b16 %v6556, %v6555
          %v6635 = vpack.c.b16 %v6558, %v6557
          %v6636 = vpack.c.b16 %v6560, %v6559
          %v6637 = vpack.c.b16 %v6562, %v6561
          %v6638 = vpack.c.b16 %v6564, %v6563
          %v6639 = vpack.c.b16 %v6566, %v6565
          %v6640 = vpack.c.b16 %v6568, %v6567
          %v6641 = vpack.c.b16 %v6570, %v6569
          %v6642 = vpack.c.b16 %v6572, %v6571
          %v6643 = vpack.c.b16 %v6574, %v6573
          %v6644 = vpack.c.b16 %v6576, %v6575
          %v6645 = vpack.c.b16 %v6578, %v6577
          %v6646 = vpack.c.b16 %v6580, %v6579
          %v6647 = vpack.c.b16 %v6582, %v6581
          %v6648 = vpack.c.b16 %v6584, %v6583
          %v6649 = vpack.c.b16 %v6586, %v6585
          %v6650 = vpack.c.b16 %v6588, %v6587
          %v6651 = vpack.c.b16 %v6590, %v6589
          %v6652 = vpack.c.b16 %v6592, %v6591
          %v6653 = vpack.c.b16 %v6594, %v6593
          %v6654 = vpack.c.b16 %v6596, %v6595
          %v6655 = vpack.c.b16 %v6598, %v6597
          %v6656 = vpack.c.b16 %v6600, %v6599
          %v6657 = vpack.c.b16 %v6602, %v6601
          %v6658 = vpack.c.b16 %v6604, %v6603
          %v6659 = vpack.c.b16 %v6606, %v6605
          %v6660 = vpack.c.b16 %v6608, %v6607
          %v6661 = vpack.c.b16 %v6610, %v6609
          %v6662 = vpack.c.b16 %v6612, %v6611
          %v6663 = vpack.c.b16 %v6614, %v6613
          %v6664 = vpack.c.b16 %v6616, %v6615
          %6713 = vmatprep.subr.bf16.mxu0 0
          %6714 = vmatpush1.bf16.msra.mxu0 %v6617
          %6715 = vmatprep.subr.bf16.mxu0 0
          %6716 = vmatpush1.bf16.msra.mxu0 %v6618
          %6717 = vmatprep.subr.bf16.mxu0 0
          %6718 = vmatpush1.bf16.msra.mxu0 %v6619
          %6719 = vmatprep.subr.bf16.mxu0 0
          %6720 = vmatpush1.bf16.msra.mxu0 %v6620
          %6721 = vmatprep.subr.bf16.mxu0 0
          %6722 = vmatpush1.bf16.msra.mxu0 %v6621
          %6723 = vmatprep.subr.bf16.mxu0 0
          %6724 = vmatpush1.bf16.msra.mxu0 %v6622
          %6725 = vmatprep.subr.bf16.mxu0 0
          %6726 = vmatpush1.bf16.msra.mxu0 %v6623
          %6727 = vmatprep.subr.bf16.mxu0 0
          %6728 = vmatpush1.bf16.msra.mxu0 %v6624
          %6729 = vmatprep.subr.bf16.mxu0 0
          %6730 = vmatpush1.bf16.msra.mxu0 %v6625
          %6731 = vmatprep.subr.bf16.mxu0 0
          %6732 = vmatpush1.bf16.msra.mxu0 %v6626
          %6733 = vmatprep.subr.bf16.mxu0 0
          %6734 = vmatpush1.bf16.msra.mxu0 %v6627
          %6735 = vmatprep.subr.bf16.mxu0 0
          %6736 = vmatpush1.bf16.msra.mxu0 %v6628
          %6737 = vmatprep.subr.bf16.mxu0 0
          %6738 = vmatpush1.bf16.msra.mxu0 %v6629
          %6739 = vmatprep.subr.bf16.mxu0 0
          %6740 = vmatpush1.bf16.msra.mxu0 %v6630
          %6741 = vmatprep.subr.bf16.mxu0 0
          %6742 = vmatpush1.bf16.msra.mxu0 %v6631
          %6743 = vmatprep.subr.bf16.mxu0 0
          %6744 = vmatpush1.bf16.msra.mxu0 %v6632
          %6745 = vmatprep.mubr.bf16.mxu0 %v6323
          %6746 = vmatmul.mubr.bf16.gmra.mrb[0].mxu0 %v6322
          %v6747 = vpop.f32.mrb[0].mxu0
          %v6748 = vadd.f32 %v6424, %v6747
          %v6749 = vpop.f32.mrb[0].mxu0
          %v6750 = vpop.f32.mrb[0].mxu0
          %v6751 = vpop.f32.mrb[0].mxu0
          %6752 = vdwg.mxu0
          %6753 = vmatprep.subr.bf16.mxu0 0
          %6754 = vmatpush1.bf16.msra.mxu0 %v6633
          %6755 = vmatprep.subr.bf16.mxu0 0
          %6756 = vmatpush1.bf16.msra.mxu0 %v6634
          %6757 = vmatprep.subr.bf16.mxu0 0
          %6758 = vmatpush1.bf16.msra.mxu0 %v6635
          %6759 = vmatprep.subr.bf16.mxu0 0
          %6760 = vmatpush1.bf16.msra.mxu0 %v6636
          %6761 = vmatprep.subr.bf16.mxu0 0
          %6762 = vmatpush1.bf16.msra.mxu0 %v6637
          %6763 = vmatprep.subr.bf16.mxu0 0
          %6764 = vmatpush1.bf16.msra.mxu0 %v6638
          %6765 = vmatprep.subr.bf16.mxu0 0
          %6766 = vmatpush1.bf16.msra.mxu0 %v6639
          %6767 = vmatprep.subr.bf16.mxu0 0
          %6768 = vmatpush1.bf16.msra.mxu0 %v6640
          %6769 = vmatprep.subr.bf16.mxu0 0
          %6770 = vmatpush1.bf16.msra.mxu0 %v6641
          %6771 = vmatprep.subr.bf16.mxu0 0
          %6772 = vmatpush1.bf16.msra.mxu0 %v6642
          %6773 = vmatprep.subr.bf16.mxu0 0
          %6774 = vmatpush1.bf16.msra.mxu0 %v6643
          %6775 = vmatprep.subr.bf16.mxu0 0
          %6776 = vmatpush1.bf16.msra.mxu0 %v6644
          %6777 = vmatprep.subr.bf16.mxu0 0
          %6778 = vmatpush1.bf16.msra.mxu0 %v6645
          %6779 = vmatprep.subr.bf16.mxu0 0
          %6780 = vmatpush1.bf16.msra.mxu0 %v6646
          %6781 = vmatprep.subr.bf16.mxu0 0
          %6782 = vmatpush1.bf16.msra.mxu0 %v6647
          %6783 = vmatprep.subr.bf16.mxu0 0
          %6784 = vmatpush1.bf16.msra.mxu0 %v6648
          %6785 = vmatprep.mubr.bf16.mxu0 %v6325
          %6786 = vmatmul.mubr.bf16.gmra.mrb[0].mxu0 %v6324
          %v6787 = vpop.f32.mrb[0].mxu0
          %v6788 = vadd.f32 %v6748, %v6787
          %v6789 = vpop.f32.mrb[0].mxu0
          %v6790 = vpop.f32.mrb[0].mxu0
          %v6791 = vpop.f32.mrb[0].mxu0
          %6792 = vdwg.mxu0
          %6793 = vmatprep.subr.bf16.mxu0 0
          %6794 = vmatpush1.bf16.msra.mxu0 %v6649
          %6795 = vmatprep.subr.bf16.mxu0 0
          %6796 = vmatpush1.bf16.msra.mxu0 %v6650
          %6797 = vmatprep.subr.bf16.mxu0 0
          %6798 = vmatpush1.bf16.msra.mxu0 %v6651
          %6799 = vmatprep.subr.bf16.mxu0 0
          %6800 = vmatpush1.bf16.msra.mxu0 %v6652
          %6801 = vmatprep.subr.bf16.mxu0 0
          %6802 = vmatpush1.bf16.msra.mxu0 %v6653
          %6803 = vmatprep.subr.bf16.mxu0 0
          %6804 = vmatpush1.bf16.msra.mxu0 %v6654
          %6805 = vmatprep.subr.bf16.mxu0 0
          %6806 = vmatpush1.bf16.msra.mxu0 %v6655
          %6807 = vmatprep.subr.bf16.mxu0 0
          %6808 = vmatpush1.bf16.msra.mxu0 %v6656
          %6809 = vmatprep.subr.bf16.mxu0 0
          %6810 = vmatpush1.bf16.msra.mxu0 %v6657
          %6811 = vmatprep.subr.bf16.mxu0 0
          %6812 = vmatpush1.bf16.msra.mxu0 %v6658
          %6813 = vmatprep.subr.bf16.mxu0 0
          %6814 = vmatpush1.bf16.msra.mxu0 %v6659
          %6815 = vmatprep.subr.bf16.mxu0 0
          %6816 = vmatpush1.bf16.msra.mxu0 %v6660
          %6817 = vmatprep.subr.bf16.mxu0 0
          %6818 = vmatpush1.bf16.msra.mxu0 %v6661
          %6819 = vmatprep.subr.bf16.mxu0 0
          %6820 = vmatpush1.bf16.msra.mxu0 %v6662
          %6821 = vmatprep.subr.bf16.mxu0 0
          %6822 = vmatpush1.bf16.msra.mxu0 %v6663
          %6823 = vmatprep.subr.bf16.mxu0 0
          %6824 = vmatpush1.bf16.msra.mxu0 %v6664
          %6825 = vmatprep.mubr.bf16.mxu0 %v6327
          %6826 = vmatmul.mubr.bf16.gmra.mrb[0].mxu0 %v6326
          %v6827 = vpop.f32.mrb[0].mxu0
          %v6828 = vadd.f32 %v6788, %v6827
          %v6829 = vpop.f32.mrb[0].mxu0
          %v6830 = vpop.f32.mrb[0].mxu0
          %v6831 = vpop.f32.mrb[0].mxu0
          %6832 = vdwg.mxu0
          %6833 = vst [vmem:[%s1401] sm:$0x1] %v6828
        $region224: #{uni_multitask_forward.1} parent=119 // pred_fallthru
          _
        %p6834 = scmp.lt.s32.totalorder %s45, 1
        %s6835 = scalar_select %p6834, %s45, 1
        %s6836 = scalar_lea.vmem %s25, %s6835
        // Predicated region
        $region225: #{uni_multitask_forward.1} parent=119 // pred_check
          %p6837 = pneg %p671
        $region226: #{uni_multitask_forward.1} parent=119 // pred_check_branch
          %6839 = sbr.rel (%p6837) target = $region228
        $region227: #{uni_multitask_forward.1} parent=119 // pred_region
          _
        $region228: #{uni_multitask_forward.1} parent=119 // pred_fallthru
          _
      $region120: #{uni_multitask_forward.1} parent=5 // pred_fallthru
        _
      %p6840 = scmp.le.s32.totalorder 2, %s36
      // Predicated region
      $region229: #{uni_multitask_forward.1} parent=5 // pred_check
        %p6841 = pneg %p6840
      $region230: #{uni_multitask_forward.1} parent=5 // pred_check_branch
        %6843 = sbr.rel (%p6841) target = $region232
      $region231: #{uni_multitask_forward.1} parent=5 // pred_region
        %s6844 = ssub.s32 %s36, 2
        // Predicated region
        $region233: #{uni_multitask_forward.1} parent=231 // pred_check
          %p6845 = pneg %p677
        $region234: #{uni_multitask_forward.1} parent=231 // pred_check_branch
          %6847 = sbr.rel (%p6845) target = $region236
        $region235: #{uni_multitask_forward.1} parent=231 // pred_region
          %p6848 = scmp.lt.s32.totalorder %s47, 1
          %s6849 = scalar_select %p6848, %s47, 1
          %s6850 = scalar_lea.vmem %s25, %s6849
        $region236: #{uni_multitask_forward.1} parent=231 // pred_fallthru
          _
      $region232: #{uni_multitask_forward.1} parent=5 // pred_fallthru
        _
    $region6: #{uni_multitask_forward.1} parent=1 // loop_footer
      %s40 = sadd.s32 1, %s36
    $region7: #{uni_multitask_forward.1} parent=1 // loop_footer_branch
      %35 = sbr.rel target = $region3
    $region8: #{uni_multitask_forward.1} parent=1 // loop_exit
      _
    %6851 = vsyncpa [#allocation4], 1
    %s6852 = scalar_lea.sflag [#allocation4], 1
    %6853 = vsyncpa %s6852, 1
    %6854 = vsyncpa [#allocation6], 1
    %6855 = vsyncpa [#allocation9], 1
    %6856 = vsyncpa [#allocation27], 1
    %6857 = vsyncpa [#allocation30], 1

</llo_original>
